<compile_context>
chip_gen: v7x
topology: tpu7x:2x2x1
jax: 0.10.0
libtpu: 0.0.40
codegen_flags: <defaults>
</compile_context>

<pallas_src>
import functools

import jax
import jax.numpy as jnp
import numpy as np
from jax.experimental import pallas as pl
from jax.experimental.pallas import tpu as pltpu

EPS = 1e-5  # nn.GroupNorm default eps


# ------------------------------------------------------------------ helpers
def _ds(start, size, stride):
    # plain slice when stride == 1, strided pl.ds otherwise
    return pl.ds(start, size) if stride == 1 else pl.ds(start, size, stride)


def _dot(a_bf16, b_bf16):
    # Single-pass MXU matmul: bf16 operands, f32 accumulation.
    return jnp.dot(a_bf16, b_bf16, preferred_element_type=jnp.float32)


def _inorm(y, g, b, relu):
    # Per-channel instance norm over the spatial axis (axis 0), f32.
    # Single-pass stats: var = E[y^2] - mean^2 (biased, matching GroupNorm).
    n = y.shape[0]
    inv_n = 1.0 / n
    s1 = jnp.sum(y, axis=0, keepdims=True)
    s2 = jnp.sum(y * y, axis=0, keepdims=True)
    mean = s1 * inv_n
    var = jnp.maximum(s2 * inv_n - mean * mean, 0.0)
    scale = jax.lax.rsqrt(var + EPS) * g
    out = y * scale + (b - mean * scale)
    if relu:
        out = jnp.maximum(out, 0.0)
    return out


# ------------------------------------------------------------------ fused kernel
def _bottleneck_kernel(*refs, H, W, stride, proj):
    if proj:
        (x_ref, w1_ref, g1_ref, b1_ref, w2_ref, g2_ref, b2_ref,
         w3_ref, g3_ref, b3_ref, ws_ref, gs_ref, bs_ref,
         o_ref, y1p_ref) = refs
    else:
        (x_ref, w1_ref, g1_ref, b1_ref, w2_ref, g2_ref, b2_ref,
         w3_ref, g3_ref, b3_ref, o_ref, y1p_ref) = refs

    planes = w1_ref.shape[1]
    Cin = x_ref.shape[3]
    Ho = (H - 1) // stride + 1
    Wo = (W - 1) // stride + 1
    HW, HWo = H * W, Ho * Wo

    x = x_ref[0]                                  # (H, W, Cin) bf16
    x_flat = x.reshape(HW, Cin)                   # bf16; reused by conv1 & shortcut

    # ---- conv1 (1x1) + instance norm + relu (stays in VMEM/registers)
    y1 = _inorm(_dot(x_flat, w1_ref[...]),
                g1_ref[...], b1_ref[...], relu=True)          # (HW, planes) f32

    # ---- stage conv1 output into bf16 zero-halo-padded VMEM scratch (pad=1).
    # Only the 1-pixel halo is zeroed; the interior is fully overwritten.
    zrow = jnp.zeros((1, W + 2, planes), jnp.bfloat16)
    y1p_ref[pl.ds(0, 1), :, :] = zrow
    y1p_ref[pl.ds(H + 1, 1), :, :] = zrow
    zcol = jnp.zeros((H, 1, planes), jnp.bfloat16)
    y1p_ref[pl.ds(1, H), pl.ds(0, 1), :] = zcol
    y1p_ref[pl.ds(1, H), pl.ds(W + 1, 1), :] = zcol
    y1p_ref[pl.ds(1, H), pl.ds(1, W), :] = (
        y1.astype(jnp.bfloat16).reshape(H, W, planes))

    # ---- conv2 (3x3, pad=1, stride) = 9 accumulated shifted-window matmuls
    acc = None
    for t in range(9):
        dy, dx = divmod(t, 3)
        tap = y1p_ref[_ds(dy, Ho, stride), _ds(dx, Wo, stride), :]   # (Ho,Wo,P) bf16
        part = _dot(tap.reshape(HWo, planes), w2_ref[t])
        acc = part if acc is None else acc + part
    y2 = _inorm(acc, g2_ref[...], b2_ref[...], relu=True)            # (HWo,P) f32

    # ---- conv3 (1x1) + instance norm
    main = _inorm(_dot(y2.astype(jnp.bfloat16), w3_ref[...]),
                  g3_ref[...], b3_ref[...], relu=False)              # (HWo, Cexp)

    # ---- shortcut
    if proj:
        if stride == 1:
            xs = x_flat
        else:
            xs = x_ref[0, _ds(0, Ho, stride), _ds(0, Wo, stride), :].reshape(HWo, Cin)
        sc = _inorm(_dot(xs, ws_ref[...]),
                    gs_ref[...], bs_ref[...], relu=False)
    else:
        sc = x_flat.astype(jnp.float32)  # identity: Cin == Cexp and stride == 1

    # residual add + final relu in f32
    o_ref[0] = jnp.maximum(main + sc, 0.0)


# ------------------------------------------------------------------ wrapper
def bottleneck_forward(x_nchw, params, stride=1):
    # Precision contract: bf16 matmul operands (activations DMA'd as bf16,
    # weights pre-cast to bf16), f32 accumulation, f32 instance norm and
    # f32 residual add. Output is f32.
    x = jnp.transpose(x_nchw, (0, 2, 3, 1)).astype(jnp.bfloat16)  # NCHW -> NHWC
    N, H, W, Cin = x.shape
    planes = params["w1"].shape[1]
    Cexp = params["w3"].shape[1]
    Ho = (H - 1) // stride + 1
    Wo = (W - 1) // stride + 1
    proj = "ws" in params
    if not proj:
        assert Cin == Cexp and stride == 1, (
            "identity shortcut requires in_planes == expansion*planes and stride == 1")

    # HWIO (3,3,P,P) -> (9, P, P), tap-major (dy, dx); weights pre-cast to bf16.
    w1 = params["w1"].astype(jnp.bfloat16)
    w2 = params["w2"].reshape(9, planes, planes).astype(jnp.bfloat16)
    w3 = params["w3"].astype(jnp.bfloat16)

    kernel = functools.partial(_bottleneck_kernel, H=H, W=W, stride=stride, proj=proj)

    in_arrays = [x, w1, params["g1"], params["b1"],
                 w2, params["g2"], params["b2"],
                 w3, params["g3"], params["b3"]]
    in_specs = [
        pl.BlockSpec((1, H, W, Cin), lambda i: (i, 0, 0, 0)),
        pl.BlockSpec((Cin, planes), lambda i: (0, 0)),
        pl.BlockSpec((1, planes), lambda i: (0, 0)),
        pl.BlockSpec((1, planes), lambda i: (0, 0)),
        pl.BlockSpec((9, planes, planes), lambda i: (0, 0, 0)),
        pl.BlockSpec((1, planes), lambda i: (0, 0)),
        pl.BlockSpec((1, planes), lambda i: (0, 0)),
        pl.BlockSpec((planes, Cexp), lambda i: (0, 0)),
        pl.BlockSpec((1, Cexp), lambda i: (0, 0)),
        pl.BlockSpec((1, Cexp), lambda i: (0, 0)),
    ]
    if proj:
        in_arrays += [params["ws"].astype(jnp.bfloat16), params["gs"], params["bs"]]
        in_specs += [
            pl.BlockSpec((Cin, Cexp), lambda i: (0, 0)),
            pl.BlockSpec((1, Cexp), lambda i: (0, 0)),
            pl.BlockSpec((1, Cexp), lambda i: (0, 0)),
        ]

    out = pl.pallas_call(
        kernel,
        out_shape=jax.ShapeDtypeStruct((N, Ho * Wo, Cexp), jnp.float32),
        grid=(N,),
        in_specs=in_specs,
        out_specs=pl.BlockSpec((1, Ho * Wo, Cexp), lambda i: (i, 0, 0)),
        scratch_shapes=[pltpu.VMEM((H + 2, W + 2, planes), jnp.bfloat16)],
        compiler_params=pltpu.CompilerParams(
            dimension_semantics=("parallel",),          # independent samples
            # 64 MiB: generous on v5e/v6e (128 MiB physical), still within v7x
            # physical VMEM. Real v7x shapes should add spatial tiling instead.
            vmem_limit_bytes=64 * 1024 * 1024,
        ),
    )(*in_arrays)

    out = out.reshape(N, Ho, Wo, Cexp)
    return jnp.transpose(out, (0, 3, 1, 2))  # back to NCHW


# ------------------------------------------------------------------ pure-JAX reference
# Computed with the SAME precision contract as the kernel (bf16 conv operands,
# f32 accumulation, f32 norms / residual) so the comparison tests the block's
# structure rather than bf16-vs-f32 rounding.
def _ref_in_norm(y, g, b):
    m = jnp.mean(y, axis=(1, 2), keepdims=True)
    v = jnp.mean(jnp.square(y - m), axis=(1, 2), keepdims=True)
    return (y - m) / jnp.sqrt(v + EPS) * g.reshape(1, 1, 1, -1) + b.reshape(1, 1, 1, -1)


def _ref_conv(x, w_hwio, stride, pad):
    return jax.lax.conv_general_dilated(
        x.astype(jnp.bfloat16), w_hwio.astype(jnp.bfloat16),
        window_strides=(stride, stride), padding=pad,
        dimension_numbers=("NHWC", "HWIO", "NHWC"),
        preferred_element_type=jnp.float32)


def ref_bottleneck(x_nchw, params, stride=1):
    # bf16-round the input once (kernel DMAs activations as bf16).
    x = jnp.transpose(x_nchw, (0, 2, 3, 1)).astype(jnp.bfloat16).astype(jnp.float32)
    Cin = x.shape[-1]
    planes = params["w1"].shape[1]
    Cexp = params["w3"].shape[1]

    o = _ref_conv(x, params["w1"].reshape(1, 1, Cin, planes), 1, [(0, 0), (0, 0)])
    o = jax.nn.relu(_ref_in_norm(o, params["g1"], params["b1"]))
    o = _ref_conv(o, params["w2"], stride, [(1, 1), (1, 1)])
    o = jax.nn.relu(_ref_in_norm(o, params["g2"], params["b2"]))
    o = _ref_conv(o, params["w3"].reshape(1, 1, planes, Cexp), 1, [(0, 0), (0, 0)])
    o = _ref_in_norm(o, params["g3"], params["b3"])
    if "ws" in params:
        s = _ref_conv(x, params["ws"].reshape(1, 1, Cin, Cexp), stride, [(0, 0), (0, 0)])
        s = _ref_in_norm(s, params["gs"], params["bs"])
    else:
        s = x
    out = jax.nn.relu(o + s)
    return jnp.transpose(out, (0, 3, 1, 2))


# ------------------------------------------------------------------ main
def _make_params(key, in_planes, planes, stride, expansion=4):
    Cexp = expansion * planes
    k1, k2, k3, ks = jax.random.split(key, 4)
    params = {
        "w1": jax.random.normal(k1, (in_planes, planes), jnp.float32) * 0.2,
        "g1": jnp.ones((1, planes), jnp.float32),
        "b1": jnp.zeros((1, planes), jnp.float32),
        "w2": jax.random.normal(k2, (3, 3, planes, planes), jnp.float32) * 0.2,  # HWIO
        "g2": jnp.ones((1, planes), jnp.float32),
        "b2": jnp.zeros((1, planes), jnp.float32),
        "w3": jax.random.normal(k3, (planes, Cexp), jnp.float32) * 0.2,
        "g3": jnp.ones((1, Cexp), jnp.float32),
        "b3": jnp.zeros((1, Cexp), jnp.float32),
    }
    if stride != 1 or in_planes != Cexp:  # projection shortcut needed
        params["ws"] = jax.random.normal(ks, (in_planes, Cexp), jnp.float32) * 0.2
        params["gs"] = jnp.ones((1, Cexp), jnp.float32)
        params["bs"] = jnp.zeros((1, Cexp), jnp.float32)
    return params


if __name__ == "__main__":
    N, H, W = 2, 16, 16
    planes, stride = 4, 1
    key = jax.random.PRNGKey(0)
    kp1, kx1, kp2, kx2 = jax.random.split(key, 4)

    # Case 1: projection shortcut (in_planes != 4*planes).
    in_planes = 4
    params1 = _make_params(kp1, in_planes, planes, stride)
    x1 = jax.random.normal(kx1, (N, in_planes, H, W), jnp.float32)  # NCHW
    out1 = jax.block_until_ready(bottleneck_forward(x1, params1, stride=stride))
    ref1 = jax.block_until_ready(ref_bottleneck(x1, params1, stride=stride))
    np.testing.assert_allclose(np.asarray(out1), np.asarray(ref1), rtol=2e-2, atol=2e-2)

    # Case 2: identity shortcut (in_planes == 4*planes, stride == 1).
    in_planes_id = 4 * planes
    params2 = _make_params(kp2, in_planes_id, planes, 1)
    assert "ws" not in params2
    x2 = jax.random.normal(kx2, (N, in_planes_id, H, W), jnp.float32)  # NCHW
    out2 = jax.block_until_ready(bottleneck_forward(x2, params2, stride=1))
    ref2 = jax.block_until_ready(ref_bottleneck(x2, params2, stride=1))
    np.testing.assert_allclose(np.asarray(out2), np.asarray(ref2), rtol=2e-2, atol=2e-2)

    print("KERNEL_OK")
</pallas_src>

<mosaic_0001>
module attributes {stable_mosaic.version = 11 : i64} {
  func.func @_bottleneck_kernel(%arg0: i32, %arg1: memref<1x16x16x4xbf16, #tpu.memory_space<vmem>>, %arg2: memref<4x4xbf16, #tpu.memory_space<vmem>>, %arg3: memref<1x4xf32, #tpu.memory_space<vmem>>, %arg4: memref<1x4xf32, #tpu.memory_space<vmem>>, %arg5: memref<9x4x4xbf16, #tpu.memory_space<vmem>>, %arg6: memref<1x4xf32, #tpu.memory_space<vmem>>, %arg7: memref<1x4xf32, #tpu.memory_space<vmem>>, %arg8: memref<4x16xbf16, #tpu.memory_space<vmem>>, %arg9: memref<1x16xf32, #tpu.memory_space<vmem>>, %arg10: memref<1x16xf32, #tpu.memory_space<vmem>>, %arg11: memref<4x16xbf16, #tpu.memory_space<vmem>>, %arg12: memref<1x16xf32, #tpu.memory_space<vmem>>, %arg13: memref<1x16xf32, #tpu.memory_space<vmem>>, %arg14: memref<1x256x16xf32, #tpu.memory_space<vmem>>, %arg15: memref<18x18x4xbf16, #tpu.memory_space<vmem>>) attributes {dimension_semantics = [#tpu.dimension_semantics<parallel>], iteration_bounds = array<i64: 2>, scalar_prefetch = 0 : i64, scratch_operands = 1 : i64, tpu.core_type = #tpu.core_type<tc>, window_params = [{transform_indices = @transform_0, window_bounds = array<i64: 1, 16, 16, 4>}, {pipeline_mode = #tpu.pipeline_mode<synchronous>, transform_indices = @transform_1, window_bounds = array<i64: 4, 4>}, {pipeline_mode = #tpu.pipeline_mode<synchronous>, transform_indices = @transform_2, window_bounds = array<i64: 1, 4>}, {pipeline_mode = #tpu.pipeline_mode<synchronous>, transform_indices = @transform_3, window_bounds = array<i64: 1, 4>}, {pipeline_mode = #tpu.pipeline_mode<synchronous>, transform_indices = @transform_4, window_bounds = array<i64: 9, 4, 4>}, {pipeline_mode = #tpu.pipeline_mode<synchronous>, transform_indices = @transform_5, window_bounds = array<i64: 1, 4>}, {pipeline_mode = #tpu.pipeline_mode<synchronous>, transform_indices = @transform_6, window_bounds = array<i64: 1, 4>}, {pipeline_mode = #tpu.pipeline_mode<synchronous>, transform_indices = @transform_7, window_bounds = array<i64: 4, 16>}, {pipeline_mode = #tpu.pipeline_mode<synchronous>, transform_indices = @transform_8, window_bounds = array<i64: 1, 16>}, {pipeline_mode = #tpu.pipeline_mode<synchronous>, transform_indices = @transform_9, window_bounds = array<i64: 1, 16>}, {pipeline_mode = #tpu.pipeline_mode<synchronous>, transform_indices = @transform_10, window_bounds = array<i64: 4, 16>}, {pipeline_mode = #tpu.pipeline_mode<synchronous>, transform_indices = @transform_11, window_bounds = array<i64: 1, 16>}, {pipeline_mode = #tpu.pipeline_mode<synchronous>, transform_indices = @transform_12, window_bounds = array<i64: 1, 16>}, {transform_indices = @transform_13, window_bounds = array<i64: 1, 256, 16>}]} {
    %c0 = arith.constant 0 : index
    %c0_0 = arith.constant 0 : index
    %c0_1 = arith.constant 0 : index
    %c0_2 = arith.constant 0 : index
    %0 = vector.load %arg1[%c0, %c0_0, %c0_1, %c0_2] : memref<1x16x16x4xbf16, #tpu.memory_space<vmem>>, vector<1x16x16x4xbf16>
    %1 = vector.shape_cast %0 : vector<1x16x16x4xbf16> to vector<16x16x4xbf16>
    %2 = vector.shape_cast %1 : vector<16x16x4xbf16> to vector<256x4xbf16>
    %c0_3 = arith.constant 0 : index
    %c0_4 = arith.constant 0 : index
    %3 = vector.load %arg2[%c0_3, %c0_4] : memref<4x4xbf16, #tpu.memory_space<vmem>>, vector<4x4xbf16>
    %cst = arith.constant dense<0.000000e+00> : vector<256x4xf32>
    %4 = tpu.matmul %2, %3, %cst {dimension_numbers = #tpu.dot_dimension_numbers<[1], [0], [0], [1], [0, 0, 1, 1], [], []>} : vector<256x4xbf16>, vector<4x4xbf16>, vector<256x4xf32> -> vector<256x4xf32>
    %c0_5 = arith.constant 0 : index
    %c0_6 = arith.constant 0 : index
    %5 = vector.load %arg3[%c0_5, %c0_6] : memref<1x4xf32, #tpu.memory_space<vmem>>, vector<1x4xf32>
    %c0_7 = arith.constant 0 : index
    %c0_8 = arith.constant 0 : index
    %6 = vector.load %arg4[%c0_7, %c0_8] : memref<1x4xf32, #tpu.memory_space<vmem>>, vector<1x4xf32>
    %cst_9 = arith.constant dense<0.000000e+00> : vector<4xf32>
    %7 = vector.multi_reduction <add>, %4, %cst_9 [0] : vector<256x4xf32> to vector<4xf32>
    %8 = vector.shape_cast %7 : vector<4xf32> to vector<1x4xf32>
    %9 = arith.mulf %4, %4 : vector<256x4xf32>
    %cst_10 = arith.constant dense<0.000000e+00> : vector<4xf32>
    %10 = vector.multi_reduction <add>, %9, %cst_10 [0] : vector<256x4xf32> to vector<4xf32>
    %11 = vector.shape_cast %10 : vector<4xf32> to vector<1x4xf32>
    %cst_11 = arith.constant 3.906250e-03 : f32
    %12 = vector.broadcast %cst_11 : f32 to vector<1x4xf32>
    %13 = arith.mulf %8, %12 : vector<1x4xf32>
    %cst_12 = arith.constant 3.906250e-03 : f32
    %14 = vector.broadcast %cst_12 : f32 to vector<1x4xf32>
    %15 = arith.mulf %11, %14 : vector<1x4xf32>
    %16 = arith.mulf %13, %13 : vector<1x4xf32>
    %17 = arith.subf %15, %16 : vector<1x4xf32>
    %cst_13 = arith.constant 0.000000e+00 : f32
    %18 = vector.broadcast %cst_13 : f32 to vector<1x4xf32>
    %19 = arith.maximumf %17, %18 : vector<1x4xf32>
    %cst_14 = arith.constant 9.99999974E-6 : f32
    %20 = vector.broadcast %cst_14 : f32 to vector<1x4xf32>
    %21 = arith.addf %19, %20 : vector<1x4xf32>
    %22 = math.rsqrt %21 : vector<1x4xf32>
    %23 = arith.mulf %22, %5 : vector<1x4xf32>
    %24 = vector.broadcast %23 : vector<1x4xf32> to vector<256x4xf32>
    %25 = arith.mulf %4, %24 : vector<256x4xf32>
    %26 = arith.mulf %13, %23 : vector<1x4xf32>
    %27 = arith.subf %6, %26 : vector<1x4xf32>
    %28 = vector.broadcast %27 : vector<1x4xf32> to vector<256x4xf32>
    %29 = arith.addf %25, %28 : vector<256x4xf32>
    %cst_15 = arith.constant 0.000000e+00 : f32
    %30 = vector.broadcast %cst_15 : f32 to vector<256x4xf32>
    %31 = arith.maximumf %29, %30 : vector<256x4xf32>
    %cst_16 = arith.constant 0.000000e+00 : bf16
    %32 = vector.broadcast %cst_16 : bf16 to vector<1x18x4xbf16>
    %c0_17 = arith.constant 0 : index
    %c0_18 = arith.constant 0 : index
    %c0_19 = arith.constant 0 : index
    %33 = vector.load %arg15[%c0_17, %c0_18, %c0_19] : memref<18x18x4xbf16, #tpu.memory_space<vmem>>, vector<1x18x4xbf16>
    tpu.vector_store %arg15[%c0_17, %c0_18, %c0_19], %32 {strides = array<i32>} : memref<18x18x4xbf16, #tpu.memory_space<vmem>>, vector<1x18x4xbf16>,
    %c17 = arith.constant 17 : index
    %c0_20 = arith.constant 0 : index
    %c0_21 = arith.constant 0 : index
    %34 = vector.load %arg15[%c17, %c0_20, %c0_21] : memref<18x18x4xbf16, #tpu.memory_space<vmem>>, vector<1x18x4xbf16>
    tpu.vector_store %arg15[%c17, %c0_20, %c0_21], %32 {strides = array<i32>} : memref<18x18x4xbf16, #tpu.memory_space<vmem>>, vector<1x18x4xbf16>,
    %cst_22 = arith.constant 0.000000e+00 : bf16
    %35 = vector.broadcast %cst_22 : bf16 to vector<16x1x4xbf16>
    %c1 = arith.constant 1 : index
    %c0_23 = arith.constant 0 : index
    %c0_24 = arith.constant 0 : index
    %36 = vector.load %arg15[%c1, %c0_23, %c0_24] : memref<18x18x4xbf16, #tpu.memory_space<vmem>>, vector<16x1x4xbf16>
    tpu.vector_store %arg15[%c1, %c0_23, %c0_24], %35 {strides = array<i32>} : memref<18x18x4xbf16, #tpu.memory_space<vmem>>, vector<16x1x4xbf16>,
    %c1_25 = arith.constant 1 : index
    %c17_26 = arith.constant 17 : index
    %c0_27 = arith.constant 0 : index
    %37 = vector.load %arg15[%c1_25, %c17_26, %c0_27] : memref<18x18x4xbf16, #tpu.memory_space<vmem>>, vector<16x1x4xbf16>
    tpu.vector_store %arg15[%c1_25, %c17_26, %c0_27], %35 {strides = array<i32>} : memref<18x18x4xbf16, #tpu.memory_space<vmem>>, vector<16x1x4xbf16>,
    %38 = arith.truncf %31 : vector<256x4xf32> to vector<256x4xbf16>
    %39 = vector.shape_cast %38 : vector<256x4xbf16> to vector<16x16x4xbf16>
    %c1_28 = arith.constant 1 : index
    %c1_29 = arith.constant 1 : index
    %c0_30 = arith.constant 0 : index
    %40 = vector.load %arg15[%c1_28, %c1_29, %c0_30] : memref<18x18x4xbf16, #tpu.memory_space<vmem>>, vector<16x16x4xbf16>
    tpu.vector_store %arg15[%c1_28, %c1_29, %c0_30], %39 {strides = array<i32>} : memref<18x18x4xbf16, #tpu.memory_space<vmem>>, vector<16x16x4xbf16>,
    %c0_31 = arith.constant 0 : index
    %c0_32 = arith.constant 0 : index
    %c0_33 = arith.constant 0 : index
    %41 = vector.load %arg15[%c0_31, %c0_32, %c0_33] : memref<18x18x4xbf16, #tpu.memory_space<vmem>>, vector<16x16x4xbf16>
    %42 = vector.shape_cast %41 : vector<16x16x4xbf16> to vector<256x4xbf16>
    %c0_34 = arith.constant 0 : index
    %c0_35 = arith.constant 0 : index
    %c0_36 = arith.constant 0 : index
    %43 = vector.load %arg5[%c0_34, %c0_35, %c0_36] : memref<9x4x4xbf16, #tpu.memory_space<vmem>>, vector<1x4x4xbf16>
    %44 = vector.shape_cast %43 : vector<1x4x4xbf16> to vector<4x4xbf16>
    %cst_37 = arith.constant dense<0.000000e+00> : vector<256x4xf32>
    %45 = tpu.matmul %42, %44, %cst_37 {dimension_numbers = #tpu.dot_dimension_numbers<[1], [0], [0], [1], [0, 0, 1, 1], [], []>} : vector<256x4xbf16>, vector<4x4xbf16>, vector<256x4xf32> -> vector<256x4xf32>
    %c0_38 = arith.constant 0 : index
    %c1_39 = arith.constant 1 : index
    %c0_40 = arith.constant 0 : index
    %46 = vector.load %arg15[%c0_38, %c1_39, %c0_40] : memref<18x18x4xbf16, #tpu.memory_space<vmem>>, vector<16x16x4xbf16>
    %47 = vector.shape_cast %46 : vector<16x16x4xbf16> to vector<256x4xbf16>
    %c1_41 = arith.constant 1 : index
    %c0_42 = arith.constant 0 : index
    %c0_43 = arith.constant 0 : index
    %48 = vector.load %arg5[%c1_41, %c0_42, %c0_43] : memref<9x4x4xbf16, #tpu.memory_space<vmem>>, vector<1x4x4xbf16>
    %49 = vector.shape_cast %48 : vector<1x4x4xbf16> to vector<4x4xbf16>
    %cst_44 = arith.constant dense<0.000000e+00> : vector<256x4xf32>
    %50 = tpu.matmul %47, %49, %cst_44 {dimension_numbers = #tpu.dot_dimension_numbers<[1], [0], [0], [1], [0, 0, 1, 1], [], []>} : vector<256x4xbf16>, vector<4x4xbf16>, vector<256x4xf32> -> vector<256x4xf32>
    %51 = arith.addf %45, %50 : vector<256x4xf32>
    %c0_45 = arith.constant 0 : index
    %c2 = arith.constant 2 : index
    %c0_46 = arith.constant 0 : index
    %52 = vector.load %arg15[%c0_45, %c2, %c0_46] : memref<18x18x4xbf16, #tpu.memory_space<vmem>>, vector<16x16x4xbf16>
    %53 = vector.shape_cast %52 : vector<16x16x4xbf16> to vector<256x4xbf16>
    %c2_47 = arith.constant 2 : index
    %c0_48 = arith.constant 0 : index
    %c0_49 = arith.constant 0 : index
    %54 = vector.load %arg5[%c2_47, %c0_48, %c0_49] : memref<9x4x4xbf16, #tpu.memory_space<vmem>>, vector<1x4x4xbf16>
    %55 = vector.shape_cast %54 : vector<1x4x4xbf16> to vector<4x4xbf16>
    %cst_50 = arith.constant dense<0.000000e+00> : vector<256x4xf32>
    %56 = tpu.matmul %53, %55, %cst_50 {dimension_numbers = #tpu.dot_dimension_numbers<[1], [0], [0], [1], [0, 0, 1, 1], [], []>} : vector<256x4xbf16>, vector<4x4xbf16>, vector<256x4xf32> -> vector<256x4xf32>
    %57 = arith.addf %51, %56 : vector<256x4xf32>
    %c1_51 = arith.constant 1 : index
    %c0_52 = arith.constant 0 : index
    %c0_53 = arith.constant 0 : index
    %58 = vector.load %arg15[%c1_51, %c0_52, %c0_53] : memref<18x18x4xbf16, #tpu.memory_space<vmem>>, vector<16x16x4xbf16>
    %59 = vector.shape_cast %58 : vector<16x16x4xbf16> to vector<256x4xbf16>
    %c3 = arith.constant 3 : index
    %c0_54 = arith.constant 0 : index
    %c0_55 = arith.constant 0 : index
    %60 = vector.load %arg5[%c3, %c0_54, %c0_55] : memref<9x4x4xbf16, #tpu.memory_space<vmem>>, vector<1x4x4xbf16>
    %61 = vector.shape_cast %60 : vector<1x4x4xbf16> to vector<4x4xbf16>
    %cst_56 = arith.constant dense<0.000000e+00> : vector<256x4xf32>
    %62 = tpu.matmul %59, %61, %cst_56 {dimension_numbers = #tpu.dot_dimension_numbers<[1], [0], [0], [1], [0, 0, 1, 1], [], []>} : vector<256x4xbf16>, vector<4x4xbf16>, vector<256x4xf32> -> vector<256x4xf32>
    %63 = arith.addf %57, %62 : vector<256x4xf32>
    %c1_57 = arith.constant 1 : index
    %c1_58 = arith.constant 1 : index
    %c0_59 = arith.constant 0 : index
    %64 = vector.load %arg15[%c1_57, %c1_58, %c0_59] : memref<18x18x4xbf16, #tpu.memory_space<vmem>>, vector<16x16x4xbf16>
    %65 = vector.shape_cast %64 : vector<16x16x4xbf16> to vector<256x4xbf16>
    %c4 = arith.constant 4 : index
    %c0_60 = arith.constant 0 : index
    %c0_61 = arith.constant 0 : index
    %66 = vector.load %arg5[%c4, %c0_60, %c0_61] : memref<9x4x4xbf16, #tpu.memory_space<vmem>>, vector<1x4x4xbf16>
    %67 = vector.shape_cast %66 : vector<1x4x4xbf16> to vector<4x4xbf16>
    %cst_62 = arith.constant dense<0.000000e+00> : vector<256x4xf32>
    %68 = tpu.matmul %65, %67, %cst_62 {dimension_numbers = #tpu.dot_dimension_numbers<[1], [0], [0], [1], [0, 0, 1, 1], [], []>} : vector<256x4xbf16>, vector<4x4xbf16>, vector<256x4xf32> -> vector<256x4xf32>
    %69 = arith.addf %63, %68 : vector<256x4xf32>
    %c1_63 = arith.constant 1 : index
    %c2_64 = arith.constant 2 : index
    %c0_65 = arith.constant 0 : index
    %70 = vector.load %arg15[%c1_63, %c2_64, %c0_65] : memref<18x18x4xbf16, #tpu.memory_space<vmem>>, vector<16x16x4xbf16>
    %71 = vector.shape_cast %70 : vector<16x16x4xbf16> to vector<256x4xbf16>
    %c5 = arith.constant 5 : index
    %c0_66 = arith.constant 0 : index
    %c0_67 = arith.constant 0 : index
    %72 = vector.load %arg5[%c5, %c0_66, %c0_67] : memref<9x4x4xbf16, #tpu.memory_space<vmem>>, vector<1x4x4xbf16>
    %73 = vector.shape_cast %72 : vector<1x4x4xbf16> to vector<4x4xbf16>
    %cst_68 = arith.constant dense<0.000000e+00> : vector<256x4xf32>
    %74 = tpu.matmul %71, %73, %cst_68 {dimension_numbers = #tpu.dot_dimension_numbers<[1], [0], [0], [1], [0, 0, 1, 1], [], []>} : vector<256x4xbf16>, vector<4x4xbf16>, vector<256x4xf32> -> vector<256x4xf32>
    %75 = arith.addf %69, %74 : vector<256x4xf32>
    %c2_69 = arith.constant 2 : index
    %c0_70 = arith.constant 0 : index
    %c0_71 = arith.constant 0 : index
    %76 = vector.load %arg15[%c2_69, %c0_70, %c0_71] : memref<18x18x4xbf16, #tpu.memory_space<vmem>>, vector<16x16x4xbf16>
    %77 = vector.shape_cast %76 : vector<16x16x4xbf16> to vector<256x4xbf16>
    %c6 = arith.constant 6 : index
    %c0_72 = arith.constant 0 : index
    %c0_73 = arith.constant 0 : index
    %78 = vector.load %arg5[%c6, %c0_72, %c0_73] : memref<9x4x4xbf16, #tpu.memory_space<vmem>>, vector<1x4x4xbf16>
    %79 = vector.shape_cast %78 : vector<1x4x4xbf16> to vector<4x4xbf16>
    %cst_74 = arith.constant dense<0.000000e+00> : vector<256x4xf32>
    %80 = tpu.matmul %77, %79, %cst_74 {dimension_numbers = #tpu.dot_dimension_numbers<[1], [0], [0], [1], [0, 0, 1, 1], [], []>} : vector<256x4xbf16>, vector<4x4xbf16>, vector<256x4xf32> -> vector<256x4xf32>
    %81 = arith.addf %75, %80 : vector<256x4xf32>
    %c2_75 = arith.constant 2 : index
    %c1_76 = arith.constant 1 : index
    %c0_77 = arith.constant 0 : index
    %82 = vector.load %arg15[%c2_75, %c1_76, %c0_77] : memref<18x18x4xbf16, #tpu.memory_space<vmem>>, vector<16x16x4xbf16>
    %83 = vector.shape_cast %82 : vector<16x16x4xbf16> to vector<256x4xbf16>
    %c7 = arith.constant 7 : index
    %c0_78 = arith.constant 0 : index
    %c0_79 = arith.constant 0 : index
    %84 = vector.load %arg5[%c7, %c0_78, %c0_79] : memref<9x4x4xbf16, #tpu.memory_space<vmem>>, vector<1x4x4xbf16>
    %85 = vector.shape_cast %84 : vector<1x4x4xbf16> to vector<4x4xbf16>
    %cst_80 = arith.constant dense<0.000000e+00> : vector<256x4xf32>
    %86 = tpu.matmul %83, %85, %cst_80 {dimension_numbers = #tpu.dot_dimension_numbers<[1], [0], [0], [1], [0, 0, 1, 1], [], []>} : vector<256x4xbf16>, vector<4x4xbf16>, vector<256x4xf32> -> vector<256x4xf32>
    %87 = arith.addf %81, %86 : vector<256x4xf32>
    %c2_81 = arith.constant 2 : index
    %c2_82 = arith.constant 2 : index
    %c0_83 = arith.constant 0 : index
    %88 = vector.load %arg15[%c2_81, %c2_82, %c0_83] : memref<18x18x4xbf16, #tpu.memory_space<vmem>>, vector<16x16x4xbf16>
    %89 = vector.shape_cast %88 : vector<16x16x4xbf16> to vector<256x4xbf16>
    %c8 = arith.constant 8 : index
    %c0_84 = arith.constant 0 : index
    %c0_85 = arith.constant 0 : index
    %90 = vector.load %arg5[%c8, %c0_84, %c0_85] : memref<9x4x4xbf16, #tpu.memory_space<vmem>>, vector<1x4x4xbf16>
    %91 = vector.shape_cast %90 : vector<1x4x4xbf16> to vector<4x4xbf16>
    %cst_86 = arith.constant dense<0.000000e+00> : vector<256x4xf32>
    %92 = tpu.matmul %89, %91, %cst_86 {dimension_numbers = #tpu.dot_dimension_numbers<[1], [0], [0], [1], [0, 0, 1, 1], [], []>} : vector<256x4xbf16>, vector<4x4xbf16>, vector<256x4xf32> -> vector<256x4xf32>
    %93 = arith.addf %87, %92 : vector<256x4xf32>
    %c0_87 = arith.constant 0 : index
    %c0_88 = arith.constant 0 : index
    %94 = vector.load %arg6[%c0_87, %c0_88] : memref<1x4xf32, #tpu.memory_space<vmem>>, vector<1x4xf32>
    %c0_89 = arith.constant 0 : index
    %c0_90 = arith.constant 0 : index
    %95 = vector.load %arg7[%c0_89, %c0_90] : memref<1x4xf32, #tpu.memory_space<vmem>>, vector<1x4xf32>
    %cst_91 = arith.constant dense<0.000000e+00> : vector<4xf32>
    %96 = vector.multi_reduction <add>, %93, %cst_91 [0] : vector<256x4xf32> to vector<4xf32>
    %97 = vector.shape_cast %96 : vector<4xf32> to vector<1x4xf32>
    %98 = arith.mulf %93, %93 : vector<256x4xf32>
    %cst_92 = arith.constant dense<0.000000e+00> : vector<4xf32>
    %99 = vector.multi_reduction <add>, %98, %cst_92 [0] : vector<256x4xf32> to vector<4xf32>
    %100 = vector.shape_cast %99 : vector<4xf32> to vector<1x4xf32>
    %cst_93 = arith.constant 3.906250e-03 : f32
    %101 = vector.broadcast %cst_93 : f32 to vector<1x4xf32>
    %102 = arith.mulf %97, %101 : vector<1x4xf32>
    %cst_94 = arith.constant 3.906250e-03 : f32
    %103 = vector.broadcast %cst_94 : f32 to vector<1x4xf32>
    %104 = arith.mulf %100, %103 : vector<1x4xf32>
    %105 = arith.mulf %102, %102 : vector<1x4xf32>
    %106 = arith.subf %104, %105 : vector<1x4xf32>
    %cst_95 = arith.constant 0.000000e+00 : f32
    %107 = vector.broadcast %cst_95 : f32 to vector<1x4xf32>
    %108 = arith.maximumf %106, %107 : vector<1x4xf32>
    %cst_96 = arith.constant 9.99999974E-6 : f32
    %109 = vector.broadcast %cst_96 : f32 to vector<1x4xf32>
    %110 = arith.addf %108, %109 : vector<1x4xf32>
    %111 = math.rsqrt %110 : vector<1x4xf32>
    %112 = arith.mulf %111, %94 : vector<1x4xf32>
    %113 = vector.broadcast %112 : vector<1x4xf32> to vector<256x4xf32>
    %114 = arith.mulf %93, %113 : vector<256x4xf32>
    %115 = arith.mulf %102, %112 : vector<1x4xf32>
    %116 = arith.subf %95, %115 : vector<1x4xf32>
    %117 = vector.broadcast %116 : vector<1x4xf32> to vector<256x4xf32>
    %118 = arith.addf %114, %117 : vector<256x4xf32>
    %cst_97 = arith.constant 0.000000e+00 : f32
    %119 = vector.broadcast %cst_97 : f32 to vector<256x4xf32>
    %120 = arith.maximumf %118, %119 : vector<256x4xf32>
    %121 = arith.truncf %120 : vector<256x4xf32> to vector<256x4xbf16>
    %c0_98 = arith.constant 0 : index
    %c0_99 = arith.constant 0 : index
    %122 = vector.load %arg8[%c0_98, %c0_99] : memref<4x16xbf16, #tpu.memory_space<vmem>>, vector<4x16xbf16>
    %cst_100 = arith.constant dense<0.000000e+00> : vector<256x16xf32>
    %123 = tpu.matmul %121, %122, %cst_100 {dimension_numbers = #tpu.dot_dimension_numbers<[1], [0], [0], [1], [0, 0, 1, 1], [], []>} : vector<256x4xbf16>, vector<4x16xbf16>, vector<256x16xf32> -> vector<256x16xf32>
    %c0_101 = arith.constant 0 : index
    %c0_102 = arith.constant 0 : index
    %124 = vector.load %arg9[%c0_101, %c0_102] : memref<1x16xf32, #tpu.memory_space<vmem>>, vector<1x16xf32>
    %c0_103 = arith.constant 0 : index
    %c0_104 = arith.constant 0 : index
    %125 = vector.load %arg10[%c0_103, %c0_104] : memref<1x16xf32, #tpu.memory_space<vmem>>, vector<1x16xf32>
    %cst_105 = arith.constant dense<0.000000e+00> : vector<16xf32>
    %126 = vector.multi_reduction <add>, %123, %cst_105 [0] : vector<256x16xf32> to vector<16xf32>
    %127 = vector.shape_cast %126 : vector<16xf32> to vector<1x16xf32>
    %128 = arith.mulf %123, %123 : vector<256x16xf32>
    %cst_106 = arith.constant dense<0.000000e+00> : vector<16xf32>
    %129 = vector.multi_reduction <add>, %128, %cst_106 [0] : vector<256x16xf32> to vector<16xf32>
    %130 = vector.shape_cast %129 : vector<16xf32> to vector<1x16xf32>
    %cst_107 = arith.constant 3.906250e-03 : f32
    %131 = vector.broadcast %cst_107 : f32 to vector<1x16xf32>
    %132 = arith.mulf %127, %131 : vector<1x16xf32>
    %cst_108 = arith.constant 3.906250e-03 : f32
    %133 = vector.broadcast %cst_108 : f32 to vector<1x16xf32>
    %134 = arith.mulf %130, %133 : vector<1x16xf32>
    %135 = arith.mulf %132, %132 : vector<1x16xf32>
    %136 = arith.subf %134, %135 : vector<1x16xf32>
    %cst_109 = arith.constant 0.000000e+00 : f32
    %137 = vector.broadcast %cst_109 : f32 to vector<1x16xf32>
    %138 = arith.maximumf %136, %137 : vector<1x16xf32>
    %cst_110 = arith.constant 9.99999974E-6 : f32
    %139 = vector.broadcast %cst_110 : f32 to vector<1x16xf32>
    %140 = arith.addf %138, %139 : vector<1x16xf32>
    %141 = math.rsqrt %140 : vector<1x16xf32>
    %142 = arith.mulf %141, %124 : vector<1x16xf32>
    %143 = vector.broadcast %142 : vector<1x16xf32> to vector<256x16xf32>
    %144 = arith.mulf %123, %143 : vector<256x16xf32>
    %145 = arith.mulf %132, %142 : vector<1x16xf32>
    %146 = arith.subf %125, %145 : vector<1x16xf32>
    %147 = vector.broadcast %146 : vector<1x16xf32> to vector<256x16xf32>
    %148 = arith.addf %144, %147 : vector<256x16xf32>
    %c0_111 = arith.constant 0 : index
    %c0_112 = arith.constant 0 : index
    %149 = vector.load %arg11[%c0_111, %c0_112] : memref<4x16xbf16, #tpu.memory_space<vmem>>, vector<4x16xbf16>
    %cst_113 = arith.constant dense<0.000000e+00> : vector<256x16xf32>
    %150 = tpu.matmul %2, %149, %cst_113 {dimension_numbers = #tpu.dot_dimension_numbers<[1], [0], [0], [1], [0, 0, 1, 1], [], []>} : vector<256x4xbf16>, vector<4x16xbf16>, vector<256x16xf32> -> vector<256x16xf32>
    %c0_114 = arith.constant 0 : index
    %c0_115 = arith.constant 0 : index
    %151 = vector.load %arg12[%c0_114, %c0_115] : memref<1x16xf32, #tpu.memory_space<vmem>>, vector<1x16xf32>
    %c0_116 = arith.constant 0 : index
    %c0_117 = arith.constant 0 : index
    %152 = vector.load %arg13[%c0_116, %c0_117] : memref<1x16xf32, #tpu.memory_space<vmem>>, vector<1x16xf32>
    %cst_118 = arith.constant dense<0.000000e+00> : vector<16xf32>
    %153 = vector.multi_reduction <add>, %150, %cst_118 [0] : vector<256x16xf32> to vector<16xf32>
    %154 = vector.shape_cast %153 : vector<16xf32> to vector<1x16xf32>
    %155 = arith.mulf %150, %150 : vector<256x16xf32>
    %cst_119 = arith.constant dense<0.000000e+00> : vector<16xf32>
    %156 = vector.multi_reduction <add>, %155, %cst_119 [0] : vector<256x16xf32> to vector<16xf32>
    %157 = vector.shape_cast %156 : vector<16xf32> to vector<1x16xf32>
    %cst_120 = arith.constant 3.906250e-03 : f32
    %158 = vector.broadcast %cst_120 : f32 to vector<1x16xf32>
    %159 = arith.mulf %154, %158 : vector<1x16xf32>
    %cst_121 = arith.constant 3.906250e-03 : f32
    %160 = vector.broadcast %cst_121 : f32 to vector<1x16xf32>
    %161 = arith.mulf %157, %160 : vector<1x16xf32>
    %162 = arith.mulf %159, %159 : vector<1x16xf32>
    %163 = arith.subf %161, %162 : vector<1x16xf32>
    %cst_122 = arith.constant 0.000000e+00 : f32
    %164 = vector.broadcast %cst_122 : f32 to vector<1x16xf32>
    %165 = arith.maximumf %163, %164 : vector<1x16xf32>
    %cst_123 = arith.constant 9.99999974E-6 : f32
    %166 = vector.broadcast %cst_123 : f32 to vector<1x16xf32>
    %167 = arith.addf %165, %166 : vector<1x16xf32>
    %168 = math.rsqrt %167 : vector<1x16xf32>
    %169 = arith.mulf %168, %151 : vector<1x16xf32>
    %170 = vector.broadcast %169 : vector<1x16xf32> to vector<256x16xf32>
    %171 = arith.mulf %150, %170 : vector<256x16xf32>
    %172 = arith.mulf %159, %169 : vector<1x16xf32>
    %173 = arith.subf %152, %172 : vector<1x16xf32>
    %174 = vector.broadcast %173 : vector<1x16xf32> to vector<256x16xf32>
    %175 = arith.addf %171, %174 : vector<256x16xf32>
    %176 = arith.addf %148, %175 : vector<256x16xf32>
    %cst_124 = arith.constant 0.000000e+00 : f32
    %177 = vector.broadcast %cst_124 : f32 to vector<256x16xf32>
    %178 = arith.maximumf %176, %177 : vector<256x16xf32>
    %c0_125 = arith.constant 0 : index
    %c0_126 = arith.constant 0 : index
    %c0_127 = arith.constant 0 : index
    %179 = vector.load %arg14[%c0_125, %c0_126, %c0_127] : memref<1x256x16xf32, #tpu.memory_space<vmem>>, vector<1x256x16xf32>
    %180 = vector.shape_cast %179 : vector<1x256x16xf32> to vector<256x16xf32>
    %181 = vector.shape_cast %178 : vector<256x16xf32> to vector<1x256x16xf32>
    tpu.vector_store %arg14[%c0_125, %c0_126, %c0_127], %181 {strides = array<i32>} : memref<1x256x16xf32, #tpu.memory_space<vmem>>, vector<1x256x16xf32>,
    return
  }
  func.func @transform_0(%arg0: i32) -> (i32, i32, i32, i32) {
    %c0_i32 = arith.constant 0 : i32
    %c0_i32_0 = arith.constant 0 : i32
    %c0_i32_1 = arith.constant 0 : i32
    %c0_i32_2 = arith.constant 0 : i32
    return %arg0, %c0_i32, %c0_i32_0, %c0_i32_1 : i32, i32, i32, i32
  }
  func.func @transform_1(%arg0: i32) -> (i32, i32) {
    %c0_i32 = arith.constant 0 : i32
    %c0_i32_0 = arith.constant 0 : i32
    %c0_i32_1 = arith.constant 0 : i32
    return %c0_i32, %c0_i32_0 : i32, i32
  }
  func.func @transform_2(%arg0: i32) -> (i32, i32) {
    %c0_i32 = arith.constant 0 : i32
    %c0_i32_0 = arith.constant 0 : i32
    %c0_i32_1 = arith.constant 0 : i32
    return %c0_i32, %c0_i32_0 : i32, i32
  }
  func.func @transform_3(%arg0: i32) -> (i32, i32) {
    %c0_i32 = arith.constant 0 : i32
    %c0_i32_0 = arith.constant 0 : i32
    %c0_i32_1 = arith.constant 0 : i32
    return %c0_i32, %c0_i32_0 : i32, i32
  }
  func.func @transform_4(%arg0: i32) -> (i32, i32, i32) {
    %c0_i32 = arith.constant 0 : i32
    %c0_i32_0 = arith.constant 0 : i32
    %c0_i32_1 = arith.constant 0 : i32
    %c0_i32_2 = arith.constant 0 : i32
    return %c0_i32, %c0_i32_0, %c0_i32_1 : i32, i32, i32
  }
  func.func @transform_5(%arg0: i32) -> (i32, i32) {
    %c0_i32 = arith.constant 0 : i32
    %c0_i32_0 = arith.constant 0 : i32
    %c0_i32_1 = arith.constant 0 : i32
    return %c0_i32, %c0_i32_0 : i32, i32
  }
  func.func @transform_6(%arg0: i32) -> (i32, i32) {
    %c0_i32 = arith.constant 0 : i32
    %c0_i32_0 = arith.constant 0 : i32
    %c0_i32_1 = arith.constant 0 : i32
    return %c0_i32, %c0_i32_0 : i32, i32
  }
  func.func @transform_7(%arg0: i32) -> (i32, i32) {
    %c0_i32 = arith.constant 0 : i32
    %c0_i32_0 = arith.constant 0 : i32
    %c0_i32_1 = arith.constant 0 : i32
    return %c0_i32, %c0_i32_0 : i32, i32
  }
  func.func @transform_8(%arg0: i32) -> (i32, i32) {
    %c0_i32 = arith.constant 0 : i32
    %c0_i32_0 = arith.constant 0 : i32
    %c0_i32_1 = arith.constant 0 : i32
    return %c0_i32, %c0_i32_0 : i32, i32
  }
  func.func @transform_9(%arg0: i32) -> (i32, i32) {
    %c0_i32 = arith.constant 0 : i32
    %c0_i32_0 = arith.constant 0 : i32
    %c0_i32_1 = arith.constant 0 : i32
    return %c0_i32, %c0_i32_0 : i32, i32
  }
  func.func @transform_10(%arg0: i32) -> (i32, i32) {
    %c0_i32 = arith.constant 0 : i32
    %c0_i32_0 = arith.constant 0 : i32
    %c0_i32_1 = arith.constant 0 : i32
    return %c0_i32, %c0_i32_0 : i32, i32
  }
  func.func @transform_11(%arg0: i32) -> (i32, i32) {
    %c0_i32 = arith.constant 0 : i32
    %c0_i32_0 = arith.constant 0 : i32
    %c0_i32_1 = arith.constant 0 : i32
    return %c0_i32, %c0_i32_0 : i32, i32
  }
  func.func @transform_12(%arg0: i32) -> (i32, i32) {
    %c0_i32 = arith.constant 0 : i32
    %c0_i32_0 = arith.constant 0 : i32
    %c0_i32_1 = arith.constant 0 : i32
    return %c0_i32, %c0_i32_0 : i32, i32
  }
  func.func @transform_13(%arg0: i32) -> (i32, i32, i32) {
    %c0_i32 = arith.constant 0 : i32
    %c0_i32_0 = arith.constant 0 : i32
    %c0_i32_1 = arith.constant 0 : i32
    return %arg0, %c0_i32, %c0_i32_0 : i32, i32, i32
  }
}

</mosaic_0001>

<llo_original>
// kernel: tpu_custom_call.1
$region0: #{tpu_custom_call.1}
  #allocation0 [shape = 'u32[]', space=smem, size = 0x4, offset = 0x4, fixed_abs, tag = 'smem constant byte address 0x4 - core index']
  #allocation1 [shape = 'u32[144,128]{1,0:T(1,128)}', space=vmem, size = 0x12000, scoped, tag = 'internal scratch']
  #allocation2 [shape = 'bf16[18,18,4]{2,1,0:T(8,128)(2,1)}', space=vmem, size = 0x1b000, scoped, tag = 'scratch operand']
  %s0 = inlined_call_operand.hbm [shape: bf16[2,16,16,4], index: 0, kind: input, shape index: {}]
  %s1 = inlined_call_operand.hbm [shape: bf16[4,4], index: 1, kind: input, shape index: {}]
  %s2 = inlined_call_operand.hbm [shape: f32[1,4], index: 2, kind: input, shape index: {}]
  %s3 = inlined_call_operand.hbm [shape: f32[1,4], index: 3, kind: input, shape index: {}]
  %s4 = inlined_call_operand.hbm [shape: bf16[9,4,4], index: 4, kind: input, shape index: {}]
  %s5 = inlined_call_operand.hbm [shape: f32[1,4], index: 5, kind: input, shape index: {}]
  %s6 = inlined_call_operand.hbm [shape: f32[1,4], index: 6, kind: input, shape index: {}]
  %s7 = inlined_call_operand.hbm [shape: bf16[4,16], index: 7, kind: input, shape index: {}]
  %s8 = inlined_call_operand.hbm [shape: f32[1,16], index: 8, kind: input, shape index: {}]
  %s9 = inlined_call_operand.hbm [shape: f32[1,16], index: 9, kind: input, shape index: {}]
  %s10 = inlined_call_operand.hbm [shape: bf16[4,16], index: 10, kind: input, shape index: {}]
  %s11 = inlined_call_operand.hbm [shape: f32[1,16], index: 11, kind: input, shape index: {}]
  %s12 = inlined_call_operand.hbm [shape: f32[1,16], index: 12, kind: input, shape index: {}]
  %s13 = inlined_call_operand.hbm [shape: f32[2,256,16], index: 13, kind: output, shape index: {}]
  %s14 = sld [smem:[#allocation0]]
  $region137: #{tpu_custom_call.1} parent=0
    _
  %s16 = ssub.s32 1, %s14
  %s17 = scalar_select 0, %s16, %s14
  $region1: #{tpu_custom_call.1} parent=0
    #allocation3 [shape = 'u8[131072]{0}', space=vmem, size = 0x20000, scoped, tag = 'input window, operand 0']
    #allocation4 [shape = 's32[2]{0}', space=sflag, size = 0x8, scoped, tag = 'scoped memory for tpu_custom_call.1']
    #allocation5 [shape = 's32[2]{0}', space=sflag, size = 0x8, scoped, tag = 'scoped memory for tpu_custom_call.1']
    #allocation6 [shape = 'u8[1024]{0}', space=vmem, size = 0x400, scoped, tag = 'input window, operand 1, single buffered']
    #allocation7 [shape = 's32[1]{0}', space=sflag, size = 0x4, scoped, tag = 'scoped memory for tpu_custom_call.1']
    #allocation8 [shape = 'u8[512]{0}', space=vmem, size = 0x400, scoped, tag = 'input window, operand 2, single buffered']
    #allocation9 [shape = 'u8[512]{0}', space=vmem, size = 0x400, scoped, tag = 'input window, operand 3, single buffered']
    #allocation10 [shape = 's32[1]{0}', space=sflag, size = 0x4, scoped, tag = 'scoped memory for tpu_custom_call.1']
    #allocation11 [shape = 'u8[9216]{0}', space=vmem, size = 0x2400, scoped, tag = 'input window, operand 4, single buffered']
    #allocation12 [shape = 'u8[512]{0}', space=vmem, size = 0x400, scoped, tag = 'input window, operand 5, single buffered']
    #allocation13 [shape = 's32[1]{0}', space=sflag, size = 0x4, scoped, tag = 'scoped memory for tpu_custom_call.1']
    #allocation14 [shape = 'u8[512]{0}', space=vmem, size = 0x400, scoped, tag = 'input window, operand 6, single buffered']
    #allocation15 [shape = 'u8[1024]{0}', space=vmem, size = 0x400, scoped, tag = 'input window, operand 7, single buffered']
    #allocation16 [shape = 's32[1]{0}', space=sflag, size = 0x4, scoped, tag = 'scoped memory for tpu_custom_call.1']
    #allocation17 [shape = 'u8[512]{0}', space=vmem, size = 0x400, scoped, tag = 'input window, operand 8, single buffered']
    #allocation18 [shape = 'u8[512]{0}', space=vmem, size = 0x400, scoped, tag = 'input window, operand 9, single buffered']
    #allocation19 [shape = 's32[1]{0}', space=sflag, size = 0x4, scoped, tag = 'scoped memory for tpu_custom_call.1']
    #allocation20 [shape = 'u8[1024]{0}', space=vmem, size = 0x400, scoped, tag = 'input window, operand 10, single buffered']
    #allocation21 [shape = 'u8[512]{0}', space=vmem, size = 0x400, scoped, tag = 'input window, operand 11, single buffered']
    #allocation22 [shape = 's32[1]{0}', space=sflag, size = 0x4, scoped, tag = 'scoped memory for tpu_custom_call.1']
    #allocation23 [shape = 'u8[512]{0}', space=vmem, size = 0x400, scoped, tag = 'input window, operand 12, single buffered']
    #allocation24 [shape = 'u8[262144]{0}', space=vmem, size = 0x40000, scoped, tag = 'output window, operand 0']
    %18 = vsyncpa [#allocation4], 0
    %s19 = scalar_lea.sflag [#allocation4], 1
    %20 = vsyncpa %s19, 0
    %21 = vsyncpa [#allocation7], 0
    %22 = vsyncpa [#allocation10], 0
    %23 = vsyncpa [#allocation13], 0
    %24 = vsyncpa [#allocation16], 0
    %25 = vsyncpa [#allocation19], 0
    %26 = vsyncpa [#allocation22], 0
    %27 = vsyncpa [#allocation5], 0
    %s28 = scalar_lea.sflag [#allocation5], 1
    %29 = vsyncpa %s28, 0
    loop: start=0, step=1, limit=4
    $region2: #{tpu_custom_call.1} parent=1 // loop_pre_header
      _
    $region3: #{tpu_custom_call.1} parent=1 // loop_header
      %s31 = sphi 0, %s35
      %p32 = scmp.ge.s32.totalorder %s31, 4
      %s41 = sphi 0, %s43
      %s44 = sphi 0, %s41
      %s45 = sphi 0, %s44
      %s61 = sphi 0, %s45
      %s65 = sphi 0, %s65
      %s67 = sphi 0, %s65
      %s68 = sphi 0, %s67
      %s82 = sphi 0, %s68
      %s86 = sphi 0, %s86
      %s88 = sphi 0, %s86
      %s89 = sphi 0, %s88
      %s103 = sphi 0, %s89
      %s107 = sphi 0, %s107
      %s109 = sphi 0, %s107
      %s110 = sphi 0, %s109
      %s124 = sphi 0, %s110
      %s128 = sphi 0, %s128
      %s130 = sphi 0, %s128
      %s131 = sphi 0, %s130
      %s145 = sphi 0, %s131
      %s149 = sphi 0, %s149
      %s151 = sphi 0, %s149
      %s152 = sphi 0, %s151
      %s166 = sphi 0, %s152
      %s170 = sphi 0, %s170
      %s172 = sphi 0, %s170
      %s173 = sphi 0, %s172
      %s187 = sphi 0, %s173
      %s191 = sphi 0, %s191
      %s193 = sphi 0, %s191
      %s194 = sphi 0, %s193
      %s208 = sphi 0, %s194
      %s212 = sphi 0, %s212
      %s214 = sphi 0, %s212
      %s215 = sphi 0, %s214
      %s229 = sphi 0, %s215
      %s233 = sphi 0, %s233
      %s235 = sphi 0, %s233
      %s236 = sphi 0, %s235
      %s250 = sphi 0, %s236
      %s254 = sphi 0, %s254
      %s256 = sphi 0, %s254
      %s257 = sphi 0, %s256
      %s271 = sphi 0, %s257
      %s275 = sphi 0, %s275
      %s277 = sphi 0, %s275
      %s278 = sphi 0, %s277
      %s292 = sphi 0, %s278
      %s296 = sphi 0, %s296
      %s298 = sphi 0, %s296
      %s299 = sphi 0, %s298
      %s313 = sphi 0, %s299
      %s319 = sphi 0, %s321
      %s322 = sphi 0, %s319
      %s323 = sphi 0, %s322
      %s339 = sphi 0, %s323
    $region4: #{tpu_custom_call.1} parent=1 // loop_header_branch
      %34 = sbr.rel (%p32) target = $region8
    $region5: #{tpu_custom_call.1} parent=1 // loop_body
      %s36 = ssub.s32 %s31, 1
      %s37 = ssub.s32 %s31, 2
      %s38 = sadd.s32 %s31, 1
      %s39 = ssub.s32 %s31, %s38
      %p40 = scmp.eq.s32.totalorder %s39, 0
      %s42 = sadd.s32 %s41, 1
      %s43 = scalar_select %p40, %s41, %s42
      %p46 = pneg %p40
      %p47 = scmp.eq.s32.totalorder %s31, 1
      %p48 = por %p46, %p47
      %p49 = scmp.ne.s32.totalorder %s41, %s44
      %p50 = scmp.eq.s32.totalorder %s31, 0
      %p51 = por %p49, %p50
      %p52 = scmp.ne.s32.totalorder %s41, %s44
      %p53 = scmp.eq.s32.totalorder %s36, 1
      %p54 = por %p52, %p53
      %p55 = scmp.ne.s32.totalorder %s44, %s45
      %p56 = scmp.eq.s32.totalorder %s36, 0
      %p57 = por %p55, %p56
      %p58 = scmp.ne.s32.totalorder %s44, %s45
      %p59 = scmp.eq.s32.totalorder %s37, 1
      %p60 = por %p58, %p59
      %p62 = scmp.ne.s32.totalorder %s45, %s61
      %p63 = scmp.eq.s32.totalorder %s37, 0
      %p64 = por %p62, %p63
      %s66 = sadd.s32 %s65, 1
      %p69 = scmp.eq.s32.totalorder %s31, 1
      %p70 = scmp.ne.s32.totalorder %s65, %s67
      %p71 = scmp.eq.s32.totalorder %s31, 0
      %p72 = por %p70, %p71
      %p73 = scmp.ne.s32.totalorder %s65, %s67
      %p74 = scmp.eq.s32.totalorder %s36, 1
      %p75 = por %p73, %p74
      %p76 = scmp.ne.s32.totalorder %s67, %s68
      %p77 = scmp.eq.s32.totalorder %s36, 0
      %p78 = por %p76, %p77
      %p79 = scmp.ne.s32.totalorder %s67, %s68
      %p80 = scmp.eq.s32.totalorder %s37, 1
      %p81 = por %p79, %p80
      %p83 = scmp.ne.s32.totalorder %s68, %s82
      %p84 = scmp.eq.s32.totalorder %s37, 0
      %p85 = por %p83, %p84
      %s87 = sadd.s32 %s86, 1
      %p90 = scmp.eq.s32.totalorder %s31, 1
      %p91 = scmp.ne.s32.totalorder %s86, %s88
      %p92 = scmp.eq.s32.totalorder %s31, 0
      %p93 = por %p91, %p92
      %p94 = scmp.ne.s32.totalorder %s86, %s88
      %p95 = scmp.eq.s32.totalorder %s36, 1
      %p96 = por %p94, %p95
      %p97 = scmp.ne.s32.totalorder %s88, %s89
      %p98 = scmp.eq.s32.totalorder %s36, 0
      %p99 = por %p97, %p98
      %p100 = scmp.ne.s32.totalorder %s88, %s89
      %p101 = scmp.eq.s32.totalorder %s37, 1
      %p102 = por %p100, %p101
      %p104 = scmp.ne.s32.totalorder %s89, %s103
      %p105 = scmp.eq.s32.totalorder %s37, 0
      %p106 = por %p104, %p105
      %s108 = sadd.s32 %s107, 1
      %p111 = scmp.eq.s32.totalorder %s31, 1
      %p112 = scmp.ne.s32.totalorder %s107, %s109
      %p113 = scmp.eq.s32.totalorder %s31, 0
      %p114 = por %p112, %p113
      %p115 = scmp.ne.s32.totalorder %s107, %s109
      %p116 = scmp.eq.s32.totalorder %s36, 1
      %p117 = por %p115, %p116
      %p118 = scmp.ne.s32.totalorder %s109, %s110
      %p119 = scmp.eq.s32.totalorder %s36, 0
      %p120 = por %p118, %p119
      %p121 = scmp.ne.s32.totalorder %s109, %s110
      %p122 = scmp.eq.s32.totalorder %s37, 1
      %p123 = por %p121, %p122
      %p125 = scmp.ne.s32.totalorder %s110, %s124
      %p126 = scmp.eq.s32.totalorder %s37, 0
      %p127 = por %p125, %p126
      %s129 = sadd.s32 %s128, 1
      %p132 = scmp.eq.s32.totalorder %s31, 1
      %p133 = scmp.ne.s32.totalorder %s128, %s130
      %p134 = scmp.eq.s32.totalorder %s31, 0
      %p135 = por %p133, %p134
      %p136 = scmp.ne.s32.totalorder %s128, %s130
      %p137 = scmp.eq.s32.totalorder %s36, 1
      %p138 = por %p136, %p137
      %p139 = scmp.ne.s32.totalorder %s130, %s131
      %p140 = scmp.eq.s32.totalorder %s36, 0
      %p141 = por %p139, %p140
      %p142 = scmp.ne.s32.totalorder %s130, %s131
      %p143 = scmp.eq.s32.totalorder %s37, 1
      %p144 = por %p142, %p143
      %p146 = scmp.ne.s32.totalorder %s131, %s145
      %p147 = scmp.eq.s32.totalorder %s37, 0
      %p148 = por %p146, %p147
      %s150 = sadd.s32 %s149, 1
      %p153 = scmp.eq.s32.totalorder %s31, 1
      %p154 = scmp.ne.s32.totalorder %s149, %s151
      %p155 = scmp.eq.s32.totalorder %s31, 0
      %p156 = por %p154, %p155
      %p157 = scmp.ne.s32.totalorder %s149, %s151
      %p158 = scmp.eq.s32.totalorder %s36, 1
      %p159 = por %p157, %p158
      %p160 = scmp.ne.s32.totalorder %s151, %s152
      %p161 = scmp.eq.s32.totalorder %s36, 0
      %p162 = por %p160, %p161
      %p163 = scmp.ne.s32.totalorder %s151, %s152
      %p164 = scmp.eq.s32.totalorder %s37, 1
      %p165 = por %p163, %p164
      %p167 = scmp.ne.s32.totalorder %s152, %s166
      %p168 = scmp.eq.s32.totalorder %s37, 0
      %p169 = por %p167, %p168
      %s171 = sadd.s32 %s170, 1
      %p174 = scmp.eq.s32.totalorder %s31, 1
      %p175 = scmp.ne.s32.totalorder %s170, %s172
      %p176 = scmp.eq.s32.totalorder %s31, 0
      %p177 = por %p175, %p176
      %p178 = scmp.ne.s32.totalorder %s170, %s172
      %p179 = scmp.eq.s32.totalorder %s36, 1
      %p180 = por %p178, %p179
      %p181 = scmp.ne.s32.totalorder %s172, %s173
      %p182 = scmp.eq.s32.totalorder %s36, 0
      %p183 = por %p181, %p182
      %p184 = scmp.ne.s32.totalorder %s172, %s173
      %p185 = scmp.eq.s32.totalorder %s37, 1
      %p186 = por %p184, %p185
      %p188 = scmp.ne.s32.totalorder %s173, %s187
      %p189 = scmp.eq.s32.totalorder %s37, 0
      %p190 = por %p188, %p189
      %s192 = sadd.s32 %s191, 1
      %p195 = scmp.eq.s32.totalorder %s31, 1
      %p196 = scmp.ne.s32.totalorder %s191, %s193
      %p197 = scmp.eq.s32.totalorder %s31, 0
      %p198 = por %p196, %p197
      %p199 = scmp.ne.s32.totalorder %s191, %s193
      %p200 = scmp.eq.s32.totalorder %s36, 1
      %p201 = por %p199, %p200
      %p202 = scmp.ne.s32.totalorder %s193, %s194
      %p203 = scmp.eq.s32.totalorder %s36, 0
      %p204 = por %p202, %p203
      %p205 = scmp.ne.s32.totalorder %s193, %s194
      %p206 = scmp.eq.s32.totalorder %s37, 1
      %p207 = por %p205, %p206
      %p209 = scmp.ne.s32.totalorder %s194, %s208
      %p210 = scmp.eq.s32.totalorder %s37, 0
      %p211 = por %p209, %p210
      %s213 = sadd.s32 %s212, 1
      %p216 = scmp.eq.s32.totalorder %s31, 1
      %p217 = scmp.ne.s32.totalorder %s212, %s214
      %p218 = scmp.eq.s32.totalorder %s31, 0
      %p219 = por %p217, %p218
      %p220 = scmp.ne.s32.totalorder %s212, %s214
      %p221 = scmp.eq.s32.totalorder %s36, 1
      %p222 = por %p220, %p221
      %p223 = scmp.ne.s32.totalorder %s214, %s215
      %p224 = scmp.eq.s32.totalorder %s36, 0
      %p225 = por %p223, %p224
      %p226 = scmp.ne.s32.totalorder %s214, %s215
      %p227 = scmp.eq.s32.totalorder %s37, 1
      %p228 = por %p226, %p227
      %p230 = scmp.ne.s32.totalorder %s215, %s229
      %p231 = scmp.eq.s32.totalorder %s37, 0
      %p232 = por %p230, %p231
      %s234 = sadd.s32 %s233, 1
      %p237 = scmp.eq.s32.totalorder %s31, 1
      %p238 = scmp.ne.s32.totalorder %s233, %s235
      %p239 = scmp.eq.s32.totalorder %s31, 0
      %p240 = por %p238, %p239
      %p241 = scmp.ne.s32.totalorder %s233, %s235
      %p242 = scmp.eq.s32.totalorder %s36, 1
      %p243 = por %p241, %p242
      %p244 = scmp.ne.s32.totalorder %s235, %s236
      %p245 = scmp.eq.s32.totalorder %s36, 0
      %p246 = por %p244, %p245
      %p247 = scmp.ne.s32.totalorder %s235, %s236
      %p248 = scmp.eq.s32.totalorder %s37, 1
      %p249 = por %p247, %p248
      %p251 = scmp.ne.s32.totalorder %s236, %s250
      %p252 = scmp.eq.s32.totalorder %s37, 0
      %p253 = por %p251, %p252
      %s255 = sadd.s32 %s254, 1
      %p258 = scmp.eq.s32.totalorder %s31, 1
      %p259 = scmp.ne.s32.totalorder %s254, %s256
      %p260 = scmp.eq.s32.totalorder %s31, 0
      %p261 = por %p259, %p260
      %p262 = scmp.ne.s32.totalorder %s254, %s256
      %p263 = scmp.eq.s32.totalorder %s36, 1
      %p264 = por %p262, %p263
      %p265 = scmp.ne.s32.totalorder %s256, %s257
      %p266 = scmp.eq.s32.totalorder %s36, 0
      %p267 = por %p265, %p266
      %p268 = scmp.ne.s32.totalorder %s256, %s257
      %p269 = scmp.eq.s32.totalorder %s37, 1
      %p270 = por %p268, %p269
      %p272 = scmp.ne.s32.totalorder %s257, %s271
      %p273 = scmp.eq.s32.totalorder %s37, 0
      %p274 = por %p272, %p273
      %s276 = sadd.s32 %s275, 1
      %p279 = scmp.eq.s32.totalorder %s31, 1
      %p280 = scmp.ne.s32.totalorder %s275, %s277
      %p281 = scmp.eq.s32.totalorder %s31, 0
      %p282 = por %p280, %p281
      %p283 = scmp.ne.s32.totalorder %s275, %s277
      %p284 = scmp.eq.s32.totalorder %s36, 1
      %p285 = por %p283, %p284
      %p286 = scmp.ne.s32.totalorder %s277, %s278
      %p287 = scmp.eq.s32.totalorder %s36, 0
      %p288 = por %p286, %p287
      %p289 = scmp.ne.s32.totalorder %s277, %s278
      %p290 = scmp.eq.s32.totalorder %s37, 1
      %p291 = por %p289, %p290
      %p293 = scmp.ne.s32.totalorder %s278, %s292
      %p294 = scmp.eq.s32.totalorder %s37, 0
      %p295 = por %p293, %p294
      %s297 = sadd.s32 %s296, 1
      %p300 = scmp.eq.s32.totalorder %s31, 1
      %p301 = scmp.ne.s32.totalorder %s296, %s298
      %p302 = scmp.eq.s32.totalorder %s31, 0
      %p303 = por %p301, %p302
      %p304 = scmp.ne.s32.totalorder %s296, %s298
      %p305 = scmp.eq.s32.totalorder %s36, 1
      %p306 = por %p304, %p305
      %p307 = scmp.ne.s32.totalorder %s298, %s299
      %p308 = scmp.eq.s32.totalorder %s36, 0
      %p309 = por %p307, %p308
      %p310 = scmp.ne.s32.totalorder %s298, %s299
      %p311 = scmp.eq.s32.totalorder %s37, 1
      %p312 = por %p310, %p311
      %p314 = scmp.ne.s32.totalorder %s299, %s313
      %p315 = scmp.eq.s32.totalorder %s37, 0
      %p316 = por %p314, %p315
      %s317 = ssub.s32 %s31, %s38
      %p318 = scmp.eq.s32.totalorder %s317, 0
      %s320 = sadd.s32 %s319, 1
      %s321 = scalar_select %p318, %s319, %s320
      %p324 = pneg %p318
      %p325 = scmp.eq.s32.totalorder %s31, 1
      %p326 = por %p324, %p325
      %p327 = scmp.ne.s32.totalorder %s319, %s322
      %p328 = scmp.eq.s32.totalorder %s31, 0
      %p329 = por %p327, %p328
      %p330 = scmp.ne.s32.totalorder %s319, %s322
      %p331 = scmp.eq.s32.totalorder %s36, 1
      %p332 = por %p330, %p331
      %p333 = scmp.ne.s32.totalorder %s322, %s323
      %p334 = scmp.eq.s32.totalorder %s36, 0
      %p335 = por %p333, %p334
      %p336 = scmp.ne.s32.totalorder %s322, %s323
      %p337 = scmp.eq.s32.totalorder %s37, 1
      %p338 = por %p336, %p337
      %p340 = scmp.ne.s32.totalorder %s323, %s339
      %p341 = scmp.eq.s32.totalorder %s37, 0
      %p342 = por %p340, %p341
      %p343 = scmp.le.s32.totalorder 1, %s31
      %p344 = scmp.lt.s32.totalorder %s31, 3
      %p345 = pnand %p343, %p344
      %p346 = pneg %p345
      // Predicated region
      $region9: #{tpu_custom_call.1} parent=5 // pred_check
        _
      $region10: #{tpu_custom_call.1} parent=5 // pred_check_branch
        %348 = sbr.rel (%p345) target = $region12
      $region11: #{tpu_custom_call.1} parent=5 // pred_region
        %s349 = ssub.s32 %s31, 1
        // Predicated region
        $region13: #{tpu_custom_call.1} parent=11 // pred_check
          %p350 = pneg %p78
        $region14: #{tpu_custom_call.1} parent=11 // pred_check_branch
          %352 = sbr.rel (%p350) target = $region16
        $region15: #{tpu_custom_call.1} parent=11 // pred_region
          %s354 = ssub.s32 32, 32
          %355 = vsyncadd [#allocation7], %s354
          %s357 = sshll.u32 [#allocation6], 4
          %s358 = int_to_ptr.vmem [resolvable:$true] %s357
          %360 = dma.hbm_to_vmem [thread:$0]  %s1, 32, %s358, [#allocation7]
        $region16: #{tpu_custom_call.1} parent=11 // pred_fallthru
          _
        // Predicated region
        $region17: #{tpu_custom_call.1} parent=11 // pred_check
          %p361 = pneg %p99
        $region18: #{tpu_custom_call.1} parent=11 // pred_check_branch
          %363 = sbr.rel (%p361) target = $region20
        $region19: #{tpu_custom_call.1} parent=11 // pred_region
          %s365 = ssub.s32 16, 16
          %366 = vsyncadd [#allocation7], %s365
          %s368 = sshll.u32 [#allocation8], 4
          %s369 = int_to_ptr.vmem [resolvable:$true] %s368
          %371 = dma.hbm_to_vmem [thread:$0]  %s2, 16, %s369, [#allocation7]
        $region20: #{tpu_custom_call.1} parent=11 // pred_fallthru
          _
        // Predicated region
        $region21: #{tpu_custom_call.1} parent=11 // pred_check
          %p372 = pneg %p120
        $region22: #{tpu_custom_call.1} parent=11 // pred_check_branch
          %374 = sbr.rel (%p372) target = $region24
        $region23: #{tpu_custom_call.1} parent=11 // pred_region
          %s376 = ssub.s32 16, 16
          %377 = vsyncadd [#allocation10], %s376
          %s379 = sshll.u32 [#allocation9], 4
          %s380 = int_to_ptr.vmem [resolvable:$true] %s379
          %382 = dma.hbm_to_vmem [thread:$0]  %s3, 16, %s380, [#allocation10]
        $region24: #{tpu_custom_call.1} parent=11 // pred_fallthru
          _
        // Predicated region
        $region25: #{tpu_custom_call.1} parent=11 // pred_check
          %p383 = pneg %p141
        $region26: #{tpu_custom_call.1} parent=11 // pred_check_branch
          %385 = sbr.rel (%p383) target = $region28
        $region27: #{tpu_custom_call.1} parent=11 // pred_region
          %s387 = ssub.s32 288, 288
          %388 = vsyncadd [#allocation10], %s387
          %s389 = sshll.u32 [#allocation11], 4
          %s390 = int_to_ptr.vmem [resolvable:$true] %s389
          %395 = dma.hbm_to_vmem [thread:$0]  %s4, 288, %s390, [#allocation10], 32, 32, 2
        $region28: #{tpu_custom_call.1} parent=11 // pred_fallthru
          _
        // Predicated region
        $region29: #{tpu_custom_call.1} parent=11 // pred_check
          %p396 = pneg %p162
        $region30: #{tpu_custom_call.1} parent=11 // pred_check_branch
          %398 = sbr.rel (%p396) target = $region32
        $region31: #{tpu_custom_call.1} parent=11 // pred_region
          %s400 = ssub.s32 16, 16
          %401 = vsyncadd [#allocation13], %s400
          %s403 = sshll.u32 [#allocation12], 4
          %s404 = int_to_ptr.vmem [resolvable:$true] %s403
          %406 = dma.hbm_to_vmem [thread:$0]  %s5, 16, %s404, [#allocation13]
        $region32: #{tpu_custom_call.1} parent=11 // pred_fallthru
          _
        // Predicated region
        $region33: #{tpu_custom_call.1} parent=11 // pred_check
          %p407 = pneg %p183
        $region34: #{tpu_custom_call.1} parent=11 // pred_check_branch
          %409 = sbr.rel (%p407) target = $region36
        $region35: #{tpu_custom_call.1} parent=11 // pred_region
          %s411 = ssub.s32 16, 16
          %412 = vsyncadd [#allocation13], %s411
          %s414 = sshll.u32 [#allocation14], 4
          %s415 = int_to_ptr.vmem [resolvable:$true] %s414
          %417 = dma.hbm_to_vmem [thread:$0]  %s6, 16, %s415, [#allocation13]
        $region36: #{tpu_custom_call.1} parent=11 // pred_fallthru
          _
        // Predicated region
        $region37: #{tpu_custom_call.1} parent=11 // pred_check
          %p418 = pneg %p204
        $region38: #{tpu_custom_call.1} parent=11 // pred_check_branch
          %420 = sbr.rel (%p418) target = $region40
        $region39: #{tpu_custom_call.1} parent=11 // pred_region
          %s422 = ssub.s32 32, 32
          %423 = vsyncadd [#allocation16], %s422
          %s425 = sshll.u32 [#allocation15], 4
          %s426 = int_to_ptr.vmem [resolvable:$true] %s425
          %428 = dma.hbm_to_vmem [thread:$0]  %s7, 32, %s426, [#allocation16]
        $region40: #{tpu_custom_call.1} parent=11 // pred_fallthru
          _
        // Predicated region
        $region41: #{tpu_custom_call.1} parent=11 // pred_check
          %p429 = pneg %p225
        $region42: #{tpu_custom_call.1} parent=11 // pred_check_branch
          %431 = sbr.rel (%p429) target = $region44
        $region43: #{tpu_custom_call.1} parent=11 // pred_region
          %s433 = ssub.s32 16, 16
          %434 = vsyncadd [#allocation16], %s433
          %s436 = sshll.u32 [#allocation17], 4
          %s437 = int_to_ptr.vmem [resolvable:$true] %s436
          %439 = dma.hbm_to_vmem [thread:$0]  %s8, 16, %s437, [#allocation16]
        $region44: #{tpu_custom_call.1} parent=11 // pred_fallthru
          _
        // Predicated region
        $region45: #{tpu_custom_call.1} parent=11 // pred_check
          %p440 = pneg %p246
        $region46: #{tpu_custom_call.1} parent=11 // pred_check_branch
          %442 = sbr.rel (%p440) target = $region48
        $region47: #{tpu_custom_call.1} parent=11 // pred_region
          %s444 = ssub.s32 16, 16
          %445 = vsyncadd [#allocation19], %s444
          %s447 = sshll.u32 [#allocation18], 4
          %s448 = int_to_ptr.vmem [resolvable:$true] %s447
          %450 = dma.hbm_to_vmem [thread:$0]  %s9, 16, %s448, [#allocation19]
        $region48: #{tpu_custom_call.1} parent=11 // pred_fallthru
          _
        // Predicated region
        $region49: #{tpu_custom_call.1} parent=11 // pred_check
          %p451 = pneg %p267
        $region50: #{tpu_custom_call.1} parent=11 // pred_check_branch
          %453 = sbr.rel (%p451) target = $region52
        $region51: #{tpu_custom_call.1} parent=11 // pred_region
          %s455 = ssub.s32 32, 32
          %456 = vsyncadd [#allocation19], %s455
          %s458 = sshll.u32 [#allocation20], 4
          %s459 = int_to_ptr.vmem [resolvable:$true] %s458
          %461 = dma.hbm_to_vmem [thread:$0]  %s10, 32, %s459, [#allocation19]
        $region52: #{tpu_custom_call.1} parent=11 // pred_fallthru
          _
        // Predicated region
        $region53: #{tpu_custom_call.1} parent=11 // pred_check
          %p462 = pneg %p288
        $region54: #{tpu_custom_call.1} parent=11 // pred_check_branch
          %464 = sbr.rel (%p462) target = $region56
        $region55: #{tpu_custom_call.1} parent=11 // pred_region
          %s466 = ssub.s32 16, 16
          %467 = vsyncadd [#allocation22], %s466
          %s469 = sshll.u32 [#allocation21], 4
          %s470 = int_to_ptr.vmem [resolvable:$true] %s469
          %472 = dma.hbm_to_vmem [thread:$0]  %s11, 16, %s470, [#allocation22]
        $region56: #{tpu_custom_call.1} parent=11 // pred_fallthru
          _
        // Predicated region
        $region57: #{tpu_custom_call.1} parent=11 // pred_check
          %p473 = pneg %p309
        $region58: #{tpu_custom_call.1} parent=11 // pred_check_branch
          %475 = sbr.rel (%p473) target = $region60
        $region59: #{tpu_custom_call.1} parent=11 // pred_region
          %s477 = ssub.s32 16, 16
          %478 = vsyncadd [#allocation22], %s477
          %s480 = sshll.u32 [#allocation23], 4
          %s481 = int_to_ptr.vmem [resolvable:$true] %s480
          %483 = dma.hbm_to_vmem [thread:$0]  %s12, 16, %s481, [#allocation22]
        $region60: #{tpu_custom_call.1} parent=11 // pred_fallthru
          _
      $region12: #{tpu_custom_call.1} parent=5 // pred_fallthru
        _
      %p484 = scmp.lt.s32.totalorder %s31, 2
      // Predicated region
      $region61: #{tpu_custom_call.1} parent=5 // pred_check
        %p485 = pneg %p484
      $region62: #{tpu_custom_call.1} parent=5 // pred_check_branch
        %487 = sbr.rel (%p485) target = $region64
      $region63: #{tpu_custom_call.1} parent=5 // pred_region
        // Predicated region
        $region65: #{tpu_custom_call.1} parent=63 // pred_check
          %p488 = pneg %p51
        $region66: #{tpu_custom_call.1} parent=63 // pred_check_branch
          %490 = sbr.rel (%p488) target = $region68
        $region67: #{tpu_custom_call.1} parent=63 // pred_region
          %s491 = sand.u32 %s41, 1
          %s492 = scalar_lea.sflag [#allocation4], %s491
          %s493 = sand.u32 %s41, 1
          %s494 = smul.addr %s493, 128
          %s495 = scalar_lea.vmem [#allocation3], %s494
          %s497 = ssub.s32 2048, 2048
          %498 = vsyncadd %s492, %s497
          %s499 = smul.addr %s31, 32
          %s500 = smul.addr %s499, 64
          %s501 = scalar_lea.hbm %s0, %s500
          %s502 = sshll.u32 %s495, 4
          %s503 = int_to_ptr.vmem [resolvable:$true] %s502
          %508 = dma.hbm_to_vmem [thread:$0]  %s501, 2048, %s503, %s492, 64, 64, 4
        $region68: #{tpu_custom_call.1} parent=63 // pred_fallthru
          _
      $region64: #{tpu_custom_call.1} parent=5 // pred_fallthru
        _
      %p509 = scmp.le.s32.totalorder 1, %s31
      %p510 = scmp.lt.s32.totalorder %s31, 3
      %p511 = pnand %p509, %p510
      %p512 = pneg %p511
      // Predicated region
      $region69: #{tpu_custom_call.1} parent=5 // pred_check
        _
      $region70: #{tpu_custom_call.1} parent=5 // pred_check_branch
        %514 = sbr.rel (%p511) target = $region72
      $region71: #{tpu_custom_call.1} parent=5 // pred_region
        %s515 = ssub.s32 %s31, 1
        %s516 = sand.u32 %s44, 1
        %s517 = scalar_lea.sflag [#allocation4], %s516
        %s518 = sand.u32 %s44, 1
        %s519 = smul.addr %s518, 128
        %s520 = scalar_lea.vmem [#allocation3], %s519
        // Predicated region
        $region73: #{tpu_custom_call.1} parent=71 // pred_check
          %p521 = pneg %p57
        $region74: #{tpu_custom_call.1} parent=71 // pred_check_branch
          %523 = sbr.rel (%p521) target = $region76
        $region75: #{tpu_custom_call.1} parent=71 // pred_region
          %524 = dma.done %s517, 2048
        $region76: #{tpu_custom_call.1} parent=71 // pred_fallthru
          _
        // Predicated region
        $region77: #{tpu_custom_call.1} parent=71 // pred_check
          %p525 = pneg %p78
        $region78: #{tpu_custom_call.1} parent=71 // pred_check_branch
          %527 = sbr.rel (%p525) target = $region80
        $region79: #{tpu_custom_call.1} parent=71 // pred_region
          %528 = dma.done [#allocation7], 32
        $region80: #{tpu_custom_call.1} parent=71 // pred_fallthru
          _
        // Predicated region
        $region81: #{tpu_custom_call.1} parent=71 // pred_check
          %p529 = pneg %p99
        $region82: #{tpu_custom_call.1} parent=71 // pred_check_branch
          %531 = sbr.rel (%p529) target = $region84
        $region83: #{tpu_custom_call.1} parent=71 // pred_region
          %532 = dma.done [#allocation7], 16
        $region84: #{tpu_custom_call.1} parent=71 // pred_fallthru
          _
        // Predicated region
        $region85: #{tpu_custom_call.1} parent=71 // pred_check
          %p533 = pneg %p120
        $region86: #{tpu_custom_call.1} parent=71 // pred_check_branch
          %535 = sbr.rel (%p533) target = $region88
        $region87: #{tpu_custom_call.1} parent=71 // pred_region
          %536 = dma.done [#allocation10], 16
        $region88: #{tpu_custom_call.1} parent=71 // pred_fallthru
          _
        // Predicated region
        $region89: #{tpu_custom_call.1} parent=71 // pred_check
          %p537 = pneg %p141
        $region90: #{tpu_custom_call.1} parent=71 // pred_check_branch
          %539 = sbr.rel (%p537) target = $region92
        $region91: #{tpu_custom_call.1} parent=71 // pred_region
          %540 = dma.done [#allocation10], 288
        $region92: #{tpu_custom_call.1} parent=71 // pred_fallthru
          _
        // Predicated region
        $region93: #{tpu_custom_call.1} parent=71 // pred_check
          %p541 = pneg %p162
        $region94: #{tpu_custom_call.1} parent=71 // pred_check_branch
          %543 = sbr.rel (%p541) target = $region96
        $region95: #{tpu_custom_call.1} parent=71 // pred_region
          %544 = dma.done [#allocation13], 16
        $region96: #{tpu_custom_call.1} parent=71 // pred_fallthru
          _
        // Predicated region
        $region97: #{tpu_custom_call.1} parent=71 // pred_check
          %p545 = pneg %p183
        $region98: #{tpu_custom_call.1} parent=71 // pred_check_branch
          %547 = sbr.rel (%p545) target = $region100
        $region99: #{tpu_custom_call.1} parent=71 // pred_region
          %548 = dma.done [#allocation13], 16
        $region100: #{tpu_custom_call.1} parent=71 // pred_fallthru
          _
        // Predicated region
        $region101: #{tpu_custom_call.1} parent=71 // pred_check
          %p549 = pneg %p204
        $region102: #{tpu_custom_call.1} parent=71 // pred_check_branch
          %551 = sbr.rel (%p549) target = $region104
        $region103: #{tpu_custom_call.1} parent=71 // pred_region
          %552 = dma.done [#allocation16], 32
        $region104: #{tpu_custom_call.1} parent=71 // pred_fallthru
          _
        // Predicated region
        $region105: #{tpu_custom_call.1} parent=71 // pred_check
          %p553 = pneg %p225
        $region106: #{tpu_custom_call.1} parent=71 // pred_check_branch
          %555 = sbr.rel (%p553) target = $region108
        $region107: #{tpu_custom_call.1} parent=71 // pred_region
          %556 = dma.done [#allocation16], 16
        $region108: #{tpu_custom_call.1} parent=71 // pred_fallthru
          _
        // Predicated region
        $region109: #{tpu_custom_call.1} parent=71 // pred_check
          %p557 = pneg %p246
        $region110: #{tpu_custom_call.1} parent=71 // pred_check_branch
          %559 = sbr.rel (%p557) target = $region112
        $region111: #{tpu_custom_call.1} parent=71 // pred_region
          %560 = dma.done [#allocation19], 16
        $region112: #{tpu_custom_call.1} parent=71 // pred_fallthru
          _
        // Predicated region
        $region113: #{tpu_custom_call.1} parent=71 // pred_check
          %p561 = pneg %p267
        $region114: #{tpu_custom_call.1} parent=71 // pred_check_branch
          %563 = sbr.rel (%p561) target = $region116
        $region115: #{tpu_custom_call.1} parent=71 // pred_region
          %564 = dma.done [#allocation19], 32
        $region116: #{tpu_custom_call.1} parent=71 // pred_fallthru
          _
        // Predicated region
        $region117: #{tpu_custom_call.1} parent=71 // pred_check
          %p565 = pneg %p288
        $region118: #{tpu_custom_call.1} parent=71 // pred_check_branch
          %567 = sbr.rel (%p565) target = $region120
        $region119: #{tpu_custom_call.1} parent=71 // pred_region
          %568 = dma.done [#allocation22], 16
        $region120: #{tpu_custom_call.1} parent=71 // pred_fallthru
          _
        // Predicated region
        $region121: #{tpu_custom_call.1} parent=71 // pred_check
          %p569 = pneg %p309
        $region122: #{tpu_custom_call.1} parent=71 // pred_check_branch
          %571 = sbr.rel (%p569) target = $region124
        $region123: #{tpu_custom_call.1} parent=71 // pred_region
          %572 = dma.done [#allocation22], 16
        $region124: #{tpu_custom_call.1} parent=71 // pred_fallthru
          _
        %s573 = sand.u32 %s44, 1
        %s574 = scalar_lea.sflag [#allocation4], %s573
        %s575 = sand.u32 %s44, 1
        %s576 = smul.addr %s575, 128
        %s577 = scalar_lea.vmem [#allocation3], %s576
        %p578 = pneg %p57
        %p579 = pneg %p54
        %p580 = pneg %p78
        %p581 = pneg %p75
        %p582 = pneg %p99
        %p583 = pneg %p96
        %p584 = pneg %p120
        %p585 = pneg %p117
        %p586 = pneg %p141
        %p587 = pneg %p138
        %p588 = pneg %p162
        %p589 = pneg %p159
        %p590 = pneg %p183
        %p591 = pneg %p180
        %p592 = pneg %p204
        %p593 = pneg %p201
        %p594 = pneg %p225
        %p595 = pneg %p222
        %p596 = pneg %p246
        %p597 = pneg %p243
        %p598 = pneg %p267
        %p599 = pneg %p264
        %p600 = pneg %p288
        %p601 = pneg %p285
        %p602 = pneg %p309
        %p603 = pneg %p306
        %p604 = pneg %p335
        %p605 = pneg %p332
        %s606 = sand.u32 %s322, 1
        %s607 = scalar_lea.sflag [#allocation5], %s606
        %s608 = sand.u32 %s322, 1
        %s609 = smul.addr %s608, 256
        %s610 = scalar_lea.vmem [#allocation24], %s609
        %v612 = vld [vmem:[%s520] sm:$0xf]
        %v613 = vld [vmem:[%s520 + $0x4] sm:$0xf]
        %v614 = vld [vmem:[%s520 + $0x8] sm:$0xf]
        %v615 = vld [vmem:[%s520 + $0xc] sm:$0xf]
        %v616 = vld [vmem:[%s520 + $0x10] sm:$0xf]
        %v617 = vld [vmem:[%s520 + $0x14] sm:$0xf]
        %v618 = vld [vmem:[%s520 + $0x18] sm:$0xf]
        %v619 = vld [vmem:[%s520 + $0x1c] sm:$0xf]
        %v620 = vld [vmem:[%s520 + $0x20] sm:$0xf]
        %v621 = vld [vmem:[%s520 + $0x24] sm:$0xf]
        %v622 = vld [vmem:[%s520 + $0x28] sm:$0xf]
        %v623 = vld [vmem:[%s520 + $0x2c] sm:$0xf]
        %v624 = vld [vmem:[%s520 + $0x30] sm:$0xf]
        %v625 = vld [vmem:[%s520 + $0x34] sm:$0xf]
        %v626 = vld [vmem:[%s520 + $0x38] sm:$0xf]
        %v627 = vld [vmem:[%s520 + $0x3c] sm:$0xf]
        %v628 = vld [vmem:[%s520 + $0x40] sm:$0xf]
        %v629 = vld [vmem:[%s520 + $0x44] sm:$0xf]
        %v630 = vld [vmem:[%s520 + $0x48] sm:$0xf]
        %v631 = vld [vmem:[%s520 + $0x4c] sm:$0xf]
        %v632 = vld [vmem:[%s520 + $0x50] sm:$0xf]
        %v633 = vld [vmem:[%s520 + $0x54] sm:$0xf]
        %v634 = vld [vmem:[%s520 + $0x58] sm:$0xf]
        %v635 = vld [vmem:[%s520 + $0x5c] sm:$0xf]
        %v636 = vld [vmem:[%s520 + $0x60] sm:$0xf]
        %v637 = vld [vmem:[%s520 + $0x64] sm:$0xf]
        %v638 = vld [vmem:[%s520 + $0x68] sm:$0xf]
        %v639 = vld [vmem:[%s520 + $0x6c] sm:$0xf]
        %v640 = vld [vmem:[%s520 + $0x70] sm:$0xf]
        %v641 = vld [vmem:[%s520 + $0x74] sm:$0xf]
        %v642 = vld [vmem:[%s520 + $0x78] sm:$0xf]
        %v643 = vld [vmem:[%s520 + $0x7c] sm:$0xf]
        %v644 = vld [vmem:[#allocation6] sm:$0x3]
        %v677 = vunpack.c.l.b16 %v612
        %v678 = vunpack.c.l.b16 %v613
        %v679 = vunpack.c.l.b16 %v614
        %v680 = vunpack.c.l.b16 %v615
        %v681 = vunpack.c.l.b16 %v616
        %v682 = vunpack.c.l.b16 %v617
        %v683 = vunpack.c.l.b16 %v618
        %v684 = vunpack.c.l.b16 %v619
        %v685 = vunpack.c.l.b16 %v620
        %v686 = vunpack.c.l.b16 %v621
        %v687 = vunpack.c.l.b16 %v622
        %v688 = vunpack.c.l.b16 %v623
        %v689 = vunpack.c.l.b16 %v624
        %v690 = vunpack.c.l.b16 %v625
        %v691 = vunpack.c.l.b16 %v626
        %v692 = vunpack.c.l.b16 %v627
        %v693 = vunpack.c.l.b16 %v628
        %v694 = vunpack.c.l.b16 %v629
        %v695 = vunpack.c.l.b16 %v630
        %v696 = vunpack.c.l.b16 %v631
        %v697 = vunpack.c.l.b16 %v632
        %v698 = vunpack.c.l.b16 %v633
        %v699 = vunpack.c.l.b16 %v634
        %v700 = vunpack.c.l.b16 %v635
        %v701 = vunpack.c.l.b16 %v636
        %v702 = vunpack.c.l.b16 %v637
        %v703 = vunpack.c.l.b16 %v638
        %v704 = vunpack.c.l.b16 %v639
        %v705 = vunpack.c.l.b16 %v640
        %v706 = vunpack.c.l.b16 %v641
        %v707 = vunpack.c.l.b16 %v642
        %v708 = vunpack.c.l.b16 %v643
        %v709 = vpack.c.b16 %v678, %v677
        %v710 = vpack.c.b16 %v680, %v679
        %v711 = vpack.c.b16 %v682, %v681
        %v712 = vpack.c.b16 %v684, %v683
        %v713 = vpack.c.b16 %v686, %v685
        %v714 = vpack.c.b16 %v688, %v687
        %v715 = vpack.c.b16 %v690, %v689
        %v716 = vpack.c.b16 %v692, %v691
        %v717 = vpack.c.b16 %v694, %v693
        %v718 = vpack.c.b16 %v696, %v695
        %v719 = vpack.c.b16 %v698, %v697
        %v720 = vpack.c.b16 %v700, %v699
        %v721 = vpack.c.b16 %v702, %v701
        %v722 = vpack.c.b16 %v704, %v703
        %v723 = vpack.c.b16 %v706, %v705
        %v724 = vpack.c.b16 %v708, %v707
        %vm725 = vcmask 31744
        %v727 = vsel %vm725, %v709, 0
        %v730 = vsel %vm725, %v710, 0
        %v733 = vsel %vm725, %v711, 0
        %v736 = vsel %vm725, %v712, 0
        %v739 = vsel %vm725, %v713, 0
        %v742 = vsel %vm725, %v714, 0
        %v745 = vsel %vm725, %v715, 0
        %v748 = vsel %vm725, %v716, 0
        %v751 = vsel %vm725, %v717, 0
        %v754 = vsel %vm725, %v718, 0
        %v757 = vsel %vm725, %v719, 0
        %v760 = vsel %vm725, %v720, 0
        %v763 = vsel %vm725, %v721, 0
        %v766 = vsel %vm725, %v722, 0
        %v769 = vsel %vm725, %v723, 0
        %v772 = vsel %vm725, %v724, 0
        %vm774 = vcmask 1041408
        %v776 = vsel %vm774, %v644, 0
        %778 = vmatprep.subr.bf16.mxu0 0
        %779 = vmatpush1.bf16.msra.mxu0 %v776
        %780 = vmatprep.subr.bf16.mxu0 0
        %781 = vmatpush1.bf16.msra.mxu0 0
        %782 = vmatprep.subr.bf16.mxu0 0
        %783 = vmatpush1.bf16.msra.mxu0 0
        %784 = vmatprep.subr.bf16.mxu0 0
        %785 = vmatpush1.bf16.msra.mxu0 0
        %786 = vmatprep.subr.bf16.mxu0 0
        %787 = vmatpush1.bf16.msra.mxu0 0
        %788 = vmatprep.subr.bf16.mxu0 0
        %789 = vmatpush1.bf16.msra.mxu0 0
        %790 = vmatprep.subr.bf16.mxu0 0
        %791 = vmatpush1.bf16.msra.mxu0 0
        %792 = vmatprep.subr.bf16.mxu0 0
        %793 = vmatpush1.bf16.msra.mxu0 0
        %794 = vmatprep.subr.bf16.mxu0 0
        %795 = vmatpush1.bf16.msra.mxu0 0
        %796 = vmatprep.subr.bf16.mxu0 0
        %797 = vmatpush1.bf16.msra.mxu0 0
        %798 = vmatprep.subr.bf16.mxu0 0
        %799 = vmatpush1.bf16.msra.mxu0 0
        %800 = vmatprep.subr.bf16.mxu0 0
        %801 = vmatpush1.bf16.msra.mxu0 0
        %802 = vmatprep.subr.bf16.mxu0 0
        %803 = vmatpush1.bf16.msra.mxu0 0
        %804 = vmatprep.subr.bf16.mxu0 0
        %805 = vmatpush1.bf16.msra.mxu0 0
        %806 = vmatprep.subr.bf16.mxu0 0
        %807 = vmatpush1.bf16.msra.mxu0 0
        %808 = vmatprep.subr.bf16.mxu0 0
        %809 = vmatpush1.bf16.msra.mxu0 0
        %810 = vmatprep.mubr.bf16.mxu0 0
        %811 = vmatmul.mubr.bf16.gmra.mrb[0].mxu0 %v727
        %v812 = vpop.f32.mrb[0].mxu0
        %v813 = vadd.f32 0.0, %v812
        %v814 = vpop.f32.mrb[0].mxu0
        %v815 = vpop.f32.mrb[0].mxu0
        %v816 = vadd.f32 0.0, %v815
        %v817 = vpop.f32.mrb[0].mxu0
        %818 = vmatprep.mubr.bf16.mxu0 0
        %819 = vmatmul.mubr.bf16.gmra.mrb[0].mxu0 %v730
        %v820 = vpop.f32.mrb[0].mxu0
        %v821 = vadd.f32 0.0, %v820
        %v822 = vpop.f32.mrb[0].mxu0
        %v823 = vpop.f32.mrb[0].mxu0
        %v824 = vadd.f32 0.0, %v823
        %v825 = vpop.f32.mrb[0].mxu0
        %826 = vmatprep.mubr.bf16.mxu0 0
        %827 = vmatmul.mubr.bf16.gmra.mrb[0].mxu0 %v733
        %v828 = vpop.f32.mrb[0].mxu0
        %v829 = vadd.f32 0.0, %v828
        %v830 = vpop.f32.mrb[0].mxu0
        %v831 = vpop.f32.mrb[0].mxu0
        %v832 = vadd.f32 0.0, %v831
        %v833 = vpop.f32.mrb[0].mxu0
        %834 = vmatprep.mubr.bf16.mxu0 0
        %835 = vmatmul.mubr.bf16.gmra.mrb[0].mxu0 %v736
        %v836 = vpop.f32.mrb[0].mxu0
        %v837 = vadd.f32 0.0, %v836
        %v838 = vpop.f32.mrb[0].mxu0
        %v839 = vpop.f32.mrb[0].mxu0
        %v840 = vadd.f32 0.0, %v839
        %v841 = vpop.f32.mrb[0].mxu0
        %842 = vmatprep.mubr.bf16.mxu0 0
        %843 = vmatmul.mubr.bf16.gmra.mrb[0].mxu0 %v739
        %v844 = vpop.f32.mrb[0].mxu0
        %v845 = vadd.f32 0.0, %v844
        %v846 = vpop.f32.mrb[0].mxu0
        %v847 = vpop.f32.mrb[0].mxu0
        %v848 = vadd.f32 0.0, %v847
        %v849 = vpop.f32.mrb[0].mxu0
        %850 = vmatprep.mubr.bf16.mxu0 0
        %851 = vmatmul.mubr.bf16.gmra.mrb[0].mxu0 %v742
        %v852 = vpop.f32.mrb[0].mxu0
        %v853 = vadd.f32 0.0, %v852
        %v854 = vpop.f32.mrb[0].mxu0
        %v855 = vpop.f32.mrb[0].mxu0
        %v856 = vadd.f32 0.0, %v855
        %v857 = vpop.f32.mrb[0].mxu0
        %858 = vmatprep.mubr.bf16.mxu0 0
        %859 = vmatmul.mubr.bf16.gmra.mrb[0].mxu0 %v745
        %v860 = vpop.f32.mrb[0].mxu0
        %v861 = vadd.f32 0.0, %v860
        %v862 = vpop.f32.mrb[0].mxu0
        %v863 = vpop.f32.mrb[0].mxu0
        %v864 = vadd.f32 0.0, %v863
        %v865 = vpop.f32.mrb[0].mxu0
        %866 = vmatprep.mubr.bf16.mxu0 0
        %867 = vmatmul.mubr.bf16.gmra.mrb[0].mxu0 %v748
        %v868 = vpop.f32.mrb[0].mxu0
        %v869 = vadd.f32 0.0, %v868
        %v870 = vpop.f32.mrb[0].mxu0
        %v871 = vpop.f32.mrb[0].mxu0
        %v872 = vadd.f32 0.0, %v871
        %v873 = vpop.f32.mrb[0].mxu0
        %874 = vmatprep.mubr.bf16.mxu0 0
        %875 = vmatmul.mubr.bf16.gmra.mrb[0].mxu0 %v751
        %v876 = vpop.f32.mrb[0].mxu0
        %v877 = vadd.f32 0.0, %v876
        %v878 = vpop.f32.mrb[0].mxu0
        %v879 = vpop.f32.mrb[0].mxu0
        %v880 = vadd.f32 0.0, %v879
        %v881 = vpop.f32.mrb[0].mxu0
        %882 = vmatprep.mubr.bf16.mxu0 0
        %883 = vmatmul.mubr.bf16.gmra.mrb[0].mxu0 %v754
        %v884 = vpop.f32.mrb[0].mxu0
        %v885 = vadd.f32 0.0, %v884
        %v886 = vpop.f32.mrb[0].mxu0
        %v887 = vpop.f32.mrb[0].mxu0
        %v888 = vadd.f32 0.0, %v887
        %v889 = vpop.f32.mrb[0].mxu0
        %890 = vmatprep.mubr.bf16.mxu0 0
        %891 = vmatmul.mubr.bf16.gmra.mrb[0].mxu0 %v757
        %v892 = vpop.f32.mrb[0].mxu0
        %v893 = vadd.f32 0.0, %v892
        %v894 = vpop.f32.mrb[0].mxu0
        %v895 = vpop.f32.mrb[0].mxu0
        %v896 = vadd.f32 0.0, %v895
        %v897 = vpop.f32.mrb[0].mxu0
        %898 = vmatprep.mubr.bf16.mxu0 0
        %899 = vmatmul.mubr.bf16.gmra.mrb[0].mxu0 %v760
        %v900 = vpop.f32.mrb[0].mxu0
        %v901 = vadd.f32 0.0, %v900
        %v902 = vpop.f32.mrb[0].mxu0
        %v903 = vpop.f32.mrb[0].mxu0
        %v904 = vadd.f32 0.0, %v903
        %v905 = vpop.f32.mrb[0].mxu0
        %906 = vmatprep.mubr.bf16.mxu0 0
        %907 = vmatmul.mubr.bf16.gmra.mrb[0].mxu0 %v763
        %v908 = vpop.f32.mrb[0].mxu0
        %v909 = vadd.f32 0.0, %v908
        %v910 = vpop.f32.mrb[0].mxu0
        %v911 = vpop.f32.mrb[0].mxu0
        %v912 = vadd.f32 0.0, %v911
        %v913 = vpop.f32.mrb[0].mxu0
        %914 = vmatprep.mubr.bf16.mxu0 0
        %915 = vmatmul.mubr.bf16.gmra.mrb[0].mxu0 %v766
        %v916 = vpop.f32.mrb[0].mxu0
        %v917 = vadd.f32 0.0, %v916
        %v918 = vpop.f32.mrb[0].mxu0
        %v919 = vpop.f32.mrb[0].mxu0
        %v920 = vadd.f32 0.0, %v919
        %v921 = vpop.f32.mrb[0].mxu0
        %922 = vmatprep.mubr.bf16.mxu0 0
        %923 = vmatmul.mubr.bf16.gmra.mrb[0].mxu0 %v769
        %v924 = vpop.f32.mrb[0].mxu0
        %v925 = vadd.f32 0.0, %v924
        %v926 = vpop.f32.mrb[0].mxu0
        %v927 = vpop.f32.mrb[0].mxu0
        %v928 = vadd.f32 0.0, %v927
        %v929 = vpop.f32.mrb[0].mxu0
        %930 = vmatprep.mubr.bf16.mxu0 0
        %931 = vmatmul.mubr.bf16.gmra.mrb[0].mxu0 %v772
        %v932 = vpop.f32.mrb[0].mxu0
        %v933 = vadd.f32 0.0, %v932
        %v934 = vpop.f32.mrb[0].mxu0
        %v935 = vpop.f32.mrb[0].mxu0
        %v936 = vadd.f32 0.0, %v935
        %v937 = vpop.f32.mrb[0].mxu0
        %938 = vdwg.mxu0
        %v939 = vld [vmem:[#allocation8] sm:$0x1]
        %v940 = vld [vmem:[#allocation9] sm:$0x1]
        %v941 = vsel %vm725, %v813, 0.0
        %v942 = vsel %vm725, %v816, 0.0
        %v943 = vadd.f32 %v941, %v942
        %v944 = vsel %vm725, %v821, 0.0
        %v945 = vadd.f32 %v943, %v944
        %v946 = vsel %vm725, %v824, 0.0
        %v947 = vadd.f32 %v945, %v946
        %v948 = vsel %vm725, %v829, 0.0
        %v949 = vadd.f32 %v947, %v948
        %v950 = vsel %vm725, %v832, 0.0
        %v951 = vadd.f32 %v949, %v950
        %v952 = vsel %vm725, %v837, 0.0
        %v953 = vadd.f32 %v951, %v952
        %v954 = vsel %vm725, %v840, 0.0
        %v955 = vadd.f32 %v953, %v954
        %v956 = vsel %vm725, %v845, 0.0
        %v957 = vadd.f32 %v955, %v956
        %v958 = vsel %vm725, %v848, 0.0
        %v959 = vadd.f32 %v957, %v958
        %v960 = vsel %vm725, %v853, 0.0
        %v961 = vadd.f32 %v959, %v960
        %v962 = vsel %vm725, %v856, 0.0
        %v963 = vadd.f32 %v961, %v962
        %v964 = vsel %vm725, %v861, 0.0
        %v965 = vadd.f32 %v963, %v964
        %v966 = vsel %vm725, %v864, 0.0
        %v967 = vadd.f32 %v965, %v966
        %v968 = vsel %vm725, %v869, 0.0
        %v969 = vadd.f32 %v967, %v968
        %v970 = vsel %vm725, %v872, 0.0
        %v971 = vadd.f32 %v969, %v970
        %v972 = vsel %vm725, %v877, 0.0
        %v973 = vadd.f32 %v971, %v972
        %v974 = vsel %vm725, %v880, 0.0
        %v975 = vadd.f32 %v973, %v974
        %v976 = vsel %vm725, %v885, 0.0
        %v977 = vadd.f32 %v975, %v976
        %v978 = vsel %vm725, %v888, 0.0
        %v979 = vadd.f32 %v977, %v978
        %v980 = vsel %vm725, %v893, 0.0
        %v981 = vadd.f32 %v979, %v980
        %v982 = vsel %vm725, %v896, 0.0
        %v983 = vadd.f32 %v981, %v982
        %v984 = vsel %vm725, %v901, 0.0
        %v985 = vadd.f32 %v983, %v984
        %v986 = vsel %vm725, %v904, 0.0
        %v987 = vadd.f32 %v985, %v986
        %v988 = vsel %vm725, %v909, 0.0
        %v989 = vadd.f32 %v987, %v988
        %v990 = vsel %vm725, %v912, 0.0
        %v991 = vadd.f32 %v989, %v990
        %v992 = vsel %vm725, %v917, 0.0
        %v993 = vadd.f32 %v991, %v992
        %v994 = vsel %vm725, %v920, 0.0
        %v995 = vadd.f32 %v993, %v994
        %v996 = vsel %vm725, %v925, 0.0
        %v997 = vadd.f32 %v995, %v996
        %v998 = vsel %vm725, %v928, 0.0
        %v999 = vadd.f32 %v997, %v998
        %v1000 = vsel %vm725, %v933, 0.0
        %v1001 = vadd.f32 %v999, %v1000
        %v1002 = vsel %vm725, %v936, 0.0
        %v1003 = vadd.f32 %v1001, %v1002
        %v1004 = vrot.slane %v1003, 4
        %v1005 = vadd.f32 %v1003, %v1004
        %v1006 = vrot.slane %v1005, 2
        %v1007 = vadd.f32 %v1005, %v1006
        %v1008 = vrot.slane %v1007, 1
        %v1009 = vadd.f32 %v1007, %v1008
        %v1010 = vmul.f32 %v813, %v813
        %v1011 = vmul.f32 %v816, %v816
        %v1012 = vmul.f32 %v821, %v821
        %v1013 = vmul.f32 %v824, %v824
        %v1014 = vmul.f32 %v829, %v829
        %v1015 = vmul.f32 %v832, %v832
        %v1016 = vmul.f32 %v837, %v837
        %v1017 = vmul.f32 %v840, %v840
        %v1018 = vmul.f32 %v845, %v845
        %v1019 = vmul.f32 %v848, %v848
        %v1020 = vmul.f32 %v853, %v853
        %v1021 = vmul.f32 %v856, %v856
        %v1022 = vmul.f32 %v861, %v861
        %v1023 = vmul.f32 %v864, %v864
        %v1024 = vmul.f32 %v869, %v869
        %v1025 = vmul.f32 %v872, %v872
        %v1026 = vmul.f32 %v877, %v877
        %v1027 = vmul.f32 %v880, %v880
        %v1028 = vmul.f32 %v885, %v885
        %v1029 = vmul.f32 %v888, %v888
        %v1030 = vmul.f32 %v893, %v893
        %v1031 = vmul.f32 %v896, %v896
        %v1032 = vmul.f32 %v901, %v901
        %v1033 = vmul.f32 %v904, %v904
        %v1034 = vmul.f32 %v909, %v909
        %v1035 = vmul.f32 %v912, %v912
        %v1036 = vmul.f32 %v917, %v917
        %v1037 = vmul.f32 %v920, %v920
        %v1038 = vmul.f32 %v925, %v925
        %v1039 = vmul.f32 %v928, %v928
        %v1040 = vmul.f32 %v933, %v933
        %v1041 = vmul.f32 %v936, %v936
        %v1042 = vsel %vm725, %v1010, 0.0
        %v1043 = vsel %vm725, %v1011, 0.0
        %v1044 = vadd.f32 %v1042, %v1043
        %v1045 = vsel %vm725, %v1012, 0.0
        %v1046 = vadd.f32 %v1044, %v1045
        %v1047 = vsel %vm725, %v1013, 0.0
        %v1048 = vadd.f32 %v1046, %v1047
        %v1049 = vsel %vm725, %v1014, 0.0
        %v1050 = vadd.f32 %v1048, %v1049
        %v1051 = vsel %vm725, %v1015, 0.0
        %v1052 = vadd.f32 %v1050, %v1051
        %v1053 = vsel %vm725, %v1016, 0.0
        %v1054 = vadd.f32 %v1052, %v1053
        %v1055 = vsel %vm725, %v1017, 0.0
        %v1056 = vadd.f32 %v1054, %v1055
        %v1057 = vsel %vm725, %v1018, 0.0
        %v1058 = vadd.f32 %v1056, %v1057
        %v1059 = vsel %vm725, %v1019, 0.0
        %v1060 = vadd.f32 %v1058, %v1059
        %v1061 = vsel %vm725, %v1020, 0.0
        %v1062 = vadd.f32 %v1060, %v1061
        %v1063 = vsel %vm725, %v1021, 0.0
        %v1064 = vadd.f32 %v1062, %v1063
        %v1065 = vsel %vm725, %v1022, 0.0
        %v1066 = vadd.f32 %v1064, %v1065
        %v1067 = vsel %vm725, %v1023, 0.0
        %v1068 = vadd.f32 %v1066, %v1067
        %v1069 = vsel %vm725, %v1024, 0.0
        %v1070 = vadd.f32 %v1068, %v1069
        %v1071 = vsel %vm725, %v1025, 0.0
        %v1072 = vadd.f32 %v1070, %v1071
        %v1073 = vsel %vm725, %v1026, 0.0
        %v1074 = vadd.f32 %v1072, %v1073
        %v1075 = vsel %vm725, %v1027, 0.0
        %v1076 = vadd.f32 %v1074, %v1075
        %v1077 = vsel %vm725, %v1028, 0.0
        %v1078 = vadd.f32 %v1076, %v1077
        %v1079 = vsel %vm725, %v1029, 0.0
        %v1080 = vadd.f32 %v1078, %v1079
        %v1081 = vsel %vm725, %v1030, 0.0
        %v1082 = vadd.f32 %v1080, %v1081
        %v1083 = vsel %vm725, %v1031, 0.0
        %v1084 = vadd.f32 %v1082, %v1083
        %v1085 = vsel %vm725, %v1032, 0.0
        %v1086 = vadd.f32 %v1084, %v1085
        %v1087 = vsel %vm725, %v1033, 0.0
        %v1088 = vadd.f32 %v1086, %v1087
        %v1089 = vsel %vm725, %v1034, 0.0
        %v1090 = vadd.f32 %v1088, %v1089
        %v1091 = vsel %vm725, %v1035, 0.0
        %v1092 = vadd.f32 %v1090, %v1091
        %v1093 = vsel %vm725, %v1036, 0.0
        %v1094 = vadd.f32 %v1092, %v1093
        %v1095 = vsel %vm725, %v1037, 0.0
        %v1096 = vadd.f32 %v1094, %v1095
        %v1097 = vsel %vm725, %v1038, 0.0
        %v1098 = vadd.f32 %v1096, %v1097
        %v1099 = vsel %vm725, %v1039, 0.0
        %v1100 = vadd.f32 %v1098, %v1099
        %v1101 = vsel %vm725, %v1040, 0.0
        %v1102 = vadd.f32 %v1100, %v1101
        %v1103 = vsel %vm725, %v1041, 0.0
        %v1104 = vadd.f32 %v1102, %v1103
        %v1105 = vrot.slane %v1104, 4
        %v1106 = vadd.f32 %v1104, %v1105
        %v1107 = vrot.slane %v1106, 2
        %v1108 = vadd.f32 %v1106, %v1107
        %v1109 = vrot.slane %v1108, 1
        %v1110 = vadd.f32 %v1108, %v1109
        %v1111 = vmul.f32 %v1009, 0.00390625
        %v1112 = vmul.f32 %v1110, 0.00390625
        %v1113 = vmul.f32 %v1111, %v1111
        %v1114 = vsub.f32 %v1112, %v1113
        %v1115 = vmax.f32 %v1114, 0.0
        %v1116 = vadd.f32 %v1115, 1e-05
        %v1117 = vrsqrt.pop %v1116
        %v1118 = vmul.f32 %v1117, %v939
        %v1119 = vlaneseq
        %v1120 = vshrl.u32 %v1119, 7
        %v1121 = vsub.s32 0, %v1120
        %v1122 = vrot.slane %v1118, %v1121
        %v1123 = vmul.f32 %v813, %v1122
        %v1124 = vmul.f32 %v816, %v1122
        %v1125 = vmul.f32 %v821, %v1122
        %v1126 = vmul.f32 %v824, %v1122
        %v1127 = vmul.f32 %v829, %v1122
        %v1128 = vmul.f32 %v832, %v1122
        %v1129 = vmul.f32 %v837, %v1122
        %v1130 = vmul.f32 %v840, %v1122
        %v1131 = vmul.f32 %v845, %v1122
        %v1132 = vmul.f32 %v848, %v1122
        %v1133 = vmul.f32 %v853, %v1122
        %v1134 = vmul.f32 %v856, %v1122
        %v1135 = vmul.f32 %v861, %v1122
        %v1136 = vmul.f32 %v864, %v1122
        %v1137 = vmul.f32 %v869, %v1122
        %v1138 = vmul.f32 %v872, %v1122
        %v1139 = vmul.f32 %v877, %v1122
        %v1140 = vmul.f32 %v880, %v1122
        %v1141 = vmul.f32 %v885, %v1122
        %v1142 = vmul.f32 %v888, %v1122
        %v1143 = vmul.f32 %v893, %v1122
        %v1144 = vmul.f32 %v896, %v1122
        %v1145 = vmul.f32 %v901, %v1122
        %v1146 = vmul.f32 %v904, %v1122
        %v1147 = vmul.f32 %v909, %v1122
        %v1148 = vmul.f32 %v912, %v1122
        %v1149 = vmul.f32 %v917, %v1122
        %v1150 = vmul.f32 %v920, %v1122
        %v1151 = vmul.f32 %v925, %v1122
        %v1152 = vmul.f32 %v928, %v1122
        %v1153 = vmul.f32 %v933, %v1122
        %v1154 = vmul.f32 %v936, %v1122
        %v1155 = vmul.f32 %v1111, %v1118
        %v1156 = vsub.f32 %v940, %v1155
        %v1158 = vlaneseq
        %v1159 = vshrl.u32 %v1158, 7
        %v1160 = vsub.s32 0, %v1159
        %v1161 = vrot.slane %v1156, %v1160
        %v1163 = vadd.f32 %v1123, %v1161
        %v1164 = vadd.f32 %v1124, %v1161
        %v1165 = vadd.f32 %v1125, %v1161
        %v1166 = vadd.f32 %v1126, %v1161
        %v1167 = vadd.f32 %v1127, %v1161
        %v1168 = vadd.f32 %v1128, %v1161
        %v1169 = vadd.f32 %v1129, %v1161
        %v1170 = vadd.f32 %v1130, %v1161
        %v1171 = vadd.f32 %v1131, %v1161
        %v1172 = vadd.f32 %v1132, %v1161
        %v1173 = vadd.f32 %v1133, %v1161
        %v1174 = vadd.f32 %v1134, %v1161
        %v1175 = vadd.f32 %v1135, %v1161
        %v1176 = vadd.f32 %v1136, %v1161
        %v1177 = vadd.f32 %v1137, %v1161
        %v1178 = vadd.f32 %v1138, %v1161
        %v1179 = vadd.f32 %v1139, %v1161
        %v1180 = vadd.f32 %v1140, %v1161
        %v1181 = vadd.f32 %v1141, %v1161
        %v1182 = vadd.f32 %v1142, %v1161
        %v1183 = vadd.f32 %v1143, %v1161
        %v1184 = vadd.f32 %v1144, %v1161
        %v1185 = vadd.f32 %v1145, %v1161
        %v1186 = vadd.f32 %v1146, %v1161
        %v1187 = vadd.f32 %v1147, %v1161
        %v1188 = vadd.f32 %v1148, %v1161
        %v1189 = vadd.f32 %v1149, %v1161
        %v1190 = vadd.f32 %v1150, %v1161
        %v1191 = vadd.f32 %v1151, %v1161
        %v1192 = vadd.f32 %v1152, %v1161
        %v1193 = vadd.f32 %v1153, %v1161
        %v1194 = vadd.f32 %v1154, %v1161
        %v1195 = vmax.f32 %v1163, 0.0
        %v1196 = vmax.f32 %v1164, 0.0
        %v1197 = vmax.f32 %v1165, 0.0
        %v1198 = vmax.f32 %v1166, 0.0
        %v1199 = vmax.f32 %v1167, 0.0
        %v1200 = vmax.f32 %v1168, 0.0
        %v1201 = vmax.f32 %v1169, 0.0
        %v1202 = vmax.f32 %v1170, 0.0
        %v1203 = vmax.f32 %v1171, 0.0
        %v1204 = vmax.f32 %v1172, 0.0
        %v1205 = vmax.f32 %v1173, 0.0
        %v1206 = vmax.f32 %v1174, 0.0
        %v1207 = vmax.f32 %v1175, 0.0
        %v1208 = vmax.f32 %v1176, 0.0
        %v1209 = vmax.f32 %v1177, 0.0
        %v1210 = vmax.f32 %v1178, 0.0
        %v1211 = vmax.f32 %v1179, 0.0
        %v1212 = vmax.f32 %v1180, 0.0
        %v1213 = vmax.f32 %v1181, 0.0
        %v1214 = vmax.f32 %v1182, 0.0
        %v1215 = vmax.f32 %v1183, 0.0
        %v1216 = vmax.f32 %v1184, 0.0
        %v1217 = vmax.f32 %v1185, 0.0
        %v1218 = vmax.f32 %v1186, 0.0
        %v1219 = vmax.f32 %v1187, 0.0
        %v1220 = vmax.f32 %v1188, 0.0
        %v1221 = vmax.f32 %v1189, 0.0
        %v1222 = vmax.f32 %v1190, 0.0
        %v1223 = vmax.f32 %v1191, 0.0
        %v1224 = vmax.f32 %v1192, 0.0
        %v1225 = vmax.f32 %v1193, 0.0
        %v1226 = vmax.f32 %v1194, 0.0
        %vm1227 = vcmask 27648
        %1228 = vst.msk [vmem:[#allocation2] sm:$0xf] %vm1227, 0
        %1229 = vst.msk [vmem:[#allocation2 + $0x4] sm:$0xf] %vm1227, 0
        %vm1230 = vcmask 24576
        %1231 = vst.msk [vmem:[#allocation2 + $0x8] sm:$0x1] %vm1230, 0
        %s1232 = scalar_lea.vmem [#allocation2], 204
        %1233 = vst.msk [vmem:[%s1232] sm:$0xf] %vm1227, 0
        %1234 = vst.msk [vmem:[%s1232 + $0x4] sm:$0xf] %vm1227, 0
        %1235 = vst.msk [vmem:[%s1232 + $0x8] sm:$0x1] %vm1230, 0
        %s1236 = scalar_lea.vmem [#allocation2], 12
        %vm1237 = vcmask 24576
        %vm1238 = vsmask.f32 256
        %vm1239 = vmand %vm1237, %vm1238
        %v1240 = vld [vmem:[%s1236] sm:$0x1]
        %v1241 = vsel %vm1239, 0, %v1240
        %1242 = vst [vmem:[%s1236] sm:$0x1] %v1241
        %v1243 = vld [vmem:[%s1236 + $0xc] sm:$0x1]
        %v1244 = vsel %vm1239, 0, %v1243
        %1245 = vst [vmem:[%s1236 + $0xc] sm:$0x1] %v1244
        %v1246 = vld [vmem:[%s1236 + $0x18] sm:$0x1]
        %v1247 = vsel %vm1239, 0, %v1246
        %1248 = vst [vmem:[%s1236 + $0x18] sm:$0x1] %v1247
        %v1249 = vld [vmem:[%s1236 + $0x24] sm:$0x1]
        %v1250 = vsel %vm1239, 0, %v1249
        %1251 = vst [vmem:[%s1236 + $0x24] sm:$0x1] %v1250
        %v1252 = vld [vmem:[%s1236 + $0x30] sm:$0x1]
        %v1253 = vsel %vm1239, 0, %v1252
        %1254 = vst [vmem:[%s1236 + $0x30] sm:$0x1] %v1253
        %v1255 = vld [vmem:[%s1236 + $0x3c] sm:$0x1]
        %v1256 = vsel %vm1239, 0, %v1255
        %1257 = vst [vmem:[%s1236 + $0x3c] sm:$0x1] %v1256
        %v1258 = vld [vmem:[%s1236 + $0x48] sm:$0x1]
        %v1259 = vsel %vm1239, 0, %v1258
        %1260 = vst [vmem:[%s1236 + $0x48] sm:$0x1] %v1259
        %v1261 = vld [vmem:[%s1236 + $0x54] sm:$0x1]
        %v1262 = vsel %vm1239, 0, %v1261
        %1263 = vst [vmem:[%s1236 + $0x54] sm:$0x1] %v1262
        %v1264 = vld [vmem:[%s1236 + $0x60] sm:$0x1]
        %v1265 = vsel %vm1239, 0, %v1264
        %1266 = vst [vmem:[%s1236 + $0x60] sm:$0x1] %v1265
        %v1267 = vld [vmem:[%s1236 + $0x6c] sm:$0x1]
        %v1268 = vsel %vm1239, 0, %v1267
        %1269 = vst [vmem:[%s1236 + $0x6c] sm:$0x1] %v1268
        %v1270 = vld [vmem:[%s1236 + $0x78] sm:$0x1]
        %v1271 = vsel %vm1239, 0, %v1270
        %1272 = vst [vmem:[%s1236 + $0x78] sm:$0x1] %v1271
        %v1273 = vld [vmem:[%s1236 + $0x84] sm:$0x1]
        %v1274 = vsel %vm1239, 0, %v1273
        %1275 = vst [vmem:[%s1236 + $0x84] sm:$0x1] %v1274
        %v1276 = vld [vmem:[%s1236 + $0x90] sm:$0x1]
        %v1277 = vsel %vm1239, 0, %v1276
        %1278 = vst [vmem:[%s1236 + $0x90] sm:$0x1] %v1277
        %v1279 = vld [vmem:[%s1236 + $0x9c] sm:$0x1]
        %v1280 = vsel %vm1239, 0, %v1279
        %1281 = vst [vmem:[%s1236 + $0x9c] sm:$0x1] %v1280
        %v1282 = vld [vmem:[%s1236 + $0xa8] sm:$0x1]
        %v1283 = vsel %vm1239, 0, %v1282
        %1284 = vst [vmem:[%s1236 + $0xa8] sm:$0x1] %v1283
        %v1285 = vld [vmem:[%s1236 + $0xb4] sm:$0x1]
        %v1286 = vsel %vm1239, 0, %v1285
        %1287 = vst [vmem:[%s1236 + $0xb4] sm:$0x1] %v1286
        %vm1288 = vsmask.f32 7938
        %vm1289 = vmand %vm1237, %vm1288
        %v1290 = vld [vmem:[%s1236 + $0x8] sm:$0x1]
        %v1291 = vsel %vm1289, 0, %v1290
        %1292 = vst [vmem:[%s1236 + $0x8] sm:$0x1] %v1291
        %v1293 = vld [vmem:[%s1236 + $0x14] sm:$0x1]
        %v1294 = vsel %vm1289, 0, %v1293
        %1295 = vst [vmem:[%s1236 + $0x14] sm:$0x1] %v1294
        %v1296 = vld [vmem:[%s1236 + $0x20] sm:$0x1]
        %v1297 = vsel %vm1289, 0, %v1296
        %1298 = vst [vmem:[%s1236 + $0x20] sm:$0x1] %v1297
        %v1299 = vld [vmem:[%s1236 + $0x2c] sm:$0x1]
        %v1300 = vsel %vm1289, 0, %v1299
        %1301 = vst [vmem:[%s1236 + $0x2c] sm:$0x1] %v1300
        %v1302 = vld [vmem:[%s1236 + $0x38] sm:$0x1]
        %v1303 = vsel %vm1289, 0, %v1302
        %1304 = vst [vmem:[%s1236 + $0x38] sm:$0x1] %v1303
        %v1305 = vld [vmem:[%s1236 + $0x44] sm:$0x1]
        %v1306 = vsel %vm1289, 0, %v1305
        %1307 = vst [vmem:[%s1236 + $0x44] sm:$0x1] %v1306
        %v1308 = vld [vmem:[%s1236 + $0x50] sm:$0x1]
        %v1309 = vsel %vm1289, 0, %v1308
        %1310 = vst [vmem:[%s1236 + $0x50] sm:$0x1] %v1309
        %v1311 = vld [vmem:[%s1236 + $0x5c] sm:$0x1]
        %v1312 = vsel %vm1289, 0, %v1311
        %1313 = vst [vmem:[%s1236 + $0x5c] sm:$0x1] %v1312
        %v1314 = vld [vmem:[%s1236 + $0x68] sm:$0x1]
        %v1315 = vsel %vm1289, 0, %v1314
        %1316 = vst [vmem:[%s1236 + $0x68] sm:$0x1] %v1315
        %v1317 = vld [vmem:[%s1236 + $0x74] sm:$0x1]
        %v1318 = vsel %vm1289, 0, %v1317
        %1319 = vst [vmem:[%s1236 + $0x74] sm:$0x1] %v1318
        %v1320 = vld [vmem:[%s1236 + $0x80] sm:$0x1]
        %v1321 = vsel %vm1289, 0, %v1320
        %1322 = vst [vmem:[%s1236 + $0x80] sm:$0x1] %v1321
        %v1323 = vld [vmem:[%s1236 + $0x8c] sm:$0x1]
        %v1324 = vsel %vm1289, 0, %v1323
        %1325 = vst [vmem:[%s1236 + $0x8c] sm:$0x1] %v1324
        %v1326 = vld [vmem:[%s1236 + $0x98] sm:$0x1]
        %v1327 = vsel %vm1289, 0, %v1326
        %1328 = vst [vmem:[%s1236 + $0x98] sm:$0x1] %v1327
        %v1329 = vld [vmem:[%s1236 + $0xa4] sm:$0x1]
        %v1330 = vsel %vm1289, 0, %v1329
        %1331 = vst [vmem:[%s1236 + $0xa4] sm:$0x1] %v1330
        %v1332 = vld [vmem:[%s1236 + $0xb0] sm:$0x1]
        %v1333 = vsel %vm1289, 0, %v1332
        %1334 = vst [vmem:[%s1236 + $0xb0] sm:$0x1] %v1333
        %v1335 = vld [vmem:[%s1236 + $0xbc] sm:$0x1]
        %v1336 = vsel %vm1289, 0, %v1335
        %1337 = vst [vmem:[%s1236 + $0xbc] sm:$0x1] %v1336
        %v1338 = vpack.c.bf16 %v1196, %v1195
        %v1339 = vpack.c.bf16 %v1198, %v1197
        %v1340 = vpack.c.bf16 %v1200, %v1199
        %v1341 = vpack.c.bf16 %v1202, %v1201
        %v1342 = vpack.c.bf16 %v1204, %v1203
        %v1343 = vpack.c.bf16 %v1206, %v1205
        %v1344 = vpack.c.bf16 %v1208, %v1207
        %v1345 = vpack.c.bf16 %v1210, %v1209
        %v1346 = vpack.c.bf16 %v1212, %v1211
        %v1347 = vpack.c.bf16 %v1214, %v1213
        %v1348 = vpack.c.bf16 %v1216, %v1215
        %v1349 = vpack.c.bf16 %v1218, %v1217
        %v1350 = vpack.c.bf16 %v1220, %v1219
        %v1351 = vpack.c.bf16 %v1222, %v1221
        %v1352 = vpack.c.bf16 %v1224, %v1223
        %v1353 = vpack.c.bf16 %v1226, %v1225
        %v1370 = vunpack.c.l.b16 %v1338
        %v1371 = vunpack.c.h.b16 %v1338
        %v1372 = vunpack.c.l.b16 %v1339
        %v1373 = vunpack.c.h.b16 %v1339
        %v1374 = vunpack.c.l.b16 %v1340
        %v1375 = vunpack.c.h.b16 %v1340
        %v1376 = vunpack.c.l.b16 %v1341
        %v1377 = vunpack.c.h.b16 %v1341
        %v1378 = vunpack.c.l.b16 %v1342
        %v1379 = vunpack.c.h.b16 %v1342
        %v1380 = vunpack.c.l.b16 %v1343
        %v1381 = vunpack.c.h.b16 %v1343
        %v1382 = vunpack.c.l.b16 %v1344
        %v1383 = vunpack.c.h.b16 %v1344
        %v1384 = vunpack.c.l.b16 %v1345
        %v1385 = vunpack.c.h.b16 %v1345
        %v1386 = vunpack.c.l.b16 %v1346
        %v1387 = vunpack.c.h.b16 %v1346
        %v1388 = vunpack.c.l.b16 %v1347
        %v1389 = vunpack.c.h.b16 %v1347
        %v1390 = vunpack.c.l.b16 %v1348
        %v1391 = vunpack.c.h.b16 %v1348
        %v1392 = vunpack.c.l.b16 %v1349
        %v1393 = vunpack.c.h.b16 %v1349
        %v1394 = vunpack.c.l.b16 %v1350
        %v1395 = vunpack.c.h.b16 %v1350
        %v1396 = vunpack.c.l.b16 %v1351
        %v1397 = vunpack.c.h.b16 %v1351
        %v1398 = vunpack.c.l.b16 %v1352
        %v1399 = vunpack.c.h.b16 %v1352
        %v1400 = vunpack.c.l.b16 %v1353
        %v1401 = vunpack.c.h.b16 %v1353
        %v1402 = vpack.c.b16 %v1370, %v1370
        %v1403 = vpack.c.b16 %v1371, %v1371
        %v1404 = vpack.c.b16 %v1372, %v1372
        %v1405 = vpack.c.b16 %v1373, %v1373
        %v1406 = vpack.c.b16 %v1374, %v1374
        %v1407 = vpack.c.b16 %v1375, %v1375
        %v1408 = vpack.c.b16 %v1376, %v1376
        %v1409 = vpack.c.b16 %v1377, %v1377
        %v1410 = vpack.c.b16 %v1378, %v1378
        %v1411 = vpack.c.b16 %v1379, %v1379
        %v1412 = vpack.c.b16 %v1380, %v1380
        %v1413 = vpack.c.b16 %v1381, %v1381
        %v1414 = vpack.c.b16 %v1382, %v1382
        %v1415 = vpack.c.b16 %v1383, %v1383
        %v1416 = vpack.c.b16 %v1384, %v1384
        %v1417 = vpack.c.b16 %v1385, %v1385
        %v1418 = vpack.c.b16 %v1386, %v1386
        %v1419 = vpack.c.b16 %v1387, %v1387
        %v1420 = vpack.c.b16 %v1388, %v1388
        %v1421 = vpack.c.b16 %v1389, %v1389
        %v1422 = vpack.c.b16 %v1390, %v1390
        %v1423 = vpack.c.b16 %v1391, %v1391
        %v1424 = vpack.c.b16 %v1392, %v1392
        %v1425 = vpack.c.b16 %v1393, %v1393
        %v1426 = vpack.c.b16 %v1394, %v1394
        %v1427 = vpack.c.b16 %v1395, %v1395
        %v1428 = vpack.c.b16 %v1396, %v1396
        %v1429 = vpack.c.b16 %v1397, %v1397
        %v1430 = vpack.c.b16 %v1398, %v1398
        %v1431 = vpack.c.b16 %v1399, %v1399
        %v1432 = vpack.c.b16 %v1400, %v1400
        %v1433 = vpack.c.b16 %v1401, %v1401
        %vm1434 = vsmask.f32 4368
        %vm1435 = vmor %vm1238, %vm1434
        %v1437 = vshrl.u32 %v1402, 16
        %v1439 = vrot.slane %v1437, 7
        %v1440 = vshll.u32 %v1402, 16
        %v1442 = vor.u32 %v1439, %v1440
        %v1443 = vrot.slane %v1439, 4
        %v1445 = vshrl.u32 %v1403, 16
        %v1447 = vrot.slane %v1445, 7
        %v1448 = vshll.u32 %v1403, 16
        %v1450 = vor.u32 %v1447, %v1448
        %v1451 = vsel %vm1435, %v1443, %v1450
        %v1452 = vrot.slane %v1447, 4
        %v1454 = vshrl.u32 %v1404, 16
        %v1456 = vrot.slane %v1454, 7
        %v1457 = vshll.u32 %v1404, 16
        %v1459 = vor.u32 %v1456, %v1457
        %v1460 = vrot.slane %v1456, 4
        %v1462 = vshrl.u32 %v1405, 16
        %v1464 = vrot.slane %v1462, 7
        %v1465 = vshll.u32 %v1405, 16
        %v1467 = vor.u32 %v1464, %v1465
        %v1468 = vsel %vm1435, %v1460, %v1467
        %v1469 = vrot.slane %v1464, 4
        %v1471 = vshrl.u32 %v1406, 16
        %v1473 = vrot.slane %v1471, 7
        %v1474 = vshll.u32 %v1406, 16
        %v1476 = vor.u32 %v1473, %v1474
        %v1477 = vrot.slane %v1473, 4
        %v1479 = vshrl.u32 %v1407, 16
        %v1481 = vrot.slane %v1479, 7
        %v1482 = vshll.u32 %v1407, 16
        %v1484 = vor.u32 %v1481, %v1482
        %v1485 = vsel %vm1435, %v1477, %v1484
        %v1486 = vrot.slane %v1481, 4
        %v1488 = vshrl.u32 %v1408, 16
        %v1490 = vrot.slane %v1488, 7
        %v1491 = vshll.u32 %v1408, 16
        %v1493 = vor.u32 %v1490, %v1491
        %v1494 = vrot.slane %v1490, 4
        %v1496 = vshrl.u32 %v1409, 16
        %v1498 = vrot.slane %v1496, 7
        %v1499 = vshll.u32 %v1409, 16
        %v1501 = vor.u32 %v1498, %v1499
        %v1502 = vsel %vm1435, %v1494, %v1501
        %v1503 = vrot.slane %v1498, 4
        %v1505 = vshrl.u32 %v1410, 16
        %v1507 = vrot.slane %v1505, 7
        %v1508 = vshll.u32 %v1410, 16
        %v1510 = vor.u32 %v1507, %v1508
        %v1511 = vrot.slane %v1507, 4
        %v1513 = vshrl.u32 %v1411, 16
        %v1515 = vrot.slane %v1513, 7
        %v1516 = vshll.u32 %v1411, 16
        %v1518 = vor.u32 %v1515, %v1516
        %v1519 = vsel %vm1435, %v1511, %v1518
        %v1520 = vrot.slane %v1515, 4
        %v1522 = vshrl.u32 %v1412, 16
        %v1524 = vrot.slane %v1522, 7
        %v1525 = vshll.u32 %v1412, 16
        %v1527 = vor.u32 %v1524, %v1525
        %v1528 = vrot.slane %v1524, 4
        %v1530 = vshrl.u32 %v1413, 16
        %v1532 = vrot.slane %v1530, 7
        %v1533 = vshll.u32 %v1413, 16
        %v1535 = vor.u32 %v1532, %v1533
        %v1536 = vsel %vm1435, %v1528, %v1535
        %v1537 = vrot.slane %v1532, 4
        %v1539 = vshrl.u32 %v1414, 16
        %v1541 = vrot.slane %v1539, 7
        %v1542 = vshll.u32 %v1414, 16
        %v1544 = vor.u32 %v1541, %v1542
        %v1545 = vrot.slane %v1541, 4
        %v1547 = vshrl.u32 %v1415, 16
        %v1549 = vrot.slane %v1547, 7
        %v1550 = vshll.u32 %v1415, 16
        %v1552 = vor.u32 %v1549, %v1550
        %v1553 = vsel %vm1435, %v1545, %v1552
        %v1554 = vrot.slane %v1549, 4
        %v1556 = vshrl.u32 %v1416, 16
        %v1558 = vrot.slane %v1556, 7
        %v1559 = vshll.u32 %v1416, 16
        %v1561 = vor.u32 %v1558, %v1559
        %v1562 = vrot.slane %v1558, 4
        %v1564 = vshrl.u32 %v1417, 16
        %v1566 = vrot.slane %v1564, 7
        %v1567 = vshll.u32 %v1417, 16
        %v1569 = vor.u32 %v1566, %v1567
        %v1570 = vsel %vm1435, %v1562, %v1569
        %v1571 = vrot.slane %v1566, 4
        %v1573 = vshrl.u32 %v1418, 16
        %v1575 = vrot.slane %v1573, 7
        %v1576 = vshll.u32 %v1418, 16
        %v1578 = vor.u32 %v1575, %v1576
        %v1579 = vrot.slane %v1575, 4
        %v1581 = vshrl.u32 %v1419, 16
        %v1583 = vrot.slane %v1581, 7
        %v1584 = vshll.u32 %v1419, 16
        %v1586 = vor.u32 %v1583, %v1584
        %v1587 = vsel %vm1435, %v1579, %v1586
        %v1588 = vrot.slane %v1583, 4
        %v1590 = vshrl.u32 %v1420, 16
        %v1592 = vrot.slane %v1590, 7
        %v1593 = vshll.u32 %v1420, 16
        %v1595 = vor.u32 %v1592, %v1593
        %v1596 = vrot.slane %v1592, 4
        %v1598 = vshrl.u32 %v1421, 16
        %v1600 = vrot.slane %v1598, 7
        %v1601 = vshll.u32 %v1421, 16
        %v1603 = vor.u32 %v1600, %v1601
        %v1604 = vsel %vm1435, %v1596, %v1603
        %v1605 = vrot.slane %v1600, 4
        %v1607 = vshrl.u32 %v1422, 16
        %v1609 = vrot.slane %v1607, 7
        %v1610 = vshll.u32 %v1422, 16
        %v1612 = vor.u32 %v1609, %v1610
        %v1613 = vrot.slane %v1609, 4
        %v1615 = vshrl.u32 %v1423, 16
        %v1617 = vrot.slane %v1615, 7
        %v1618 = vshll.u32 %v1423, 16
        %v1620 = vor.u32 %v1617, %v1618
        %v1621 = vsel %vm1435, %v1613, %v1620
        %v1622 = vrot.slane %v1617, 4
        %v1624 = vshrl.u32 %v1424, 16
        %v1626 = vrot.slane %v1624, 7
        %v1627 = vshll.u32 %v1424, 16
        %v1629 = vor.u32 %v1626, %v1627
        %v1630 = vrot.slane %v1626, 4
        %v1632 = vshrl.u32 %v1425, 16
        %v1634 = vrot.slane %v1632, 7
        %v1635 = vshll.u32 %v1425, 16
        %v1637 = vor.u32 %v1634, %v1635
        %v1638 = vsel %vm1435, %v1630, %v1637
        %v1639 = vrot.slane %v1634, 4
        %v1641 = vshrl.u32 %v1426, 16
        %v1643 = vrot.slane %v1641, 7
        %v1644 = vshll.u32 %v1426, 16
        %v1646 = vor.u32 %v1643, %v1644
        %v1647 = vrot.slane %v1643, 4
        %v1649 = vshrl.u32 %v1427, 16
        %v1651 = vrot.slane %v1649, 7
        %v1652 = vshll.u32 %v1427, 16
        %v1654 = vor.u32 %v1651, %v1652
        %v1655 = vsel %vm1435, %v1647, %v1654
        %v1656 = vrot.slane %v1651, 4
        %v1658 = vshrl.u32 %v1428, 16
        %v1660 = vrot.slane %v1658, 7
        %v1661 = vshll.u32 %v1428, 16
        %v1663 = vor.u32 %v1660, %v1661
        %v1664 = vrot.slane %v1660, 4
        %v1666 = vshrl.u32 %v1429, 16
        %v1668 = vrot.slane %v1666, 7
        %v1669 = vshll.u32 %v1429, 16
        %v1671 = vor.u32 %v1668, %v1669
        %v1672 = vsel %vm1435, %v1664, %v1671
        %v1673 = vrot.slane %v1668, 4
        %v1675 = vshrl.u32 %v1430, 16
        %v1677 = vrot.slane %v1675, 7
        %v1678 = vshll.u32 %v1430, 16
        %v1680 = vor.u32 %v1677, %v1678
        %v1681 = vrot.slane %v1677, 4
        %v1683 = vshrl.u32 %v1431, 16
        %v1685 = vrot.slane %v1683, 7
        %v1686 = vshll.u32 %v1431, 16
        %v1688 = vor.u32 %v1685, %v1686
        %v1689 = vsel %vm1435, %v1681, %v1688
        %v1690 = vrot.slane %v1685, 4
        %v1692 = vshrl.u32 %v1432, 16
        %v1694 = vrot.slane %v1692, 7
        %v1695 = vshll.u32 %v1432, 16
        %v1697 = vor.u32 %v1694, %v1695
        %v1698 = vrot.slane %v1694, 4
        %v1700 = vshrl.u32 %v1433, 16
        %v1702 = vrot.slane %v1700, 7
        %v1703 = vshll.u32 %v1433, 16
        %v1705 = vor.u32 %v1702, %v1703
        %v1706 = vsel %vm1435, %v1698, %v1705
        %v1707 = vrot.slane %v1702, 4
        %vm1756 = vcmask 27648
        %vm1757 = vmand %vm1756, %vm1288
        %v1758 = vld [vmem:[%s1236] sm:$0xf]
        %v1759 = vsel %vm1757, %v1442, %v1758
        %1760 = vst [vmem:[%s1236] sm:$0xf] %v1759
        %1761 = vst.msk [vmem:[%s1236 + $0x4] sm:$0xf] %vm1227, %v1451
        %v1762 = vld [vmem:[%s1236 + $0x8] sm:$0x1]
        %v1763 = vsel %vm1239, %v1452, %v1762
        %1764 = vst [vmem:[%s1236 + $0x8] sm:$0x1] %v1763
        %v1765 = vld [vmem:[%s1236 + $0xc] sm:$0xf]
        %v1766 = vsel %vm1757, %v1459, %v1765
        %1767 = vst [vmem:[%s1236 + $0xc] sm:$0xf] %v1766
        %1768 = vst.msk [vmem:[%s1236 + $0x10] sm:$0xf] %vm1227, %v1468
        %v1769 = vld [vmem:[%s1236 + $0x14] sm:$0x1]
        %v1770 = vsel %vm1239, %v1469, %v1769
        %1771 = vst [vmem:[%s1236 + $0x14] sm:$0x1] %v1770
        %v1772 = vld [vmem:[%s1236 + $0x18] sm:$0xf]
        %v1773 = vsel %vm1757, %v1476, %v1772
        %1774 = vst [vmem:[%s1236 + $0x18] sm:$0xf] %v1773
        %1775 = vst.msk [vmem:[%s1236 + $0x1c] sm:$0xf] %vm1227, %v1485
        %v1776 = vld [vmem:[%s1236 + $0x20] sm:$0x1]
        %v1777 = vsel %vm1239, %v1486, %v1776
        %1778 = vst [vmem:[%s1236 + $0x20] sm:$0x1] %v1777
        %v1779 = vld [vmem:[%s1236 + $0x24] sm:$0xf]
        %v1780 = vsel %vm1757, %v1493, %v1779
        %1781 = vst [vmem:[%s1236 + $0x24] sm:$0xf] %v1780
        %1782 = vst.msk [vmem:[%s1236 + $0x28] sm:$0xf] %vm1227, %v1502
        %v1783 = vld [vmem:[%s1236 + $0x2c] sm:$0x1]
        %v1784 = vsel %vm1239, %v1503, %v1783
        %1785 = vst [vmem:[%s1236 + $0x2c] sm:$0x1] %v1784
        %v1786 = vld [vmem:[%s1236 + $0x30] sm:$0xf]
        %v1787 = vsel %vm1757, %v1510, %v1786
        %1788 = vst [vmem:[%s1236 + $0x30] sm:$0xf] %v1787
        %1789 = vst.msk [vmem:[%s1236 + $0x34] sm:$0xf] %vm1227, %v1519
        %v1790 = vld [vmem:[%s1236 + $0x38] sm:$0x1]
        %v1791 = vsel %vm1239, %v1520, %v1790
        %1792 = vst [vmem:[%s1236 + $0x38] sm:$0x1] %v1791
        %v1793 = vld [vmem:[%s1236 + $0x3c] sm:$0xf]
        %v1794 = vsel %vm1757, %v1527, %v1793
        %1795 = vst [vmem:[%s1236 + $0x3c] sm:$0xf] %v1794
        %1796 = vst.msk [vmem:[%s1236 + $0x40] sm:$0xf] %vm1227, %v1536
        %v1797 = vld [vmem:[%s1236 + $0x44] sm:$0x1]
        %v1798 = vsel %vm1239, %v1537, %v1797
        %1799 = vst [vmem:[%s1236 + $0x44] sm:$0x1] %v1798
        %v1800 = vld [vmem:[%s1236 + $0x48] sm:$0xf]
        %v1801 = vsel %vm1757, %v1544, %v1800
        %1802 = vst [vmem:[%s1236 + $0x48] sm:$0xf] %v1801
        %1803 = vst.msk [vmem:[%s1236 + $0x4c] sm:$0xf] %vm1227, %v1553
        %v1804 = vld [vmem:[%s1236 + $0x50] sm:$0x1]
        %v1805 = vsel %vm1239, %v1554, %v1804
        %1806 = vst [vmem:[%s1236 + $0x50] sm:$0x1] %v1805
        %v1807 = vld [vmem:[%s1236 + $0x54] sm:$0xf]
        %v1808 = vsel %vm1757, %v1561, %v1807
        %1809 = vst [vmem:[%s1236 + $0x54] sm:$0xf] %v1808
        %1810 = vst.msk [vmem:[%s1236 + $0x58] sm:$0xf] %vm1227, %v1570
        %v1811 = vld [vmem:[%s1236 + $0x5c] sm:$0x1]
        %v1812 = vsel %vm1239, %v1571, %v1811
        %1813 = vst [vmem:[%s1236 + $0x5c] sm:$0x1] %v1812
        %v1814 = vld [vmem:[%s1236 + $0x60] sm:$0xf]
        %v1815 = vsel %vm1757, %v1578, %v1814
        %1816 = vst [vmem:[%s1236 + $0x60] sm:$0xf] %v1815
        %1817 = vst.msk [vmem:[%s1236 + $0x64] sm:$0xf] %vm1227, %v1587
        %v1818 = vld [vmem:[%s1236 + $0x68] sm:$0x1]
        %v1819 = vsel %vm1239, %v1588, %v1818
        %1820 = vst [vmem:[%s1236 + $0x68] sm:$0x1] %v1819
        %v1821 = vld [vmem:[%s1236 + $0x6c] sm:$0xf]
        %v1822 = vsel %vm1757, %v1595, %v1821
        %1823 = vst [vmem:[%s1236 + $0x6c] sm:$0xf] %v1822
        %1824 = vst.msk [vmem:[%s1236 + $0x70] sm:$0xf] %vm1227, %v1604
        %v1825 = vld [vmem:[%s1236 + $0x74] sm:$0x1]
        %v1826 = vsel %vm1239, %v1605, %v1825
        %1827 = vst [vmem:[%s1236 + $0x74] sm:$0x1] %v1826
        %v1828 = vld [vmem:[%s1236 + $0x78] sm:$0xf]
        %v1829 = vsel %vm1757, %v1612, %v1828
        %1830 = vst [vmem:[%s1236 + $0x78] sm:$0xf] %v1829
        %1831 = vst.msk [vmem:[%s1236 + $0x7c] sm:$0xf] %vm1227, %v1621
        %v1832 = vld [vmem:[%s1236 + $0x80] sm:$0x1]
        %v1833 = vsel %vm1239, %v1622, %v1832
        %1834 = vst [vmem:[%s1236 + $0x80] sm:$0x1] %v1833
        %v1835 = vld [vmem:[%s1236 + $0x84] sm:$0xf]
        %v1836 = vsel %vm1757, %v1629, %v1835
        %1837 = vst [vmem:[%s1236 + $0x84] sm:$0xf] %v1836
        %1838 = vst.msk [vmem:[%s1236 + $0x88] sm:$0xf] %vm1227, %v1638
        %v1839 = vld [vmem:[%s1236 + $0x8c] sm:$0x1]
        %v1840 = vsel %vm1239, %v1639, %v1839
        %1841 = vst [vmem:[%s1236 + $0x8c] sm:$0x1] %v1840
        %v1842 = vld [vmem:[%s1236 + $0x90] sm:$0xf]
        %v1843 = vsel %vm1757, %v1646, %v1842
        %1844 = vst [vmem:[%s1236 + $0x90] sm:$0xf] %v1843
        %1845 = vst.msk [vmem:[%s1236 + $0x94] sm:$0xf] %vm1227, %v1655
        %v1846 = vld [vmem:[%s1236 + $0x98] sm:$0x1]
        %v1847 = vsel %vm1239, %v1656, %v1846
        %1848 = vst [vmem:[%s1236 + $0x98] sm:$0x1] %v1847
        %v1849 = vld [vmem:[%s1236 + $0x9c] sm:$0xf]
        %v1850 = vsel %vm1757, %v1663, %v1849
        %1851 = vst [vmem:[%s1236 + $0x9c] sm:$0xf] %v1850
        %1852 = vst.msk [vmem:[%s1236 + $0xa0] sm:$0xf] %vm1227, %v1672
        %v1853 = vld [vmem:[%s1236 + $0xa4] sm:$0x1]
        %v1854 = vsel %vm1239, %v1673, %v1853
        %1855 = vst [vmem:[%s1236 + $0xa4] sm:$0x1] %v1854
        %v1856 = vld [vmem:[%s1236 + $0xa8] sm:$0xf]
        %v1857 = vsel %vm1757, %v1680, %v1856
        %1858 = vst [vmem:[%s1236 + $0xa8] sm:$0xf] %v1857
        %1859 = vst.msk [vmem:[%s1236 + $0xac] sm:$0xf] %vm1227, %v1689
        %v1860 = vld [vmem:[%s1236 + $0xb0] sm:$0x1]
        %v1861 = vsel %vm1239, %v1690, %v1860
        %1862 = vst [vmem:[%s1236 + $0xb0] sm:$0x1] %v1861
        %v1863 = vld [vmem:[%s1236 + $0xb4] sm:$0xf]
        %v1864 = vsel %vm1757, %v1697, %v1863
        %1865 = vst [vmem:[%s1236 + $0xb4] sm:$0xf] %v1864
        %1866 = vst.msk [vmem:[%s1236 + $0xb8] sm:$0xf] %vm1227, %v1706
        %v1867 = vld [vmem:[%s1236 + $0xbc] sm:$0x1]
        %v1868 = vsel %vm1239, %v1707, %v1867
        %1869 = vst [vmem:[%s1236 + $0xbc] sm:$0x1] %v1868
        %v1870 = vld [vmem:[#allocation2] sm:$0xf]
        %v1871 = vld [vmem:[#allocation2 + $0x4] sm:$0xf]
        %v1872 = vld [vmem:[#allocation2 + $0xc] sm:$0xf]
        %v1873 = vld [vmem:[#allocation2 + $0x10] sm:$0xf]
        %v1874 = vld [vmem:[#allocation2 + $0x18] sm:$0xf]
        %v1875 = vld [vmem:[#allocation2 + $0x1c] sm:$0xf]
        %v1876 = vld [vmem:[#allocation2 + $0x24] sm:$0xf]
        %v1877 = vld [vmem:[#allocation2 + $0x28] sm:$0xf]
        %v1878 = vld [vmem:[#allocation2 + $0x30] sm:$0xf]
        %v1879 = vld [vmem:[#allocation2 + $0x34] sm:$0xf]
        %v1880 = vld [vmem:[#allocation2 + $0x3c] sm:$0xf]
        %v1881 = vld [vmem:[#allocation2 + $0x40] sm:$0xf]
        %v1882 = vld [vmem:[#allocation2 + $0x48] sm:$0xf]
        %v1883 = vld [vmem:[#allocation2 + $0x4c] sm:$0xf]
        %v1884 = vld [vmem:[#allocation2 + $0x54] sm:$0xf]
        %v1885 = vld [vmem:[#allocation2 + $0x58] sm:$0xf]
        %v1886 = vld [vmem:[#allocation2 + $0x60] sm:$0xf]
        %v1887 = vld [vmem:[#allocation2 + $0x64] sm:$0xf]
        %v1888 = vld [vmem:[#allocation2 + $0x6c] sm:$0xf]
        %v1889 = vld [vmem:[#allocation2 + $0x70] sm:$0xf]
        %v1890 = vld [vmem:[#allocation2 + $0x78] sm:$0xf]
        %v1891 = vld [vmem:[#allocation2 + $0x7c] sm:$0xf]
        %v1892 = vld [vmem:[#allocation2 + $0x84] sm:$0xf]
        %v1893 = vld [vmem:[#allocation2 + $0x88] sm:$0xf]
        %v1894 = vld [vmem:[#allocation2 + $0x90] sm:$0xf]
        %v1895 = vld [vmem:[#allocation2 + $0x94] sm:$0xf]
        %v1896 = vld [vmem:[#allocation2 + $0x9c] sm:$0xf]
        %v1897 = vld [vmem:[#allocation2 + $0xa0] sm:$0xf]
        %v1898 = vld [vmem:[#allocation2 + $0xa8] sm:$0xf]
        %v1899 = vld [vmem:[#allocation2 + $0xac] sm:$0xf]
        %v1900 = vld [vmem:[#allocation2 + $0xb4] sm:$0xf]
        %v1901 = vld [vmem:[#allocation2 + $0xb8] sm:$0xf]
        %v1902 = vld [vmem:[#allocation11] sm:$0x3]
        %v1903 = vld [vmem:[#allocation2 + $0x8] sm:$0x1]
        %v1904 = vld [vmem:[#allocation2 + $0x14] sm:$0x1]
        %v1905 = vld [vmem:[#allocation2 + $0x20] sm:$0x1]
        %v1906 = vld [vmem:[#allocation2 + $0x2c] sm:$0x1]
        %v1907 = vld [vmem:[#allocation2 + $0x38] sm:$0x1]
        %v1908 = vld [vmem:[#allocation2 + $0x44] sm:$0x1]
        %v1909 = vld [vmem:[#allocation2 + $0x50] sm:$0x1]
        %v1910 = vld [vmem:[#allocation2 + $0x5c] sm:$0x1]
        %v1911 = vld [vmem:[#allocation2 + $0x68] sm:$0x1]
        %v1912 = vld [vmem:[#allocation2 + $0x74] sm:$0x1]
        %v1913 = vld [vmem:[#allocation2 + $0x80] sm:$0x1]
        %v1914 = vld [vmem:[#allocation2 + $0x8c] sm:$0x1]
        %v1915 = vld [vmem:[#allocation2 + $0x98] sm:$0x1]
        %v1916 = vld [vmem:[#allocation2 + $0xa4] sm:$0x1]
        %v1917 = vld [vmem:[#allocation2 + $0xb0] sm:$0x1]
        %v1918 = vld [vmem:[#allocation2 + $0xbc] sm:$0x1]
        %vm1919 = vsmask.f32 3328
        %vm1920 = vsmask.f32 7440
        %vm1921 = vmor %vm1919, %vm1920
        %v1923 = vshrl.u32 %v1870, 16
        %v1925 = vrot.slane %v1923, 4
        %v1926 = vshll.u32 %v1870, 16
        %v1928 = vrot.slane %v1926, 5
        %v1929 = vor.u32 %v1925, %v1928
        %v1930 = vrot.slane %v1929, 4
        %v1932 = vshll.u32 %v1871, 16
        %v1934 = vrot.slane %v1932, 5
        %v1935 = vsel %vm1921, %v1930, %v1934
        %v1936 = vshrl.u32 %v1871, 16
        %v1938 = vrot.slane %v1936, 4
        %v1939 = vor.u32 %v1938, %v1934
        %v1940 = vrot.slane %v1939, 4
        %v1942 = vshll.u32 %v1903, 16
        %v1944 = vrot.slane %v1942, 5
        %v1945 = vsel %vm1921, %v1940, %v1944
        %v1947 = vshrl.u32 %v1872, 16
        %v1949 = vrot.slane %v1947, 4
        %v1950 = vshll.u32 %v1872, 16
        %v1952 = vrot.slane %v1950, 5
        %v1953 = vor.u32 %v1949, %v1952
        %v1954 = vrot.slane %v1953, 4
        %v1956 = vshll.u32 %v1873, 16
        %v1958 = vrot.slane %v1956, 5
        %v1959 = vsel %vm1921, %v1954, %v1958
        %v1960 = vshrl.u32 %v1873, 16
        %v1962 = vrot.slane %v1960, 4
        %v1963 = vor.u32 %v1962, %v1958
        %v1964 = vrot.slane %v1963, 4
        %v1966 = vshll.u32 %v1904, 16
        %v1968 = vrot.slane %v1966, 5
        %v1969 = vsel %vm1921, %v1964, %v1968
        %v1971 = vshrl.u32 %v1874, 16
        %v1973 = vrot.slane %v1971, 4
        %v1974 = vshll.u32 %v1874, 16
        %v1976 = vrot.slane %v1974, 5
        %v1977 = vor.u32 %v1973, %v1976
        %v1978 = vrot.slane %v1977, 4
        %v1980 = vshll.u32 %v1875, 16
        %v1982 = vrot.slane %v1980, 5
        %v1983 = vsel %vm1921, %v1978, %v1982
        %v1984 = vshrl.u32 %v1875, 16
        %v1986 = vrot.slane %v1984, 4
        %v1987 = vor.u32 %v1986, %v1982
        %v1988 = vrot.slane %v1987, 4
        %v1990 = vshll.u32 %v1905, 16
        %v1992 = vrot.slane %v1990, 5
        %v1993 = vsel %vm1921, %v1988, %v1992
        %v1995 = vshrl.u32 %v1876, 16
        %v1997 = vrot.slane %v1995, 4
        %v1998 = vshll.u32 %v1876, 16
        %v2000 = vrot.slane %v1998, 5
        %v2001 = vor.u32 %v1997, %v2000
        %v2002 = vrot.slane %v2001, 4
        %v2004 = vshll.u32 %v1877, 16
        %v2006 = vrot.slane %v2004, 5
        %v2007 = vsel %vm1921, %v2002, %v2006
        %v2008 = vshrl.u32 %v1877, 16
        %v2010 = vrot.slane %v2008, 4
        %v2011 = vor.u32 %v2010, %v2006
        %v2012 = vrot.slane %v2011, 4
        %v2014 = vshll.u32 %v1906, 16
        %v2016 = vrot.slane %v2014, 5
        %v2017 = vsel %vm1921, %v2012, %v2016
        %v2019 = vshrl.u32 %v1878, 16
        %v2021 = vrot.slane %v2019, 4
        %v2022 = vshll.u32 %v1878, 16
        %v2024 = vrot.slane %v2022, 5
        %v2025 = vor.u32 %v2021, %v2024
        %v2026 = vrot.slane %v2025, 4
        %v2028 = vshll.u32 %v1879, 16
        %v2030 = vrot.slane %v2028, 5
        %v2031 = vsel %vm1921, %v2026, %v2030
        %v2032 = vshrl.u32 %v1879, 16
        %v2034 = vrot.slane %v2032, 4
        %v2035 = vor.u32 %v2034, %v2030
        %v2036 = vrot.slane %v2035, 4
        %v2038 = vshll.u32 %v1907, 16
        %v2040 = vrot.slane %v2038, 5
        %v2041 = vsel %vm1921, %v2036, %v2040
        %v2043 = vshrl.u32 %v1880, 16
        %v2045 = vrot.slane %v2043, 4
        %v2046 = vshll.u32 %v1880, 16
        %v2048 = vrot.slane %v2046, 5
        %v2049 = vor.u32 %v2045, %v2048
        %v2050 = vrot.slane %v2049, 4
        %v2052 = vshll.u32 %v1881, 16
        %v2054 = vrot.slane %v2052, 5
        %v2055 = vsel %vm1921, %v2050, %v2054
        %v2056 = vshrl.u32 %v1881, 16
        %v2058 = vrot.slane %v2056, 4
        %v2059 = vor.u32 %v2058, %v2054
        %v2060 = vrot.slane %v2059, 4
        %v2062 = vshll.u32 %v1908, 16
        %v2064 = vrot.slane %v2062, 5
        %v2065 = vsel %vm1921, %v2060, %v2064
        %v2067 = vshrl.u32 %v1882, 16
        %v2069 = vrot.slane %v2067, 4
        %v2070 = vshll.u32 %v1882, 16
        %v2072 = vrot.slane %v2070, 5
        %v2073 = vor.u32 %v2069, %v2072
        %v2074 = vrot.slane %v2073, 4
        %v2076 = vshll.u32 %v1883, 16
        %v2078 = vrot.slane %v2076, 5
        %v2079 = vsel %vm1921, %v2074, %v2078
        %v2080 = vshrl.u32 %v1883, 16
        %v2082 = vrot.slane %v2080, 4
        %v2083 = vor.u32 %v2082, %v2078
        %v2084 = vrot.slane %v2083, 4
        %v2086 = vshll.u32 %v1909, 16
        %v2088 = vrot.slane %v2086, 5
        %v2089 = vsel %vm1921, %v2084, %v2088
        %v2091 = vshrl.u32 %v1884, 16
        %v2093 = vrot.slane %v2091, 4
        %v2094 = vshll.u32 %v1884, 16
        %v2096 = vrot.slane %v2094, 5
        %v2097 = vor.u32 %v2093, %v2096
        %v2098 = vrot.slane %v2097, 4
        %v2100 = vshll.u32 %v1885, 16
        %v2102 = vrot.slane %v2100, 5
        %v2103 = vsel %vm1921, %v2098, %v2102
        %v2104 = vshrl.u32 %v1885, 16
        %v2106 = vrot.slane %v2104, 4
        %v2107 = vor.u32 %v2106, %v2102
        %v2108 = vrot.slane %v2107, 4
        %v2110 = vshll.u32 %v1910, 16
        %v2112 = vrot.slane %v2110, 5
        %v2113 = vsel %vm1921, %v2108, %v2112
        %v2115 = vshrl.u32 %v1886, 16
        %v2117 = vrot.slane %v2115, 4
        %v2118 = vshll.u32 %v1886, 16
        %v2120 = vrot.slane %v2118, 5
        %v2121 = vor.u32 %v2117, %v2120
        %v2122 = vrot.slane %v2121, 4
        %v2124 = vshll.u32 %v1887, 16
        %v2126 = vrot.slane %v2124, 5
        %v2127 = vsel %vm1921, %v2122, %v2126
        %v2128 = vshrl.u32 %v1887, 16
        %v2130 = vrot.slane %v2128, 4
        %v2131 = vor.u32 %v2130, %v2126
        %v2132 = vrot.slane %v2131, 4
        %v2134 = vshll.u32 %v1911, 16
        %v2136 = vrot.slane %v2134, 5
        %v2137 = vsel %vm1921, %v2132, %v2136
        %v2139 = vshrl.u32 %v1888, 16
        %v2141 = vrot.slane %v2139, 4
        %v2142 = vshll.u32 %v1888, 16
        %v2144 = vrot.slane %v2142, 5
        %v2145 = vor.u32 %v2141, %v2144
        %v2146 = vrot.slane %v2145, 4
        %v2148 = vshll.u32 %v1889, 16
        %v2150 = vrot.slane %v2148, 5
        %v2151 = vsel %vm1921, %v2146, %v2150
        %v2152 = vshrl.u32 %v1889, 16
        %v2154 = vrot.slane %v2152, 4
        %v2155 = vor.u32 %v2154, %v2150
        %v2156 = vrot.slane %v2155, 4
        %v2158 = vshll.u32 %v1912, 16
        %v2160 = vrot.slane %v2158, 5
        %v2161 = vsel %vm1921, %v2156, %v2160
        %v2163 = vshrl.u32 %v1890, 16
        %v2165 = vrot.slane %v2163, 4
        %v2166 = vshll.u32 %v1890, 16
        %v2168 = vrot.slane %v2166, 5
        %v2169 = vor.u32 %v2165, %v2168
        %v2170 = vrot.slane %v2169, 4
        %v2172 = vshll.u32 %v1891, 16
        %v2174 = vrot.slane %v2172, 5
        %v2175 = vsel %vm1921, %v2170, %v2174
        %v2176 = vshrl.u32 %v1891, 16
        %v2178 = vrot.slane %v2176, 4
        %v2179 = vor.u32 %v2178, %v2174
        %v2180 = vrot.slane %v2179, 4
        %v2182 = vshll.u32 %v1913, 16
        %v2184 = vrot.slane %v2182, 5
        %v2185 = vsel %vm1921, %v2180, %v2184
        %v2187 = vshrl.u32 %v1892, 16
        %v2189 = vrot.slane %v2187, 4
        %v2190 = vshll.u32 %v1892, 16
        %v2192 = vrot.slane %v2190, 5
        %v2193 = vor.u32 %v2189, %v2192
        %v2194 = vrot.slane %v2193, 4
        %v2196 = vshll.u32 %v1893, 16
        %v2198 = vrot.slane %v2196, 5
        %v2199 = vsel %vm1921, %v2194, %v2198
        %v2200 = vshrl.u32 %v1893, 16
        %v2202 = vrot.slane %v2200, 4
        %v2203 = vor.u32 %v2202, %v2198
        %v2204 = vrot.slane %v2203, 4
        %v2206 = vshll.u32 %v1914, 16
        %v2208 = vrot.slane %v2206, 5
        %v2209 = vsel %vm1921, %v2204, %v2208
        %v2211 = vshrl.u32 %v1894, 16
        %v2213 = vrot.slane %v2211, 4
        %v2214 = vshll.u32 %v1894, 16
        %v2216 = vrot.slane %v2214, 5
        %v2217 = vor.u32 %v2213, %v2216
        %v2218 = vrot.slane %v2217, 4
        %v2220 = vshll.u32 %v1895, 16
        %v2222 = vrot.slane %v2220, 5
        %v2223 = vsel %vm1921, %v2218, %v2222
        %v2224 = vshrl.u32 %v1895, 16
        %v2226 = vrot.slane %v2224, 4
        %v2227 = vor.u32 %v2226, %v2222
        %v2228 = vrot.slane %v2227, 4
        %v2230 = vshll.u32 %v1915, 16
        %v2232 = vrot.slane %v2230, 5
        %v2233 = vsel %vm1921, %v2228, %v2232
        %v2235 = vshrl.u32 %v1896, 16
        %v2237 = vrot.slane %v2235, 4
        %v2238 = vshll.u32 %v1896, 16
        %v2240 = vrot.slane %v2238, 5
        %v2241 = vor.u32 %v2237, %v2240
        %v2242 = vrot.slane %v2241, 4
        %v2244 = vshll.u32 %v1897, 16
        %v2246 = vrot.slane %v2244, 5
        %v2247 = vsel %vm1921, %v2242, %v2246
        %v2248 = vshrl.u32 %v1897, 16
        %v2250 = vrot.slane %v2248, 4
        %v2251 = vor.u32 %v2250, %v2246
        %v2252 = vrot.slane %v2251, 4
        %v2254 = vshll.u32 %v1916, 16
        %v2256 = vrot.slane %v2254, 5
        %v2257 = vsel %vm1921, %v2252, %v2256
        %v2259 = vshrl.u32 %v1898, 16
        %v2261 = vrot.slane %v2259, 4
        %v2262 = vshll.u32 %v1898, 16
        %v2264 = vrot.slane %v2262, 5
        %v2265 = vor.u32 %v2261, %v2264
        %v2266 = vrot.slane %v2265, 4
        %v2268 = vshll.u32 %v1899, 16
        %v2270 = vrot.slane %v2268, 5
        %v2271 = vsel %vm1921, %v2266, %v2270
        %v2272 = vshrl.u32 %v1899, 16
        %v2274 = vrot.slane %v2272, 4
        %v2275 = vor.u32 %v2274, %v2270
        %v2276 = vrot.slane %v2275, 4
        %v2278 = vshll.u32 %v1917, 16
        %v2280 = vrot.slane %v2278, 5
        %v2281 = vsel %vm1921, %v2276, %v2280
        %v2283 = vshrl.u32 %v1900, 16
        %v2285 = vrot.slane %v2283, 4
        %v2286 = vshll.u32 %v1900, 16
        %v2288 = vrot.slane %v2286, 5
        %v2289 = vor.u32 %v2285, %v2288
        %v2290 = vrot.slane %v2289, 4
        %v2292 = vshll.u32 %v1901, 16
        %v2294 = vrot.slane %v2292, 5
        %v2295 = vsel %vm1921, %v2290, %v2294
        %v2296 = vshrl.u32 %v1901, 16
        %v2298 = vrot.slane %v2296, 4
        %v2299 = vor.u32 %v2298, %v2294
        %v2300 = vrot.slane %v2299, 4
        %v2302 = vshll.u32 %v1918, 16
        %v2304 = vrot.slane %v2302, 5
        %v2305 = vsel %vm1921, %v2300, %v2304
        %s2306 = scalar_lea.vmem [#allocation11], 2
        %v2307 = vld [vmem:[%s2306] sm:$0x3]
        %v2308 = vunpack.c.l.b16 %v1935
        %v2309 = vunpack.c.l.b16 %v1945
        %v2310 = vunpack.c.l.b16 %v1959
        %v2311 = vunpack.c.l.b16 %v1969
        %v2312 = vunpack.c.l.b16 %v1983
        %v2313 = vunpack.c.l.b16 %v1993
        %v2314 = vunpack.c.l.b16 %v2007
        %v2315 = vunpack.c.l.b16 %v2017
        %v2316 = vunpack.c.l.b16 %v2031
        %v2317 = vunpack.c.l.b16 %v2041
        %v2318 = vunpack.c.l.b16 %v2055
        %v2319 = vunpack.c.l.b16 %v2065
        %v2320 = vunpack.c.l.b16 %v2079
        %v2321 = vunpack.c.l.b16 %v2089
        %v2322 = vunpack.c.l.b16 %v2103
        %v2323 = vunpack.c.l.b16 %v2113
        %v2324 = vunpack.c.l.b16 %v2127
        %v2325 = vunpack.c.l.b16 %v2137
        %v2326 = vunpack.c.l.b16 %v2151
        %v2327 = vunpack.c.l.b16 %v2161
        %v2328 = vunpack.c.l.b16 %v2175
        %v2329 = vunpack.c.l.b16 %v2185
        %v2330 = vunpack.c.l.b16 %v2199
        %v2331 = vunpack.c.l.b16 %v2209
        %v2332 = vunpack.c.l.b16 %v2223
        %v2333 = vunpack.c.l.b16 %v2233
        %v2334 = vunpack.c.l.b16 %v2247
        %v2335 = vunpack.c.l.b16 %v2257
        %v2336 = vunpack.c.l.b16 %v2271
        %v2337 = vunpack.c.l.b16 %v2281
        %v2338 = vunpack.c.l.b16 %v2295
        %v2339 = vunpack.c.l.b16 %v2305
        %v2340 = vpack.c.b16 %v2309, %v2308
        %v2341 = vpack.c.b16 %v2311, %v2310
        %v2342 = vpack.c.b16 %v2313, %v2312
        %v2343 = vpack.c.b16 %v2315, %v2314
        %v2344 = vpack.c.b16 %v2317, %v2316
        %v2345 = vpack.c.b16 %v2319, %v2318
        %v2346 = vpack.c.b16 %v2321, %v2320
        %v2347 = vpack.c.b16 %v2323, %v2322
        %v2348 = vpack.c.b16 %v2325, %v2324
        %v2349 = vpack.c.b16 %v2327, %v2326
        %v2350 = vpack.c.b16 %v2329, %v2328
        %v2351 = vpack.c.b16 %v2331, %v2330
        %v2352 = vpack.c.b16 %v2333, %v2332
        %v2353 = vpack.c.b16 %v2335, %v2334
        %v2354 = vpack.c.b16 %v2337, %v2336
        %v2355 = vpack.c.b16 %v2339, %v2338
        %v2357 = vsel %vm725, %v2340, 0
        %v2360 = vsel %vm725, %v2341, 0
        %v2363 = vsel %vm725, %v2342, 0
        %v2366 = vsel %vm725, %v2343, 0
        %v2369 = vsel %vm725, %v2344, 0
        %v2372 = vsel %vm725, %v2345, 0
        %v2375 = vsel %vm725, %v2346, 0
        %v2378 = vsel %vm725, %v2347, 0
        %v2381 = vsel %vm725, %v2348, 0
        %v2384 = vsel %vm725, %v2349, 0
        %v2387 = vsel %vm725, %v2350, 0
        %v2390 = vsel %vm725, %v2351, 0
        %v2393 = vsel %vm725, %v2352, 0
        %v2396 = vsel %vm725, %v2353, 0
        %v2399 = vsel %vm725, %v2354, 0
        %v2402 = vsel %vm725, %v2355, 0
        %v2405 = vsel %vm774, %v2307, 0
        %2407 = vmatprep.subr.bf16.mxu0 0
        %2408 = vmatpush1.bf16.msra.mxu0 %v2405
        %2409 = vmatprep.subr.bf16.mxu0 0
        %2410 = vmatpush1.bf16.msra.mxu0 0
        %2411 = vmatprep.subr.bf16.mxu0 0
        %2412 = vmatpush1.bf16.msra.mxu0 0
        %2413 = vmatprep.subr.bf16.mxu0 0
        %2414 = vmatpush1.bf16.msra.mxu0 0
        %2415 = vmatprep.subr.bf16.mxu0 0
        %2416 = vmatpush1.bf16.msra.mxu0 0
        %2417 = vmatprep.subr.bf16.mxu0 0
        %2418 = vmatpush1.bf16.msra.mxu0 0
        %2419 = vmatprep.subr.bf16.mxu0 0
        %2420 = vmatpush1.bf16.msra.mxu0 0
        %2421 = vmatprep.subr.bf16.mxu0 0
        %2422 = vmatpush1.bf16.msra.mxu0 0
        %2423 = vmatprep.subr.bf16.mxu0 0
        %2424 = vmatpush1.bf16.msra.mxu0 0
        %2425 = vmatprep.subr.bf16.mxu0 0
        %2426 = vmatpush1.bf16.msra.mxu0 0
        %2427 = vmatprep.subr.bf16.mxu0 0
        %2428 = vmatpush1.bf16.msra.mxu0 0
        %2429 = vmatprep.subr.bf16.mxu0 0
        %2430 = vmatpush1.bf16.msra.mxu0 0
        %2431 = vmatprep.subr.bf16.mxu0 0
        %2432 = vmatpush1.bf16.msra.mxu0 0
        %2433 = vmatprep.subr.bf16.mxu0 0
        %2434 = vmatpush1.bf16.msra.mxu0 0
        %2435 = vmatprep.subr.bf16.mxu0 0
        %2436 = vmatpush1.bf16.msra.mxu0 0
        %2437 = vmatprep.subr.bf16.mxu0 0
        %2438 = vmatpush1.bf16.msra.mxu0 0
        %2439 = vmatprep.mubr.bf16.mxu0 0
        %2440 = vmatmul.mubr.bf16.gmra.mrb[0].mxu0 %v2357
        %v2441 = vpop.f32.mrb[0].mxu0
        %v2442 = vadd.f32 0.0, %v2441
        %v2443 = vpop.f32.mrb[0].mxu0
        %v2444 = vpop.f32.mrb[0].mxu0
        %v2445 = vadd.f32 0.0, %v2444
        %v2446 = vpop.f32.mrb[0].mxu0
        %2447 = vmatprep.mubr.bf16.mxu0 0
        %2448 = vmatmul.mubr.bf16.gmra.mrb[0].mxu0 %v2360
        %v2449 = vpop.f32.mrb[0].mxu0
        %v2450 = vadd.f32 0.0, %v2449
        %v2451 = vpop.f32.mrb[0].mxu0
        %v2452 = vpop.f32.mrb[0].mxu0
        %v2453 = vadd.f32 0.0, %v2452
        %v2454 = vpop.f32.mrb[0].mxu0
        %2455 = vmatprep.mubr.bf16.mxu0 0
        %2456 = vmatmul.mubr.bf16.gmra.mrb[0].mxu0 %v2363
        %v2457 = vpop.f32.mrb[0].mxu0
        %v2458 = vadd.f32 0.0, %v2457
        %v2459 = vpop.f32.mrb[0].mxu0
        %v2460 = vpop.f32.mrb[0].mxu0
        %v2461 = vadd.f32 0.0, %v2460
        %v2462 = vpop.f32.mrb[0].mxu0
        %2463 = vmatprep.mubr.bf16.mxu0 0
        %2464 = vmatmul.mubr.bf16.gmra.mrb[0].mxu0 %v2366
        %v2465 = vpop.f32.mrb[0].mxu0
        %v2466 = vadd.f32 0.0, %v2465
        %v2467 = vpop.f32.mrb[0].mxu0
        %v2468 = vpop.f32.mrb[0].mxu0
        %v2469 = vadd.f32 0.0, %v2468
        %v2470 = vpop.f32.mrb[0].mxu0
        %2471 = vmatprep.mubr.bf16.mxu0 0
        %2472 = vmatmul.mubr.bf16.gmra.mrb[0].mxu0 %v2369
        %v2473 = vpop.f32.mrb[0].mxu0
        %v2474 = vadd.f32 0.0, %v2473
        %v2475 = vpop.f32.mrb[0].mxu0
        %v2476 = vpop.f32.mrb[0].mxu0
        %v2477 = vadd.f32 0.0, %v2476
        %v2478 = vpop.f32.mrb[0].mxu0
        %2479 = vmatprep.mubr.bf16.mxu0 0
        %2480 = vmatmul.mubr.bf16.gmra.mrb[0].mxu0 %v2372
        %v2481 = vpop.f32.mrb[0].mxu0
        %v2482 = vadd.f32 0.0, %v2481
        %v2483 = vpop.f32.mrb[0].mxu0
        %v2484 = vpop.f32.mrb[0].mxu0
        %v2485 = vadd.f32 0.0, %v2484
        %v2486 = vpop.f32.mrb[0].mxu0
        %2487 = vmatprep.mubr.bf16.mxu0 0
        %2488 = vmatmul.mubr.bf16.gmra.mrb[0].mxu0 %v2375
        %v2489 = vpop.f32.mrb[0].mxu0
        %v2490 = vadd.f32 0.0, %v2489
        %v2491 = vpop.f32.mrb[0].mxu0
        %v2492 = vpop.f32.mrb[0].mxu0
        %v2493 = vadd.f32 0.0, %v2492
        %v2494 = vpop.f32.mrb[0].mxu0
        %2495 = vmatprep.mubr.bf16.mxu0 0
        %2496 = vmatmul.mubr.bf16.gmra.mrb[0].mxu0 %v2378
        %v2497 = vpop.f32.mrb[0].mxu0
        %v2498 = vadd.f32 0.0, %v2497
        %v2499 = vpop.f32.mrb[0].mxu0
        %v2500 = vpop.f32.mrb[0].mxu0
        %v2501 = vadd.f32 0.0, %v2500
        %v2502 = vpop.f32.mrb[0].mxu0
        %2503 = vmatprep.mubr.bf16.mxu0 0
        %2504 = vmatmul.mubr.bf16.gmra.mrb[0].mxu0 %v2381
        %v2505 = vpop.f32.mrb[0].mxu0
        %v2506 = vadd.f32 0.0, %v2505
        %v2507 = vpop.f32.mrb[0].mxu0
        %v2508 = vpop.f32.mrb[0].mxu0
        %v2509 = vadd.f32 0.0, %v2508
        %v2510 = vpop.f32.mrb[0].mxu0
        %2511 = vmatprep.mubr.bf16.mxu0 0
        %2512 = vmatmul.mubr.bf16.gmra.mrb[0].mxu0 %v2384
        %v2513 = vpop.f32.mrb[0].mxu0
        %v2514 = vadd.f32 0.0, %v2513
        %v2515 = vpop.f32.mrb[0].mxu0
        %v2516 = vpop.f32.mrb[0].mxu0
        %v2517 = vadd.f32 0.0, %v2516
        %v2518 = vpop.f32.mrb[0].mxu0
        %2519 = vmatprep.mubr.bf16.mxu0 0
        %2520 = vmatmul.mubr.bf16.gmra.mrb[0].mxu0 %v2387
        %v2521 = vpop.f32.mrb[0].mxu0
        %v2522 = vadd.f32 0.0, %v2521
        %v2523 = vpop.f32.mrb[0].mxu0
        %v2524 = vpop.f32.mrb[0].mxu0
        %v2525 = vadd.f32 0.0, %v2524
        %v2526 = vpop.f32.mrb[0].mxu0
        %2527 = vmatprep.mubr.bf16.mxu0 0
        %2528 = vmatmul.mubr.bf16.gmra.mrb[0].mxu0 %v2390
        %v2529 = vpop.f32.mrb[0].mxu0
        %v2530 = vadd.f32 0.0, %v2529
        %v2531 = vpop.f32.mrb[0].mxu0
        %v2532 = vpop.f32.mrb[0].mxu0
        %v2533 = vadd.f32 0.0, %v2532
        %v2534 = vpop.f32.mrb[0].mxu0
        %2535 = vmatprep.mubr.bf16.mxu0 0
        %2536 = vmatmul.mubr.bf16.gmra.mrb[0].mxu0 %v2393
        %v2537 = vpop.f32.mrb[0].mxu0
        %v2538 = vadd.f32 0.0, %v2537
        %v2539 = vpop.f32.mrb[0].mxu0
        %v2540 = vpop.f32.mrb[0].mxu0
        %v2541 = vadd.f32 0.0, %v2540
        %v2542 = vpop.f32.mrb[0].mxu0
        %2543 = vmatprep.mubr.bf16.mxu0 0
        %2544 = vmatmul.mubr.bf16.gmra.mrb[0].mxu0 %v2396
        %v2545 = vpop.f32.mrb[0].mxu0
        %v2546 = vadd.f32 0.0, %v2545
        %v2547 = vpop.f32.mrb[0].mxu0
        %v2548 = vpop.f32.mrb[0].mxu0
        %v2549 = vadd.f32 0.0, %v2548
        %v2550 = vpop.f32.mrb[0].mxu0
        %2551 = vmatprep.mubr.bf16.mxu0 0
        %2552 = vmatmul.mubr.bf16.gmra.mrb[0].mxu0 %v2399
        %v2553 = vpop.f32.mrb[0].mxu0
        %v2554 = vadd.f32 0.0, %v2553
        %v2555 = vpop.f32.mrb[0].mxu0
        %v2556 = vpop.f32.mrb[0].mxu0
        %v2557 = vadd.f32 0.0, %v2556
        %v2558 = vpop.f32.mrb[0].mxu0
        %2559 = vmatprep.mubr.bf16.mxu0 0
        %2560 = vmatmul.mubr.bf16.gmra.mrb[0].mxu0 %v2402
        %v2561 = vpop.f32.mrb[0].mxu0
        %v2562 = vadd.f32 0.0, %v2561
        %v2563 = vpop.f32.mrb[0].mxu0
        %v2564 = vpop.f32.mrb[0].mxu0
        %v2565 = vadd.f32 0.0, %v2564
        %v2566 = vpop.f32.mrb[0].mxu0
        %2567 = vdwg.mxu0
        %v2600 = vunpack.c.l.b16 %v1870
        %v2601 = vunpack.c.l.b16 %v1871
        %v2602 = vunpack.c.l.b16 %v1872
        %v2603 = vunpack.c.l.b16 %v1873
        %v2604 = vunpack.c.l.b16 %v1874
        %v2605 = vunpack.c.l.b16 %v1875
        %v2606 = vunpack.c.l.b16 %v1876
        %v2607 = vunpack.c.l.b16 %v1877
        %v2608 = vunpack.c.l.b16 %v1878
        %v2609 = vunpack.c.l.b16 %v1879
        %v2610 = vunpack.c.l.b16 %v1880
        %v2611 = vunpack.c.l.b16 %v1881
        %v2612 = vunpack.c.l.b16 %v1882
        %v2613 = vunpack.c.l.b16 %v1883
        %v2614 = vunpack.c.l.b16 %v1884
        %v2615 = vunpack.c.l.b16 %v1885
        %v2616 = vunpack.c.l.b16 %v1886
        %v2617 = vunpack.c.l.b16 %v1887
        %v2618 = vunpack.c.l.b16 %v1888
        %v2619 = vunpack.c.l.b16 %v1889
        %v2620 = vunpack.c.l.b16 %v1890
        %v2621 = vunpack.c.l.b16 %v1891
        %v2622 = vunpack.c.l.b16 %v1892
        %v2623 = vunpack.c.l.b16 %v1893
        %v2624 = vunpack.c.l.b16 %v1894
        %v2625 = vunpack.c.l.b16 %v1895
        %v2626 = vunpack.c.l.b16 %v1896
        %v2627 = vunpack.c.l.b16 %v1897
        %v2628 = vunpack.c.l.b16 %v1898
        %v2629 = vunpack.c.l.b16 %v1899
        %v2630 = vunpack.c.l.b16 %v1900
        %v2631 = vunpack.c.l.b16 %v1901
        %v2632 = vpack.c.b16 %v2601, %v2600
        %v2633 = vpack.c.b16 %v2603, %v2602
        %v2634 = vpack.c.b16 %v2605, %v2604
        %v2635 = vpack.c.b16 %v2607, %v2606
        %v2636 = vpack.c.b16 %v2609, %v2608
        %v2637 = vpack.c.b16 %v2611, %v2610
        %v2638 = vpack.c.b16 %v2613, %v2612
        %v2639 = vpack.c.b16 %v2615, %v2614
        %v2640 = vpack.c.b16 %v2617, %v2616
        %v2641 = vpack.c.b16 %v2619, %v2618
        %v2642 = vpack.c.b16 %v2621, %v2620
        %v2643 = vpack.c.b16 %v2623, %v2622
        %v2644 = vpack.c.b16 %v2625, %v2624
        %v2645 = vpack.c.b16 %v2627, %v2626
        %v2646 = vpack.c.b16 %v2629, %v2628
        %v2647 = vpack.c.b16 %v2631, %v2630
        %v2649 = vsel %vm725, %v2632, 0
        %v2652 = vsel %vm725, %v2633, 0
        %v2655 = vsel %vm725, %v2634, 0
        %v2658 = vsel %vm725, %v2635, 0
        %v2661 = vsel %vm725, %v2636, 0
        %v2664 = vsel %vm725, %v2637, 0
        %v2667 = vsel %vm725, %v2638, 0
        %v2670 = vsel %vm725, %v2639, 0
        %v2673 = vsel %vm725, %v2640, 0
        %v2676 = vsel %vm725, %v2641, 0
        %v2679 = vsel %vm725, %v2642, 0
        %v2682 = vsel %vm725, %v2643, 0
        %v2685 = vsel %vm725, %v2644, 0
        %v2688 = vsel %vm725, %v2645, 0
        %v2691 = vsel %vm725, %v2646, 0
        %v2694 = vsel %vm725, %v2647, 0
        %v2697 = vsel %vm774, %v1902, 0
        %2699 = vmatprep.subr.bf16.mxu0 0
        %2700 = vmatpush1.bf16.msra.mxu0 %v2697
        %2701 = vmatprep.subr.bf16.mxu0 0
        %2702 = vmatpush1.bf16.msra.mxu0 0
        %2703 = vmatprep.subr.bf16.mxu0 0
        %2704 = vmatpush1.bf16.msra.mxu0 0
        %2705 = vmatprep.subr.bf16.mxu0 0
        %2706 = vmatpush1.bf16.msra.mxu0 0
        %2707 = vmatprep.subr.bf16.mxu0 0
        %2708 = vmatpush1.bf16.msra.mxu0 0
        %2709 = vmatprep.subr.bf16.mxu0 0
        %2710 = vmatpush1.bf16.msra.mxu0 0
        %2711 = vmatprep.subr.bf16.mxu0 0
        %2712 = vmatpush1.bf16.msra.mxu0 0
        %2713 = vmatprep.subr.bf16.mxu0 0
        %2714 = vmatpush1.bf16.msra.mxu0 0
        %2715 = vmatprep.subr.bf16.mxu0 0
        %2716 = vmatpush1.bf16.msra.mxu0 0
        %2717 = vmatprep.subr.bf16.mxu0 0
        %2718 = vmatpush1.bf16.msra.mxu0 0
        %2719 = vmatprep.subr.bf16.mxu0 0
        %2720 = vmatpush1.bf16.msra.mxu0 0
        %2721 = vmatprep.subr.bf16.mxu0 0
        %2722 = vmatpush1.bf16.msra.mxu0 0
        %2723 = vmatprep.subr.bf16.mxu0 0
        %2724 = vmatpush1.bf16.msra.mxu0 0
        %2725 = vmatprep.subr.bf16.mxu0 0
        %2726 = vmatpush1.bf16.msra.mxu0 0
        %2727 = vmatprep.subr.bf16.mxu0 0
        %2728 = vmatpush1.bf16.msra.mxu0 0
        %2729 = vmatprep.subr.bf16.mxu0 0
        %2730 = vmatpush1.bf16.msra.mxu0 0
        %2731 = vmatprep.mubr.bf16.mxu0 0
        %2732 = vmatmul.mubr.bf16.gmra.mrb[0].mxu0 %v2649
        %v2733 = vpop.f32.mrb[0].mxu0
        %v2734 = vadd.f32 %v2442, %v2733
        %v2735 = vpop.f32.mrb[0].mxu0
        %v2736 = vpop.f32.mrb[0].mxu0
        %v2737 = vadd.f32 %v2445, %v2736
        %v2738 = vpop.f32.mrb[0].mxu0
        %2739 = vmatprep.mubr.bf16.mxu0 0
        %2740 = vmatmul.mubr.bf16.gmra.mrb[0].mxu0 %v2652
        %v2741 = vpop.f32.mrb[0].mxu0
        %v2742 = vadd.f32 %v2450, %v2741
        %v2743 = vpop.f32.mrb[0].mxu0
        %v2744 = vpop.f32.mrb[0].mxu0
        %v2745 = vadd.f32 %v2453, %v2744
        %v2746 = vpop.f32.mrb[0].mxu0
        %2747 = vmatprep.mubr.bf16.mxu0 0
        %2748 = vmatmul.mubr.bf16.gmra.mrb[0].mxu0 %v2655
        %v2749 = vpop.f32.mrb[0].mxu0
        %v2750 = vadd.f32 %v2458, %v2749
        %v2751 = vpop.f32.mrb[0].mxu0
        %v2752 = vpop.f32.mrb[0].mxu0
        %v2753 = vadd.f32 %v2461, %v2752
        %v2754 = vpop.f32.mrb[0].mxu0
        %2755 = vmatprep.mubr.bf16.mxu0 0
        %2756 = vmatmul.mubr.bf16.gmra.mrb[0].mxu0 %v2658
        %v2757 = vpop.f32.mrb[0].mxu0
        %v2758 = vadd.f32 %v2466, %v2757
        %v2759 = vpop.f32.mrb[0].mxu0
        %v2760 = vpop.f32.mrb[0].mxu0
        %v2761 = vadd.f32 %v2469, %v2760
        %v2762 = vpop.f32.mrb[0].mxu0
        %2763 = vmatprep.mubr.bf16.mxu0 0
        %2764 = vmatmul.mubr.bf16.gmra.mrb[0].mxu0 %v2661
        %v2765 = vpop.f32.mrb[0].mxu0
        %v2766 = vadd.f32 %v2474, %v2765
        %v2767 = vpop.f32.mrb[0].mxu0
        %v2768 = vpop.f32.mrb[0].mxu0
        %v2769 = vadd.f32 %v2477, %v2768
        %v2770 = vpop.f32.mrb[0].mxu0
        %2771 = vmatprep.mubr.bf16.mxu0 0
        %2772 = vmatmul.mubr.bf16.gmra.mrb[0].mxu0 %v2664
        %v2773 = vpop.f32.mrb[0].mxu0
        %v2774 = vadd.f32 %v2482, %v2773
        %v2775 = vpop.f32.mrb[0].mxu0
        %v2776 = vpop.f32.mrb[0].mxu0
        %v2777 = vadd.f32 %v2485, %v2776
        %v2778 = vpop.f32.mrb[0].mxu0
        %2779 = vmatprep.mubr.bf16.mxu0 0
        %2780 = vmatmul.mubr.bf16.gmra.mrb[0].mxu0 %v2667
        %v2781 = vpop.f32.mrb[0].mxu0
        %v2782 = vadd.f32 %v2490, %v2781
        %v2783 = vpop.f32.mrb[0].mxu0
        %v2784 = vpop.f32.mrb[0].mxu0
        %v2785 = vadd.f32 %v2493, %v2784
        %v2786 = vpop.f32.mrb[0].mxu0
        %2787 = vmatprep.mubr.bf16.mxu0 0
        %2788 = vmatmul.mubr.bf16.gmra.mrb[0].mxu0 %v2670
        %v2789 = vpop.f32.mrb[0].mxu0
        %v2790 = vadd.f32 %v2498, %v2789
        %v2791 = vpop.f32.mrb[0].mxu0
        %v2792 = vpop.f32.mrb[0].mxu0
        %v2793 = vadd.f32 %v2501, %v2792
        %v2794 = vpop.f32.mrb[0].mxu0
        %2795 = vmatprep.mubr.bf16.mxu0 0
        %2796 = vmatmul.mubr.bf16.gmra.mrb[0].mxu0 %v2673
        %v2797 = vpop.f32.mrb[0].mxu0
        %v2798 = vadd.f32 %v2506, %v2797
        %v2799 = vpop.f32.mrb[0].mxu0
        %v2800 = vpop.f32.mrb[0].mxu0
        %v2801 = vadd.f32 %v2509, %v2800
        %v2802 = vpop.f32.mrb[0].mxu0
        %2803 = vmatprep.mubr.bf16.mxu0 0
        %2804 = vmatmul.mubr.bf16.gmra.mrb[0].mxu0 %v2676
        %v2805 = vpop.f32.mrb[0].mxu0
        %v2806 = vadd.f32 %v2514, %v2805
        %v2807 = vpop.f32.mrb[0].mxu0
        %v2808 = vpop.f32.mrb[0].mxu0
        %v2809 = vadd.f32 %v2517, %v2808
        %v2810 = vpop.f32.mrb[0].mxu0
        %2811 = vmatprep.mubr.bf16.mxu0 0
        %2812 = vmatmul.mubr.bf16.gmra.mrb[0].mxu0 %v2679
        %v2813 = vpop.f32.mrb[0].mxu0
        %v2814 = vadd.f32 %v2522, %v2813
        %v2815 = vpop.f32.mrb[0].mxu0
        %v2816 = vpop.f32.mrb[0].mxu0
        %v2817 = vadd.f32 %v2525, %v2816
        %v2818 = vpop.f32.mrb[0].mxu0
        %2819 = vmatprep.mubr.bf16.mxu0 0
        %2820 = vmatmul.mubr.bf16.gmra.mrb[0].mxu0 %v2682
        %v2821 = vpop.f32.mrb[0].mxu0
        %v2822 = vadd.f32 %v2530, %v2821
        %v2823 = vpop.f32.mrb[0].mxu0
        %v2824 = vpop.f32.mrb[0].mxu0
        %v2825 = vadd.f32 %v2533, %v2824
        %v2826 = vpop.f32.mrb[0].mxu0
        %2827 = vmatprep.mubr.bf16.mxu0 0
        %2828 = vmatmul.mubr.bf16.gmra.mrb[0].mxu0 %v2685
        %v2829 = vpop.f32.mrb[0].mxu0
        %v2830 = vadd.f32 %v2538, %v2829
        %v2831 = vpop.f32.mrb[0].mxu0
        %v2832 = vpop.f32.mrb[0].mxu0
        %v2833 = vadd.f32 %v2541, %v2832
        %v2834 = vpop.f32.mrb[0].mxu0
        %2835 = vmatprep.mubr.bf16.mxu0 0
        %2836 = vmatmul.mubr.bf16.gmra.mrb[0].mxu0 %v2688
        %v2837 = vpop.f32.mrb[0].mxu0
        %v2838 = vadd.f32 %v2546, %v2837
        %v2839 = vpop.f32.mrb[0].mxu0
        %v2840 = vpop.f32.mrb[0].mxu0
        %v2841 = vadd.f32 %v2549, %v2840
        %v2842 = vpop.f32.mrb[0].mxu0
        %2843 = vmatprep.mubr.bf16.mxu0 0
        %2844 = vmatmul.mubr.bf16.gmra.mrb[0].mxu0 %v2691
        %v2845 = vpop.f32.mrb[0].mxu0
        %v2846 = vadd.f32 %v2554, %v2845
        %v2847 = vpop.f32.mrb[0].mxu0
        %v2848 = vpop.f32.mrb[0].mxu0
        %v2849 = vadd.f32 %v2557, %v2848
        %v2850 = vpop.f32.mrb[0].mxu0
        %2851 = vmatprep.mubr.bf16.mxu0 0
        %2852 = vmatmul.mubr.bf16.gmra.mrb[0].mxu0 %v2694
        %v2853 = vpop.f32.mrb[0].mxu0
        %v2854 = vadd.f32 %v2562, %v2853
        %v2855 = vpop.f32.mrb[0].mxu0
        %v2856 = vpop.f32.mrb[0].mxu0
        %v2857 = vadd.f32 %v2565, %v2856
        %v2858 = vpop.f32.mrb[0].mxu0
        %2859 = vdwg.mxu0
        %v2860 = vld [vmem:[#allocation2] sm:$0xe]
        %v2861 = vld [vmem:[#allocation2 + $0xc] sm:$0xe]
        %v2862 = vld [vmem:[#allocation2 + $0x18] sm:$0xe]
        %v2863 = vld [vmem:[#allocation2 + $0x24] sm:$0xe]
        %v2864 = vld [vmem:[#allocation2 + $0x30] sm:$0xe]
        %v2865 = vld [vmem:[#allocation2 + $0x3c] sm:$0xe]
        %v2866 = vld [vmem:[#allocation2 + $0x48] sm:$0xe]
        %v2867 = vld [vmem:[#allocation2 + $0x54] sm:$0xe]
        %v2868 = vld [vmem:[#allocation2 + $0x60] sm:$0xe]
        %v2869 = vld [vmem:[#allocation2 + $0x6c] sm:$0xe]
        %v2870 = vld [vmem:[#allocation2 + $0x78] sm:$0xe]
        %v2871 = vld [vmem:[#allocation2 + $0x84] sm:$0xe]
        %v2872 = vld [vmem:[#allocation2 + $0x90] sm:$0xe]
        %v2873 = vld [vmem:[#allocation2 + $0x9c] sm:$0xe]
        %v2874 = vld [vmem:[#allocation2 + $0xa8] sm:$0xe]
        %v2875 = vld [vmem:[#allocation2 + $0xb4] sm:$0xe]
        %vm2908 = vcmask 1042432
        %vm2909 = vcmask 1046532
        %vm2910 = vmor %vm2908, %vm2909
        %v2911 = vrot.slane %v2860, 5
        %v2912 = vrot.slane %v2911, 4
        %v2913 = vrot.slane %v1871, 5
        %v2914 = vsel %vm2910, %v2912, %v2913
        %v2915 = vrot.slane %v2913, 4
        %v2916 = vrot.slane %v1903, 5
        %v2917 = vsel %vm2910, %v2915, %v2916
        %v2918 = vrot.slane %v2861, 5
        %v2919 = vrot.slane %v2918, 4
        %v2920 = vrot.slane %v1873, 5
        %v2921 = vsel %vm2910, %v2919, %v2920
        %v2922 = vrot.slane %v2920, 4
        %v2923 = vrot.slane %v1904, 5
        %v2924 = vsel %vm2910, %v2922, %v2923
        %v2925 = vrot.slane %v2862, 5
        %v2926 = vrot.slane %v2925, 4
        %v2927 = vrot.slane %v1875, 5
        %v2928 = vsel %vm2910, %v2926, %v2927
        %v2929 = vrot.slane %v2927, 4
        %v2930 = vrot.slane %v1905, 5
        %v2931 = vsel %vm2910, %v2929, %v2930
        %v2932 = vrot.slane %v2863, 5
        %v2933 = vrot.slane %v2932, 4
        %v2934 = vrot.slane %v1877, 5
        %v2935 = vsel %vm2910, %v2933, %v2934
        %v2936 = vrot.slane %v2934, 4
        %v2937 = vrot.slane %v1906, 5
        %v2938 = vsel %vm2910, %v2936, %v2937
        %v2939 = vrot.slane %v2864, 5
        %v2940 = vrot.slane %v2939, 4
        %v2941 = vrot.slane %v1879, 5
        %v2942 = vsel %vm2910, %v2940, %v2941
        %v2943 = vrot.slane %v2941, 4
        %v2944 = vrot.slane %v1907, 5
        %v2945 = vsel %vm2910, %v2943, %v2944
        %v2946 = vrot.slane %v2865, 5
        %v2947 = vrot.slane %v2946, 4
        %v2948 = vrot.slane %v1881, 5
        %v2949 = vsel %vm2910, %v2947, %v2948
        %v2950 = vrot.slane %v2948, 4
        %v2951 = vrot.slane %v1908, 5
        %v2952 = vsel %vm2910, %v2950, %v2951
        %v2953 = vrot.slane %v2866, 5
        %v2954 = vrot.slane %v2953, 4
        %v2955 = vrot.slane %v1883, 5
        %v2956 = vsel %vm2910, %v2954, %v2955
        %v2957 = vrot.slane %v2955, 4
        %v2958 = vrot.slane %v1909, 5
        %v2959 = vsel %vm2910, %v2957, %v2958
        %v2960 = vrot.slane %v2867, 5
        %v2961 = vrot.slane %v2960, 4
        %v2962 = vrot.slane %v1885, 5
        %v2963 = vsel %vm2910, %v2961, %v2962
        %v2964 = vrot.slane %v2962, 4
        %v2965 = vrot.slane %v1910, 5
        %v2966 = vsel %vm2910, %v2964, %v2965
        %v2967 = vrot.slane %v2868, 5
        %v2968 = vrot.slane %v2967, 4
        %v2969 = vrot.slane %v1887, 5
        %v2970 = vsel %vm2910, %v2968, %v2969
        %v2971 = vrot.slane %v2969, 4
        %v2972 = vrot.slane %v1911, 5
        %v2973 = vsel %vm2910, %v2971, %v2972
        %v2974 = vrot.slane %v2869, 5
        %v2975 = vrot.slane %v2974, 4
        %v2976 = vrot.slane %v1889, 5
        %v2977 = vsel %vm2910, %v2975, %v2976
        %v2978 = vrot.slane %v2976, 4
        %v2979 = vrot.slane %v1912, 5
        %v2980 = vsel %vm2910, %v2978, %v2979
        %v2981 = vrot.slane %v2870, 5
        %v2982 = vrot.slane %v2981, 4
        %v2983 = vrot.slane %v1891, 5
        %v2984 = vsel %vm2910, %v2982, %v2983
        %v2985 = vrot.slane %v2983, 4
        %v2986 = vrot.slane %v1913, 5
        %v2987 = vsel %vm2910, %v2985, %v2986
        %v2988 = vrot.slane %v2871, 5
        %v2989 = vrot.slane %v2988, 4
        %v2990 = vrot.slane %v1893, 5
        %v2991 = vsel %vm2910, %v2989, %v2990
        %v2992 = vrot.slane %v2990, 4
        %v2993 = vrot.slane %v1914, 5
        %v2994 = vsel %vm2910, %v2992, %v2993
        %v2995 = vrot.slane %v2872, 5
        %v2996 = vrot.slane %v2995, 4
        %v2997 = vrot.slane %v1895, 5
        %v2998 = vsel %vm2910, %v2996, %v2997
        %v2999 = vrot.slane %v2997, 4
        %v3000 = vrot.slane %v1915, 5
        %v3001 = vsel %vm2910, %v2999, %v3000
        %v3002 = vrot.slane %v2873, 5
        %v3003 = vrot.slane %v3002, 4
        %v3004 = vrot.slane %v1897, 5
        %v3005 = vsel %vm2910, %v3003, %v3004
        %v3006 = vrot.slane %v3004, 4
        %v3007 = vrot.slane %v1916, 5
        %v3008 = vsel %vm2910, %v3006, %v3007
        %v3009 = vrot.slane %v2874, 5
        %v3010 = vrot.slane %v3009, 4
        %v3011 = vrot.slane %v1899, 5
        %v3012 = vsel %vm2910, %v3010, %v3011
        %v3013 = vrot.slane %v3011, 4
        %v3014 = vrot.slane %v1917, 5
        %v3015 = vsel %vm2910, %v3013, %v3014
        %v3016 = vrot.slane %v2875, 5
        %v3017 = vrot.slane %v3016, 4
        %v3018 = vrot.slane %v1901, 5
        %v3019 = vsel %vm2910, %v3017, %v3018
        %v3020 = vrot.slane %v3018, 4
        %v3021 = vrot.slane %v1918, 5
        %v3022 = vsel %vm2910, %v3020, %v3021
        %s3023 = scalar_lea.vmem [#allocation11], 4
        %v3024 = vld [vmem:[%s3023] sm:$0x3]
        %v3025 = vunpack.c.l.b16 %v2914
        %v3026 = vunpack.c.l.b16 %v2917
        %v3027 = vunpack.c.l.b16 %v2921
        %v3028 = vunpack.c.l.b16 %v2924
        %v3029 = vunpack.c.l.b16 %v2928
        %v3030 = vunpack.c.l.b16 %v2931
        %v3031 = vunpack.c.l.b16 %v2935
        %v3032 = vunpack.c.l.b16 %v2938
        %v3033 = vunpack.c.l.b16 %v2942
        %v3034 = vunpack.c.l.b16 %v2945
        %v3035 = vunpack.c.l.b16 %v2949
        %v3036 = vunpack.c.l.b16 %v2952
        %v3037 = vunpack.c.l.b16 %v2956
        %v3038 = vunpack.c.l.b16 %v2959
        %v3039 = vunpack.c.l.b16 %v2963
        %v3040 = vunpack.c.l.b16 %v2966
        %v3041 = vunpack.c.l.b16 %v2970
        %v3042 = vunpack.c.l.b16 %v2973
        %v3043 = vunpack.c.l.b16 %v2977
        %v3044 = vunpack.c.l.b16 %v2980
        %v3045 = vunpack.c.l.b16 %v2984
        %v3046 = vunpack.c.l.b16 %v2987
        %v3047 = vunpack.c.l.b16 %v2991
        %v3048 = vunpack.c.l.b16 %v2994
        %v3049 = vunpack.c.l.b16 %v2998
        %v3050 = vunpack.c.l.b16 %v3001
        %v3051 = vunpack.c.l.b16 %v3005
        %v3052 = vunpack.c.l.b16 %v3008
        %v3053 = vunpack.c.l.b16 %v3012
        %v3054 = vunpack.c.l.b16 %v3015
        %v3055 = vunpack.c.l.b16 %v3019
        %v3056 = vunpack.c.l.b16 %v3022
        %v3057 = vpack.c.b16 %v3026, %v3025
        %v3058 = vpack.c.b16 %v3028, %v3027
        %v3059 = vpack.c.b16 %v3030, %v3029
        %v3060 = vpack.c.b16 %v3032, %v3031
        %v3061 = vpack.c.b16 %v3034, %v3033
        %v3062 = vpack.c.b16 %v3036, %v3035
        %v3063 = vpack.c.b16 %v3038, %v3037
        %v3064 = vpack.c.b16 %v3040, %v3039
        %v3065 = vpack.c.b16 %v3042, %v3041
        %v3066 = vpack.c.b16 %v3044, %v3043
        %v3067 = vpack.c.b16 %v3046, %v3045
        %v3068 = vpack.c.b16 %v3048, %v3047
        %v3069 = vpack.c.b16 %v3050, %v3049
        %v3070 = vpack.c.b16 %v3052, %v3051
        %v3071 = vpack.c.b16 %v3054, %v3053
        %v3072 = vpack.c.b16 %v3056, %v3055
        %v3074 = vsel %vm725, %v3057, 0
        %v3077 = vsel %vm725, %v3058, 0
        %v3080 = vsel %vm725, %v3059, 0
        %v3083 = vsel %vm725, %v3060, 0
        %v3086 = vsel %vm725, %v3061, 0
        %v3089 = vsel %vm725, %v3062, 0
        %v3092 = vsel %vm725, %v3063, 0
        %v3095 = vsel %vm725, %v3064, 0
        %v3098 = vsel %vm725, %v3065, 0
        %v3101 = vsel %vm725, %v3066, 0
        %v3104 = vsel %vm725, %v3067, 0
        %v3107 = vsel %vm725, %v3068, 0
        %v3110 = vsel %vm725, %v3069, 0
        %v3113 = vsel %vm725, %v3070, 0
        %v3116 = vsel %vm725, %v3071, 0
        %v3119 = vsel %vm725, %v3072, 0
        %v3122 = vsel %vm774, %v3024, 0
        %3124 = vmatprep.subr.bf16.mxu0 0
        %3125 = vmatpush1.bf16.msra.mxu0 %v3122
        %3126 = vmatprep.subr.bf16.mxu0 0
        %3127 = vmatpush1.bf16.msra.mxu0 0
        %3128 = vmatprep.subr.bf16.mxu0 0
        %3129 = vmatpush1.bf16.msra.mxu0 0
        %3130 = vmatprep.subr.bf16.mxu0 0
        %3131 = vmatpush1.bf16.msra.mxu0 0
        %3132 = vmatprep.subr.bf16.mxu0 0
        %3133 = vmatpush1.bf16.msra.mxu0 0
        %3134 = vmatprep.subr.bf16.mxu0 0
        %3135 = vmatpush1.bf16.msra.mxu0 0
        %3136 = vmatprep.subr.bf16.mxu0 0
        %3137 = vmatpush1.bf16.msra.mxu0 0
        %3138 = vmatprep.subr.bf16.mxu0 0
        %3139 = vmatpush1.bf16.msra.mxu0 0
        %3140 = vmatprep.subr.bf16.mxu0 0
        %3141 = vmatpush1.bf16.msra.mxu0 0
        %3142 = vmatprep.subr.bf16.mxu0 0
        %3143 = vmatpush1.bf16.msra.mxu0 0
        %3144 = vmatprep.subr.bf16.mxu0 0
        %3145 = vmatpush1.bf16.msra.mxu0 0
        %3146 = vmatprep.subr.bf16.mxu0 0
        %3147 = vmatpush1.bf16.msra.mxu0 0
        %3148 = vmatprep.subr.bf16.mxu0 0
        %3149 = vmatpush1.bf16.msra.mxu0 0
        %3150 = vmatprep.subr.bf16.mxu0 0
        %3151 = vmatpush1.bf16.msra.mxu0 0
        %3152 = vmatprep.subr.bf16.mxu0 0
        %3153 = vmatpush1.bf16.msra.mxu0 0
        %3154 = vmatprep.subr.bf16.mxu0 0
        %3155 = vmatpush1.bf16.msra.mxu0 0
        %3156 = vmatprep.mubr.bf16.mxu0 0
        %3157 = vmatmul.mubr.bf16.gmra.mrb[0].mxu0 %v3074
        %v3158 = vpop.f32.mrb[0].mxu0
        %v3159 = vadd.f32 0.0, %v3158
        %v3160 = vpop.f32.mrb[0].mxu0
        %v3161 = vpop.f32.mrb[0].mxu0
        %v3162 = vadd.f32 0.0, %v3161
        %v3163 = vpop.f32.mrb[0].mxu0
        %3164 = vmatprep.mubr.bf16.mxu0 0
        %3165 = vmatmul.mubr.bf16.gmra.mrb[0].mxu0 %v3077
        %v3166 = vpop.f32.mrb[0].mxu0
        %v3167 = vadd.f32 0.0, %v3166
        %v3168 = vpop.f32.mrb[0].mxu0
        %v3169 = vpop.f32.mrb[0].mxu0
        %v3170 = vadd.f32 0.0, %v3169
        %v3171 = vpop.f32.mrb[0].mxu0
        %3172 = vmatprep.mubr.bf16.mxu0 0
        %3173 = vmatmul.mubr.bf16.gmra.mrb[0].mxu0 %v3080
        %v3174 = vpop.f32.mrb[0].mxu0
        %v3175 = vadd.f32 0.0, %v3174
        %v3176 = vpop.f32.mrb[0].mxu0
        %v3177 = vpop.f32.mrb[0].mxu0
        %v3178 = vadd.f32 0.0, %v3177
        %v3179 = vpop.f32.mrb[0].mxu0
        %3180 = vmatprep.mubr.bf16.mxu0 0
        %3181 = vmatmul.mubr.bf16.gmra.mrb[0].mxu0 %v3083
        %v3182 = vpop.f32.mrb[0].mxu0
        %v3183 = vadd.f32 0.0, %v3182
        %v3184 = vpop.f32.mrb[0].mxu0
        %v3185 = vpop.f32.mrb[0].mxu0
        %v3186 = vadd.f32 0.0, %v3185
        %v3187 = vpop.f32.mrb[0].mxu0
        %3188 = vmatprep.mubr.bf16.mxu0 0
        %3189 = vmatmul.mubr.bf16.gmra.mrb[0].mxu0 %v3086
        %v3190 = vpop.f32.mrb[0].mxu0
        %v3191 = vadd.f32 0.0, %v3190
        %v3192 = vpop.f32.mrb[0].mxu0
        %v3193 = vpop.f32.mrb[0].mxu0
        %v3194 = vadd.f32 0.0, %v3193
        %v3195 = vpop.f32.mrb[0].mxu0
        %3196 = vmatprep.mubr.bf16.mxu0 0
        %3197 = vmatmul.mubr.bf16.gmra.mrb[0].mxu0 %v3089
        %v3198 = vpop.f32.mrb[0].mxu0
        %v3199 = vadd.f32 0.0, %v3198
        %v3200 = vpop.f32.mrb[0].mxu0
        %v3201 = vpop.f32.mrb[0].mxu0
        %v3202 = vadd.f32 0.0, %v3201
        %v3203 = vpop.f32.mrb[0].mxu0
        %3204 = vmatprep.mubr.bf16.mxu0 0
        %3205 = vmatmul.mubr.bf16.gmra.mrb[0].mxu0 %v3092
        %v3206 = vpop.f32.mrb[0].mxu0
        %v3207 = vadd.f32 0.0, %v3206
        %v3208 = vpop.f32.mrb[0].mxu0
        %v3209 = vpop.f32.mrb[0].mxu0
        %v3210 = vadd.f32 0.0, %v3209
        %v3211 = vpop.f32.mrb[0].mxu0
        %3212 = vmatprep.mubr.bf16.mxu0 0
        %3213 = vmatmul.mubr.bf16.gmra.mrb[0].mxu0 %v3095
        %v3214 = vpop.f32.mrb[0].mxu0
        %v3215 = vadd.f32 0.0, %v3214
        %v3216 = vpop.f32.mrb[0].mxu0
        %v3217 = vpop.f32.mrb[0].mxu0
        %v3218 = vadd.f32 0.0, %v3217
        %v3219 = vpop.f32.mrb[0].mxu0
        %3220 = vmatprep.mubr.bf16.mxu0 0
        %3221 = vmatmul.mubr.bf16.gmra.mrb[0].mxu0 %v3098
        %v3222 = vpop.f32.mrb[0].mxu0
        %v3223 = vadd.f32 0.0, %v3222
        %v3224 = vpop.f32.mrb[0].mxu0
        %v3225 = vpop.f32.mrb[0].mxu0
        %v3226 = vadd.f32 0.0, %v3225
        %v3227 = vpop.f32.mrb[0].mxu0
        %3228 = vmatprep.mubr.bf16.mxu0 0
        %3229 = vmatmul.mubr.bf16.gmra.mrb[0].mxu0 %v3101
        %v3230 = vpop.f32.mrb[0].mxu0
        %v3231 = vadd.f32 0.0, %v3230
        %v3232 = vpop.f32.mrb[0].mxu0
        %v3233 = vpop.f32.mrb[0].mxu0
        %v3234 = vadd.f32 0.0, %v3233
        %v3235 = vpop.f32.mrb[0].mxu0
        %3236 = vmatprep.mubr.bf16.mxu0 0
        %3237 = vmatmul.mubr.bf16.gmra.mrb[0].mxu0 %v3104
        %v3238 = vpop.f32.mrb[0].mxu0
        %v3239 = vadd.f32 0.0, %v3238
        %v3240 = vpop.f32.mrb[0].mxu0
        %v3241 = vpop.f32.mrb[0].mxu0
        %v3242 = vadd.f32 0.0, %v3241
        %v3243 = vpop.f32.mrb[0].mxu0
        %3244 = vmatprep.mubr.bf16.mxu0 0
        %3245 = vmatmul.mubr.bf16.gmra.mrb[0].mxu0 %v3107
        %v3246 = vpop.f32.mrb[0].mxu0
        %v3247 = vadd.f32 0.0, %v3246
        %v3248 = vpop.f32.mrb[0].mxu0
        %v3249 = vpop.f32.mrb[0].mxu0
        %v3250 = vadd.f32 0.0, %v3249
        %v3251 = vpop.f32.mrb[0].mxu0
        %3252 = vmatprep.mubr.bf16.mxu0 0
        %3253 = vmatmul.mubr.bf16.gmra.mrb[0].mxu0 %v3110
        %v3254 = vpop.f32.mrb[0].mxu0
        %v3255 = vadd.f32 0.0, %v3254
        %v3256 = vpop.f32.mrb[0].mxu0
        %v3257 = vpop.f32.mrb[0].mxu0
        %v3258 = vadd.f32 0.0, %v3257
        %v3259 = vpop.f32.mrb[0].mxu0
        %3260 = vmatprep.mubr.bf16.mxu0 0
        %3261 = vmatmul.mubr.bf16.gmra.mrb[0].mxu0 %v3113
        %v3262 = vpop.f32.mrb[0].mxu0
        %v3263 = vadd.f32 0.0, %v3262
        %v3264 = vpop.f32.mrb[0].mxu0
        %v3265 = vpop.f32.mrb[0].mxu0
        %v3266 = vadd.f32 0.0, %v3265
        %v3267 = vpop.f32.mrb[0].mxu0
        %3268 = vmatprep.mubr.bf16.mxu0 0
        %3269 = vmatmul.mubr.bf16.gmra.mrb[0].mxu0 %v3116
        %v3270 = vpop.f32.mrb[0].mxu0
        %v3271 = vadd.f32 0.0, %v3270
        %v3272 = vpop.f32.mrb[0].mxu0
        %v3273 = vpop.f32.mrb[0].mxu0
        %v3274 = vadd.f32 0.0, %v3273
        %v3275 = vpop.f32.mrb[0].mxu0
        %3276 = vmatprep.mubr.bf16.mxu0 0
        %3277 = vmatmul.mubr.bf16.gmra.mrb[0].mxu0 %v3119
        %v3278 = vpop.f32.mrb[0].mxu0
        %v3279 = vadd.f32 0.0, %v3278
        %v3280 = vpop.f32.mrb[0].mxu0
        %v3281 = vpop.f32.mrb[0].mxu0
        %v3282 = vadd.f32 0.0, %v3281
        %v3283 = vpop.f32.mrb[0].mxu0
        %3284 = vdwg.mxu0
        %v3285 = vadd.f32 %v2734, %v3159
        %v3286 = vadd.f32 %v2737, %v3162
        %v3287 = vadd.f32 %v2742, %v3167
        %v3288 = vadd.f32 %v2745, %v3170
        %v3289 = vadd.f32 %v2750, %v3175
        %v3290 = vadd.f32 %v2753, %v3178
        %v3291 = vadd.f32 %v2758, %v3183
        %v3292 = vadd.f32 %v2761, %v3186
        %v3293 = vadd.f32 %v2766, %v3191
        %v3294 = vadd.f32 %v2769, %v3194
        %v3295 = vadd.f32 %v2774, %v3199
        %v3296 = vadd.f32 %v2777, %v3202
        %v3297 = vadd.f32 %v2782, %v3207
        %v3298 = vadd.f32 %v2785, %v3210
        %v3299 = vadd.f32 %v2790, %v3215
        %v3300 = vadd.f32 %v2793, %v3218
        %v3301 = vadd.f32 %v2798, %v3223
        %v3302 = vadd.f32 %v2801, %v3226
        %v3303 = vadd.f32 %v2806, %v3231
        %v3304 = vadd.f32 %v2809, %v3234
        %v3305 = vadd.f32 %v2814, %v3239
        %v3306 = vadd.f32 %v2817, %v3242
        %v3307 = vadd.f32 %v2822, %v3247
        %v3308 = vadd.f32 %v2825, %v3250
        %v3309 = vadd.f32 %v2830, %v3255
        %v3310 = vadd.f32 %v2833, %v3258
        %v3311 = vadd.f32 %v2838, %v3263
        %v3312 = vadd.f32 %v2841, %v3266
        %v3313 = vadd.f32 %v2846, %v3271
        %v3314 = vadd.f32 %v2849, %v3274
        %v3315 = vadd.f32 %v2854, %v3279
        %v3316 = vadd.f32 %v2857, %v3282
        %v3317 = vld [vmem:[%s1236] sm:$0xf]
        %v3318 = vld [vmem:[%s1236 + $0x4] sm:$0xf]
        %v3319 = vld [vmem:[%s1236 + $0xc] sm:$0xf]
        %v3320 = vld [vmem:[%s1236 + $0x10] sm:$0xf]
        %v3321 = vld [vmem:[%s1236 + $0x18] sm:$0xf]
        %v3322 = vld [vmem:[%s1236 + $0x1c] sm:$0xf]
        %v3323 = vld [vmem:[%s1236 + $0x24] sm:$0xf]
        %v3324 = vld [vmem:[%s1236 + $0x28] sm:$0xf]
        %v3325 = vld [vmem:[%s1236 + $0x30] sm:$0xf]
        %v3326 = vld [vmem:[%s1236 + $0x34] sm:$0xf]
        %v3327 = vld [vmem:[%s1236 + $0x3c] sm:$0xf]
        %v3328 = vld [vmem:[%s1236 + $0x40] sm:$0xf]
        %v3329 = vld [vmem:[%s1236 + $0x48] sm:$0xf]
        %v3330 = vld [vmem:[%s1236 + $0x4c] sm:$0xf]
        %v3331 = vld [vmem:[%s1236 + $0x54] sm:$0xf]
        %v3332 = vld [vmem:[%s1236 + $0x58] sm:$0xf]
        %v3333 = vld [vmem:[%s1236 + $0x60] sm:$0xf]
        %v3334 = vld [vmem:[%s1236 + $0x64] sm:$0xf]
        %v3335 = vld [vmem:[%s1236 + $0x6c] sm:$0xf]
        %v3336 = vld [vmem:[%s1236 + $0x70] sm:$0xf]
        %v3337 = vld [vmem:[%s1236 + $0x78] sm:$0xf]
        %v3338 = vld [vmem:[%s1236 + $0x7c] sm:$0xf]
        %v3339 = vld [vmem:[%s1236 + $0x84] sm:$0xf]
        %v3340 = vld [vmem:[%s1236 + $0x88] sm:$0xf]
        %v3341 = vld [vmem:[%s1236 + $0x90] sm:$0xf]
        %v3342 = vld [vmem:[%s1236 + $0x94] sm:$0xf]
        %v3343 = vld [vmem:[%s1236 + $0x9c] sm:$0xf]
        %v3344 = vld [vmem:[%s1236 + $0xa0] sm:$0xf]
        %v3345 = vld [vmem:[%s1236 + $0xa8] sm:$0xf]
        %v3346 = vld [vmem:[%s1236 + $0xac] sm:$0xf]
        %v3347 = vld [vmem:[%s1236 + $0xb4] sm:$0xf]
        %v3348 = vld [vmem:[%s1236 + $0xb8] sm:$0xf]
        %s3349 = scalar_lea.vmem [#allocation11], 6
        %v3350 = vld [vmem:[%s3349] sm:$0x3]
        %v3383 = vunpack.c.l.b16 %v3317
        %v3384 = vunpack.c.l.b16 %v3318
        %v3385 = vunpack.c.l.b16 %v3319
        %v3386 = vunpack.c.l.b16 %v3320
        %v3387 = vunpack.c.l.b16 %v3321
        %v3388 = vunpack.c.l.b16 %v3322
        %v3389 = vunpack.c.l.b16 %v3323
        %v3390 = vunpack.c.l.b16 %v3324
        %v3391 = vunpack.c.l.b16 %v3325
        %v3392 = vunpack.c.l.b16 %v3326
        %v3393 = vunpack.c.l.b16 %v3327
        %v3394 = vunpack.c.l.b16 %v3328
        %v3395 = vunpack.c.l.b16 %v3329
        %v3396 = vunpack.c.l.b16 %v3330
        %v3397 = vunpack.c.l.b16 %v3331
        %v3398 = vunpack.c.l.b16 %v3332
        %v3399 = vunpack.c.l.b16 %v3333
        %v3400 = vunpack.c.l.b16 %v3334
        %v3401 = vunpack.c.l.b16 %v3335
        %v3402 = vunpack.c.l.b16 %v3336
        %v3403 = vunpack.c.l.b16 %v3337
        %v3404 = vunpack.c.l.b16 %v3338
        %v3405 = vunpack.c.l.b16 %v3339
        %v3406 = vunpack.c.l.b16 %v3340
        %v3407 = vunpack.c.l.b16 %v3341
        %v3408 = vunpack.c.l.b16 %v3342
        %v3409 = vunpack.c.l.b16 %v3343
        %v3410 = vunpack.c.l.b16 %v3344
        %v3411 = vunpack.c.l.b16 %v3345
        %v3412 = vunpack.c.l.b16 %v3346
        %v3413 = vunpack.c.l.b16 %v3347
        %v3414 = vunpack.c.l.b16 %v3348
        %v3415 = vpack.c.b16 %v3384, %v3383
        %v3416 = vpack.c.b16 %v3386, %v3385
        %v3417 = vpack.c.b16 %v3388, %v3387
        %v3418 = vpack.c.b16 %v3390, %v3389
        %v3419 = vpack.c.b16 %v3392, %v3391
        %v3420 = vpack.c.b16 %v3394, %v3393
        %v3421 = vpack.c.b16 %v3396, %v3395
        %v3422 = vpack.c.b16 %v3398, %v3397
        %v3423 = vpack.c.b16 %v3400, %v3399
        %v3424 = vpack.c.b16 %v3402, %v3401
        %v3425 = vpack.c.b16 %v3404, %v3403
        %v3426 = vpack.c.b16 %v3406, %v3405
        %v3427 = vpack.c.b16 %v3408, %v3407
        %v3428 = vpack.c.b16 %v3410, %v3409
        %v3429 = vpack.c.b16 %v3412, %v3411
        %v3430 = vpack.c.b16 %v3414, %v3413
        %v3432 = vsel %vm725, %v3415, 0
        %v3435 = vsel %vm725, %v3416, 0
        %v3438 = vsel %vm725, %v3417, 0
        %v3441 = vsel %vm725, %v3418, 0
        %v3444 = vsel %vm725, %v3419, 0
        %v3447 = vsel %vm725, %v3420, 0
        %v3450 = vsel %vm725, %v3421, 0
        %v3453 = vsel %vm725, %v3422, 0
        %v3456 = vsel %vm725, %v3423, 0
        %v3459 = vsel %vm725, %v3424, 0
        %v3462 = vsel %vm725, %v3425, 0
        %v3465 = vsel %vm725, %v3426, 0
        %v3468 = vsel %vm725, %v3427, 0
        %v3471 = vsel %vm725, %v3428, 0
        %v3474 = vsel %vm725, %v3429, 0
        %v3477 = vsel %vm725, %v3430, 0
        %v3480 = vsel %vm774, %v3350, 0
        %3482 = vmatprep.subr.bf16.mxu0 0
        %3483 = vmatpush1.bf16.msra.mxu0 %v3480
        %3484 = vmatprep.subr.bf16.mxu0 0
        %3485 = vmatpush1.bf16.msra.mxu0 0
        %3486 = vmatprep.subr.bf16.mxu0 0
        %3487 = vmatpush1.bf16.msra.mxu0 0
        %3488 = vmatprep.subr.bf16.mxu0 0
        %3489 = vmatpush1.bf16.msra.mxu0 0
        %3490 = vmatprep.subr.bf16.mxu0 0
        %3491 = vmatpush1.bf16.msra.mxu0 0
        %3492 = vmatprep.subr.bf16.mxu0 0
        %3493 = vmatpush1.bf16.msra.mxu0 0
        %3494 = vmatprep.subr.bf16.mxu0 0
        %3495 = vmatpush1.bf16.msra.mxu0 0
        %3496 = vmatprep.subr.bf16.mxu0 0
        %3497 = vmatpush1.bf16.msra.mxu0 0
        %3498 = vmatprep.subr.bf16.mxu0 0
        %3499 = vmatpush1.bf16.msra.mxu0 0
        %3500 = vmatprep.subr.bf16.mxu0 0
        %3501 = vmatpush1.bf16.msra.mxu0 0
        %3502 = vmatprep.subr.bf16.mxu0 0
        %3503 = vmatpush1.bf16.msra.mxu0 0
        %3504 = vmatprep.subr.bf16.mxu0 0
        %3505 = vmatpush1.bf16.msra.mxu0 0
        %3506 = vmatprep.subr.bf16.mxu0 0
        %3507 = vmatpush1.bf16.msra.mxu0 0
        %3508 = vmatprep.subr.bf16.mxu0 0
        %3509 = vmatpush1.bf16.msra.mxu0 0
        %3510 = vmatprep.subr.bf16.mxu0 0
        %3511 = vmatpush1.bf16.msra.mxu0 0
        %3512 = vmatprep.subr.bf16.mxu0 0
        %3513 = vmatpush1.bf16.msra.mxu0 0
        %3514 = vmatprep.mubr.bf16.mxu0 0
        %3515 = vmatmul.mubr.bf16.gmra.mrb[0].mxu0 %v3432
        %v3516 = vpop.f32.mrb[0].mxu0
        %v3517 = vadd.f32 0.0, %v3516
        %v3518 = vpop.f32.mrb[0].mxu0
        %v3519 = vpop.f32.mrb[0].mxu0
        %v3520 = vadd.f32 0.0, %v3519
        %v3521 = vpop.f32.mrb[0].mxu0
        %3522 = vmatprep.mubr.bf16.mxu0 0
        %3523 = vmatmul.mubr.bf16.gmra.mrb[0].mxu0 %v3435
        %v3524 = vpop.f32.mrb[0].mxu0
        %v3525 = vadd.f32 0.0, %v3524
        %v3526 = vpop.f32.mrb[0].mxu0
        %v3527 = vpop.f32.mrb[0].mxu0
        %v3528 = vadd.f32 0.0, %v3527
        %v3529 = vpop.f32.mrb[0].mxu0
        %3530 = vmatprep.mubr.bf16.mxu0 0
        %3531 = vmatmul.mubr.bf16.gmra.mrb[0].mxu0 %v3438
        %v3532 = vpop.f32.mrb[0].mxu0
        %v3533 = vadd.f32 0.0, %v3532
        %v3534 = vpop.f32.mrb[0].mxu0
        %v3535 = vpop.f32.mrb[0].mxu0
        %v3536 = vadd.f32 0.0, %v3535
        %v3537 = vpop.f32.mrb[0].mxu0
        %3538 = vmatprep.mubr.bf16.mxu0 0
        %3539 = vmatmul.mubr.bf16.gmra.mrb[0].mxu0 %v3441
        %v3540 = vpop.f32.mrb[0].mxu0
        %v3541 = vadd.f32 0.0, %v3540
        %v3542 = vpop.f32.mrb[0].mxu0
        %v3543 = vpop.f32.mrb[0].mxu0
        %v3544 = vadd.f32 0.0, %v3543
        %v3545 = vpop.f32.mrb[0].mxu0
        %3546 = vmatprep.mubr.bf16.mxu0 0
        %3547 = vmatmul.mubr.bf16.gmra.mrb[0].mxu0 %v3444
        %v3548 = vpop.f32.mrb[0].mxu0
        %v3549 = vadd.f32 0.0, %v3548
        %v3550 = vpop.f32.mrb[0].mxu0
        %v3551 = vpop.f32.mrb[0].mxu0
        %v3552 = vadd.f32 0.0, %v3551
        %v3553 = vpop.f32.mrb[0].mxu0
        %3554 = vmatprep.mubr.bf16.mxu0 0
        %3555 = vmatmul.mubr.bf16.gmra.mrb[0].mxu0 %v3447
        %v3556 = vpop.f32.mrb[0].mxu0
        %v3557 = vadd.f32 0.0, %v3556
        %v3558 = vpop.f32.mrb[0].mxu0
        %v3559 = vpop.f32.mrb[0].mxu0
        %v3560 = vadd.f32 0.0, %v3559
        %v3561 = vpop.f32.mrb[0].mxu0
        %3562 = vmatprep.mubr.bf16.mxu0 0
        %3563 = vmatmul.mubr.bf16.gmra.mrb[0].mxu0 %v3450
        %v3564 = vpop.f32.mrb[0].mxu0
        %v3565 = vadd.f32 0.0, %v3564
        %v3566 = vpop.f32.mrb[0].mxu0
        %v3567 = vpop.f32.mrb[0].mxu0
        %v3568 = vadd.f32 0.0, %v3567
        %v3569 = vpop.f32.mrb[0].mxu0
        %3570 = vmatprep.mubr.bf16.mxu0 0
        %3571 = vmatmul.mubr.bf16.gmra.mrb[0].mxu0 %v3453
        %v3572 = vpop.f32.mrb[0].mxu0
        %v3573 = vadd.f32 0.0, %v3572
        %v3574 = vpop.f32.mrb[0].mxu0
        %v3575 = vpop.f32.mrb[0].mxu0
        %v3576 = vadd.f32 0.0, %v3575
        %v3577 = vpop.f32.mrb[0].mxu0
        %3578 = vmatprep.mubr.bf16.mxu0 0
        %3579 = vmatmul.mubr.bf16.gmra.mrb[0].mxu0 %v3456
        %v3580 = vpop.f32.mrb[0].mxu0
        %v3581 = vadd.f32 0.0, %v3580
        %v3582 = vpop.f32.mrb[0].mxu0
        %v3583 = vpop.f32.mrb[0].mxu0
        %v3584 = vadd.f32 0.0, %v3583
        %v3585 = vpop.f32.mrb[0].mxu0
        %3586 = vmatprep.mubr.bf16.mxu0 0
        %3587 = vmatmul.mubr.bf16.gmra.mrb[0].mxu0 %v3459
        %v3588 = vpop.f32.mrb[0].mxu0
        %v3589 = vadd.f32 0.0, %v3588
        %v3590 = vpop.f32.mrb[0].mxu0
        %v3591 = vpop.f32.mrb[0].mxu0
        %v3592 = vadd.f32 0.0, %v3591
        %v3593 = vpop.f32.mrb[0].mxu0
        %3594 = vmatprep.mubr.bf16.mxu0 0
        %3595 = vmatmul.mubr.bf16.gmra.mrb[0].mxu0 %v3462
        %v3596 = vpop.f32.mrb[0].mxu0
        %v3597 = vadd.f32 0.0, %v3596
        %v3598 = vpop.f32.mrb[0].mxu0
        %v3599 = vpop.f32.mrb[0].mxu0
        %v3600 = vadd.f32 0.0, %v3599
        %v3601 = vpop.f32.mrb[0].mxu0
        %3602 = vmatprep.mubr.bf16.mxu0 0
        %3603 = vmatmul.mubr.bf16.gmra.mrb[0].mxu0 %v3465
        %v3604 = vpop.f32.mrb[0].mxu0
        %v3605 = vadd.f32 0.0, %v3604
        %v3606 = vpop.f32.mrb[0].mxu0
        %v3607 = vpop.f32.mrb[0].mxu0
        %v3608 = vadd.f32 0.0, %v3607
        %v3609 = vpop.f32.mrb[0].mxu0
        %3610 = vmatprep.mubr.bf16.mxu0 0
        %3611 = vmatmul.mubr.bf16.gmra.mrb[0].mxu0 %v3468
        %v3612 = vpop.f32.mrb[0].mxu0
        %v3613 = vadd.f32 0.0, %v3612
        %v3614 = vpop.f32.mrb[0].mxu0
        %v3615 = vpop.f32.mrb[0].mxu0
        %v3616 = vadd.f32 0.0, %v3615
        %v3617 = vpop.f32.mrb[0].mxu0
        %3618 = vmatprep.mubr.bf16.mxu0 0
        %3619 = vmatmul.mubr.bf16.gmra.mrb[0].mxu0 %v3471
        %v3620 = vpop.f32.mrb[0].mxu0
        %v3621 = vadd.f32 0.0, %v3620
        %v3622 = vpop.f32.mrb[0].mxu0
        %v3623 = vpop.f32.mrb[0].mxu0
        %v3624 = vadd.f32 0.0, %v3623
        %v3625 = vpop.f32.mrb[0].mxu0
        %3626 = vmatprep.mubr.bf16.mxu0 0
        %3627 = vmatmul.mubr.bf16.gmra.mrb[0].mxu0 %v3474
        %v3628 = vpop.f32.mrb[0].mxu0
        %v3629 = vadd.f32 0.0, %v3628
        %v3630 = vpop.f32.mrb[0].mxu0
        %v3631 = vpop.f32.mrb[0].mxu0
        %v3632 = vadd.f32 0.0, %v3631
        %v3633 = vpop.f32.mrb[0].mxu0
        %3634 = vmatprep.mubr.bf16.mxu0 0
        %3635 = vmatmul.mubr.bf16.gmra.mrb[0].mxu0 %v3477
        %v3636 = vpop.f32.mrb[0].mxu0
        %v3637 = vadd.f32 0.0, %v3636
        %v3638 = vpop.f32.mrb[0].mxu0
        %v3639 = vpop.f32.mrb[0].mxu0
        %v3640 = vadd.f32 0.0, %v3639
        %v3641 = vpop.f32.mrb[0].mxu0
        %3642 = vdwg.mxu0
        %v3643 = vadd.f32 %v3285, %v3517
        %v3644 = vadd.f32 %v3286, %v3520
        %v3645 = vadd.f32 %v3287, %v3525
        %v3646 = vadd.f32 %v3288, %v3528
        %v3647 = vadd.f32 %v3289, %v3533
        %v3648 = vadd.f32 %v3290, %v3536
        %v3649 = vadd.f32 %v3291, %v3541
        %v3650 = vadd.f32 %v3292, %v3544
        %v3651 = vadd.f32 %v3293, %v3549
        %v3652 = vadd.f32 %v3294, %v3552
        %v3653 = vadd.f32 %v3295, %v3557
        %v3654 = vadd.f32 %v3296, %v3560
        %v3655 = vadd.f32 %v3297, %v3565
        %v3656 = vadd.f32 %v3298, %v3568
        %v3657 = vadd.f32 %v3299, %v3573
        %v3658 = vadd.f32 %v3300, %v3576
        %v3659 = vadd.f32 %v3301, %v3581
        %v3660 = vadd.f32 %v3302, %v3584
        %v3661 = vadd.f32 %v3303, %v3589
        %v3662 = vadd.f32 %v3304, %v3592
        %v3663 = vadd.f32 %v3305, %v3597
        %v3664 = vadd.f32 %v3306, %v3600
        %v3665 = vadd.f32 %v3307, %v3605
        %v3666 = vadd.f32 %v3308, %v3608
        %v3667 = vadd.f32 %v3309, %v3613
        %v3668 = vadd.f32 %v3310, %v3616
        %v3669 = vadd.f32 %v3311, %v3621
        %v3670 = vadd.f32 %v3312, %v3624
        %v3671 = vadd.f32 %v3313, %v3629
        %v3672 = vadd.f32 %v3314, %v3632
        %v3673 = vadd.f32 %v3315, %v3637
        %v3674 = vadd.f32 %v3316, %v3640
        %v3675 = vld [vmem:[%s1236] sm:$0xf]
        %v3676 = vld [vmem:[%s1236 + $0x4] sm:$0xf]
        %v3677 = vld [vmem:[%s1236 + $0x8] sm:$0x1]
        %v3678 = vld [vmem:[%s1236 + $0xc] sm:$0xf]
        %v3679 = vld [vmem:[%s1236 + $0x10] sm:$0xf]
        %v3680 = vld [vmem:[%s1236 + $0x14] sm:$0x1]
        %v3681 = vld [vmem:[%s1236 + $0x18] sm:$0xf]
        %v3682 = vld [vmem:[%s1236 + $0x1c] sm:$0xf]
        %v3683 = vld [vmem:[%s1236 + $0x20] sm:$0x1]
        %v3684 = vld [vmem:[%s1236 + $0x24] sm:$0xf]
        %v3685 = vld [vmem:[%s1236 + $0x28] sm:$0xf]
        %v3686 = vld [vmem:[%s1236 + $0x2c] sm:$0x1]
        %v3687 = vld [vmem:[%s1236 + $0x30] sm:$0xf]
        %v3688 = vld [vmem:[%s1236 + $0x34] sm:$0xf]
        %v3689 = vld [vmem:[%s1236 + $0x38] sm:$0x1]
        %v3690 = vld [vmem:[%s1236 + $0x3c] sm:$0xf]
        %v3691 = vld [vmem:[%s1236 + $0x40] sm:$0xf]
        %v3692 = vld [vmem:[%s1236 + $0x44] sm:$0x1]
        %v3693 = vld [vmem:[%s1236 + $0x48] sm:$0xf]
        %v3694 = vld [vmem:[%s1236 + $0x4c] sm:$0xf]
        %v3695 = vld [vmem:[%s1236 + $0x50] sm:$0x1]
        %v3696 = vld [vmem:[%s1236 + $0x54] sm:$0xf]
        %v3697 = vld [vmem:[%s1236 + $0x58] sm:$0xf]
        %v3698 = vld [vmem:[%s1236 + $0x5c] sm:$0x1]
        %v3699 = vld [vmem:[%s1236 + $0x60] sm:$0xf]
        %v3700 = vld [vmem:[%s1236 + $0x64] sm:$0xf]
        %v3701 = vld [vmem:[%s1236 + $0x68] sm:$0x1]
        %v3702 = vld [vmem:[%s1236 + $0x6c] sm:$0xf]
        %v3703 = vld [vmem:[%s1236 + $0x70] sm:$0xf]
        %v3704 = vld [vmem:[%s1236 + $0x74] sm:$0x1]
        %v3705 = vld [vmem:[%s1236 + $0x78] sm:$0xf]
        %v3706 = vld [vmem:[%s1236 + $0x7c] sm:$0xf]
        %v3707 = vld [vmem:[%s1236 + $0x80] sm:$0x1]
        %v3708 = vld [vmem:[%s1236 + $0x84] sm:$0xf]
        %v3709 = vld [vmem:[%s1236 + $0x88] sm:$0xf]
        %v3710 = vld [vmem:[%s1236 + $0x8c] sm:$0x1]
        %v3711 = vld [vmem:[%s1236 + $0x90] sm:$0xf]
        %v3712 = vld [vmem:[%s1236 + $0x94] sm:$0xf]
        %v3713 = vld [vmem:[%s1236 + $0x98] sm:$0x1]
        %v3714 = vld [vmem:[%s1236 + $0x9c] sm:$0xf]
        %v3715 = vld [vmem:[%s1236 + $0xa0] sm:$0xf]
        %v3716 = vld [vmem:[%s1236 + $0xa4] sm:$0x1]
        %v3717 = vld [vmem:[%s1236 + $0xa8] sm:$0xf]
        %v3718 = vld [vmem:[%s1236 + $0xac] sm:$0xf]
        %v3719 = vld [vmem:[%s1236 + $0xb0] sm:$0x1]
        %v3720 = vld [vmem:[%s1236 + $0xb4] sm:$0xf]
        %v3721 = vld [vmem:[%s1236 + $0xb8] sm:$0xf]
        %v3722 = vld [vmem:[%s1236 + $0xbc] sm:$0x1]
        %v3724 = vshrl.u32 %v3675, 16
        %v3726 = vrot.slane %v3724, 4
        %v3727 = vshll.u32 %v3675, 16
        %v3729 = vrot.slane %v3727, 5
        %v3730 = vor.u32 %v3726, %v3729
        %v3731 = vrot.slane %v3730, 4
        %v3733 = vshll.u32 %v3676, 16
        %v3735 = vrot.slane %v3733, 5
        %v3736 = vsel %vm1921, %v3731, %v3735
        %v3737 = vshrl.u32 %v3676, 16
        %v3739 = vrot.slane %v3737, 4
        %v3740 = vor.u32 %v3739, %v3735
        %v3741 = vrot.slane %v3740, 4
        %v3743 = vshll.u32 %v3677, 16
        %v3745 = vrot.slane %v3743, 5
        %v3746 = vsel %vm1921, %v3741, %v3745
        %v3748 = vshrl.u32 %v3678, 16
        %v3750 = vrot.slane %v3748, 4
        %v3751 = vshll.u32 %v3678, 16
        %v3753 = vrot.slane %v3751, 5
        %v3754 = vor.u32 %v3750, %v3753
        %v3755 = vrot.slane %v3754, 4
        %v3757 = vshll.u32 %v3679, 16
        %v3759 = vrot.slane %v3757, 5
        %v3760 = vsel %vm1921, %v3755, %v3759
        %v3761 = vshrl.u32 %v3679, 16
        %v3763 = vrot.slane %v3761, 4
        %v3764 = vor.u32 %v3763, %v3759
        %v3765 = vrot.slane %v3764, 4
        %v3767 = vshll.u32 %v3680, 16
        %v3769 = vrot.slane %v3767, 5
        %v3770 = vsel %vm1921, %v3765, %v3769
        %v3772 = vshrl.u32 %v3681, 16
        %v3774 = vrot.slane %v3772, 4
        %v3775 = vshll.u32 %v3681, 16
        %v3777 = vrot.slane %v3775, 5
        %v3778 = vor.u32 %v3774, %v3777
        %v3779 = vrot.slane %v3778, 4
        %v3781 = vshll.u32 %v3682, 16
        %v3783 = vrot.slane %v3781, 5
        %v3784 = vsel %vm1921, %v3779, %v3783
        %v3785 = vshrl.u32 %v3682, 16
        %v3787 = vrot.slane %v3785, 4
        %v3788 = vor.u32 %v3787, %v3783
        %v3789 = vrot.slane %v3788, 4
        %v3791 = vshll.u32 %v3683, 16
        %v3793 = vrot.slane %v3791, 5
        %v3794 = vsel %vm1921, %v3789, %v3793
        %v3796 = vshrl.u32 %v3684, 16
        %v3798 = vrot.slane %v3796, 4
        %v3799 = vshll.u32 %v3684, 16
        %v3801 = vrot.slane %v3799, 5
        %v3802 = vor.u32 %v3798, %v3801
        %v3803 = vrot.slane %v3802, 4
        %v3805 = vshll.u32 %v3685, 16
        %v3807 = vrot.slane %v3805, 5
        %v3808 = vsel %vm1921, %v3803, %v3807
        %v3809 = vshrl.u32 %v3685, 16
        %v3811 = vrot.slane %v3809, 4
        %v3812 = vor.u32 %v3811, %v3807
        %v3813 = vrot.slane %v3812, 4
        %v3815 = vshll.u32 %v3686, 16
        %v3817 = vrot.slane %v3815, 5
        %v3818 = vsel %vm1921, %v3813, %v3817
        %v3820 = vshrl.u32 %v3687, 16
        %v3822 = vrot.slane %v3820, 4
        %v3823 = vshll.u32 %v3687, 16
        %v3825 = vrot.slane %v3823, 5
        %v3826 = vor.u32 %v3822, %v3825
        %v3827 = vrot.slane %v3826, 4
        %v3829 = vshll.u32 %v3688, 16
        %v3831 = vrot.slane %v3829, 5
        %v3832 = vsel %vm1921, %v3827, %v3831
        %v3833 = vshrl.u32 %v3688, 16
        %v3835 = vrot.slane %v3833, 4
        %v3836 = vor.u32 %v3835, %v3831
        %v3837 = vrot.slane %v3836, 4
        %v3839 = vshll.u32 %v3689, 16
        %v3841 = vrot.slane %v3839, 5
        %v3842 = vsel %vm1921, %v3837, %v3841
        %v3844 = vshrl.u32 %v3690, 16
        %v3846 = vrot.slane %v3844, 4
        %v3847 = vshll.u32 %v3690, 16
        %v3849 = vrot.slane %v3847, 5
        %v3850 = vor.u32 %v3846, %v3849
        %v3851 = vrot.slane %v3850, 4
        %v3853 = vshll.u32 %v3691, 16
        %v3855 = vrot.slane %v3853, 5
        %v3856 = vsel %vm1921, %v3851, %v3855
        %v3857 = vshrl.u32 %v3691, 16
        %v3859 = vrot.slane %v3857, 4
        %v3860 = vor.u32 %v3859, %v3855
        %v3861 = vrot.slane %v3860, 4
        %v3863 = vshll.u32 %v3692, 16
        %v3865 = vrot.slane %v3863, 5
        %v3866 = vsel %vm1921, %v3861, %v3865
        %v3868 = vshrl.u32 %v3693, 16
        %v3870 = vrot.slane %v3868, 4
        %v3871 = vshll.u32 %v3693, 16
        %v3873 = vrot.slane %v3871, 5
        %v3874 = vor.u32 %v3870, %v3873
        %v3875 = vrot.slane %v3874, 4
        %v3877 = vshll.u32 %v3694, 16
        %v3879 = vrot.slane %v3877, 5
        %v3880 = vsel %vm1921, %v3875, %v3879
        %v3881 = vshrl.u32 %v3694, 16
        %v3883 = vrot.slane %v3881, 4
        %v3884 = vor.u32 %v3883, %v3879
        %v3885 = vrot.slane %v3884, 4
        %v3887 = vshll.u32 %v3695, 16
        %v3889 = vrot.slane %v3887, 5
        %v3890 = vsel %vm1921, %v3885, %v3889
        %v3892 = vshrl.u32 %v3696, 16
        %v3894 = vrot.slane %v3892, 4
        %v3895 = vshll.u32 %v3696, 16
        %v3897 = vrot.slane %v3895, 5
        %v3898 = vor.u32 %v3894, %v3897
        %v3899 = vrot.slane %v3898, 4
        %v3901 = vshll.u32 %v3697, 16
        %v3903 = vrot.slane %v3901, 5
        %v3904 = vsel %vm1921, %v3899, %v3903
        %v3905 = vshrl.u32 %v3697, 16
        %v3907 = vrot.slane %v3905, 4
        %v3908 = vor.u32 %v3907, %v3903
        %v3909 = vrot.slane %v3908, 4
        %v3911 = vshll.u32 %v3698, 16
        %v3913 = vrot.slane %v3911, 5
        %v3914 = vsel %vm1921, %v3909, %v3913
        %v3916 = vshrl.u32 %v3699, 16
        %v3918 = vrot.slane %v3916, 4
        %v3919 = vshll.u32 %v3699, 16
        %v3921 = vrot.slane %v3919, 5
        %v3922 = vor.u32 %v3918, %v3921
        %v3923 = vrot.slane %v3922, 4
        %v3925 = vshll.u32 %v3700, 16
        %v3927 = vrot.slane %v3925, 5
        %v3928 = vsel %vm1921, %v3923, %v3927
        %v3929 = vshrl.u32 %v3700, 16
        %v3931 = vrot.slane %v3929, 4
        %v3932 = vor.u32 %v3931, %v3927
        %v3933 = vrot.slane %v3932, 4
        %v3935 = vshll.u32 %v3701, 16
        %v3937 = vrot.slane %v3935, 5
        %v3938 = vsel %vm1921, %v3933, %v3937
        %v3940 = vshrl.u32 %v3702, 16
        %v3942 = vrot.slane %v3940, 4
        %v3943 = vshll.u32 %v3702, 16
        %v3945 = vrot.slane %v3943, 5
        %v3946 = vor.u32 %v3942, %v3945
        %v3947 = vrot.slane %v3946, 4
        %v3949 = vshll.u32 %v3703, 16
        %v3951 = vrot.slane %v3949, 5
        %v3952 = vsel %vm1921, %v3947, %v3951
        %v3953 = vshrl.u32 %v3703, 16
        %v3955 = vrot.slane %v3953, 4
        %v3956 = vor.u32 %v3955, %v3951
        %v3957 = vrot.slane %v3956, 4
        %v3959 = vshll.u32 %v3704, 16
        %v3961 = vrot.slane %v3959, 5
        %v3962 = vsel %vm1921, %v3957, %v3961
        %v3964 = vshrl.u32 %v3705, 16
        %v3966 = vrot.slane %v3964, 4
        %v3967 = vshll.u32 %v3705, 16
        %v3969 = vrot.slane %v3967, 5
        %v3970 = vor.u32 %v3966, %v3969
        %v3971 = vrot.slane %v3970, 4
        %v3973 = vshll.u32 %v3706, 16
        %v3975 = vrot.slane %v3973, 5
        %v3976 = vsel %vm1921, %v3971, %v3975
        %v3977 = vshrl.u32 %v3706, 16
        %v3979 = vrot.slane %v3977, 4
        %v3980 = vor.u32 %v3979, %v3975
        %v3981 = vrot.slane %v3980, 4
        %v3983 = vshll.u32 %v3707, 16
        %v3985 = vrot.slane %v3983, 5
        %v3986 = vsel %vm1921, %v3981, %v3985
        %v3988 = vshrl.u32 %v3708, 16
        %v3990 = vrot.slane %v3988, 4
        %v3991 = vshll.u32 %v3708, 16
        %v3993 = vrot.slane %v3991, 5
        %v3994 = vor.u32 %v3990, %v3993
        %v3995 = vrot.slane %v3994, 4
        %v3997 = vshll.u32 %v3709, 16
        %v3999 = vrot.slane %v3997, 5
        %v4000 = vsel %vm1921, %v3995, %v3999
        %v4001 = vshrl.u32 %v3709, 16
        %v4003 = vrot.slane %v4001, 4
        %v4004 = vor.u32 %v4003, %v3999
        %v4005 = vrot.slane %v4004, 4
        %v4007 = vshll.u32 %v3710, 16
        %v4009 = vrot.slane %v4007, 5
        %v4010 = vsel %vm1921, %v4005, %v4009
        %v4012 = vshrl.u32 %v3711, 16
        %v4014 = vrot.slane %v4012, 4
        %v4015 = vshll.u32 %v3711, 16
        %v4017 = vrot.slane %v4015, 5
        %v4018 = vor.u32 %v4014, %v4017
        %v4019 = vrot.slane %v4018, 4
        %v4021 = vshll.u32 %v3712, 16
        %v4023 = vrot.slane %v4021, 5
        %v4024 = vsel %vm1921, %v4019, %v4023
        %v4025 = vshrl.u32 %v3712, 16
        %v4027 = vrot.slane %v4025, 4
        %v4028 = vor.u32 %v4027, %v4023
        %v4029 = vrot.slane %v4028, 4
        %v4031 = vshll.u32 %v3713, 16
        %v4033 = vrot.slane %v4031, 5
        %v4034 = vsel %vm1921, %v4029, %v4033
        %v4036 = vshrl.u32 %v3714, 16
        %v4038 = vrot.slane %v4036, 4
        %v4039 = vshll.u32 %v3714, 16
        %v4041 = vrot.slane %v4039, 5
        %v4042 = vor.u32 %v4038, %v4041
        %v4043 = vrot.slane %v4042, 4
        %v4045 = vshll.u32 %v3715, 16
        %v4047 = vrot.slane %v4045, 5
        %v4048 = vsel %vm1921, %v4043, %v4047
        %v4049 = vshrl.u32 %v3715, 16
        %v4051 = vrot.slane %v4049, 4
        %v4052 = vor.u32 %v4051, %v4047
        %v4053 = vrot.slane %v4052, 4
        %v4055 = vshll.u32 %v3716, 16
        %v4057 = vrot.slane %v4055, 5
        %v4058 = vsel %vm1921, %v4053, %v4057
        %v4060 = vshrl.u32 %v3717, 16
        %v4062 = vrot.slane %v4060, 4
        %v4063 = vshll.u32 %v3717, 16
        %v4065 = vrot.slane %v4063, 5
        %v4066 = vor.u32 %v4062, %v4065
        %v4067 = vrot.slane %v4066, 4
        %v4069 = vshll.u32 %v3718, 16
        %v4071 = vrot.slane %v4069, 5
        %v4072 = vsel %vm1921, %v4067, %v4071
        %v4073 = vshrl.u32 %v3718, 16
        %v4075 = vrot.slane %v4073, 4
        %v4076 = vor.u32 %v4075, %v4071
        %v4077 = vrot.slane %v4076, 4
        %v4079 = vshll.u32 %v3719, 16
        %v4081 = vrot.slane %v4079, 5
        %v4082 = vsel %vm1921, %v4077, %v4081
        %v4084 = vshrl.u32 %v3720, 16
        %v4086 = vrot.slane %v4084, 4
        %v4087 = vshll.u32 %v3720, 16
        %v4089 = vrot.slane %v4087, 5
        %v4090 = vor.u32 %v4086, %v4089
        %v4091 = vrot.slane %v4090, 4
        %v4093 = vshll.u32 %v3721, 16
        %v4095 = vrot.slane %v4093, 5
        %v4096 = vsel %vm1921, %v4091, %v4095
        %v4097 = vshrl.u32 %v3721, 16
        %v4099 = vrot.slane %v4097, 4
        %v4100 = vor.u32 %v4099, %v4095
        %v4101 = vrot.slane %v4100, 4
        %v4103 = vshll.u32 %v3722, 16
        %v4105 = vrot.slane %v4103, 5
        %v4106 = vsel %vm1921, %v4101, %v4105
        %s4107 = scalar_lea.vmem [#allocation11], 8
        %v4108 = vld [vmem:[%s4107] sm:$0x3]
        %v4109 = vunpack.c.l.b16 %v3736
        %v4110 = vunpack.c.l.b16 %v3746
        %v4111 = vunpack.c.l.b16 %v3760
        %v4112 = vunpack.c.l.b16 %v3770
        %v4113 = vunpack.c.l.b16 %v3784
        %v4114 = vunpack.c.l.b16 %v3794
        %v4115 = vunpack.c.l.b16 %v3808
        %v4116 = vunpack.c.l.b16 %v3818
        %v4117 = vunpack.c.l.b16 %v3832
        %v4118 = vunpack.c.l.b16 %v3842
        %v4119 = vunpack.c.l.b16 %v3856
        %v4120 = vunpack.c.l.b16 %v3866
        %v4121 = vunpack.c.l.b16 %v3880
        %v4122 = vunpack.c.l.b16 %v3890
        %v4123 = vunpack.c.l.b16 %v3904
        %v4124 = vunpack.c.l.b16 %v3914
        %v4125 = vunpack.c.l.b16 %v3928
        %v4126 = vunpack.c.l.b16 %v3938
        %v4127 = vunpack.c.l.b16 %v3952
        %v4128 = vunpack.c.l.b16 %v3962
        %v4129 = vunpack.c.l.b16 %v3976
        %v4130 = vunpack.c.l.b16 %v3986
        %v4131 = vunpack.c.l.b16 %v4000
        %v4132 = vunpack.c.l.b16 %v4010
        %v4133 = vunpack.c.l.b16 %v4024
        %v4134 = vunpack.c.l.b16 %v4034
        %v4135 = vunpack.c.l.b16 %v4048
        %v4136 = vunpack.c.l.b16 %v4058
        %v4137 = vunpack.c.l.b16 %v4072
        %v4138 = vunpack.c.l.b16 %v4082
        %v4139 = vunpack.c.l.b16 %v4096
        %v4140 = vunpack.c.l.b16 %v4106
        %v4141 = vpack.c.b16 %v4110, %v4109
        %v4142 = vpack.c.b16 %v4112, %v4111
        %v4143 = vpack.c.b16 %v4114, %v4113
        %v4144 = vpack.c.b16 %v4116, %v4115
        %v4145 = vpack.c.b16 %v4118, %v4117
        %v4146 = vpack.c.b16 %v4120, %v4119
        %v4147 = vpack.c.b16 %v4122, %v4121
        %v4148 = vpack.c.b16 %v4124, %v4123
        %v4149 = vpack.c.b16 %v4126, %v4125
        %v4150 = vpack.c.b16 %v4128, %v4127
        %v4151 = vpack.c.b16 %v4130, %v4129
        %v4152 = vpack.c.b16 %v4132, %v4131
        %v4153 = vpack.c.b16 %v4134, %v4133
        %v4154 = vpack.c.b16 %v4136, %v4135
        %v4155 = vpack.c.b16 %v4138, %v4137
        %v4156 = vpack.c.b16 %v4140, %v4139
        %v4158 = vsel %vm725, %v4141, 0
        %v4161 = vsel %vm725, %v4142, 0
        %v4164 = vsel %vm725, %v4143, 0
        %v4167 = vsel %vm725, %v4144, 0
        %v4170 = vsel %vm725, %v4145, 0
        %v4173 = vsel %vm725, %v4146, 0
        %v4176 = vsel %vm725, %v4147, 0
        %v4179 = vsel %vm725, %v4148, 0
        %v4182 = vsel %vm725, %v4149, 0
        %v4185 = vsel %vm725, %v4150, 0
        %v4188 = vsel %vm725, %v4151, 0
        %v4191 = vsel %vm725, %v4152, 0
        %v4194 = vsel %vm725, %v4153, 0
        %v4197 = vsel %vm725, %v4154, 0
        %v4200 = vsel %vm725, %v4155, 0
        %v4203 = vsel %vm725, %v4156, 0
        %v4206 = vsel %vm774, %v4108, 0
        %4208 = vmatprep.subr.bf16.mxu0 0
        %4209 = vmatpush1.bf16.msra.mxu0 %v4206
        %4210 = vmatprep.subr.bf16.mxu0 0
        %4211 = vmatpush1.bf16.msra.mxu0 0
        %4212 = vmatprep.subr.bf16.mxu0 0
        %4213 = vmatpush1.bf16.msra.mxu0 0
        %4214 = vmatprep.subr.bf16.mxu0 0
        %4215 = vmatpush1.bf16.msra.mxu0 0
        %4216 = vmatprep.subr.bf16.mxu0 0
        %4217 = vmatpush1.bf16.msra.mxu0 0
        %4218 = vmatprep.subr.bf16.mxu0 0
        %4219 = vmatpush1.bf16.msra.mxu0 0
        %4220 = vmatprep.subr.bf16.mxu0 0
        %4221 = vmatpush1.bf16.msra.mxu0 0
        %4222 = vmatprep.subr.bf16.mxu0 0
        %4223 = vmatpush1.bf16.msra.mxu0 0
        %4224 = vmatprep.subr.bf16.mxu0 0
        %4225 = vmatpush1.bf16.msra.mxu0 0
        %4226 = vmatprep.subr.bf16.mxu0 0
        %4227 = vmatpush1.bf16.msra.mxu0 0
        %4228 = vmatprep.subr.bf16.mxu0 0
        %4229 = vmatpush1.bf16.msra.mxu0 0
        %4230 = vmatprep.subr.bf16.mxu0 0
        %4231 = vmatpush1.bf16.msra.mxu0 0
        %4232 = vmatprep.subr.bf16.mxu0 0
        %4233 = vmatpush1.bf16.msra.mxu0 0
        %4234 = vmatprep.subr.bf16.mxu0 0
        %4235 = vmatpush1.bf16.msra.mxu0 0
        %4236 = vmatprep.subr.bf16.mxu0 0
        %4237 = vmatpush1.bf16.msra.mxu0 0
        %4238 = vmatprep.subr.bf16.mxu0 0
        %4239 = vmatpush1.bf16.msra.mxu0 0
        %4240 = vmatprep.mubr.bf16.mxu0 0
        %4241 = vmatmul.mubr.bf16.gmra.mrb[0].mxu0 %v4158
        %v4242 = vpop.f32.mrb[0].mxu0
        %v4243 = vadd.f32 0.0, %v4242
        %v4244 = vpop.f32.mrb[0].mxu0
        %v4245 = vpop.f32.mrb[0].mxu0
        %v4246 = vadd.f32 0.0, %v4245
        %v4247 = vpop.f32.mrb[0].mxu0
        %4248 = vmatprep.mubr.bf16.mxu0 0
        %4249 = vmatmul.mubr.bf16.gmra.mrb[0].mxu0 %v4161
        %v4250 = vpop.f32.mrb[0].mxu0
        %v4251 = vadd.f32 0.0, %v4250
        %v4252 = vpop.f32.mrb[0].mxu0
        %v4253 = vpop.f32.mrb[0].mxu0
        %v4254 = vadd.f32 0.0, %v4253
        %v4255 = vpop.f32.mrb[0].mxu0
        %4256 = vmatprep.mubr.bf16.mxu0 0
        %4257 = vmatmul.mubr.bf16.gmra.mrb[0].mxu0 %v4164
        %v4258 = vpop.f32.mrb[0].mxu0
        %v4259 = vadd.f32 0.0, %v4258
        %v4260 = vpop.f32.mrb[0].mxu0
        %v4261 = vpop.f32.mrb[0].mxu0
        %v4262 = vadd.f32 0.0, %v4261
        %v4263 = vpop.f32.mrb[0].mxu0
        %4264 = vmatprep.mubr.bf16.mxu0 0
        %4265 = vmatmul.mubr.bf16.gmra.mrb[0].mxu0 %v4167
        %v4266 = vpop.f32.mrb[0].mxu0
        %v4267 = vadd.f32 0.0, %v4266
        %v4268 = vpop.f32.mrb[0].mxu0
        %v4269 = vpop.f32.mrb[0].mxu0
        %v4270 = vadd.f32 0.0, %v4269
        %v4271 = vpop.f32.mrb[0].mxu0
        %4272 = vmatprep.mubr.bf16.mxu0 0
        %4273 = vmatmul.mubr.bf16.gmra.mrb[0].mxu0 %v4170
        %v4274 = vpop.f32.mrb[0].mxu0
        %v4275 = vadd.f32 0.0, %v4274
        %v4276 = vpop.f32.mrb[0].mxu0
        %v4277 = vpop.f32.mrb[0].mxu0
        %v4278 = vadd.f32 0.0, %v4277
        %v4279 = vpop.f32.mrb[0].mxu0
        %4280 = vmatprep.mubr.bf16.mxu0 0
        %4281 = vmatmul.mubr.bf16.gmra.mrb[0].mxu0 %v4173
        %v4282 = vpop.f32.mrb[0].mxu0
        %v4283 = vadd.f32 0.0, %v4282
        %v4284 = vpop.f32.mrb[0].mxu0
        %v4285 = vpop.f32.mrb[0].mxu0
        %v4286 = vadd.f32 0.0, %v4285
        %v4287 = vpop.f32.mrb[0].mxu0
        %4288 = vmatprep.mubr.bf16.mxu0 0
        %4289 = vmatmul.mubr.bf16.gmra.mrb[0].mxu0 %v4176
        %v4290 = vpop.f32.mrb[0].mxu0
        %v4291 = vadd.f32 0.0, %v4290
        %v4292 = vpop.f32.mrb[0].mxu0
        %v4293 = vpop.f32.mrb[0].mxu0
        %v4294 = vadd.f32 0.0, %v4293
        %v4295 = vpop.f32.mrb[0].mxu0
        %4296 = vmatprep.mubr.bf16.mxu0 0
        %4297 = vmatmul.mubr.bf16.gmra.mrb[0].mxu0 %v4179
        %v4298 = vpop.f32.mrb[0].mxu0
        %v4299 = vadd.f32 0.0, %v4298
        %v4300 = vpop.f32.mrb[0].mxu0
        %v4301 = vpop.f32.mrb[0].mxu0
        %v4302 = vadd.f32 0.0, %v4301
        %v4303 = vpop.f32.mrb[0].mxu0
        %4304 = vmatprep.mubr.bf16.mxu0 0
        %4305 = vmatmul.mubr.bf16.gmra.mrb[0].mxu0 %v4182
        %v4306 = vpop.f32.mrb[0].mxu0
        %v4307 = vadd.f32 0.0, %v4306
        %v4308 = vpop.f32.mrb[0].mxu0
        %v4309 = vpop.f32.mrb[0].mxu0
        %v4310 = vadd.f32 0.0, %v4309
        %v4311 = vpop.f32.mrb[0].mxu0
        %4312 = vmatprep.mubr.bf16.mxu0 0
        %4313 = vmatmul.mubr.bf16.gmra.mrb[0].mxu0 %v4185
        %v4314 = vpop.f32.mrb[0].mxu0
        %v4315 = vadd.f32 0.0, %v4314
        %v4316 = vpop.f32.mrb[0].mxu0
        %v4317 = vpop.f32.mrb[0].mxu0
        %v4318 = vadd.f32 0.0, %v4317
        %v4319 = vpop.f32.mrb[0].mxu0
        %4320 = vmatprep.mubr.bf16.mxu0 0
        %4321 = vmatmul.mubr.bf16.gmra.mrb[0].mxu0 %v4188
        %v4322 = vpop.f32.mrb[0].mxu0
        %v4323 = vadd.f32 0.0, %v4322
        %v4324 = vpop.f32.mrb[0].mxu0
        %v4325 = vpop.f32.mrb[0].mxu0
        %v4326 = vadd.f32 0.0, %v4325
        %v4327 = vpop.f32.mrb[0].mxu0
        %4328 = vmatprep.mubr.bf16.mxu0 0
        %4329 = vmatmul.mubr.bf16.gmra.mrb[0].mxu0 %v4191
        %v4330 = vpop.f32.mrb[0].mxu0
        %v4331 = vadd.f32 0.0, %v4330
        %v4332 = vpop.f32.mrb[0].mxu0
        %v4333 = vpop.f32.mrb[0].mxu0
        %v4334 = vadd.f32 0.0, %v4333
        %v4335 = vpop.f32.mrb[0].mxu0
        %4336 = vmatprep.mubr.bf16.mxu0 0
        %4337 = vmatmul.mubr.bf16.gmra.mrb[0].mxu0 %v4194
        %v4338 = vpop.f32.mrb[0].mxu0
        %v4339 = vadd.f32 0.0, %v4338
        %v4340 = vpop.f32.mrb[0].mxu0
        %v4341 = vpop.f32.mrb[0].mxu0
        %v4342 = vadd.f32 0.0, %v4341
        %v4343 = vpop.f32.mrb[0].mxu0
        %4344 = vmatprep.mubr.bf16.mxu0 0
        %4345 = vmatmul.mubr.bf16.gmra.mrb[0].mxu0 %v4197
        %v4346 = vpop.f32.mrb[0].mxu0
        %v4347 = vadd.f32 0.0, %v4346
        %v4348 = vpop.f32.mrb[0].mxu0
        %v4349 = vpop.f32.mrb[0].mxu0
        %v4350 = vadd.f32 0.0, %v4349
        %v4351 = vpop.f32.mrb[0].mxu0
        %4352 = vmatprep.mubr.bf16.mxu0 0
        %4353 = vmatmul.mubr.bf16.gmra.mrb[0].mxu0 %v4200
        %v4354 = vpop.f32.mrb[0].mxu0
        %v4355 = vadd.f32 0.0, %v4354
        %v4356 = vpop.f32.mrb[0].mxu0
        %v4357 = vpop.f32.mrb[0].mxu0
        %v4358 = vadd.f32 0.0, %v4357
        %v4359 = vpop.f32.mrb[0].mxu0
        %4360 = vmatprep.mubr.bf16.mxu0 0
        %4361 = vmatmul.mubr.bf16.gmra.mrb[0].mxu0 %v4203
        %v4362 = vpop.f32.mrb[0].mxu0
        %v4363 = vadd.f32 0.0, %v4362
        %v4364 = vpop.f32.mrb[0].mxu0
        %v4365 = vpop.f32.mrb[0].mxu0
        %v4366 = vadd.f32 0.0, %v4365
        %v4367 = vpop.f32.mrb[0].mxu0
        %4368 = vdwg.mxu0
        %v4369 = vadd.f32 %v3643, %v4243
        %v4370 = vadd.f32 %v3644, %v4246
        %v4371 = vadd.f32 %v3645, %v4251
        %v4372 = vadd.f32 %v3646, %v4254
        %v4373 = vadd.f32 %v3647, %v4259
        %v4374 = vadd.f32 %v3648, %v4262
        %v4375 = vadd.f32 %v3649, %v4267
        %v4376 = vadd.f32 %v3650, %v4270
        %v4377 = vadd.f32 %v3651, %v4275
        %v4378 = vadd.f32 %v3652, %v4278
        %v4379 = vadd.f32 %v3653, %v4283
        %v4380 = vadd.f32 %v3654, %v4286
        %v4381 = vadd.f32 %v3655, %v4291
        %v4382 = vadd.f32 %v3656, %v4294
        %v4383 = vadd.f32 %v3657, %v4299
        %v4384 = vadd.f32 %v3658, %v4302
        %v4385 = vadd.f32 %v3659, %v4307
        %v4386 = vadd.f32 %v3660, %v4310
        %v4387 = vadd.f32 %v3661, %v4315
        %v4388 = vadd.f32 %v3662, %v4318
        %v4389 = vadd.f32 %v3663, %v4323
        %v4390 = vadd.f32 %v3664, %v4326
        %v4391 = vadd.f32 %v3665, %v4331
        %v4392 = vadd.f32 %v3666, %v4334
        %v4393 = vadd.f32 %v3667, %v4339
        %v4394 = vadd.f32 %v3668, %v4342
        %v4395 = vadd.f32 %v3669, %v4347
        %v4396 = vadd.f32 %v3670, %v4350
        %v4397 = vadd.f32 %v3671, %v4355
        %v4398 = vadd.f32 %v3672, %v4358
        %v4399 = vadd.f32 %v3673, %v4363
        %v4400 = vadd.f32 %v3674, %v4366
        %v4401 = vld [vmem:[%s1236] sm:$0xe]
        %v4402 = vld [vmem:[%s1236 + $0xc] sm:$0xe]
        %v4403 = vld [vmem:[%s1236 + $0x18] sm:$0xe]
        %v4404 = vld [vmem:[%s1236 + $0x24] sm:$0xe]
        %v4405 = vld [vmem:[%s1236 + $0x30] sm:$0xe]
        %v4406 = vld [vmem:[%s1236 + $0x3c] sm:$0xe]
        %v4407 = vld [vmem:[%s1236 + $0x48] sm:$0xe]
        %v4408 = vld [vmem:[%s1236 + $0x54] sm:$0xe]
        %v4409 = vld [vmem:[%s1236 + $0x60] sm:$0xe]
        %v4410 = vld [vmem:[%s1236 + $0x6c] sm:$0xe]
        %v4411 = vld [vmem:[%s1236 + $0x78] sm:$0xe]
        %v4412 = vld [vmem:[%s1236 + $0x84] sm:$0xe]
        %v4413 = vld [vmem:[%s1236 + $0x90] sm:$0xe]
        %v4414 = vld [vmem:[%s1236 + $0x9c] sm:$0xe]
        %v4415 = vld [vmem:[%s1236 + $0xa8] sm:$0xe]
        %v4416 = vld [vmem:[%s1236 + $0xb4] sm:$0xe]
        %v4465 = vrot.slane %v4401, 5
        %v4466 = vrot.slane %v4465, 4
        %v4467 = vrot.slane %v3676, 5
        %v4468 = vsel %vm2910, %v4466, %v4467
        %v4469 = vrot.slane %v4467, 4
        %v4470 = vrot.slane %v3677, 5
        %v4471 = vsel %vm2910, %v4469, %v4470
        %v4472 = vrot.slane %v4402, 5
        %v4473 = vrot.slane %v4472, 4
        %v4474 = vrot.slane %v3679, 5
        %v4475 = vsel %vm2910, %v4473, %v4474
        %v4476 = vrot.slane %v4474, 4
        %v4477 = vrot.slane %v3680, 5
        %v4478 = vsel %vm2910, %v4476, %v4477
        %v4479 = vrot.slane %v4403, 5
        %v4480 = vrot.slane %v4479, 4
        %v4481 = vrot.slane %v3682, 5
        %v4482 = vsel %vm2910, %v4480, %v4481
        %v4483 = vrot.slane %v4481, 4
        %v4484 = vrot.slane %v3683, 5
        %v4485 = vsel %vm2910, %v4483, %v4484
        %v4486 = vrot.slane %v4404, 5
        %v4487 = vrot.slane %v4486, 4
        %v4488 = vrot.slane %v3685, 5
        %v4489 = vsel %vm2910, %v4487, %v4488
        %v4490 = vrot.slane %v4488, 4
        %v4491 = vrot.slane %v3686, 5
        %v4492 = vsel %vm2910, %v4490, %v4491
        %v4493 = vrot.slane %v4405, 5
        %v4494 = vrot.slane %v4493, 4
        %v4495 = vrot.slane %v3688, 5
        %v4496 = vsel %vm2910, %v4494, %v4495
        %v4497 = vrot.slane %v4495, 4
        %v4498 = vrot.slane %v3689, 5
        %v4499 = vsel %vm2910, %v4497, %v4498
        %v4500 = vrot.slane %v4406, 5
        %v4501 = vrot.slane %v4500, 4
        %v4502 = vrot.slane %v3691, 5
        %v4503 = vsel %vm2910, %v4501, %v4502
        %v4504 = vrot.slane %v4502, 4
        %v4505 = vrot.slane %v3692, 5
        %v4506 = vsel %vm2910, %v4504, %v4505
        %v4507 = vrot.slane %v4407, 5
        %v4508 = vrot.slane %v4507, 4
        %v4509 = vrot.slane %v3694, 5
        %v4510 = vsel %vm2910, %v4508, %v4509
        %v4511 = vrot.slane %v4509, 4
        %v4512 = vrot.slane %v3695, 5
        %v4513 = vsel %vm2910, %v4511, %v4512
        %v4514 = vrot.slane %v4408, 5
        %v4515 = vrot.slane %v4514, 4
        %v4516 = vrot.slane %v3697, 5
        %v4517 = vsel %vm2910, %v4515, %v4516
        %v4518 = vrot.slane %v4516, 4
        %v4519 = vrot.slane %v3698, 5
        %v4520 = vsel %vm2910, %v4518, %v4519
        %v4521 = vrot.slane %v4409, 5
        %v4522 = vrot.slane %v4521, 4
        %v4523 = vrot.slane %v3700, 5
        %v4524 = vsel %vm2910, %v4522, %v4523
        %v4525 = vrot.slane %v4523, 4
        %v4526 = vrot.slane %v3701, 5
        %v4527 = vsel %vm2910, %v4525, %v4526
        %v4528 = vrot.slane %v4410, 5
        %v4529 = vrot.slane %v4528, 4
        %v4530 = vrot.slane %v3703, 5
        %v4531 = vsel %vm2910, %v4529, %v4530
        %v4532 = vrot.slane %v4530, 4
        %v4533 = vrot.slane %v3704, 5
        %v4534 = vsel %vm2910, %v4532, %v4533
        %v4535 = vrot.slane %v4411, 5
        %v4536 = vrot.slane %v4535, 4
        %v4537 = vrot.slane %v3706, 5
        %v4538 = vsel %vm2910, %v4536, %v4537
        %v4539 = vrot.slane %v4537, 4
        %v4540 = vrot.slane %v3707, 5
        %v4541 = vsel %vm2910, %v4539, %v4540
        %v4542 = vrot.slane %v4412, 5
        %v4543 = vrot.slane %v4542, 4
        %v4544 = vrot.slane %v3709, 5
        %v4545 = vsel %vm2910, %v4543, %v4544
        %v4546 = vrot.slane %v4544, 4
        %v4547 = vrot.slane %v3710, 5
        %v4548 = vsel %vm2910, %v4546, %v4547
        %v4549 = vrot.slane %v4413, 5
        %v4550 = vrot.slane %v4549, 4
        %v4551 = vrot.slane %v3712, 5
        %v4552 = vsel %vm2910, %v4550, %v4551
        %v4553 = vrot.slane %v4551, 4
        %v4554 = vrot.slane %v3713, 5
        %v4555 = vsel %vm2910, %v4553, %v4554
        %v4556 = vrot.slane %v4414, 5
        %v4557 = vrot.slane %v4556, 4
        %v4558 = vrot.slane %v3715, 5
        %v4559 = vsel %vm2910, %v4557, %v4558
        %v4560 = vrot.slane %v4558, 4
        %v4561 = vrot.slane %v3716, 5
        %v4562 = vsel %vm2910, %v4560, %v4561
        %v4563 = vrot.slane %v4415, 5
        %v4564 = vrot.slane %v4563, 4
        %v4565 = vrot.slane %v3718, 5
        %v4566 = vsel %vm2910, %v4564, %v4565
        %v4567 = vrot.slane %v4565, 4
        %v4568 = vrot.slane %v3719, 5
        %v4569 = vsel %vm2910, %v4567, %v4568
        %v4570 = vrot.slane %v4416, 5
        %v4571 = vrot.slane %v4570, 4
        %v4572 = vrot.slane %v3721, 5
        %v4573 = vsel %vm2910, %v4571, %v4572
        %v4574 = vrot.slane %v4572, 4
        %v4575 = vrot.slane %v3722, 5
        %v4576 = vsel %vm2910, %v4574, %v4575
        %s4577 = scalar_lea.vmem [#allocation11], 10
        %v4578 = vld [vmem:[%s4577] sm:$0x3]
        %v4579 = vunpack.c.l.b16 %v4468
        %v4580 = vunpack.c.l.b16 %v4471
        %v4581 = vunpack.c.l.b16 %v4475
        %v4582 = vunpack.c.l.b16 %v4478
        %v4583 = vunpack.c.l.b16 %v4482
        %v4584 = vunpack.c.l.b16 %v4485
        %v4585 = vunpack.c.l.b16 %v4489
        %v4586 = vunpack.c.l.b16 %v4492
        %v4587 = vunpack.c.l.b16 %v4496
        %v4588 = vunpack.c.l.b16 %v4499
        %v4589 = vunpack.c.l.b16 %v4503
        %v4590 = vunpack.c.l.b16 %v4506
        %v4591 = vunpack.c.l.b16 %v4510
        %v4592 = vunpack.c.l.b16 %v4513
        %v4593 = vunpack.c.l.b16 %v4517
        %v4594 = vunpack.c.l.b16 %v4520
        %v4595 = vunpack.c.l.b16 %v4524
        %v4596 = vunpack.c.l.b16 %v4527
        %v4597 = vunpack.c.l.b16 %v4531
        %v4598 = vunpack.c.l.b16 %v4534
        %v4599 = vunpack.c.l.b16 %v4538
        %v4600 = vunpack.c.l.b16 %v4541
        %v4601 = vunpack.c.l.b16 %v4545
        %v4602 = vunpack.c.l.b16 %v4548
        %v4603 = vunpack.c.l.b16 %v4552
        %v4604 = vunpack.c.l.b16 %v4555
        %v4605 = vunpack.c.l.b16 %v4559
        %v4606 = vunpack.c.l.b16 %v4562
        %v4607 = vunpack.c.l.b16 %v4566
        %v4608 = vunpack.c.l.b16 %v4569
        %v4609 = vunpack.c.l.b16 %v4573
        %v4610 = vunpack.c.l.b16 %v4576
        %v4611 = vpack.c.b16 %v4580, %v4579
        %v4612 = vpack.c.b16 %v4582, %v4581
        %v4613 = vpack.c.b16 %v4584, %v4583
        %v4614 = vpack.c.b16 %v4586, %v4585
        %v4615 = vpack.c.b16 %v4588, %v4587
        %v4616 = vpack.c.b16 %v4590, %v4589
        %v4617 = vpack.c.b16 %v4592, %v4591
        %v4618 = vpack.c.b16 %v4594, %v4593
        %v4619 = vpack.c.b16 %v4596, %v4595
        %v4620 = vpack.c.b16 %v4598, %v4597
        %v4621 = vpack.c.b16 %v4600, %v4599
        %v4622 = vpack.c.b16 %v4602, %v4601
        %v4623 = vpack.c.b16 %v4604, %v4603
        %v4624 = vpack.c.b16 %v4606, %v4605
        %v4625 = vpack.c.b16 %v4608, %v4607
        %v4626 = vpack.c.b16 %v4610, %v4609
        %v4628 = vsel %vm725, %v4611, 0
        %v4631 = vsel %vm725, %v4612, 0
        %v4634 = vsel %vm725, %v4613, 0
        %v4637 = vsel %vm725, %v4614, 0
        %v4640 = vsel %vm725, %v4615, 0
        %v4643 = vsel %vm725, %v4616, 0
        %v4646 = vsel %vm725, %v4617, 0
        %v4649 = vsel %vm725, %v4618, 0
        %v4652 = vsel %vm725, %v4619, 0
        %v4655 = vsel %vm725, %v4620, 0
        %v4658 = vsel %vm725, %v4621, 0
        %v4661 = vsel %vm725, %v4622, 0
        %v4664 = vsel %vm725, %v4623, 0
        %v4667 = vsel %vm725, %v4624, 0
        %v4670 = vsel %vm725, %v4625, 0
        %v4673 = vsel %vm725, %v4626, 0
        %v4676 = vsel %vm774, %v4578, 0
        %4678 = vmatprep.subr.bf16.mxu0 0
        %4679 = vmatpush1.bf16.msra.mxu0 %v4676
        %4680 = vmatprep.subr.bf16.mxu0 0
        %4681 = vmatpush1.bf16.msra.mxu0 0
        %4682 = vmatprep.subr.bf16.mxu0 0
        %4683 = vmatpush1.bf16.msra.mxu0 0
        %4684 = vmatprep.subr.bf16.mxu0 0
        %4685 = vmatpush1.bf16.msra.mxu0 0
        %4686 = vmatprep.subr.bf16.mxu0 0
        %4687 = vmatpush1.bf16.msra.mxu0 0
        %4688 = vmatprep.subr.bf16.mxu0 0
        %4689 = vmatpush1.bf16.msra.mxu0 0
        %4690 = vmatprep.subr.bf16.mxu0 0
        %4691 = vmatpush1.bf16.msra.mxu0 0
        %4692 = vmatprep.subr.bf16.mxu0 0
        %4693 = vmatpush1.bf16.msra.mxu0 0
        %4694 = vmatprep.subr.bf16.mxu0 0
        %4695 = vmatpush1.bf16.msra.mxu0 0
        %4696 = vmatprep.subr.bf16.mxu0 0
        %4697 = vmatpush1.bf16.msra.mxu0 0
        %4698 = vmatprep.subr.bf16.mxu0 0
        %4699 = vmatpush1.bf16.msra.mxu0 0
        %4700 = vmatprep.subr.bf16.mxu0 0
        %4701 = vmatpush1.bf16.msra.mxu0 0
        %4702 = vmatprep.subr.bf16.mxu0 0
        %4703 = vmatpush1.bf16.msra.mxu0 0
        %4704 = vmatprep.subr.bf16.mxu0 0
        %4705 = vmatpush1.bf16.msra.mxu0 0
        %4706 = vmatprep.subr.bf16.mxu0 0
        %4707 = vmatpush1.bf16.msra.mxu0 0
        %4708 = vmatprep.subr.bf16.mxu0 0
        %4709 = vmatpush1.bf16.msra.mxu0 0
        %4710 = vmatprep.mubr.bf16.mxu0 0
        %4711 = vmatmul.mubr.bf16.gmra.mrb[0].mxu0 %v4628
        %v4712 = vpop.f32.mrb[0].mxu0
        %v4713 = vadd.f32 0.0, %v4712
        %v4714 = vpop.f32.mrb[0].mxu0
        %v4715 = vpop.f32.mrb[0].mxu0
        %v4716 = vadd.f32 0.0, %v4715
        %v4717 = vpop.f32.mrb[0].mxu0
        %4718 = vmatprep.mubr.bf16.mxu0 0
        %4719 = vmatmul.mubr.bf16.gmra.mrb[0].mxu0 %v4631
        %v4720 = vpop.f32.mrb[0].mxu0
        %v4721 = vadd.f32 0.0, %v4720
        %v4722 = vpop.f32.mrb[0].mxu0
        %v4723 = vpop.f32.mrb[0].mxu0
        %v4724 = vadd.f32 0.0, %v4723
        %v4725 = vpop.f32.mrb[0].mxu0
        %4726 = vmatprep.mubr.bf16.mxu0 0
        %4727 = vmatmul.mubr.bf16.gmra.mrb[0].mxu0 %v4634
        %v4728 = vpop.f32.mrb[0].mxu0
        %v4729 = vadd.f32 0.0, %v4728
        %v4730 = vpop.f32.mrb[0].mxu0
        %v4731 = vpop.f32.mrb[0].mxu0
        %v4732 = vadd.f32 0.0, %v4731
        %v4733 = vpop.f32.mrb[0].mxu0
        %4734 = vmatprep.mubr.bf16.mxu0 0
        %4735 = vmatmul.mubr.bf16.gmra.mrb[0].mxu0 %v4637
        %v4736 = vpop.f32.mrb[0].mxu0
        %v4737 = vadd.f32 0.0, %v4736
        %v4738 = vpop.f32.mrb[0].mxu0
        %v4739 = vpop.f32.mrb[0].mxu0
        %v4740 = vadd.f32 0.0, %v4739
        %v4741 = vpop.f32.mrb[0].mxu0
        %4742 = vmatprep.mubr.bf16.mxu0 0
        %4743 = vmatmul.mubr.bf16.gmra.mrb[0].mxu0 %v4640
        %v4744 = vpop.f32.mrb[0].mxu0
        %v4745 = vadd.f32 0.0, %v4744
        %v4746 = vpop.f32.mrb[0].mxu0
        %v4747 = vpop.f32.mrb[0].mxu0
        %v4748 = vadd.f32 0.0, %v4747
        %v4749 = vpop.f32.mrb[0].mxu0
        %4750 = vmatprep.mubr.bf16.mxu0 0
        %4751 = vmatmul.mubr.bf16.gmra.mrb[0].mxu0 %v4643
        %v4752 = vpop.f32.mrb[0].mxu0
        %v4753 = vadd.f32 0.0, %v4752
        %v4754 = vpop.f32.mrb[0].mxu0
        %v4755 = vpop.f32.mrb[0].mxu0
        %v4756 = vadd.f32 0.0, %v4755
        %v4757 = vpop.f32.mrb[0].mxu0
        %4758 = vmatprep.mubr.bf16.mxu0 0
        %4759 = vmatmul.mubr.bf16.gmra.mrb[0].mxu0 %v4646
        %v4760 = vpop.f32.mrb[0].mxu0
        %v4761 = vadd.f32 0.0, %v4760
        %v4762 = vpop.f32.mrb[0].mxu0
        %v4763 = vpop.f32.mrb[0].mxu0
        %v4764 = vadd.f32 0.0, %v4763
        %v4765 = vpop.f32.mrb[0].mxu0
        %4766 = vmatprep.mubr.bf16.mxu0 0
        %4767 = vmatmul.mubr.bf16.gmra.mrb[0].mxu0 %v4649
        %v4768 = vpop.f32.mrb[0].mxu0
        %v4769 = vadd.f32 0.0, %v4768
        %v4770 = vpop.f32.mrb[0].mxu0
        %v4771 = vpop.f32.mrb[0].mxu0
        %v4772 = vadd.f32 0.0, %v4771
        %v4773 = vpop.f32.mrb[0].mxu0
        %4774 = vmatprep.mubr.bf16.mxu0 0
        %4775 = vmatmul.mubr.bf16.gmra.mrb[0].mxu0 %v4652
        %v4776 = vpop.f32.mrb[0].mxu0
        %v4777 = vadd.f32 0.0, %v4776
        %v4778 = vpop.f32.mrb[0].mxu0
        %v4779 = vpop.f32.mrb[0].mxu0
        %v4780 = vadd.f32 0.0, %v4779
        %v4781 = vpop.f32.mrb[0].mxu0
        %4782 = vmatprep.mubr.bf16.mxu0 0
        %4783 = vmatmul.mubr.bf16.gmra.mrb[0].mxu0 %v4655
        %v4784 = vpop.f32.mrb[0].mxu0
        %v4785 = vadd.f32 0.0, %v4784
        %v4786 = vpop.f32.mrb[0].mxu0
        %v4787 = vpop.f32.mrb[0].mxu0
        %v4788 = vadd.f32 0.0, %v4787
        %v4789 = vpop.f32.mrb[0].mxu0
        %4790 = vmatprep.mubr.bf16.mxu0 0
        %4791 = vmatmul.mubr.bf16.gmra.mrb[0].mxu0 %v4658
        %v4792 = vpop.f32.mrb[0].mxu0
        %v4793 = vadd.f32 0.0, %v4792
        %v4794 = vpop.f32.mrb[0].mxu0
        %v4795 = vpop.f32.mrb[0].mxu0
        %v4796 = vadd.f32 0.0, %v4795
        %v4797 = vpop.f32.mrb[0].mxu0
        %4798 = vmatprep.mubr.bf16.mxu0 0
        %4799 = vmatmul.mubr.bf16.gmra.mrb[0].mxu0 %v4661
        %v4800 = vpop.f32.mrb[0].mxu0
        %v4801 = vadd.f32 0.0, %v4800
        %v4802 = vpop.f32.mrb[0].mxu0
        %v4803 = vpop.f32.mrb[0].mxu0
        %v4804 = vadd.f32 0.0, %v4803
        %v4805 = vpop.f32.mrb[0].mxu0
        %4806 = vmatprep.mubr.bf16.mxu0 0
        %4807 = vmatmul.mubr.bf16.gmra.mrb[0].mxu0 %v4664
        %v4808 = vpop.f32.mrb[0].mxu0
        %v4809 = vadd.f32 0.0, %v4808
        %v4810 = vpop.f32.mrb[0].mxu0
        %v4811 = vpop.f32.mrb[0].mxu0
        %v4812 = vadd.f32 0.0, %v4811
        %v4813 = vpop.f32.mrb[0].mxu0
        %4814 = vmatprep.mubr.bf16.mxu0 0
        %4815 = vmatmul.mubr.bf16.gmra.mrb[0].mxu0 %v4667
        %v4816 = vpop.f32.mrb[0].mxu0
        %v4817 = vadd.f32 0.0, %v4816
        %v4818 = vpop.f32.mrb[0].mxu0
        %v4819 = vpop.f32.mrb[0].mxu0
        %v4820 = vadd.f32 0.0, %v4819
        %v4821 = vpop.f32.mrb[0].mxu0
        %4822 = vmatprep.mubr.bf16.mxu0 0
        %4823 = vmatmul.mubr.bf16.gmra.mrb[0].mxu0 %v4670
        %v4824 = vpop.f32.mrb[0].mxu0
        %v4825 = vadd.f32 0.0, %v4824
        %v4826 = vpop.f32.mrb[0].mxu0
        %v4827 = vpop.f32.mrb[0].mxu0
        %v4828 = vadd.f32 0.0, %v4827
        %v4829 = vpop.f32.mrb[0].mxu0
        %4830 = vmatprep.mubr.bf16.mxu0 0
        %4831 = vmatmul.mubr.bf16.gmra.mrb[0].mxu0 %v4673
        %v4832 = vpop.f32.mrb[0].mxu0
        %v4833 = vadd.f32 0.0, %v4832
        %v4834 = vpop.f32.mrb[0].mxu0
        %v4835 = vpop.f32.mrb[0].mxu0
        %v4836 = vadd.f32 0.0, %v4835
        %v4837 = vpop.f32.mrb[0].mxu0
        %4838 = vdwg.mxu0
        %v4839 = vadd.f32 %v4369, %v4713
        %v4840 = vadd.f32 %v4370, %v4716
        %v4841 = vadd.f32 %v4371, %v4721
        %v4842 = vadd.f32 %v4372, %v4724
        %v4843 = vadd.f32 %v4373, %v4729
        %v4844 = vadd.f32 %v4374, %v4732
        %v4845 = vadd.f32 %v4375, %v4737
        %v4846 = vadd.f32 %v4376, %v4740
        %v4847 = vadd.f32 %v4377, %v4745
        %v4848 = vadd.f32 %v4378, %v4748
        %v4849 = vadd.f32 %v4379, %v4753
        %v4850 = vadd.f32 %v4380, %v4756
        %v4851 = vadd.f32 %v4381, %v4761
        %v4852 = vadd.f32 %v4382, %v4764
        %v4853 = vadd.f32 %v4383, %v4769
        %v4854 = vadd.f32 %v4384, %v4772
        %v4855 = vadd.f32 %v4385, %v4777
        %v4856 = vadd.f32 %v4386, %v4780
        %v4857 = vadd.f32 %v4387, %v4785
        %v4858 = vadd.f32 %v4388, %v4788
        %v4859 = vadd.f32 %v4389, %v4793
        %v4860 = vadd.f32 %v4390, %v4796
        %v4861 = vadd.f32 %v4391, %v4801
        %v4862 = vadd.f32 %v4392, %v4804
        %v4863 = vadd.f32 %v4393, %v4809
        %v4864 = vadd.f32 %v4394, %v4812
        %v4865 = vadd.f32 %v4395, %v4817
        %v4866 = vadd.f32 %v4396, %v4820
        %v4867 = vadd.f32 %v4397, %v4825
        %v4868 = vadd.f32 %v4398, %v4828
        %v4869 = vadd.f32 %v4399, %v4833
        %v4870 = vadd.f32 %v4400, %v4836
        %s4871 = scalar_lea.vmem [#allocation2], 24
        %v4872 = vld [vmem:[%s4871] sm:$0xf]
        %v4873 = vld [vmem:[%s4871 + $0x4] sm:$0xf]
        %v4874 = vld [vmem:[%s4871 + $0xc] sm:$0xf]
        %v4875 = vld [vmem:[%s4871 + $0x10] sm:$0xf]
        %v4876 = vld [vmem:[%s4871 + $0x18] sm:$0xf]
        %v4877 = vld [vmem:[%s4871 + $0x1c] sm:$0xf]
        %v4878 = vld [vmem:[%s4871 + $0x24] sm:$0xf]
        %v4879 = vld [vmem:[%s4871 + $0x28] sm:$0xf]
        %v4880 = vld [vmem:[%s4871 + $0x30] sm:$0xf]
        %v4881 = vld [vmem:[%s4871 + $0x34] sm:$0xf]
        %v4882 = vld [vmem:[%s4871 + $0x3c] sm:$0xf]
        %v4883 = vld [vmem:[%s4871 + $0x40] sm:$0xf]
        %v4884 = vld [vmem:[%s4871 + $0x48] sm:$0xf]
        %v4885 = vld [vmem:[%s4871 + $0x4c] sm:$0xf]
        %v4886 = vld [vmem:[%s4871 + $0x54] sm:$0xf]
        %v4887 = vld [vmem:[%s4871 + $0x58] sm:$0xf]
        %v4888 = vld [vmem:[%s4871 + $0x60] sm:$0xf]
        %v4889 = vld [vmem:[%s4871 + $0x64] sm:$0xf]
        %v4890 = vld [vmem:[%s4871 + $0x6c] sm:$0xf]
        %v4891 = vld [vmem:[%s4871 + $0x70] sm:$0xf]
        %v4892 = vld [vmem:[%s4871 + $0x78] sm:$0xf]
        %v4893 = vld [vmem:[%s4871 + $0x7c] sm:$0xf]
        %v4894 = vld [vmem:[%s4871 + $0x84] sm:$0xf]
        %v4895 = vld [vmem:[%s4871 + $0x88] sm:$0xf]
        %v4896 = vld [vmem:[%s4871 + $0x90] sm:$0xf]
        %v4897 = vld [vmem:[%s4871 + $0x94] sm:$0xf]
        %v4898 = vld [vmem:[%s4871 + $0x9c] sm:$0xf]
        %v4899 = vld [vmem:[%s4871 + $0xa0] sm:$0xf]
        %v4900 = vld [vmem:[%s4871 + $0xa8] sm:$0xf]
        %v4901 = vld [vmem:[%s4871 + $0xac] sm:$0xf]
        %v4902 = vld [vmem:[%s4871 + $0xb4] sm:$0xf]
        %v4903 = vld [vmem:[%s4871 + $0xb8] sm:$0xf]
        %s4904 = scalar_lea.vmem [#allocation11], 12
        %v4905 = vld [vmem:[%s4904] sm:$0x3]
        %v4938 = vunpack.c.l.b16 %v4872
        %v4939 = vunpack.c.l.b16 %v4873
        %v4940 = vunpack.c.l.b16 %v4874
        %v4941 = vunpack.c.l.b16 %v4875
        %v4942 = vunpack.c.l.b16 %v4876
        %v4943 = vunpack.c.l.b16 %v4877
        %v4944 = vunpack.c.l.b16 %v4878
        %v4945 = vunpack.c.l.b16 %v4879
        %v4946 = vunpack.c.l.b16 %v4880
        %v4947 = vunpack.c.l.b16 %v4881
        %v4948 = vunpack.c.l.b16 %v4882
        %v4949 = vunpack.c.l.b16 %v4883
        %v4950 = vunpack.c.l.b16 %v4884
        %v4951 = vunpack.c.l.b16 %v4885
        %v4952 = vunpack.c.l.b16 %v4886
        %v4953 = vunpack.c.l.b16 %v4887
        %v4954 = vunpack.c.l.b16 %v4888
        %v4955 = vunpack.c.l.b16 %v4889
        %v4956 = vunpack.c.l.b16 %v4890
        %v4957 = vunpack.c.l.b16 %v4891
        %v4958 = vunpack.c.l.b16 %v4892
        %v4959 = vunpack.c.l.b16 %v4893
        %v4960 = vunpack.c.l.b16 %v4894
        %v4961 = vunpack.c.l.b16 %v4895
        %v4962 = vunpack.c.l.b16 %v4896
        %v4963 = vunpack.c.l.b16 %v4897
        %v4964 = vunpack.c.l.b16 %v4898
        %v4965 = vunpack.c.l.b16 %v4899
        %v4966 = vunpack.c.l.b16 %v4900
        %v4967 = vunpack.c.l.b16 %v4901
        %v4968 = vunpack.c.l.b16 %v4902
        %v4969 = vunpack.c.l.b16 %v4903
        %v4970 = vpack.c.b16 %v4939, %v4938
        %v4971 = vpack.c.b16 %v4941, %v4940
        %v4972 = vpack.c.b16 %v4943, %v4942
        %v4973 = vpack.c.b16 %v4945, %v4944
        %v4974 = vpack.c.b16 %v4947, %v4946
        %v4975 = vpack.c.b16 %v4949, %v4948
        %v4976 = vpack.c.b16 %v4951, %v4950
        %v4977 = vpack.c.b16 %v4953, %v4952
        %v4978 = vpack.c.b16 %v4955, %v4954
        %v4979 = vpack.c.b16 %v4957, %v4956
        %v4980 = vpack.c.b16 %v4959, %v4958
        %v4981 = vpack.c.b16 %v4961, %v4960
        %v4982 = vpack.c.b16 %v4963, %v4962
        %v4983 = vpack.c.b16 %v4965, %v4964
        %v4984 = vpack.c.b16 %v4967, %v4966
        %v4985 = vpack.c.b16 %v4969, %v4968
        %v4987 = vsel %vm725, %v4970, 0
        %v4990 = vsel %vm725, %v4971, 0
        %v4993 = vsel %vm725, %v4972, 0
        %v4996 = vsel %vm725, %v4973, 0
        %v4999 = vsel %vm725, %v4974, 0
        %v5002 = vsel %vm725, %v4975, 0
        %v5005 = vsel %vm725, %v4976, 0
        %v5008 = vsel %vm725, %v4977, 0
        %v5011 = vsel %vm725, %v4978, 0
        %v5014 = vsel %vm725, %v4979, 0
        %v5017 = vsel %vm725, %v4980, 0
        %v5020 = vsel %vm725, %v4981, 0
        %v5023 = vsel %vm725, %v4982, 0
        %v5026 = vsel %vm725, %v4983, 0
        %v5029 = vsel %vm725, %v4984, 0
        %v5032 = vsel %vm725, %v4985, 0
        %v5035 = vsel %vm774, %v4905, 0
        %5037 = vmatprep.subr.bf16.mxu0 0
        %5038 = vmatpush1.bf16.msra.mxu0 %v5035
        %5039 = vmatprep.subr.bf16.mxu0 0
        %5040 = vmatpush1.bf16.msra.mxu0 0
        %5041 = vmatprep.subr.bf16.mxu0 0
        %5042 = vmatpush1.bf16.msra.mxu0 0
        %5043 = vmatprep.subr.bf16.mxu0 0
        %5044 = vmatpush1.bf16.msra.mxu0 0
        %5045 = vmatprep.subr.bf16.mxu0 0
        %5046 = vmatpush1.bf16.msra.mxu0 0
        %5047 = vmatprep.subr.bf16.mxu0 0
        %5048 = vmatpush1.bf16.msra.mxu0 0
        %5049 = vmatprep.subr.bf16.mxu0 0
        %5050 = vmatpush1.bf16.msra.mxu0 0
        %5051 = vmatprep.subr.bf16.mxu0 0
        %5052 = vmatpush1.bf16.msra.mxu0 0
        %5053 = vmatprep.subr.bf16.mxu0 0
        %5054 = vmatpush1.bf16.msra.mxu0 0
        %5055 = vmatprep.subr.bf16.mxu0 0
        %5056 = vmatpush1.bf16.msra.mxu0 0
        %5057 = vmatprep.subr.bf16.mxu0 0
        %5058 = vmatpush1.bf16.msra.mxu0 0
        %5059 = vmatprep.subr.bf16.mxu0 0
        %5060 = vmatpush1.bf16.msra.mxu0 0
        %5061 = vmatprep.subr.bf16.mxu0 0
        %5062 = vmatpush1.bf16.msra.mxu0 0
        %5063 = vmatprep.subr.bf16.mxu0 0
        %5064 = vmatpush1.bf16.msra.mxu0 0
        %5065 = vmatprep.subr.bf16.mxu0 0
        %5066 = vmatpush1.bf16.msra.mxu0 0
        %5067 = vmatprep.subr.bf16.mxu0 0
        %5068 = vmatpush1.bf16.msra.mxu0 0
        %5069 = vmatprep.mubr.bf16.mxu0 0
        %5070 = vmatmul.mubr.bf16.gmra.mrb[0].mxu0 %v4987
        %v5071 = vpop.f32.mrb[0].mxu0
        %v5072 = vadd.f32 0.0, %v5071
        %v5073 = vpop.f32.mrb[0].mxu0
        %v5074 = vpop.f32.mrb[0].mxu0
        %v5075 = vadd.f32 0.0, %v5074
        %v5076 = vpop.f32.mrb[0].mxu0
        %5077 = vmatprep.mubr.bf16.mxu0 0
        %5078 = vmatmul.mubr.bf16.gmra.mrb[0].mxu0 %v4990
        %v5079 = vpop.f32.mrb[0].mxu0
        %v5080 = vadd.f32 0.0, %v5079
        %v5081 = vpop.f32.mrb[0].mxu0
        %v5082 = vpop.f32.mrb[0].mxu0
        %v5083 = vadd.f32 0.0, %v5082
        %v5084 = vpop.f32.mrb[0].mxu0
        %5085 = vmatprep.mubr.bf16.mxu0 0
        %5086 = vmatmul.mubr.bf16.gmra.mrb[0].mxu0 %v4993
        %v5087 = vpop.f32.mrb[0].mxu0
        %v5088 = vadd.f32 0.0, %v5087
        %v5089 = vpop.f32.mrb[0].mxu0
        %v5090 = vpop.f32.mrb[0].mxu0
        %v5091 = vadd.f32 0.0, %v5090
        %v5092 = vpop.f32.mrb[0].mxu0
        %5093 = vmatprep.mubr.bf16.mxu0 0
        %5094 = vmatmul.mubr.bf16.gmra.mrb[0].mxu0 %v4996
        %v5095 = vpop.f32.mrb[0].mxu0
        %v5096 = vadd.f32 0.0, %v5095
        %v5097 = vpop.f32.mrb[0].mxu0
        %v5098 = vpop.f32.mrb[0].mxu0
        %v5099 = vadd.f32 0.0, %v5098
        %v5100 = vpop.f32.mrb[0].mxu0
        %5101 = vmatprep.mubr.bf16.mxu0 0
        %5102 = vmatmul.mubr.bf16.gmra.mrb[0].mxu0 %v4999
        %v5103 = vpop.f32.mrb[0].mxu0
        %v5104 = vadd.f32 0.0, %v5103
        %v5105 = vpop.f32.mrb[0].mxu0
        %v5106 = vpop.f32.mrb[0].mxu0
        %v5107 = vadd.f32 0.0, %v5106
        %v5108 = vpop.f32.mrb[0].mxu0
        %5109 = vmatprep.mubr.bf16.mxu0 0
        %5110 = vmatmul.mubr.bf16.gmra.mrb[0].mxu0 %v5002
        %v5111 = vpop.f32.mrb[0].mxu0
        %v5112 = vadd.f32 0.0, %v5111
        %v5113 = vpop.f32.mrb[0].mxu0
        %v5114 = vpop.f32.mrb[0].mxu0
        %v5115 = vadd.f32 0.0, %v5114
        %v5116 = vpop.f32.mrb[0].mxu0
        %5117 = vmatprep.mubr.bf16.mxu0 0
        %5118 = vmatmul.mubr.bf16.gmra.mrb[0].mxu0 %v5005
        %v5119 = vpop.f32.mrb[0].mxu0
        %v5120 = vadd.f32 0.0, %v5119
        %v5121 = vpop.f32.mrb[0].mxu0
        %v5122 = vpop.f32.mrb[0].mxu0
        %v5123 = vadd.f32 0.0, %v5122
        %v5124 = vpop.f32.mrb[0].mxu0
        %5125 = vmatprep.mubr.bf16.mxu0 0
        %5126 = vmatmul.mubr.bf16.gmra.mrb[0].mxu0 %v5008
        %v5127 = vpop.f32.mrb[0].mxu0
        %v5128 = vadd.f32 0.0, %v5127
        %v5129 = vpop.f32.mrb[0].mxu0
        %v5130 = vpop.f32.mrb[0].mxu0
        %v5131 = vadd.f32 0.0, %v5130
        %v5132 = vpop.f32.mrb[0].mxu0
        %5133 = vmatprep.mubr.bf16.mxu0 0
        %5134 = vmatmul.mubr.bf16.gmra.mrb[0].mxu0 %v5011
        %v5135 = vpop.f32.mrb[0].mxu0
        %v5136 = vadd.f32 0.0, %v5135
        %v5137 = vpop.f32.mrb[0].mxu0
        %v5138 = vpop.f32.mrb[0].mxu0
        %v5139 = vadd.f32 0.0, %v5138
        %v5140 = vpop.f32.mrb[0].mxu0
        %5141 = vmatprep.mubr.bf16.mxu0 0
        %5142 = vmatmul.mubr.bf16.gmra.mrb[0].mxu0 %v5014
        %v5143 = vpop.f32.mrb[0].mxu0
        %v5144 = vadd.f32 0.0, %v5143
        %v5145 = vpop.f32.mrb[0].mxu0
        %v5146 = vpop.f32.mrb[0].mxu0
        %v5147 = vadd.f32 0.0, %v5146
        %v5148 = vpop.f32.mrb[0].mxu0
        %5149 = vmatprep.mubr.bf16.mxu0 0
        %5150 = vmatmul.mubr.bf16.gmra.mrb[0].mxu0 %v5017
        %v5151 = vpop.f32.mrb[0].mxu0
        %v5152 = vadd.f32 0.0, %v5151
        %v5153 = vpop.f32.mrb[0].mxu0
        %v5154 = vpop.f32.mrb[0].mxu0
        %v5155 = vadd.f32 0.0, %v5154
        %v5156 = vpop.f32.mrb[0].mxu0
        %5157 = vmatprep.mubr.bf16.mxu0 0
        %5158 = vmatmul.mubr.bf16.gmra.mrb[0].mxu0 %v5020
        %v5159 = vpop.f32.mrb[0].mxu0
        %v5160 = vadd.f32 0.0, %v5159
        %v5161 = vpop.f32.mrb[0].mxu0
        %v5162 = vpop.f32.mrb[0].mxu0
        %v5163 = vadd.f32 0.0, %v5162
        %v5164 = vpop.f32.mrb[0].mxu0
        %5165 = vmatprep.mubr.bf16.mxu0 0
        %5166 = vmatmul.mubr.bf16.gmra.mrb[0].mxu0 %v5023
        %v5167 = vpop.f32.mrb[0].mxu0
        %v5168 = vadd.f32 0.0, %v5167
        %v5169 = vpop.f32.mrb[0].mxu0
        %v5170 = vpop.f32.mrb[0].mxu0
        %v5171 = vadd.f32 0.0, %v5170
        %v5172 = vpop.f32.mrb[0].mxu0
        %5173 = vmatprep.mubr.bf16.mxu0 0
        %5174 = vmatmul.mubr.bf16.gmra.mrb[0].mxu0 %v5026
        %v5175 = vpop.f32.mrb[0].mxu0
        %v5176 = vadd.f32 0.0, %v5175
        %v5177 = vpop.f32.mrb[0].mxu0
        %v5178 = vpop.f32.mrb[0].mxu0
        %v5179 = vadd.f32 0.0, %v5178
        %v5180 = vpop.f32.mrb[0].mxu0
        %5181 = vmatprep.mubr.bf16.mxu0 0
        %5182 = vmatmul.mubr.bf16.gmra.mrb[0].mxu0 %v5029
        %v5183 = vpop.f32.mrb[0].mxu0
        %v5184 = vadd.f32 0.0, %v5183
        %v5185 = vpop.f32.mrb[0].mxu0
        %v5186 = vpop.f32.mrb[0].mxu0
        %v5187 = vadd.f32 0.0, %v5186
        %v5188 = vpop.f32.mrb[0].mxu0
        %5189 = vmatprep.mubr.bf16.mxu0 0
        %5190 = vmatmul.mubr.bf16.gmra.mrb[0].mxu0 %v5032
        %v5191 = vpop.f32.mrb[0].mxu0
        %v5192 = vadd.f32 0.0, %v5191
        %v5193 = vpop.f32.mrb[0].mxu0
        %v5194 = vpop.f32.mrb[0].mxu0
        %v5195 = vadd.f32 0.0, %v5194
        %v5196 = vpop.f32.mrb[0].mxu0
        %5197 = vdwg.mxu0
        %v5198 = vadd.f32 %v4839, %v5072
        %v5199 = vadd.f32 %v4840, %v5075
        %v5200 = vadd.f32 %v4841, %v5080
        %v5201 = vadd.f32 %v4842, %v5083
        %v5202 = vadd.f32 %v4843, %v5088
        %v5203 = vadd.f32 %v4844, %v5091
        %v5204 = vadd.f32 %v4845, %v5096
        %v5205 = vadd.f32 %v4846, %v5099
        %v5206 = vadd.f32 %v4847, %v5104
        %v5207 = vadd.f32 %v4848, %v5107
        %v5208 = vadd.f32 %v4849, %v5112
        %v5209 = vadd.f32 %v4850, %v5115
        %v5210 = vadd.f32 %v4851, %v5120
        %v5211 = vadd.f32 %v4852, %v5123
        %v5212 = vadd.f32 %v4853, %v5128
        %v5213 = vadd.f32 %v4854, %v5131
        %v5214 = vadd.f32 %v4855, %v5136
        %v5215 = vadd.f32 %v4856, %v5139
        %v5216 = vadd.f32 %v4857, %v5144
        %v5217 = vadd.f32 %v4858, %v5147
        %v5218 = vadd.f32 %v4859, %v5152
        %v5219 = vadd.f32 %v4860, %v5155
        %v5220 = vadd.f32 %v4861, %v5160
        %v5221 = vadd.f32 %v4862, %v5163
        %v5222 = vadd.f32 %v4863, %v5168
        %v5223 = vadd.f32 %v4864, %v5171
        %v5224 = vadd.f32 %v4865, %v5176
        %v5225 = vadd.f32 %v4866, %v5179
        %v5226 = vadd.f32 %v4867, %v5184
        %v5227 = vadd.f32 %v4868, %v5187
        %v5228 = vadd.f32 %v4869, %v5192
        %v5229 = vadd.f32 %v4870, %v5195
        %v5230 = vld [vmem:[%s4871] sm:$0xf]
        %v5231 = vld [vmem:[%s4871 + $0x4] sm:$0xf]
        %v5232 = vld [vmem:[%s4871 + $0x8] sm:$0x1]
        %v5233 = vld [vmem:[%s4871 + $0xc] sm:$0xf]
        %v5234 = vld [vmem:[%s4871 + $0x10] sm:$0xf]
        %v5235 = vld [vmem:[%s4871 + $0x14] sm:$0x1]
        %v5236 = vld [vmem:[%s4871 + $0x18] sm:$0xf]
        %v5237 = vld [vmem:[%s4871 + $0x1c] sm:$0xf]
        %v5238 = vld [vmem:[%s4871 + $0x20] sm:$0x1]
        %v5239 = vld [vmem:[%s4871 + $0x24] sm:$0xf]
        %v5240 = vld [vmem:[%s4871 + $0x28] sm:$0xf]
        %v5241 = vld [vmem:[%s4871 + $0x2c] sm:$0x1]
        %v5242 = vld [vmem:[%s4871 + $0x30] sm:$0xf]
        %v5243 = vld [vmem:[%s4871 + $0x34] sm:$0xf]
        %v5244 = vld [vmem:[%s4871 + $0x38] sm:$0x1]
        %v5245 = vld [vmem:[%s4871 + $0x3c] sm:$0xf]
        %v5246 = vld [vmem:[%s4871 + $0x40] sm:$0xf]
        %v5247 = vld [vmem:[%s4871 + $0x44] sm:$0x1]
        %v5248 = vld [vmem:[%s4871 + $0x48] sm:$0xf]
        %v5249 = vld [vmem:[%s4871 + $0x4c] sm:$0xf]
        %v5250 = vld [vmem:[%s4871 + $0x50] sm:$0x1]
        %v5251 = vld [vmem:[%s4871 + $0x54] sm:$0xf]
        %v5252 = vld [vmem:[%s4871 + $0x58] sm:$0xf]
        %v5253 = vld [vmem:[%s4871 + $0x5c] sm:$0x1]
        %v5254 = vld [vmem:[%s4871 + $0x60] sm:$0xf]
        %v5255 = vld [vmem:[%s4871 + $0x64] sm:$0xf]
        %v5256 = vld [vmem:[%s4871 + $0x68] sm:$0x1]
        %v5257 = vld [vmem:[%s4871 + $0x6c] sm:$0xf]
        %v5258 = vld [vmem:[%s4871 + $0x70] sm:$0xf]
        %v5259 = vld [vmem:[%s4871 + $0x74] sm:$0x1]
        %v5260 = vld [vmem:[%s4871 + $0x78] sm:$0xf]
        %v5261 = vld [vmem:[%s4871 + $0x7c] sm:$0xf]
        %v5262 = vld [vmem:[%s4871 + $0x80] sm:$0x1]
        %v5263 = vld [vmem:[%s4871 + $0x84] sm:$0xf]
        %v5264 = vld [vmem:[%s4871 + $0x88] sm:$0xf]
        %v5265 = vld [vmem:[%s4871 + $0x8c] sm:$0x1]
        %v5266 = vld [vmem:[%s4871 + $0x90] sm:$0xf]
        %v5267 = vld [vmem:[%s4871 + $0x94] sm:$0xf]
        %v5268 = vld [vmem:[%s4871 + $0x98] sm:$0x1]
        %v5269 = vld [vmem:[%s4871 + $0x9c] sm:$0xf]
        %v5270 = vld [vmem:[%s4871 + $0xa0] sm:$0xf]
        %v5271 = vld [vmem:[%s4871 + $0xa4] sm:$0x1]
        %v5272 = vld [vmem:[%s4871 + $0xa8] sm:$0xf]
        %v5273 = vld [vmem:[%s4871 + $0xac] sm:$0xf]
        %v5274 = vld [vmem:[%s4871 + $0xb0] sm:$0x1]
        %v5275 = vld [vmem:[%s4871 + $0xb4] sm:$0xf]
        %v5276 = vld [vmem:[%s4871 + $0xb8] sm:$0xf]
        %v5277 = vld [vmem:[%s4871 + $0xbc] sm:$0x1]
        %v5279 = vshrl.u32 %v5230, 16
        %v5281 = vrot.slane %v5279, 4
        %v5282 = vshll.u32 %v5230, 16
        %v5284 = vrot.slane %v5282, 5
        %v5285 = vor.u32 %v5281, %v5284
        %v5286 = vrot.slane %v5285, 4
        %v5288 = vshll.u32 %v5231, 16
        %v5290 = vrot.slane %v5288, 5
        %v5291 = vsel %vm1921, %v5286, %v5290
        %v5292 = vshrl.u32 %v5231, 16
        %v5294 = vrot.slane %v5292, 4
        %v5295 = vor.u32 %v5294, %v5290
        %v5296 = vrot.slane %v5295, 4
        %v5298 = vshll.u32 %v5232, 16
        %v5300 = vrot.slane %v5298, 5
        %v5301 = vsel %vm1921, %v5296, %v5300
        %v5303 = vshrl.u32 %v5233, 16
        %v5305 = vrot.slane %v5303, 4
        %v5306 = vshll.u32 %v5233, 16
        %v5308 = vrot.slane %v5306, 5
        %v5309 = vor.u32 %v5305, %v5308
        %v5310 = vrot.slane %v5309, 4
        %v5312 = vshll.u32 %v5234, 16
        %v5314 = vrot.slane %v5312, 5
        %v5315 = vsel %vm1921, %v5310, %v5314
        %v5316 = vshrl.u32 %v5234, 16
        %v5318 = vrot.slane %v5316, 4
        %v5319 = vor.u32 %v5318, %v5314
        %v5320 = vrot.slane %v5319, 4
        %v5322 = vshll.u32 %v5235, 16
        %v5324 = vrot.slane %v5322, 5
        %v5325 = vsel %vm1921, %v5320, %v5324
        %v5327 = vshrl.u32 %v5236, 16
        %v5329 = vrot.slane %v5327, 4
        %v5330 = vshll.u32 %v5236, 16
        %v5332 = vrot.slane %v5330, 5
        %v5333 = vor.u32 %v5329, %v5332
        %v5334 = vrot.slane %v5333, 4
        %v5336 = vshll.u32 %v5237, 16
        %v5338 = vrot.slane %v5336, 5
        %v5339 = vsel %vm1921, %v5334, %v5338
        %v5340 = vshrl.u32 %v5237, 16
        %v5342 = vrot.slane %v5340, 4
        %v5343 = vor.u32 %v5342, %v5338
        %v5344 = vrot.slane %v5343, 4
        %v5346 = vshll.u32 %v5238, 16
        %v5348 = vrot.slane %v5346, 5
        %v5349 = vsel %vm1921, %v5344, %v5348
        %v5351 = vshrl.u32 %v5239, 16
        %v5353 = vrot.slane %v5351, 4
        %v5354 = vshll.u32 %v5239, 16
        %v5356 = vrot.slane %v5354, 5
        %v5357 = vor.u32 %v5353, %v5356
        %v5358 = vrot.slane %v5357, 4
        %v5360 = vshll.u32 %v5240, 16
        %v5362 = vrot.slane %v5360, 5
        %v5363 = vsel %vm1921, %v5358, %v5362
        %v5364 = vshrl.u32 %v5240, 16
        %v5366 = vrot.slane %v5364, 4
        %v5367 = vor.u32 %v5366, %v5362
        %v5368 = vrot.slane %v5367, 4
        %v5370 = vshll.u32 %v5241, 16
        %v5372 = vrot.slane %v5370, 5
        %v5373 = vsel %vm1921, %v5368, %v5372
        %v5375 = vshrl.u32 %v5242, 16
        %v5377 = vrot.slane %v5375, 4
        %v5378 = vshll.u32 %v5242, 16
        %v5380 = vrot.slane %v5378, 5
        %v5381 = vor.u32 %v5377, %v5380
        %v5382 = vrot.slane %v5381, 4
        %v5384 = vshll.u32 %v5243, 16
        %v5386 = vrot.slane %v5384, 5
        %v5387 = vsel %vm1921, %v5382, %v5386
        %v5388 = vshrl.u32 %v5243, 16
        %v5390 = vrot.slane %v5388, 4
        %v5391 = vor.u32 %v5390, %v5386
        %v5392 = vrot.slane %v5391, 4
        %v5394 = vshll.u32 %v5244, 16
        %v5396 = vrot.slane %v5394, 5
        %v5397 = vsel %vm1921, %v5392, %v5396
        %v5399 = vshrl.u32 %v5245, 16
        %v5401 = vrot.slane %v5399, 4
        %v5402 = vshll.u32 %v5245, 16
        %v5404 = vrot.slane %v5402, 5
        %v5405 = vor.u32 %v5401, %v5404
        %v5406 = vrot.slane %v5405, 4
        %v5408 = vshll.u32 %v5246, 16
        %v5410 = vrot.slane %v5408, 5
        %v5411 = vsel %vm1921, %v5406, %v5410
        %v5412 = vshrl.u32 %v5246, 16
        %v5414 = vrot.slane %v5412, 4
        %v5415 = vor.u32 %v5414, %v5410
        %v5416 = vrot.slane %v5415, 4
        %v5418 = vshll.u32 %v5247, 16
        %v5420 = vrot.slane %v5418, 5
        %v5421 = vsel %vm1921, %v5416, %v5420
        %v5423 = vshrl.u32 %v5248, 16
        %v5425 = vrot.slane %v5423, 4
        %v5426 = vshll.u32 %v5248, 16
        %v5428 = vrot.slane %v5426, 5
        %v5429 = vor.u32 %v5425, %v5428
        %v5430 = vrot.slane %v5429, 4
        %v5432 = vshll.u32 %v5249, 16
        %v5434 = vrot.slane %v5432, 5
        %v5435 = vsel %vm1921, %v5430, %v5434
        %v5436 = vshrl.u32 %v5249, 16
        %v5438 = vrot.slane %v5436, 4
        %v5439 = vor.u32 %v5438, %v5434
        %v5440 = vrot.slane %v5439, 4
        %v5442 = vshll.u32 %v5250, 16
        %v5444 = vrot.slane %v5442, 5
        %v5445 = vsel %vm1921, %v5440, %v5444
        %v5447 = vshrl.u32 %v5251, 16
        %v5449 = vrot.slane %v5447, 4
        %v5450 = vshll.u32 %v5251, 16
        %v5452 = vrot.slane %v5450, 5
        %v5453 = vor.u32 %v5449, %v5452
        %v5454 = vrot.slane %v5453, 4
        %v5456 = vshll.u32 %v5252, 16
        %v5458 = vrot.slane %v5456, 5
        %v5459 = vsel %vm1921, %v5454, %v5458
        %v5460 = vshrl.u32 %v5252, 16
        %v5462 = vrot.slane %v5460, 4
        %v5463 = vor.u32 %v5462, %v5458
        %v5464 = vrot.slane %v5463, 4
        %v5466 = vshll.u32 %v5253, 16
        %v5468 = vrot.slane %v5466, 5
        %v5469 = vsel %vm1921, %v5464, %v5468
        %v5471 = vshrl.u32 %v5254, 16
        %v5473 = vrot.slane %v5471, 4
        %v5474 = vshll.u32 %v5254, 16
        %v5476 = vrot.slane %v5474, 5
        %v5477 = vor.u32 %v5473, %v5476
        %v5478 = vrot.slane %v5477, 4
        %v5480 = vshll.u32 %v5255, 16
        %v5482 = vrot.slane %v5480, 5
        %v5483 = vsel %vm1921, %v5478, %v5482
        %v5484 = vshrl.u32 %v5255, 16
        %v5486 = vrot.slane %v5484, 4
        %v5487 = vor.u32 %v5486, %v5482
        %v5488 = vrot.slane %v5487, 4
        %v5490 = vshll.u32 %v5256, 16
        %v5492 = vrot.slane %v5490, 5
        %v5493 = vsel %vm1921, %v5488, %v5492
        %v5495 = vshrl.u32 %v5257, 16
        %v5497 = vrot.slane %v5495, 4
        %v5498 = vshll.u32 %v5257, 16
        %v5500 = vrot.slane %v5498, 5
        %v5501 = vor.u32 %v5497, %v5500
        %v5502 = vrot.slane %v5501, 4
        %v5504 = vshll.u32 %v5258, 16
        %v5506 = vrot.slane %v5504, 5
        %v5507 = vsel %vm1921, %v5502, %v5506
        %v5508 = vshrl.u32 %v5258, 16
        %v5510 = vrot.slane %v5508, 4
        %v5511 = vor.u32 %v5510, %v5506
        %v5512 = vrot.slane %v5511, 4
        %v5514 = vshll.u32 %v5259, 16
        %v5516 = vrot.slane %v5514, 5
        %v5517 = vsel %vm1921, %v5512, %v5516
        %v5519 = vshrl.u32 %v5260, 16
        %v5521 = vrot.slane %v5519, 4
        %v5522 = vshll.u32 %v5260, 16
        %v5524 = vrot.slane %v5522, 5
        %v5525 = vor.u32 %v5521, %v5524
        %v5526 = vrot.slane %v5525, 4
        %v5528 = vshll.u32 %v5261, 16
        %v5530 = vrot.slane %v5528, 5
        %v5531 = vsel %vm1921, %v5526, %v5530
        %v5532 = vshrl.u32 %v5261, 16
        %v5534 = vrot.slane %v5532, 4
        %v5535 = vor.u32 %v5534, %v5530
        %v5536 = vrot.slane %v5535, 4
        %v5538 = vshll.u32 %v5262, 16
        %v5540 = vrot.slane %v5538, 5
        %v5541 = vsel %vm1921, %v5536, %v5540
        %v5543 = vshrl.u32 %v5263, 16
        %v5545 = vrot.slane %v5543, 4
        %v5546 = vshll.u32 %v5263, 16
        %v5548 = vrot.slane %v5546, 5
        %v5549 = vor.u32 %v5545, %v5548
        %v5550 = vrot.slane %v5549, 4
        %v5552 = vshll.u32 %v5264, 16
        %v5554 = vrot.slane %v5552, 5
        %v5555 = vsel %vm1921, %v5550, %v5554
        %v5556 = vshrl.u32 %v5264, 16
        %v5558 = vrot.slane %v5556, 4
        %v5559 = vor.u32 %v5558, %v5554
        %v5560 = vrot.slane %v5559, 4
        %v5562 = vshll.u32 %v5265, 16
        %v5564 = vrot.slane %v5562, 5
        %v5565 = vsel %vm1921, %v5560, %v5564
        %v5567 = vshrl.u32 %v5266, 16
        %v5569 = vrot.slane %v5567, 4
        %v5570 = vshll.u32 %v5266, 16
        %v5572 = vrot.slane %v5570, 5
        %v5573 = vor.u32 %v5569, %v5572
        %v5574 = vrot.slane %v5573, 4
        %v5576 = vshll.u32 %v5267, 16
        %v5578 = vrot.slane %v5576, 5
        %v5579 = vsel %vm1921, %v5574, %v5578
        %v5580 = vshrl.u32 %v5267, 16
        %v5582 = vrot.slane %v5580, 4
        %v5583 = vor.u32 %v5582, %v5578
        %v5584 = vrot.slane %v5583, 4
        %v5586 = vshll.u32 %v5268, 16
        %v5588 = vrot.slane %v5586, 5
        %v5589 = vsel %vm1921, %v5584, %v5588
        %v5591 = vshrl.u32 %v5269, 16
        %v5593 = vrot.slane %v5591, 4
        %v5594 = vshll.u32 %v5269, 16
        %v5596 = vrot.slane %v5594, 5
        %v5597 = vor.u32 %v5593, %v5596
        %v5598 = vrot.slane %v5597, 4
        %v5600 = vshll.u32 %v5270, 16
        %v5602 = vrot.slane %v5600, 5
        %v5603 = vsel %vm1921, %v5598, %v5602
        %v5604 = vshrl.u32 %v5270, 16
        %v5606 = vrot.slane %v5604, 4
        %v5607 = vor.u32 %v5606, %v5602
        %v5608 = vrot.slane %v5607, 4
        %v5610 = vshll.u32 %v5271, 16
        %v5612 = vrot.slane %v5610, 5
        %v5613 = vsel %vm1921, %v5608, %v5612
        %v5615 = vshrl.u32 %v5272, 16
        %v5617 = vrot.slane %v5615, 4
        %v5618 = vshll.u32 %v5272, 16
        %v5620 = vrot.slane %v5618, 5
        %v5621 = vor.u32 %v5617, %v5620
        %v5622 = vrot.slane %v5621, 4
        %v5624 = vshll.u32 %v5273, 16
        %v5626 = vrot.slane %v5624, 5
        %v5627 = vsel %vm1921, %v5622, %v5626
        %v5628 = vshrl.u32 %v5273, 16
        %v5630 = vrot.slane %v5628, 4
        %v5631 = vor.u32 %v5630, %v5626
        %v5632 = vrot.slane %v5631, 4
        %v5634 = vshll.u32 %v5274, 16
        %v5636 = vrot.slane %v5634, 5
        %v5637 = vsel %vm1921, %v5632, %v5636
        %v5639 = vshrl.u32 %v5275, 16
        %v5641 = vrot.slane %v5639, 4
        %v5642 = vshll.u32 %v5275, 16
        %v5644 = vrot.slane %v5642, 5
        %v5645 = vor.u32 %v5641, %v5644
        %v5646 = vrot.slane %v5645, 4
        %v5648 = vshll.u32 %v5276, 16
        %v5650 = vrot.slane %v5648, 5
        %v5651 = vsel %vm1921, %v5646, %v5650
        %v5652 = vshrl.u32 %v5276, 16
        %v5654 = vrot.slane %v5652, 4
        %v5655 = vor.u32 %v5654, %v5650
        %v5656 = vrot.slane %v5655, 4
        %v5658 = vshll.u32 %v5277, 16
        %v5660 = vrot.slane %v5658, 5
        %v5661 = vsel %vm1921, %v5656, %v5660
        %s5662 = scalar_lea.vmem [#allocation11], 14
        %v5663 = vld [vmem:[%s5662] sm:$0x3]
        %v5664 = vunpack.c.l.b16 %v5291
        %v5665 = vunpack.c.l.b16 %v5301
        %v5666 = vunpack.c.l.b16 %v5315
        %v5667 = vunpack.c.l.b16 %v5325
        %v5668 = vunpack.c.l.b16 %v5339
        %v5669 = vunpack.c.l.b16 %v5349
        %v5670 = vunpack.c.l.b16 %v5363
        %v5671 = vunpack.c.l.b16 %v5373
        %v5672 = vunpack.c.l.b16 %v5387
        %v5673 = vunpack.c.l.b16 %v5397
        %v5674 = vunpack.c.l.b16 %v5411
        %v5675 = vunpack.c.l.b16 %v5421
        %v5676 = vunpack.c.l.b16 %v5435
        %v5677 = vunpack.c.l.b16 %v5445
        %v5678 = vunpack.c.l.b16 %v5459
        %v5679 = vunpack.c.l.b16 %v5469
        %v5680 = vunpack.c.l.b16 %v5483
        %v5681 = vunpack.c.l.b16 %v5493
        %v5682 = vunpack.c.l.b16 %v5507
        %v5683 = vunpack.c.l.b16 %v5517
        %v5684 = vunpack.c.l.b16 %v5531
        %v5685 = vunpack.c.l.b16 %v5541
        %v5686 = vunpack.c.l.b16 %v5555
        %v5687 = vunpack.c.l.b16 %v5565
        %v5688 = vunpack.c.l.b16 %v5579
        %v5689 = vunpack.c.l.b16 %v5589
        %v5690 = vunpack.c.l.b16 %v5603
        %v5691 = vunpack.c.l.b16 %v5613
        %v5692 = vunpack.c.l.b16 %v5627
        %v5693 = vunpack.c.l.b16 %v5637
        %v5694 = vunpack.c.l.b16 %v5651
        %v5695 = vunpack.c.l.b16 %v5661
        %v5696 = vpack.c.b16 %v5665, %v5664
        %v5697 = vpack.c.b16 %v5667, %v5666
        %v5698 = vpack.c.b16 %v5669, %v5668
        %v5699 = vpack.c.b16 %v5671, %v5670
        %v5700 = vpack.c.b16 %v5673, %v5672
        %v5701 = vpack.c.b16 %v5675, %v5674
        %v5702 = vpack.c.b16 %v5677, %v5676
        %v5703 = vpack.c.b16 %v5679, %v5678
        %v5704 = vpack.c.b16 %v5681, %v5680
        %v5705 = vpack.c.b16 %v5683, %v5682
        %v5706 = vpack.c.b16 %v5685, %v5684
        %v5707 = vpack.c.b16 %v5687, %v5686
        %v5708 = vpack.c.b16 %v5689, %v5688
        %v5709 = vpack.c.b16 %v5691, %v5690
        %v5710 = vpack.c.b16 %v5693, %v5692
        %v5711 = vpack.c.b16 %v5695, %v5694
        %v5713 = vsel %vm725, %v5696, 0
        %v5716 = vsel %vm725, %v5697, 0
        %v5719 = vsel %vm725, %v5698, 0
        %v5722 = vsel %vm725, %v5699, 0
        %v5725 = vsel %vm725, %v5700, 0
        %v5728 = vsel %vm725, %v5701, 0
        %v5731 = vsel %vm725, %v5702, 0
        %v5734 = vsel %vm725, %v5703, 0
        %v5737 = vsel %vm725, %v5704, 0
        %v5740 = vsel %vm725, %v5705, 0
        %v5743 = vsel %vm725, %v5706, 0
        %v5746 = vsel %vm725, %v5707, 0
        %v5749 = vsel %vm725, %v5708, 0
        %v5752 = vsel %vm725, %v5709, 0
        %v5755 = vsel %vm725, %v5710, 0
        %v5758 = vsel %vm725, %v5711, 0
        %v5761 = vsel %vm774, %v5663, 0
        %5763 = vmatprep.subr.bf16.mxu0 0
        %5764 = vmatpush1.bf16.msra.mxu0 %v5761
        %5765 = vmatprep.subr.bf16.mxu0 0
        %5766 = vmatpush1.bf16.msra.mxu0 0
        %5767 = vmatprep.subr.bf16.mxu0 0
        %5768 = vmatpush1.bf16.msra.mxu0 0
        %5769 = vmatprep.subr.bf16.mxu0 0
        %5770 = vmatpush1.bf16.msra.mxu0 0
        %5771 = vmatprep.subr.bf16.mxu0 0
        %5772 = vmatpush1.bf16.msra.mxu0 0
        %5773 = vmatprep.subr.bf16.mxu0 0
        %5774 = vmatpush1.bf16.msra.mxu0 0
        %5775 = vmatprep.subr.bf16.mxu0 0
        %5776 = vmatpush1.bf16.msra.mxu0 0
        %5777 = vmatprep.subr.bf16.mxu0 0
        %5778 = vmatpush1.bf16.msra.mxu0 0
        %5779 = vmatprep.subr.bf16.mxu0 0
        %5780 = vmatpush1.bf16.msra.mxu0 0
        %5781 = vmatprep.subr.bf16.mxu0 0
        %5782 = vmatpush1.bf16.msra.mxu0 0
        %5783 = vmatprep.subr.bf16.mxu0 0
        %5784 = vmatpush1.bf16.msra.mxu0 0
        %5785 = vmatprep.subr.bf16.mxu0 0
        %5786 = vmatpush1.bf16.msra.mxu0 0
        %5787 = vmatprep.subr.bf16.mxu0 0
        %5788 = vmatpush1.bf16.msra.mxu0 0
        %5789 = vmatprep.subr.bf16.mxu0 0
        %5790 = vmatpush1.bf16.msra.mxu0 0
        %5791 = vmatprep.subr.bf16.mxu0 0
        %5792 = vmatpush1.bf16.msra.mxu0 0
        %5793 = vmatprep.subr.bf16.mxu0 0
        %5794 = vmatpush1.bf16.msra.mxu0 0
        %5795 = vmatprep.mubr.bf16.mxu0 0
        %5796 = vmatmul.mubr.bf16.gmra.mrb[0].mxu0 %v5713
        %v5797 = vpop.f32.mrb[0].mxu0
        %v5798 = vadd.f32 0.0, %v5797
        %v5799 = vpop.f32.mrb[0].mxu0
        %v5800 = vpop.f32.mrb[0].mxu0
        %v5801 = vadd.f32 0.0, %v5800
        %v5802 = vpop.f32.mrb[0].mxu0
        %5803 = vmatprep.mubr.bf16.mxu0 0
        %5804 = vmatmul.mubr.bf16.gmra.mrb[0].mxu0 %v5716
        %v5805 = vpop.f32.mrb[0].mxu0
        %v5806 = vadd.f32 0.0, %v5805
        %v5807 = vpop.f32.mrb[0].mxu0
        %v5808 = vpop.f32.mrb[0].mxu0
        %v5809 = vadd.f32 0.0, %v5808
        %v5810 = vpop.f32.mrb[0].mxu0
        %5811 = vmatprep.mubr.bf16.mxu0 0
        %5812 = vmatmul.mubr.bf16.gmra.mrb[0].mxu0 %v5719
        %v5813 = vpop.f32.mrb[0].mxu0
        %v5814 = vadd.f32 0.0, %v5813
        %v5815 = vpop.f32.mrb[0].mxu0
        %v5816 = vpop.f32.mrb[0].mxu0
        %v5817 = vadd.f32 0.0, %v5816
        %v5818 = vpop.f32.mrb[0].mxu0
        %5819 = vmatprep.mubr.bf16.mxu0 0
        %5820 = vmatmul.mubr.bf16.gmra.mrb[0].mxu0 %v5722
        %v5821 = vpop.f32.mrb[0].mxu0
        %v5822 = vadd.f32 0.0, %v5821
        %v5823 = vpop.f32.mrb[0].mxu0
        %v5824 = vpop.f32.mrb[0].mxu0
        %v5825 = vadd.f32 0.0, %v5824
        %v5826 = vpop.f32.mrb[0].mxu0
        %5827 = vmatprep.mubr.bf16.mxu0 0
        %5828 = vmatmul.mubr.bf16.gmra.mrb[0].mxu0 %v5725
        %v5829 = vpop.f32.mrb[0].mxu0
        %v5830 = vadd.f32 0.0, %v5829
        %v5831 = vpop.f32.mrb[0].mxu0
        %v5832 = vpop.f32.mrb[0].mxu0
        %v5833 = vadd.f32 0.0, %v5832
        %v5834 = vpop.f32.mrb[0].mxu0
        %5835 = vmatprep.mubr.bf16.mxu0 0
        %5836 = vmatmul.mubr.bf16.gmra.mrb[0].mxu0 %v5728
        %v5837 = vpop.f32.mrb[0].mxu0
        %v5838 = vadd.f32 0.0, %v5837
        %v5839 = vpop.f32.mrb[0].mxu0
        %v5840 = vpop.f32.mrb[0].mxu0
        %v5841 = vadd.f32 0.0, %v5840
        %v5842 = vpop.f32.mrb[0].mxu0
        %5843 = vmatprep.mubr.bf16.mxu0 0
        %5844 = vmatmul.mubr.bf16.gmra.mrb[0].mxu0 %v5731
        %v5845 = vpop.f32.mrb[0].mxu0
        %v5846 = vadd.f32 0.0, %v5845
        %v5847 = vpop.f32.mrb[0].mxu0
        %v5848 = vpop.f32.mrb[0].mxu0
        %v5849 = vadd.f32 0.0, %v5848
        %v5850 = vpop.f32.mrb[0].mxu0
        %5851 = vmatprep.mubr.bf16.mxu0 0
        %5852 = vmatmul.mubr.bf16.gmra.mrb[0].mxu0 %v5734
        %v5853 = vpop.f32.mrb[0].mxu0
        %v5854 = vadd.f32 0.0, %v5853
        %v5855 = vpop.f32.mrb[0].mxu0
        %v5856 = vpop.f32.mrb[0].mxu0
        %v5857 = vadd.f32 0.0, %v5856
        %v5858 = vpop.f32.mrb[0].mxu0
        %5859 = vmatprep.mubr.bf16.mxu0 0
        %5860 = vmatmul.mubr.bf16.gmra.mrb[0].mxu0 %v5737
        %v5861 = vpop.f32.mrb[0].mxu0
        %v5862 = vadd.f32 0.0, %v5861
        %v5863 = vpop.f32.mrb[0].mxu0
        %v5864 = vpop.f32.mrb[0].mxu0
        %v5865 = vadd.f32 0.0, %v5864
        %v5866 = vpop.f32.mrb[0].mxu0
        %5867 = vmatprep.mubr.bf16.mxu0 0
        %5868 = vmatmul.mubr.bf16.gmra.mrb[0].mxu0 %v5740
        %v5869 = vpop.f32.mrb[0].mxu0
        %v5870 = vadd.f32 0.0, %v5869
        %v5871 = vpop.f32.mrb[0].mxu0
        %v5872 = vpop.f32.mrb[0].mxu0
        %v5873 = vadd.f32 0.0, %v5872
        %v5874 = vpop.f32.mrb[0].mxu0
        %5875 = vmatprep.mubr.bf16.mxu0 0
        %5876 = vmatmul.mubr.bf16.gmra.mrb[0].mxu0 %v5743
        %v5877 = vpop.f32.mrb[0].mxu0
        %v5878 = vadd.f32 0.0, %v5877
        %v5879 = vpop.f32.mrb[0].mxu0
        %v5880 = vpop.f32.mrb[0].mxu0
        %v5881 = vadd.f32 0.0, %v5880
        %v5882 = vpop.f32.mrb[0].mxu0
        %5883 = vmatprep.mubr.bf16.mxu0 0
        %5884 = vmatmul.mubr.bf16.gmra.mrb[0].mxu0 %v5746
        %v5885 = vpop.f32.mrb[0].mxu0
        %v5886 = vadd.f32 0.0, %v5885
        %v5887 = vpop.f32.mrb[0].mxu0
        %v5888 = vpop.f32.mrb[0].mxu0
        %v5889 = vadd.f32 0.0, %v5888
        %v5890 = vpop.f32.mrb[0].mxu0
        %5891 = vmatprep.mubr.bf16.mxu0 0
        %5892 = vmatmul.mubr.bf16.gmra.mrb[0].mxu0 %v5749
        %v5893 = vpop.f32.mrb[0].mxu0
        %v5894 = vadd.f32 0.0, %v5893
        %v5895 = vpop.f32.mrb[0].mxu0
        %v5896 = vpop.f32.mrb[0].mxu0
        %v5897 = vadd.f32 0.0, %v5896
        %v5898 = vpop.f32.mrb[0].mxu0
        %5899 = vmatprep.mubr.bf16.mxu0 0
        %5900 = vmatmul.mubr.bf16.gmra.mrb[0].mxu0 %v5752
        %v5901 = vpop.f32.mrb[0].mxu0
        %v5902 = vadd.f32 0.0, %v5901
        %v5903 = vpop.f32.mrb[0].mxu0
        %v5904 = vpop.f32.mrb[0].mxu0
        %v5905 = vadd.f32 0.0, %v5904
        %v5906 = vpop.f32.mrb[0].mxu0
        %5907 = vmatprep.mubr.bf16.mxu0 0
        %5908 = vmatmul.mubr.bf16.gmra.mrb[0].mxu0 %v5755
        %v5909 = vpop.f32.mrb[0].mxu0
        %v5910 = vadd.f32 0.0, %v5909
        %v5911 = vpop.f32.mrb[0].mxu0
        %v5912 = vpop.f32.mrb[0].mxu0
        %v5913 = vadd.f32 0.0, %v5912
        %v5914 = vpop.f32.mrb[0].mxu0
        %5915 = vmatprep.mubr.bf16.mxu0 0
        %5916 = vmatmul.mubr.bf16.gmra.mrb[0].mxu0 %v5758
        %v5917 = vpop.f32.mrb[0].mxu0
        %v5918 = vadd.f32 0.0, %v5917
        %v5919 = vpop.f32.mrb[0].mxu0
        %v5920 = vpop.f32.mrb[0].mxu0
        %v5921 = vadd.f32 0.0, %v5920
        %v5922 = vpop.f32.mrb[0].mxu0
        %5923 = vdwg.mxu0
        %v5924 = vadd.f32 %v5198, %v5798
        %v5925 = vadd.f32 %v5199, %v5801
        %v5926 = vadd.f32 %v5200, %v5806
        %v5927 = vadd.f32 %v5201, %v5809
        %v5928 = vadd.f32 %v5202, %v5814
        %v5929 = vadd.f32 %v5203, %v5817
        %v5930 = vadd.f32 %v5204, %v5822
        %v5931 = vadd.f32 %v5205, %v5825
        %v5932 = vadd.f32 %v5206, %v5830
        %v5933 = vadd.f32 %v5207, %v5833
        %v5934 = vadd.f32 %v5208, %v5838
        %v5935 = vadd.f32 %v5209, %v5841
        %v5936 = vadd.f32 %v5210, %v5846
        %v5937 = vadd.f32 %v5211, %v5849
        %v5938 = vadd.f32 %v5212, %v5854
        %v5939 = vadd.f32 %v5213, %v5857
        %v5940 = vadd.f32 %v5214, %v5862
        %v5941 = vadd.f32 %v5215, %v5865
        %v5942 = vadd.f32 %v5216, %v5870
        %v5943 = vadd.f32 %v5217, %v5873
        %v5944 = vadd.f32 %v5218, %v5878
        %v5945 = vadd.f32 %v5219, %v5881
        %v5946 = vadd.f32 %v5220, %v5886
        %v5947 = vadd.f32 %v5221, %v5889
        %v5948 = vadd.f32 %v5222, %v5894
        %v5949 = vadd.f32 %v5223, %v5897
        %v5950 = vadd.f32 %v5224, %v5902
        %v5951 = vadd.f32 %v5225, %v5905
        %v5952 = vadd.f32 %v5226, %v5910
        %v5953 = vadd.f32 %v5227, %v5913
        %v5954 = vadd.f32 %v5228, %v5918
        %v5955 = vadd.f32 %v5229, %v5921
        %v5956 = vld [vmem:[%s4871] sm:$0xe]
        %v5957 = vld [vmem:[%s4871 + $0xc] sm:$0xe]
        %v5958 = vld [vmem:[%s4871 + $0x18] sm:$0xe]
        %v5959 = vld [vmem:[%s4871 + $0x24] sm:$0xe]
        %v5960 = vld [vmem:[%s4871 + $0x30] sm:$0xe]
        %v5961 = vld [vmem:[%s4871 + $0x3c] sm:$0xe]
        %v5962 = vld [vmem:[%s4871 + $0x48] sm:$0xe]
        %v5963 = vld [vmem:[%s4871 + $0x54] sm:$0xe]
        %v5964 = vld [vmem:[%s4871 + $0x60] sm:$0xe]
        %v5965 = vld [vmem:[%s4871 + $0x6c] sm:$0xe]
        %v5966 = vld [vmem:[%s4871 + $0x78] sm:$0xe]
        %v5967 = vld [vmem:[%s4871 + $0x84] sm:$0xe]
        %v5968 = vld [vmem:[%s4871 + $0x90] sm:$0xe]
        %v5969 = vld [vmem:[%s4871 + $0x9c] sm:$0xe]
        %v5970 = vld [vmem:[%s4871 + $0xa8] sm:$0xe]
        %v5971 = vld [vmem:[%s4871 + $0xb4] sm:$0xe]
        %v6020 = vrot.slane %v5956, 5
        %v6021 = vrot.slane %v6020, 4
        %v6022 = vrot.slane %v5231, 5
        %v6023 = vsel %vm2910, %v6021, %v6022
        %v6024 = vrot.slane %v6022, 4
        %v6025 = vrot.slane %v5232, 5
        %v6026 = vsel %vm2910, %v6024, %v6025
        %v6027 = vrot.slane %v5957, 5
        %v6028 = vrot.slane %v6027, 4
        %v6029 = vrot.slane %v5234, 5
        %v6030 = vsel %vm2910, %v6028, %v6029
        %v6031 = vrot.slane %v6029, 4
        %v6032 = vrot.slane %v5235, 5
        %v6033 = vsel %vm2910, %v6031, %v6032
        %v6034 = vrot.slane %v5958, 5
        %v6035 = vrot.slane %v6034, 4
        %v6036 = vrot.slane %v5237, 5
        %v6037 = vsel %vm2910, %v6035, %v6036
        %v6038 = vrot.slane %v6036, 4
        %v6039 = vrot.slane %v5238, 5
        %v6040 = vsel %vm2910, %v6038, %v6039
        %v6041 = vrot.slane %v5959, 5
        %v6042 = vrot.slane %v6041, 4
        %v6043 = vrot.slane %v5240, 5
        %v6044 = vsel %vm2910, %v6042, %v6043
        %v6045 = vrot.slane %v6043, 4
        %v6046 = vrot.slane %v5241, 5
        %v6047 = vsel %vm2910, %v6045, %v6046
        %v6048 = vrot.slane %v5960, 5
        %v6049 = vrot.slane %v6048, 4
        %v6050 = vrot.slane %v5243, 5
        %v6051 = vsel %vm2910, %v6049, %v6050
        %v6052 = vrot.slane %v6050, 4
        %v6053 = vrot.slane %v5244, 5
        %v6054 = vsel %vm2910, %v6052, %v6053
        %v6055 = vrot.slane %v5961, 5
        %v6056 = vrot.slane %v6055, 4
        %v6057 = vrot.slane %v5246, 5
        %v6058 = vsel %vm2910, %v6056, %v6057
        %v6059 = vrot.slane %v6057, 4
        %v6060 = vrot.slane %v5247, 5
        %v6061 = vsel %vm2910, %v6059, %v6060
        %v6062 = vrot.slane %v5962, 5
        %v6063 = vrot.slane %v6062, 4
        %v6064 = vrot.slane %v5249, 5
        %v6065 = vsel %vm2910, %v6063, %v6064
        %v6066 = vrot.slane %v6064, 4
        %v6067 = vrot.slane %v5250, 5
        %v6068 = vsel %vm2910, %v6066, %v6067
        %v6069 = vrot.slane %v5963, 5
        %v6070 = vrot.slane %v6069, 4
        %v6071 = vrot.slane %v5252, 5
        %v6072 = vsel %vm2910, %v6070, %v6071
        %v6073 = vrot.slane %v6071, 4
        %v6074 = vrot.slane %v5253, 5
        %v6075 = vsel %vm2910, %v6073, %v6074
        %v6076 = vrot.slane %v5964, 5
        %v6077 = vrot.slane %v6076, 4
        %v6078 = vrot.slane %v5255, 5
        %v6079 = vsel %vm2910, %v6077, %v6078
        %v6080 = vrot.slane %v6078, 4
        %v6081 = vrot.slane %v5256, 5
        %v6082 = vsel %vm2910, %v6080, %v6081
        %v6083 = vrot.slane %v5965, 5
        %v6084 = vrot.slane %v6083, 4
        %v6085 = vrot.slane %v5258, 5
        %v6086 = vsel %vm2910, %v6084, %v6085
        %v6087 = vrot.slane %v6085, 4
        %v6088 = vrot.slane %v5259, 5
        %v6089 = vsel %vm2910, %v6087, %v6088
        %v6090 = vrot.slane %v5966, 5
        %v6091 = vrot.slane %v6090, 4
        %v6092 = vrot.slane %v5261, 5
        %v6093 = vsel %vm2910, %v6091, %v6092
        %v6094 = vrot.slane %v6092, 4
        %v6095 = vrot.slane %v5262, 5
        %v6096 = vsel %vm2910, %v6094, %v6095
        %v6097 = vrot.slane %v5967, 5
        %v6098 = vrot.slane %v6097, 4
        %v6099 = vrot.slane %v5264, 5
        %v6100 = vsel %vm2910, %v6098, %v6099
        %v6101 = vrot.slane %v6099, 4
        %v6102 = vrot.slane %v5265, 5
        %v6103 = vsel %vm2910, %v6101, %v6102
        %v6104 = vrot.slane %v5968, 5
        %v6105 = vrot.slane %v6104, 4
        %v6106 = vrot.slane %v5267, 5
        %v6107 = vsel %vm2910, %v6105, %v6106
        %v6108 = vrot.slane %v6106, 4
        %v6109 = vrot.slane %v5268, 5
        %v6110 = vsel %vm2910, %v6108, %v6109
        %v6111 = vrot.slane %v5969, 5
        %v6112 = vrot.slane %v6111, 4
        %v6113 = vrot.slane %v5270, 5
        %v6114 = vsel %vm2910, %v6112, %v6113
        %v6115 = vrot.slane %v6113, 4
        %v6116 = vrot.slane %v5271, 5
        %v6117 = vsel %vm2910, %v6115, %v6116
        %v6118 = vrot.slane %v5970, 5
        %v6119 = vrot.slane %v6118, 4
        %v6120 = vrot.slane %v5273, 5
        %v6121 = vsel %vm2910, %v6119, %v6120
        %v6122 = vrot.slane %v6120, 4
        %v6123 = vrot.slane %v5274, 5
        %v6124 = vsel %vm2910, %v6122, %v6123
        %v6125 = vrot.slane %v5971, 5
        %v6126 = vrot.slane %v6125, 4
        %v6127 = vrot.slane %v5276, 5
        %v6128 = vsel %vm2910, %v6126, %v6127
        %v6129 = vrot.slane %v6127, 4
        %v6130 = vrot.slane %v5277, 5
        %v6131 = vsel %vm2910, %v6129, %v6130
        %s6132 = scalar_lea.vmem [#allocation11], 16
        %v6133 = vld [vmem:[%s6132] sm:$0x3]
        %v6134 = vunpack.c.l.b16 %v6023
        %v6135 = vunpack.c.l.b16 %v6026
        %v6136 = vunpack.c.l.b16 %v6030
        %v6137 = vunpack.c.l.b16 %v6033
        %v6138 = vunpack.c.l.b16 %v6037
        %v6139 = vunpack.c.l.b16 %v6040
        %v6140 = vunpack.c.l.b16 %v6044
        %v6141 = vunpack.c.l.b16 %v6047
        %v6142 = vunpack.c.l.b16 %v6051
        %v6143 = vunpack.c.l.b16 %v6054
        %v6144 = vunpack.c.l.b16 %v6058
        %v6145 = vunpack.c.l.b16 %v6061
        %v6146 = vunpack.c.l.b16 %v6065
        %v6147 = vunpack.c.l.b16 %v6068
        %v6148 = vunpack.c.l.b16 %v6072
        %v6149 = vunpack.c.l.b16 %v6075
        %v6150 = vunpack.c.l.b16 %v6079
        %v6151 = vunpack.c.l.b16 %v6082
        %v6152 = vunpack.c.l.b16 %v6086
        %v6153 = vunpack.c.l.b16 %v6089
        %v6154 = vunpack.c.l.b16 %v6093
        %v6155 = vunpack.c.l.b16 %v6096
        %v6156 = vunpack.c.l.b16 %v6100
        %v6157 = vunpack.c.l.b16 %v6103
        %v6158 = vunpack.c.l.b16 %v6107
        %v6159 = vunpack.c.l.b16 %v6110
        %v6160 = vunpack.c.l.b16 %v6114
        %v6161 = vunpack.c.l.b16 %v6117
        %v6162 = vunpack.c.l.b16 %v6121
        %v6163 = vunpack.c.l.b16 %v6124
        %v6164 = vunpack.c.l.b16 %v6128
        %v6165 = vunpack.c.l.b16 %v6131
        %v6166 = vpack.c.b16 %v6135, %v6134
        %v6167 = vpack.c.b16 %v6137, %v6136
        %v6168 = vpack.c.b16 %v6139, %v6138
        %v6169 = vpack.c.b16 %v6141, %v6140
        %v6170 = vpack.c.b16 %v6143, %v6142
        %v6171 = vpack.c.b16 %v6145, %v6144
        %v6172 = vpack.c.b16 %v6147, %v6146
        %v6173 = vpack.c.b16 %v6149, %v6148
        %v6174 = vpack.c.b16 %v6151, %v6150
        %v6175 = vpack.c.b16 %v6153, %v6152
        %v6176 = vpack.c.b16 %v6155, %v6154
        %v6177 = vpack.c.b16 %v6157, %v6156
        %v6178 = vpack.c.b16 %v6159, %v6158
        %v6179 = vpack.c.b16 %v6161, %v6160
        %v6180 = vpack.c.b16 %v6163, %v6162
        %v6181 = vpack.c.b16 %v6165, %v6164
        %v6183 = vsel %vm725, %v6166, 0
        %v6186 = vsel %vm725, %v6167, 0
        %v6189 = vsel %vm725, %v6168, 0
        %v6192 = vsel %vm725, %v6169, 0
        %v6195 = vsel %vm725, %v6170, 0
        %v6198 = vsel %vm725, %v6171, 0
        %v6201 = vsel %vm725, %v6172, 0
        %v6204 = vsel %vm725, %v6173, 0
        %v6207 = vsel %vm725, %v6174, 0
        %v6210 = vsel %vm725, %v6175, 0
        %v6213 = vsel %vm725, %v6176, 0
        %v6216 = vsel %vm725, %v6177, 0
        %v6219 = vsel %vm725, %v6178, 0
        %v6222 = vsel %vm725, %v6179, 0
        %v6225 = vsel %vm725, %v6180, 0
        %v6228 = vsel %vm725, %v6181, 0
        %v6231 = vsel %vm774, %v6133, 0
        %6233 = vmatprep.subr.bf16.mxu0 0
        %6234 = vmatpush1.bf16.msra.mxu0 %v6231
        %6235 = vmatprep.subr.bf16.mxu0 0
        %6236 = vmatpush1.bf16.msra.mxu0 0
        %6237 = vmatprep.subr.bf16.mxu0 0
        %6238 = vmatpush1.bf16.msra.mxu0 0
        %6239 = vmatprep.subr.bf16.mxu0 0
        %6240 = vmatpush1.bf16.msra.mxu0 0
        %6241 = vmatprep.subr.bf16.mxu0 0
        %6242 = vmatpush1.bf16.msra.mxu0 0
        %6243 = vmatprep.subr.bf16.mxu0 0
        %6244 = vmatpush1.bf16.msra.mxu0 0
        %6245 = vmatprep.subr.bf16.mxu0 0
        %6246 = vmatpush1.bf16.msra.mxu0 0
        %6247 = vmatprep.subr.bf16.mxu0 0
        %6248 = vmatpush1.bf16.msra.mxu0 0
        %6249 = vmatprep.subr.bf16.mxu0 0
        %6250 = vmatpush1.bf16.msra.mxu0 0
        %6251 = vmatprep.subr.bf16.mxu0 0
        %6252 = vmatpush1.bf16.msra.mxu0 0
        %6253 = vmatprep.subr.bf16.mxu0 0
        %6254 = vmatpush1.bf16.msra.mxu0 0
        %6255 = vmatprep.subr.bf16.mxu0 0
        %6256 = vmatpush1.bf16.msra.mxu0 0
        %6257 = vmatprep.subr.bf16.mxu0 0
        %6258 = vmatpush1.bf16.msra.mxu0 0
        %6259 = vmatprep.subr.bf16.mxu0 0
        %6260 = vmatpush1.bf16.msra.mxu0 0
        %6261 = vmatprep.subr.bf16.mxu0 0
        %6262 = vmatpush1.bf16.msra.mxu0 0
        %6263 = vmatprep.subr.bf16.mxu0 0
        %6264 = vmatpush1.bf16.msra.mxu0 0
        %6265 = vmatprep.mubr.bf16.mxu0 0
        %6266 = vmatmul.mubr.bf16.gmra.mrb[0].mxu0 %v6183
        %v6267 = vpop.f32.mrb[0].mxu0
        %v6268 = vadd.f32 0.0, %v6267
        %v6269 = vpop.f32.mrb[0].mxu0
        %v6270 = vpop.f32.mrb[0].mxu0
        %v6271 = vadd.f32 0.0, %v6270
        %v6272 = vpop.f32.mrb[0].mxu0
        %6273 = vmatprep.mubr.bf16.mxu0 0
        %6274 = vmatmul.mubr.bf16.gmra.mrb[0].mxu0 %v6186
        %v6275 = vpop.f32.mrb[0].mxu0
        %v6276 = vadd.f32 0.0, %v6275
        %v6277 = vpop.f32.mrb[0].mxu0
        %v6278 = vpop.f32.mrb[0].mxu0
        %v6279 = vadd.f32 0.0, %v6278
        %v6280 = vpop.f32.mrb[0].mxu0
        %6281 = vmatprep.mubr.bf16.mxu0 0
        %6282 = vmatmul.mubr.bf16.gmra.mrb[0].mxu0 %v6189
        %v6283 = vpop.f32.mrb[0].mxu0
        %v6284 = vadd.f32 0.0, %v6283
        %v6285 = vpop.f32.mrb[0].mxu0
        %v6286 = vpop.f32.mrb[0].mxu0
        %v6287 = vadd.f32 0.0, %v6286
        %v6288 = vpop.f32.mrb[0].mxu0
        %6289 = vmatprep.mubr.bf16.mxu0 0
        %6290 = vmatmul.mubr.bf16.gmra.mrb[0].mxu0 %v6192
        %v6291 = vpop.f32.mrb[0].mxu0
        %v6292 = vadd.f32 0.0, %v6291
        %v6293 = vpop.f32.mrb[0].mxu0
        %v6294 = vpop.f32.mrb[0].mxu0
        %v6295 = vadd.f32 0.0, %v6294
        %v6296 = vpop.f32.mrb[0].mxu0
        %6297 = vmatprep.mubr.bf16.mxu0 0
        %6298 = vmatmul.mubr.bf16.gmra.mrb[0].mxu0 %v6195
        %v6299 = vpop.f32.mrb[0].mxu0
        %v6300 = vadd.f32 0.0, %v6299
        %v6301 = vpop.f32.mrb[0].mxu0
        %v6302 = vpop.f32.mrb[0].mxu0
        %v6303 = vadd.f32 0.0, %v6302
        %v6304 = vpop.f32.mrb[0].mxu0
        %6305 = vmatprep.mubr.bf16.mxu0 0
        %6306 = vmatmul.mubr.bf16.gmra.mrb[0].mxu0 %v6198
        %v6307 = vpop.f32.mrb[0].mxu0
        %v6308 = vadd.f32 0.0, %v6307
        %v6309 = vpop.f32.mrb[0].mxu0
        %v6310 = vpop.f32.mrb[0].mxu0
        %v6311 = vadd.f32 0.0, %v6310
        %v6312 = vpop.f32.mrb[0].mxu0
        %6313 = vmatprep.mubr.bf16.mxu0 0
        %6314 = vmatmul.mubr.bf16.gmra.mrb[0].mxu0 %v6201
        %v6315 = vpop.f32.mrb[0].mxu0
        %v6316 = vadd.f32 0.0, %v6315
        %v6317 = vpop.f32.mrb[0].mxu0
        %v6318 = vpop.f32.mrb[0].mxu0
        %v6319 = vadd.f32 0.0, %v6318
        %v6320 = vpop.f32.mrb[0].mxu0
        %6321 = vmatprep.mubr.bf16.mxu0 0
        %6322 = vmatmul.mubr.bf16.gmra.mrb[0].mxu0 %v6204
        %v6323 = vpop.f32.mrb[0].mxu0
        %v6324 = vadd.f32 0.0, %v6323
        %v6325 = vpop.f32.mrb[0].mxu0
        %v6326 = vpop.f32.mrb[0].mxu0
        %v6327 = vadd.f32 0.0, %v6326
        %v6328 = vpop.f32.mrb[0].mxu0
        %6329 = vmatprep.mubr.bf16.mxu0 0
        %6330 = vmatmul.mubr.bf16.gmra.mrb[0].mxu0 %v6207
        %v6331 = vpop.f32.mrb[0].mxu0
        %v6332 = vadd.f32 0.0, %v6331
        %v6333 = vpop.f32.mrb[0].mxu0
        %v6334 = vpop.f32.mrb[0].mxu0
        %v6335 = vadd.f32 0.0, %v6334
        %v6336 = vpop.f32.mrb[0].mxu0
        %6337 = vmatprep.mubr.bf16.mxu0 0
        %6338 = vmatmul.mubr.bf16.gmra.mrb[0].mxu0 %v6210
        %v6339 = vpop.f32.mrb[0].mxu0
        %v6340 = vadd.f32 0.0, %v6339
        %v6341 = vpop.f32.mrb[0].mxu0
        %v6342 = vpop.f32.mrb[0].mxu0
        %v6343 = vadd.f32 0.0, %v6342
        %v6344 = vpop.f32.mrb[0].mxu0
        %6345 = vmatprep.mubr.bf16.mxu0 0
        %6346 = vmatmul.mubr.bf16.gmra.mrb[0].mxu0 %v6213
        %v6347 = vpop.f32.mrb[0].mxu0
        %v6348 = vadd.f32 0.0, %v6347
        %v6349 = vpop.f32.mrb[0].mxu0
        %v6350 = vpop.f32.mrb[0].mxu0
        %v6351 = vadd.f32 0.0, %v6350
        %v6352 = vpop.f32.mrb[0].mxu0
        %6353 = vmatprep.mubr.bf16.mxu0 0
        %6354 = vmatmul.mubr.bf16.gmra.mrb[0].mxu0 %v6216
        %v6355 = vpop.f32.mrb[0].mxu0
        %v6356 = vadd.f32 0.0, %v6355
        %v6357 = vpop.f32.mrb[0].mxu0
        %v6358 = vpop.f32.mrb[0].mxu0
        %v6359 = vadd.f32 0.0, %v6358
        %v6360 = vpop.f32.mrb[0].mxu0
        %6361 = vmatprep.mubr.bf16.mxu0 0
        %6362 = vmatmul.mubr.bf16.gmra.mrb[0].mxu0 %v6219
        %v6363 = vpop.f32.mrb[0].mxu0
        %v6364 = vadd.f32 0.0, %v6363
        %v6365 = vpop.f32.mrb[0].mxu0
        %v6366 = vpop.f32.mrb[0].mxu0
        %v6367 = vadd.f32 0.0, %v6366
        %v6368 = vpop.f32.mrb[0].mxu0
        %6369 = vmatprep.mubr.bf16.mxu0 0
        %6370 = vmatmul.mubr.bf16.gmra.mrb[0].mxu0 %v6222
        %v6371 = vpop.f32.mrb[0].mxu0
        %v6372 = vadd.f32 0.0, %v6371
        %v6373 = vpop.f32.mrb[0].mxu0
        %v6374 = vpop.f32.mrb[0].mxu0
        %v6375 = vadd.f32 0.0, %v6374
        %v6376 = vpop.f32.mrb[0].mxu0
        %6377 = vmatprep.mubr.bf16.mxu0 0
        %6378 = vmatmul.mubr.bf16.gmra.mrb[0].mxu0 %v6225
        %v6379 = vpop.f32.mrb[0].mxu0
        %v6380 = vadd.f32 0.0, %v6379
        %v6381 = vpop.f32.mrb[0].mxu0
        %v6382 = vpop.f32.mrb[0].mxu0
        %v6383 = vadd.f32 0.0, %v6382
        %v6384 = vpop.f32.mrb[0].mxu0
        %6385 = vmatprep.mubr.bf16.mxu0 0
        %6386 = vmatmul.mubr.bf16.gmra.mrb[0].mxu0 %v6228
        %v6387 = vpop.f32.mrb[0].mxu0
        %v6388 = vadd.f32 0.0, %v6387
        %v6389 = vpop.f32.mrb[0].mxu0
        %v6390 = vpop.f32.mrb[0].mxu0
        %v6391 = vadd.f32 0.0, %v6390
        %v6392 = vpop.f32.mrb[0].mxu0
        %6393 = vdwg.mxu0
        %v6394 = vadd.f32 %v5924, %v6268
        %v6395 = vadd.f32 %v5925, %v6271
        %v6396 = vadd.f32 %v5926, %v6276
        %v6397 = vadd.f32 %v5927, %v6279
        %v6398 = vadd.f32 %v5928, %v6284
        %v6399 = vadd.f32 %v5929, %v6287
        %v6400 = vadd.f32 %v5930, %v6292
        %v6401 = vadd.f32 %v5931, %v6295
        %v6402 = vadd.f32 %v5932, %v6300
        %v6403 = vadd.f32 %v5933, %v6303
        %v6404 = vadd.f32 %v5934, %v6308
        %v6405 = vadd.f32 %v5935, %v6311
        %v6406 = vadd.f32 %v5936, %v6316
        %v6407 = vadd.f32 %v5937, %v6319
        %v6408 = vadd.f32 %v5938, %v6324
        %v6409 = vadd.f32 %v5939, %v6327
        %v6410 = vadd.f32 %v5940, %v6332
        %v6411 = vadd.f32 %v5941, %v6335
        %v6412 = vadd.f32 %v5942, %v6340
        %v6413 = vadd.f32 %v5943, %v6343
        %v6414 = vadd.f32 %v5944, %v6348
        %v6415 = vadd.f32 %v5945, %v6351
        %v6416 = vadd.f32 %v5946, %v6356
        %v6417 = vadd.f32 %v5947, %v6359
        %v6418 = vadd.f32 %v5948, %v6364
        %v6419 = vadd.f32 %v5949, %v6367
        %v6420 = vadd.f32 %v5950, %v6372
        %v6421 = vadd.f32 %v5951, %v6375
        %v6422 = vadd.f32 %v5952, %v6380
        %v6423 = vadd.f32 %v5953, %v6383
        %v6424 = vadd.f32 %v5954, %v6388
        %v6425 = vadd.f32 %v5955, %v6391
        %v6426 = vld [vmem:[#allocation12] sm:$0x1]
        %v6427 = vld [vmem:[#allocation14] sm:$0x1]
        %v6428 = vsel %vm725, %v6394, 0.0
        %v6429 = vsel %vm725, %v6395, 0.0
        %v6430 = vadd.f32 %v6428, %v6429
        %v6431 = vsel %vm725, %v6396, 0.0
        %v6432 = vadd.f32 %v6430, %v6431
        %v6433 = vsel %vm725, %v6397, 0.0
        %v6434 = vadd.f32 %v6432, %v6433
        %v6435 = vsel %vm725, %v6398, 0.0
        %v6436 = vadd.f32 %v6434, %v6435
        %v6437 = vsel %vm725, %v6399, 0.0
        %v6438 = vadd.f32 %v6436, %v6437
        %v6439 = vsel %vm725, %v6400, 0.0
        %v6440 = vadd.f32 %v6438, %v6439
        %v6441 = vsel %vm725, %v6401, 0.0
        %v6442 = vadd.f32 %v6440, %v6441
        %v6443 = vsel %vm725, %v6402, 0.0
        %v6444 = vadd.f32 %v6442, %v6443
        %v6445 = vsel %vm725, %v6403, 0.0
        %v6446 = vadd.f32 %v6444, %v6445
        %v6447 = vsel %vm725, %v6404, 0.0
        %v6448 = vadd.f32 %v6446, %v6447
        %v6449 = vsel %vm725, %v6405, 0.0
        %v6450 = vadd.f32 %v6448, %v6449
        %v6451 = vsel %vm725, %v6406, 0.0
        %v6452 = vadd.f32 %v6450, %v6451
        %v6453 = vsel %vm725, %v6407, 0.0
        %v6454 = vadd.f32 %v6452, %v6453
        %v6455 = vsel %vm725, %v6408, 0.0
        %v6456 = vadd.f32 %v6454, %v6455
        %v6457 = vsel %vm725, %v6409, 0.0
        %v6458 = vadd.f32 %v6456, %v6457
        %v6459 = vsel %vm725, %v6410, 0.0
        %v6460 = vadd.f32 %v6458, %v6459
        %v6461 = vsel %vm725, %v6411, 0.0
        %v6462 = vadd.f32 %v6460, %v6461
        %v6463 = vsel %vm725, %v6412, 0.0
        %v6464 = vadd.f32 %v6462, %v6463
        %v6465 = vsel %vm725, %v6413, 0.0
        %v6466 = vadd.f32 %v6464, %v6465
        %v6467 = vsel %vm725, %v6414, 0.0
        %v6468 = vadd.f32 %v6466, %v6467
        %v6469 = vsel %vm725, %v6415, 0.0
        %v6470 = vadd.f32 %v6468, %v6469
        %v6471 = vsel %vm725, %v6416, 0.0
        %v6472 = vadd.f32 %v6470, %v6471
        %v6473 = vsel %vm725, %v6417, 0.0
        %v6474 = vadd.f32 %v6472, %v6473
        %v6475 = vsel %vm725, %v6418, 0.0
        %v6476 = vadd.f32 %v6474, %v6475
        %v6477 = vsel %vm725, %v6419, 0.0
        %v6478 = vadd.f32 %v6476, %v6477
        %v6479 = vsel %vm725, %v6420, 0.0
        %v6480 = vadd.f32 %v6478, %v6479
        %v6481 = vsel %vm725, %v6421, 0.0
        %v6482 = vadd.f32 %v6480, %v6481
        %v6483 = vsel %vm725, %v6422, 0.0
        %v6484 = vadd.f32 %v6482, %v6483
        %v6485 = vsel %vm725, %v6423, 0.0
        %v6486 = vadd.f32 %v6484, %v6485
        %v6487 = vsel %vm725, %v6424, 0.0
        %v6488 = vadd.f32 %v6486, %v6487
        %v6489 = vsel %vm725, %v6425, 0.0
        %v6490 = vadd.f32 %v6488, %v6489
        %v6491 = vrot.slane %v6490, 4
        %v6492 = vadd.f32 %v6490, %v6491
        %v6493 = vrot.slane %v6492, 2
        %v6494 = vadd.f32 %v6492, %v6493
        %v6495 = vrot.slane %v6494, 1
        %v6496 = vadd.f32 %v6494, %v6495
        %v6497 = vmul.f32 %v6394, %v6394
        %v6498 = vmul.f32 %v6395, %v6395
        %v6499 = vmul.f32 %v6396, %v6396
        %v6500 = vmul.f32 %v6397, %v6397
        %v6501 = vmul.f32 %v6398, %v6398
        %v6502 = vmul.f32 %v6399, %v6399
        %v6503 = vmul.f32 %v6400, %v6400
        %v6504 = vmul.f32 %v6401, %v6401
        %v6505 = vmul.f32 %v6402, %v6402
        %v6506 = vmul.f32 %v6403, %v6403
        %v6507 = vmul.f32 %v6404, %v6404
        %v6508 = vmul.f32 %v6405, %v6405
        %v6509 = vmul.f32 %v6406, %v6406
        %v6510 = vmul.f32 %v6407, %v6407
        %v6511 = vmul.f32 %v6408, %v6408
        %v6512 = vmul.f32 %v6409, %v6409
        %v6513 = vmul.f32 %v6410, %v6410
        %v6514 = vmul.f32 %v6411, %v6411
        %v6515 = vmul.f32 %v6412, %v6412
        %v6516 = vmul.f32 %v6413, %v6413
        %v6517 = vmul.f32 %v6414, %v6414
        %v6518 = vmul.f32 %v6415, %v6415
        %v6519 = vmul.f32 %v6416, %v6416
        %v6520 = vmul.f32 %v6417, %v6417
        %v6521 = vmul.f32 %v6418, %v6418
        %v6522 = vmul.f32 %v6419, %v6419
        %v6523 = vmul.f32 %v6420, %v6420
        %v6524 = vmul.f32 %v6421, %v6421
        %v6525 = vmul.f32 %v6422, %v6422
        %v6526 = vmul.f32 %v6423, %v6423
        %v6527 = vmul.f32 %v6424, %v6424
        %v6528 = vmul.f32 %v6425, %v6425
        %v6529 = vsel %vm725, %v6497, 0.0
        %v6530 = vsel %vm725, %v6498, 0.0
        %v6531 = vadd.f32 %v6529, %v6530
        %v6532 = vsel %vm725, %v6499, 0.0
        %v6533 = vadd.f32 %v6531, %v6532
        %v6534 = vsel %vm725, %v6500, 0.0
        %v6535 = vadd.f32 %v6533, %v6534
        %v6536 = vsel %vm725, %v6501, 0.0
        %v6537 = vadd.f32 %v6535, %v6536
        %v6538 = vsel %vm725, %v6502, 0.0
        %v6539 = vadd.f32 %v6537, %v6538
        %v6540 = vsel %vm725, %v6503, 0.0
        %v6541 = vadd.f32 %v6539, %v6540
        %v6542 = vsel %vm725, %v6504, 0.0
        %v6543 = vadd.f32 %v6541, %v6542
        %v6544 = vsel %vm725, %v6505, 0.0
        %v6545 = vadd.f32 %v6543, %v6544
        %v6546 = vsel %vm725, %v6506, 0.0
        %v6547 = vadd.f32 %v6545, %v6546
        %v6548 = vsel %vm725, %v6507, 0.0
        %v6549 = vadd.f32 %v6547, %v6548
        %v6550 = vsel %vm725, %v6508, 0.0
        %v6551 = vadd.f32 %v6549, %v6550
        %v6552 = vsel %vm725, %v6509, 0.0
        %v6553 = vadd.f32 %v6551, %v6552
        %v6554 = vsel %vm725, %v6510, 0.0
        %v6555 = vadd.f32 %v6553, %v6554
        %v6556 = vsel %vm725, %v6511, 0.0
        %v6557 = vadd.f32 %v6555, %v6556
        %v6558 = vsel %vm725, %v6512, 0.0
        %v6559 = vadd.f32 %v6557, %v6558
        %v6560 = vsel %vm725, %v6513, 0.0
        %v6561 = vadd.f32 %v6559, %v6560
        %v6562 = vsel %vm725, %v6514, 0.0
        %v6563 = vadd.f32 %v6561, %v6562
        %v6564 = vsel %vm725, %v6515, 0.0
        %v6565 = vadd.f32 %v6563, %v6564
        %v6566 = vsel %vm725, %v6516, 0.0
        %v6567 = vadd.f32 %v6565, %v6566
        %v6568 = vsel %vm725, %v6517, 0.0
        %v6569 = vadd.f32 %v6567, %v6568
        %v6570 = vsel %vm725, %v6518, 0.0
        %v6571 = vadd.f32 %v6569, %v6570
        %v6572 = vsel %vm725, %v6519, 0.0
        %v6573 = vadd.f32 %v6571, %v6572
        %v6574 = vsel %vm725, %v6520, 0.0
        %v6575 = vadd.f32 %v6573, %v6574
        %v6576 = vsel %vm725, %v6521, 0.0
        %v6577 = vadd.f32 %v6575, %v6576
        %v6578 = vsel %vm725, %v6522, 0.0
        %v6579 = vadd.f32 %v6577, %v6578
        %v6580 = vsel %vm725, %v6523, 0.0
        %v6581 = vadd.f32 %v6579, %v6580
        %v6582 = vsel %vm725, %v6524, 0.0
        %v6583 = vadd.f32 %v6581, %v6582
        %v6584 = vsel %vm725, %v6525, 0.0
        %v6585 = vadd.f32 %v6583, %v6584
        %v6586 = vsel %vm725, %v6526, 0.0
        %v6587 = vadd.f32 %v6585, %v6586
        %v6588 = vsel %vm725, %v6527, 0.0
        %v6589 = vadd.f32 %v6587, %v6588
        %v6590 = vsel %vm725, %v6528, 0.0
        %v6591 = vadd.f32 %v6589, %v6590
        %v6592 = vrot.slane %v6591, 4
        %v6593 = vadd.f32 %v6591, %v6592
        %v6594 = vrot.slane %v6593, 2
        %v6595 = vadd.f32 %v6593, %v6594
        %v6596 = vrot.slane %v6595, 1
        %v6597 = vadd.f32 %v6595, %v6596
        %v6598 = vmul.f32 %v6496, 0.00390625
        %v6599 = vmul.f32 %v6597, 0.00390625
        %v6600 = vmul.f32 %v6598, %v6598
        %v6601 = vsub.f32 %v6599, %v6600
        %v6602 = vmax.f32 %v6601, 0.0
        %v6603 = vadd.f32 %v6602, 1e-05
        %v6604 = vrsqrt.pop %v6603
        %v6605 = vmul.f32 %v6604, %v6426
        %v6606 = vlaneseq
        %v6607 = vshrl.u32 %v6606, 7
        %v6608 = vsub.s32 0, %v6607
        %v6609 = vrot.slane %v6605, %v6608
        %v6610 = vmul.f32 %v6394, %v6609
        %v6611 = vmul.f32 %v6395, %v6609
        %v6612 = vmul.f32 %v6396, %v6609
        %v6613 = vmul.f32 %v6397, %v6609
        %v6614 = vmul.f32 %v6398, %v6609
        %v6615 = vmul.f32 %v6399, %v6609
        %v6616 = vmul.f32 %v6400, %v6609
        %v6617 = vmul.f32 %v6401, %v6609
        %v6618 = vmul.f32 %v6402, %v6609
        %v6619 = vmul.f32 %v6403, %v6609
        %v6620 = vmul.f32 %v6404, %v6609
        %v6621 = vmul.f32 %v6405, %v6609
        %v6622 = vmul.f32 %v6406, %v6609
        %v6623 = vmul.f32 %v6407, %v6609
        %v6624 = vmul.f32 %v6408, %v6609
        %v6625 = vmul.f32 %v6409, %v6609
        %v6626 = vmul.f32 %v6410, %v6609
        %v6627 = vmul.f32 %v6411, %v6609
        %v6628 = vmul.f32 %v6412, %v6609
        %v6629 = vmul.f32 %v6413, %v6609
        %v6630 = vmul.f32 %v6414, %v6609
        %v6631 = vmul.f32 %v6415, %v6609
        %v6632 = vmul.f32 %v6416, %v6609
        %v6633 = vmul.f32 %v6417, %v6609
        %v6634 = vmul.f32 %v6418, %v6609
        %v6635 = vmul.f32 %v6419, %v6609
        %v6636 = vmul.f32 %v6420, %v6609
        %v6637 = vmul.f32 %v6421, %v6609
        %v6638 = vmul.f32 %v6422, %v6609
        %v6639 = vmul.f32 %v6423, %v6609
        %v6640 = vmul.f32 %v6424, %v6609
        %v6641 = vmul.f32 %v6425, %v6609
        %v6642 = vmul.f32 %v6598, %v6605
        %v6643 = vsub.f32 %v6427, %v6642
        %v6645 = vlaneseq
        %v6646 = vshrl.u32 %v6645, 7
        %v6647 = vsub.s32 0, %v6646
        %v6648 = vrot.slane %v6643, %v6647
        %v6650 = vadd.f32 %v6610, %v6648
        %v6651 = vadd.f32 %v6611, %v6648
        %v6652 = vadd.f32 %v6612, %v6648
        %v6653 = vadd.f32 %v6613, %v6648
        %v6654 = vadd.f32 %v6614, %v6648
        %v6655 = vadd.f32 %v6615, %v6648
        %v6656 = vadd.f32 %v6616, %v6648
        %v6657 = vadd.f32 %v6617, %v6648
        %v6658 = vadd.f32 %v6618, %v6648
        %v6659 = vadd.f32 %v6619, %v6648
        %v6660 = vadd.f32 %v6620, %v6648
        %v6661 = vadd.f32 %v6621, %v6648
        %v6662 = vadd.f32 %v6622, %v6648
        %v6663 = vadd.f32 %v6623, %v6648
        %v6664 = vadd.f32 %v6624, %v6648
        %v6665 = vadd.f32 %v6625, %v6648
        %v6666 = vadd.f32 %v6626, %v6648
        %v6667 = vadd.f32 %v6627, %v6648
        %v6668 = vadd.f32 %v6628, %v6648
        %v6669 = vadd.f32 %v6629, %v6648
        %v6670 = vadd.f32 %v6630, %v6648
        %v6671 = vadd.f32 %v6631, %v6648
        %v6672 = vadd.f32 %v6632, %v6648
        %v6673 = vadd.f32 %v6633, %v6648
        %v6674 = vadd.f32 %v6634, %v6648
        %v6675 = vadd.f32 %v6635, %v6648
        %v6676 = vadd.f32 %v6636, %v6648
        %v6677 = vadd.f32 %v6637, %v6648
        %v6678 = vadd.f32 %v6638, %v6648
        %v6679 = vadd.f32 %v6639, %v6648
        %v6680 = vadd.f32 %v6640, %v6648
        %v6681 = vadd.f32 %v6641, %v6648
        %v6682 = vmax.f32 %v6650, 0.0
        %v6683 = vmax.f32 %v6651, 0.0
        %v6684 = vmax.f32 %v6652, 0.0
        %v6685 = vmax.f32 %v6653, 0.0
        %v6686 = vmax.f32 %v6654, 0.0
        %v6687 = vmax.f32 %v6655, 0.0
        %v6688 = vmax.f32 %v6656, 0.0
        %v6689 = vmax.f32 %v6657, 0.0
        %v6690 = vmax.f32 %v6658, 0.0
        %v6691 = vmax.f32 %v6659, 0.0
        %v6692 = vmax.f32 %v6660, 0.0
        %v6693 = vmax.f32 %v6661, 0.0
        %v6694 = vmax.f32 %v6662, 0.0
        %v6695 = vmax.f32 %v6663, 0.0
        %v6696 = vmax.f32 %v6664, 0.0
        %v6697 = vmax.f32 %v6665, 0.0
        %v6698 = vmax.f32 %v6666, 0.0
        %v6699 = vmax.f32 %v6667, 0.0
        %v6700 = vmax.f32 %v6668, 0.0
        %v6701 = vmax.f32 %v6669, 0.0
        %v6702 = vmax.f32 %v6670, 0.0
        %v6703 = vmax.f32 %v6671, 0.0
        %v6704 = vmax.f32 %v6672, 0.0
        %v6705 = vmax.f32 %v6673, 0.0
        %v6706 = vmax.f32 %v6674, 0.0
        %v6707 = vmax.f32 %v6675, 0.0
        %v6708 = vmax.f32 %v6676, 0.0
        %v6709 = vmax.f32 %v6677, 0.0
        %v6710 = vmax.f32 %v6678, 0.0
        %v6711 = vmax.f32 %v6679, 0.0
        %v6712 = vmax.f32 %v6680, 0.0
        %v6713 = vmax.f32 %v6681, 0.0
        %v6714 = vpack.c.bf16 %v6683, %v6682
        %v6715 = vpack.c.bf16 %v6685, %v6684
        %v6716 = vpack.c.bf16 %v6687, %v6686
        %v6717 = vpack.c.bf16 %v6689, %v6688
        %v6718 = vpack.c.bf16 %v6691, %v6690
        %v6719 = vpack.c.bf16 %v6693, %v6692
        %v6720 = vpack.c.bf16 %v6695, %v6694
        %v6721 = vpack.c.bf16 %v6697, %v6696
        %v6722 = vpack.c.bf16 %v6699, %v6698
        %v6723 = vpack.c.bf16 %v6701, %v6700
        %v6724 = vpack.c.bf16 %v6703, %v6702
        %v6725 = vpack.c.bf16 %v6705, %v6704
        %v6726 = vpack.c.bf16 %v6707, %v6706
        %v6727 = vpack.c.bf16 %v6709, %v6708
        %v6728 = vpack.c.bf16 %v6711, %v6710
        %v6729 = vpack.c.bf16 %v6713, %v6712
        %v6730 = vld [vmem:[#allocation15] sm:$0x3]
        %v6732 = vsel %vm725, %v6714, 0
        %v6735 = vsel %vm725, %v6715, 0
        %v6738 = vsel %vm725, %v6716, 0
        %v6741 = vsel %vm725, %v6717, 0
        %v6744 = vsel %vm725, %v6718, 0
        %v6747 = vsel %vm725, %v6719, 0
        %v6750 = vsel %vm725, %v6720, 0
        %v6753 = vsel %vm725, %v6721, 0
        %v6756 = vsel %vm725, %v6722, 0
        %v6759 = vsel %vm725, %v6723, 0
        %v6762 = vsel %vm725, %v6724, 0
        %v6765 = vsel %vm725, %v6725, 0
        %v6768 = vsel %vm725, %v6726, 0
        %v6771 = vsel %vm725, %v6727, 0
        %v6774 = vsel %vm725, %v6728, 0
        %v6777 = vsel %vm725, %v6729, 0
        %v6780 = vsel %vm774, %v6730, 0
        %6782 = vmatprep.subr.bf16.mxu0 0
        %6783 = vmatpush1.bf16.msra.mxu0 %v6780
        %6784 = vmatprep.subr.bf16.mxu0 0
        %6785 = vmatpush1.bf16.msra.mxu0 0
        %6786 = vmatprep.subr.bf16.mxu0 0
        %6787 = vmatpush1.bf16.msra.mxu0 0
        %6788 = vmatprep.subr.bf16.mxu0 0
        %6789 = vmatpush1.bf16.msra.mxu0 0
        %6790 = vmatprep.subr.bf16.mxu0 0
        %6791 = vmatpush1.bf16.msra.mxu0 0
        %6792 = vmatprep.subr.bf16.mxu0 0
        %6793 = vmatpush1.bf16.msra.mxu0 0
        %6794 = vmatprep.subr.bf16.mxu0 0
        %6795 = vmatpush1.bf16.msra.mxu0 0
        %6796 = vmatprep.subr.bf16.mxu0 0
        %6797 = vmatpush1.bf16.msra.mxu0 0
        %6798 = vmatprep.subr.bf16.mxu0 0
        %6799 = vmatpush1.bf16.msra.mxu0 0
        %6800 = vmatprep.subr.bf16.mxu0 0
        %6801 = vmatpush1.bf16.msra.mxu0 0
        %6802 = vmatprep.subr.bf16.mxu0 0
        %6803 = vmatpush1.bf16.msra.mxu0 0
        %6804 = vmatprep.subr.bf16.mxu0 0
        %6805 = vmatpush1.bf16.msra.mxu0 0
        %6806 = vmatprep.subr.bf16.mxu0 0
        %6807 = vmatpush1.bf16.msra.mxu0 0
        %6808 = vmatprep.subr.bf16.mxu0 0
        %6809 = vmatpush1.bf16.msra.mxu0 0
        %6810 = vmatprep.subr.bf16.mxu0 0
        %6811 = vmatpush1.bf16.msra.mxu0 0
        %6812 = vmatprep.subr.bf16.mxu0 0
        %6813 = vmatpush1.bf16.msra.mxu0 0
        %6814 = vmatprep.mubr.bf16.mxu0 0
        %6815 = vmatmul.mubr.bf16.gmra.mrb[0].mxu0 %v6732
        %v6816 = vpop.f32.mrb[0].mxu0
        %v6817 = vadd.f32 0.0, %v6816
        %v6818 = vpop.f32.mrb[0].mxu0
        %v6819 = vpop.f32.mrb[0].mxu0
        %v6820 = vadd.f32 0.0, %v6819
        %v6821 = vpop.f32.mrb[0].mxu0
        %6822 = vmatprep.mubr.bf16.mxu0 0
        %6823 = vmatmul.mubr.bf16.gmra.mrb[0].mxu0 %v6735
        %v6824 = vpop.f32.mrb[0].mxu0
        %v6825 = vadd.f32 0.0, %v6824
        %v6826 = vpop.f32.mrb[0].mxu0
        %v6827 = vpop.f32.mrb[0].mxu0
        %v6828 = vadd.f32 0.0, %v6827
        %v6829 = vpop.f32.mrb[0].mxu0
        %6830 = vmatprep.mubr.bf16.mxu0 0
        %6831 = vmatmul.mubr.bf16.gmra.mrb[0].mxu0 %v6738
        %v6832 = vpop.f32.mrb[0].mxu0
        %v6833 = vadd.f32 0.0, %v6832
        %v6834 = vpop.f32.mrb[0].mxu0
        %v6835 = vpop.f32.mrb[0].mxu0
        %v6836 = vadd.f32 0.0, %v6835
        %v6837 = vpop.f32.mrb[0].mxu0
        %6838 = vmatprep.mubr.bf16.mxu0 0
        %6839 = vmatmul.mubr.bf16.gmra.mrb[0].mxu0 %v6741
        %v6840 = vpop.f32.mrb[0].mxu0
        %v6841 = vadd.f32 0.0, %v6840
        %v6842 = vpop.f32.mrb[0].mxu0
        %v6843 = vpop.f32.mrb[0].mxu0
        %v6844 = vadd.f32 0.0, %v6843
        %v6845 = vpop.f32.mrb[0].mxu0
        %6846 = vmatprep.mubr.bf16.mxu0 0
        %6847 = vmatmul.mubr.bf16.gmra.mrb[0].mxu0 %v6744
        %v6848 = vpop.f32.mrb[0].mxu0
        %v6849 = vadd.f32 0.0, %v6848
        %v6850 = vpop.f32.mrb[0].mxu0
        %v6851 = vpop.f32.mrb[0].mxu0
        %v6852 = vadd.f32 0.0, %v6851
        %v6853 = vpop.f32.mrb[0].mxu0
        %6854 = vmatprep.mubr.bf16.mxu0 0
        %6855 = vmatmul.mubr.bf16.gmra.mrb[0].mxu0 %v6747
        %v6856 = vpop.f32.mrb[0].mxu0
        %v6857 = vadd.f32 0.0, %v6856
        %v6858 = vpop.f32.mrb[0].mxu0
        %v6859 = vpop.f32.mrb[0].mxu0
        %v6860 = vadd.f32 0.0, %v6859
        %v6861 = vpop.f32.mrb[0].mxu0
        %6862 = vmatprep.mubr.bf16.mxu0 0
        %6863 = vmatmul.mubr.bf16.gmra.mrb[0].mxu0 %v6750
        %v6864 = vpop.f32.mrb[0].mxu0
        %v6865 = vadd.f32 0.0, %v6864
        %v6866 = vpop.f32.mrb[0].mxu0
        %v6867 = vpop.f32.mrb[0].mxu0
        %v6868 = vadd.f32 0.0, %v6867
        %v6869 = vpop.f32.mrb[0].mxu0
        %6870 = vmatprep.mubr.bf16.mxu0 0
        %6871 = vmatmul.mubr.bf16.gmra.mrb[0].mxu0 %v6753
        %v6872 = vpop.f32.mrb[0].mxu0
        %v6873 = vadd.f32 0.0, %v6872
        %v6874 = vpop.f32.mrb[0].mxu0
        %v6875 = vpop.f32.mrb[0].mxu0
        %v6876 = vadd.f32 0.0, %v6875
        %v6877 = vpop.f32.mrb[0].mxu0
        %6878 = vmatprep.mubr.bf16.mxu0 0
        %6879 = vmatmul.mubr.bf16.gmra.mrb[0].mxu0 %v6756
        %v6880 = vpop.f32.mrb[0].mxu0
        %v6881 = vadd.f32 0.0, %v6880
        %v6882 = vpop.f32.mrb[0].mxu0
        %v6883 = vpop.f32.mrb[0].mxu0
        %v6884 = vadd.f32 0.0, %v6883
        %v6885 = vpop.f32.mrb[0].mxu0
        %6886 = vmatprep.mubr.bf16.mxu0 0
        %6887 = vmatmul.mubr.bf16.gmra.mrb[0].mxu0 %v6759
        %v6888 = vpop.f32.mrb[0].mxu0
        %v6889 = vadd.f32 0.0, %v6888
        %v6890 = vpop.f32.mrb[0].mxu0
        %v6891 = vpop.f32.mrb[0].mxu0
        %v6892 = vadd.f32 0.0, %v6891
        %v6893 = vpop.f32.mrb[0].mxu0
        %6894 = vmatprep.mubr.bf16.mxu0 0
        %6895 = vmatmul.mubr.bf16.gmra.mrb[0].mxu0 %v6762
        %v6896 = vpop.f32.mrb[0].mxu0
        %v6897 = vadd.f32 0.0, %v6896
        %v6898 = vpop.f32.mrb[0].mxu0
        %v6899 = vpop.f32.mrb[0].mxu0
        %v6900 = vadd.f32 0.0, %v6899
        %v6901 = vpop.f32.mrb[0].mxu0
        %6902 = vmatprep.mubr.bf16.mxu0 0
        %6903 = vmatmul.mubr.bf16.gmra.mrb[0].mxu0 %v6765
        %v6904 = vpop.f32.mrb[0].mxu0
        %v6905 = vadd.f32 0.0, %v6904
        %v6906 = vpop.f32.mrb[0].mxu0
        %v6907 = vpop.f32.mrb[0].mxu0
        %v6908 = vadd.f32 0.0, %v6907
        %v6909 = vpop.f32.mrb[0].mxu0
        %6910 = vmatprep.mubr.bf16.mxu0 0
        %6911 = vmatmul.mubr.bf16.gmra.mrb[0].mxu0 %v6768
        %v6912 = vpop.f32.mrb[0].mxu0
        %v6913 = vadd.f32 0.0, %v6912
        %v6914 = vpop.f32.mrb[0].mxu0
        %v6915 = vpop.f32.mrb[0].mxu0
        %v6916 = vadd.f32 0.0, %v6915
        %v6917 = vpop.f32.mrb[0].mxu0
        %6918 = vmatprep.mubr.bf16.mxu0 0
        %6919 = vmatmul.mubr.bf16.gmra.mrb[0].mxu0 %v6771
        %v6920 = vpop.f32.mrb[0].mxu0
        %v6921 = vadd.f32 0.0, %v6920
        %v6922 = vpop.f32.mrb[0].mxu0
        %v6923 = vpop.f32.mrb[0].mxu0
        %v6924 = vadd.f32 0.0, %v6923
        %v6925 = vpop.f32.mrb[0].mxu0
        %6926 = vmatprep.mubr.bf16.mxu0 0
        %6927 = vmatmul.mubr.bf16.gmra.mrb[0].mxu0 %v6774
        %v6928 = vpop.f32.mrb[0].mxu0
        %v6929 = vadd.f32 0.0, %v6928
        %v6930 = vpop.f32.mrb[0].mxu0
        %v6931 = vpop.f32.mrb[0].mxu0
        %v6932 = vadd.f32 0.0, %v6931
        %v6933 = vpop.f32.mrb[0].mxu0
        %6934 = vmatprep.mubr.bf16.mxu0 0
        %6935 = vmatmul.mubr.bf16.gmra.mrb[0].mxu0 %v6777
        %v6936 = vpop.f32.mrb[0].mxu0
        %v6937 = vadd.f32 0.0, %v6936
        %v6938 = vpop.f32.mrb[0].mxu0
        %v6939 = vpop.f32.mrb[0].mxu0
        %v6940 = vadd.f32 0.0, %v6939
        %v6941 = vpop.f32.mrb[0].mxu0
        %6942 = vdwg.mxu0
        %v6943 = vld [vmem:[#allocation17] sm:$0x1]
        %v6944 = vld [vmem:[#allocation18] sm:$0x1]
        %vm6945 = vcmask 130048
        %v6946 = vsel %vm6945, %v6817, 0.0
        %v6947 = vsel %vm6945, %v6820, 0.0
        %v6948 = vadd.f32 %v6946, %v6947
        %v6949 = vsel %vm6945, %v6825, 0.0
        %v6950 = vadd.f32 %v6948, %v6949
        %v6951 = vsel %vm6945, %v6828, 0.0
        %v6952 = vadd.f32 %v6950, %v6951
        %v6953 = vsel %vm6945, %v6833, 0.0
        %v6954 = vadd.f32 %v6952, %v6953
        %v6955 = vsel %vm6945, %v6836, 0.0
        %v6956 = vadd.f32 %v6954, %v6955
        %v6957 = vsel %vm6945, %v6841, 0.0
        %v6958 = vadd.f32 %v6956, %v6957
        %v6959 = vsel %vm6945, %v6844, 0.0
        %v6960 = vadd.f32 %v6958, %v6959
        %v6961 = vsel %vm6945, %v6849, 0.0
        %v6962 = vadd.f32 %v6960, %v6961
        %v6963 = vsel %vm6945, %v6852, 0.0
        %v6964 = vadd.f32 %v6962, %v6963
        %v6965 = vsel %vm6945, %v6857, 0.0
        %v6966 = vadd.f32 %v6964, %v6965
        %v6967 = vsel %vm6945, %v6860, 0.0
        %v6968 = vadd.f32 %v6966, %v6967
        %v6969 = vsel %vm6945, %v6865, 0.0
        %v6970 = vadd.f32 %v6968, %v6969
        %v6971 = vsel %vm6945, %v6868, 0.0
        %v6972 = vadd.f32 %v6970, %v6971
        %v6973 = vsel %vm6945, %v6873, 0.0
        %v6974 = vadd.f32 %v6972, %v6973
        %v6975 = vsel %vm6945, %v6876, 0.0
        %v6976 = vadd.f32 %v6974, %v6975
        %v6977 = vsel %vm6945, %v6881, 0.0
        %v6978 = vadd.f32 %v6976, %v6977
        %v6979 = vsel %vm6945, %v6884, 0.0
        %v6980 = vadd.f32 %v6978, %v6979
        %v6981 = vsel %vm6945, %v6889, 0.0
        %v6982 = vadd.f32 %v6980, %v6981
        %v6983 = vsel %vm6945, %v6892, 0.0
        %v6984 = vadd.f32 %v6982, %v6983
        %v6985 = vsel %vm6945, %v6897, 0.0
        %v6986 = vadd.f32 %v6984, %v6985
        %v6987 = vsel %vm6945, %v6900, 0.0
        %v6988 = vadd.f32 %v6986, %v6987
        %v6989 = vsel %vm6945, %v6905, 0.0
        %v6990 = vadd.f32 %v6988, %v6989
        %v6991 = vsel %vm6945, %v6908, 0.0
        %v6992 = vadd.f32 %v6990, %v6991
        %v6993 = vsel %vm6945, %v6913, 0.0
        %v6994 = vadd.f32 %v6992, %v6993
        %v6995 = vsel %vm6945, %v6916, 0.0
        %v6996 = vadd.f32 %v6994, %v6995
        %v6997 = vsel %vm6945, %v6921, 0.0
        %v6998 = vadd.f32 %v6996, %v6997
        %v6999 = vsel %vm6945, %v6924, 0.0
        %v7000 = vadd.f32 %v6998, %v6999
        %v7001 = vsel %vm6945, %v6929, 0.0
        %v7002 = vadd.f32 %v7000, %v7001
        %v7003 = vsel %vm6945, %v6932, 0.0
        %v7004 = vadd.f32 %v7002, %v7003
        %v7005 = vsel %vm6945, %v6937, 0.0
        %v7006 = vadd.f32 %v7004, %v7005
        %v7007 = vsel %vm6945, %v6940, 0.0
        %v7008 = vadd.f32 %v7006, %v7007
        %v7009 = vrot.slane %v7008, 4
        %v7010 = vadd.f32 %v7008, %v7009
        %v7011 = vrot.slane %v7010, 2
        %v7012 = vadd.f32 %v7010, %v7011
        %v7013 = vrot.slane %v7012, 1
        %v7014 = vadd.f32 %v7012, %v7013
        %v7015 = vmul.f32 %v6817, %v6817
        %v7016 = vmul.f32 %v6820, %v6820
        %v7017 = vmul.f32 %v6825, %v6825
        %v7018 = vmul.f32 %v6828, %v6828
        %v7019 = vmul.f32 %v6833, %v6833
        %v7020 = vmul.f32 %v6836, %v6836
        %v7021 = vmul.f32 %v6841, %v6841
        %v7022 = vmul.f32 %v6844, %v6844
        %v7023 = vmul.f32 %v6849, %v6849
        %v7024 = vmul.f32 %v6852, %v6852
        %v7025 = vmul.f32 %v6857, %v6857
        %v7026 = vmul.f32 %v6860, %v6860
        %v7027 = vmul.f32 %v6865, %v6865
        %v7028 = vmul.f32 %v6868, %v6868
        %v7029 = vmul.f32 %v6873, %v6873
        %v7030 = vmul.f32 %v6876, %v6876
        %v7031 = vmul.f32 %v6881, %v6881
        %v7032 = vmul.f32 %v6884, %v6884
        %v7033 = vmul.f32 %v6889, %v6889
        %v7034 = vmul.f32 %v6892, %v6892
        %v7035 = vmul.f32 %v6897, %v6897
        %v7036 = vmul.f32 %v6900, %v6900
        %v7037 = vmul.f32 %v6905, %v6905
        %v7038 = vmul.f32 %v6908, %v6908
        %v7039 = vmul.f32 %v6913, %v6913
        %v7040 = vmul.f32 %v6916, %v6916
        %v7041 = vmul.f32 %v6921, %v6921
        %v7042 = vmul.f32 %v6924, %v6924
        %v7043 = vmul.f32 %v6929, %v6929
        %v7044 = vmul.f32 %v6932, %v6932
        %v7045 = vmul.f32 %v6937, %v6937
        %v7046 = vmul.f32 %v6940, %v6940
        %v7047 = vsel %vm6945, %v7015, 0.0
        %v7048 = vsel %vm6945, %v7016, 0.0
        %v7049 = vadd.f32 %v7047, %v7048
        %v7050 = vsel %vm6945, %v7017, 0.0
        %v7051 = vadd.f32 %v7049, %v7050
        %v7052 = vsel %vm6945, %v7018, 0.0
        %v7053 = vadd.f32 %v7051, %v7052
        %v7054 = vsel %vm6945, %v7019, 0.0
        %v7055 = vadd.f32 %v7053, %v7054
        %v7056 = vsel %vm6945, %v7020, 0.0
        %v7057 = vadd.f32 %v7055, %v7056
        %v7058 = vsel %vm6945, %v7021, 0.0
        %v7059 = vadd.f32 %v7057, %v7058
        %v7060 = vsel %vm6945, %v7022, 0.0
        %v7061 = vadd.f32 %v7059, %v7060
        %v7062 = vsel %vm6945, %v7023, 0.0
        %v7063 = vadd.f32 %v7061, %v7062
        %v7064 = vsel %vm6945, %v7024, 0.0
        %v7065 = vadd.f32 %v7063, %v7064
        %v7066 = vsel %vm6945, %v7025, 0.0
        %v7067 = vadd.f32 %v7065, %v7066
        %v7068 = vsel %vm6945, %v7026, 0.0
        %v7069 = vadd.f32 %v7067, %v7068
        %v7070 = vsel %vm6945, %v7027, 0.0
        %v7071 = vadd.f32 %v7069, %v7070
        %v7072 = vsel %vm6945, %v7028, 0.0
        %v7073 = vadd.f32 %v7071, %v7072
        %v7074 = vsel %vm6945, %v7029, 0.0
        %v7075 = vadd.f32 %v7073, %v7074
        %v7076 = vsel %vm6945, %v7030, 0.0
        %v7077 = vadd.f32 %v7075, %v7076
        %v7078 = vsel %vm6945, %v7031, 0.0
        %v7079 = vadd.f32 %v7077, %v7078
        %v7080 = vsel %vm6945, %v7032, 0.0
        %v7081 = vadd.f32 %v7079, %v7080
        %v7082 = vsel %vm6945, %v7033, 0.0
        %v7083 = vadd.f32 %v7081, %v7082
        %v7084 = vsel %vm6945, %v7034, 0.0
        %v7085 = vadd.f32 %v7083, %v7084
        %v7086 = vsel %vm6945, %v7035, 0.0
        %v7087 = vadd.f32 %v7085, %v7086
        %v7088 = vsel %vm6945, %v7036, 0.0
        %v7089 = vadd.f32 %v7087, %v7088
        %v7090 = vsel %vm6945, %v7037, 0.0
        %v7091 = vadd.f32 %v7089, %v7090
        %v7092 = vsel %vm6945, %v7038, 0.0
        %v7093 = vadd.f32 %v7091, %v7092
        %v7094 = vsel %vm6945, %v7039, 0.0
        %v7095 = vadd.f32 %v7093, %v7094
        %v7096 = vsel %vm6945, %v7040, 0.0
        %v7097 = vadd.f32 %v7095, %v7096
        %v7098 = vsel %vm6945, %v7041, 0.0
        %v7099 = vadd.f32 %v7097, %v7098
        %v7100 = vsel %vm6945, %v7042, 0.0
        %v7101 = vadd.f32 %v7099, %v7100
        %v7102 = vsel %vm6945, %v7043, 0.0
        %v7103 = vadd.f32 %v7101, %v7102
        %v7104 = vsel %vm6945, %v7044, 0.0
        %v7105 = vadd.f32 %v7103, %v7104
        %v7106 = vsel %vm6945, %v7045, 0.0
        %v7107 = vadd.f32 %v7105, %v7106
        %v7108 = vsel %vm6945, %v7046, 0.0
        %v7109 = vadd.f32 %v7107, %v7108
        %v7110 = vrot.slane %v7109, 4
        %v7111 = vadd.f32 %v7109, %v7110
        %v7112 = vrot.slane %v7111, 2
        %v7113 = vadd.f32 %v7111, %v7112
        %v7114 = vrot.slane %v7113, 1
        %v7115 = vadd.f32 %v7113, %v7114
        %v7116 = vmul.f32 %v7014, 0.00390625
        %v7117 = vmul.f32 %v7115, 0.00390625
        %v7118 = vmul.f32 %v7116, %v7116
        %v7119 = vsub.f32 %v7117, %v7118
        %v7120 = vmax.f32 %v7119, 0.0
        %v7121 = vadd.f32 %v7120, 1e-05
        %v7122 = vrsqrt.pop %v7121
        %v7123 = vmul.f32 %v7122, %v6943
        %v7124 = vlaneseq
        %v7125 = vshrl.u32 %v7124, 7
        %v7126 = vsub.s32 0, %v7125
        %v7127 = vrot.slane %v7123, %v7126
        %v7128 = vmul.f32 %v6817, %v7127
        %v7129 = vmul.f32 %v6820, %v7127
        %v7130 = vmul.f32 %v6825, %v7127
        %v7131 = vmul.f32 %v6828, %v7127
        %v7132 = vmul.f32 %v6833, %v7127
        %v7133 = vmul.f32 %v6836, %v7127
        %v7134 = vmul.f32 %v6841, %v7127
        %v7135 = vmul.f32 %v6844, %v7127
        %v7136 = vmul.f32 %v6849, %v7127
        %v7137 = vmul.f32 %v6852, %v7127
        %v7138 = vmul.f32 %v6857, %v7127
        %v7139 = vmul.f32 %v6860, %v7127
        %v7140 = vmul.f32 %v6865, %v7127
        %v7141 = vmul.f32 %v6868, %v7127
        %v7142 = vmul.f32 %v6873, %v7127
        %v7143 = vmul.f32 %v6876, %v7127
        %v7144 = vmul.f32 %v6881, %v7127
        %v7145 = vmul.f32 %v6884, %v7127
        %v7146 = vmul.f32 %v6889, %v7127
        %v7147 = vmul.f32 %v6892, %v7127
        %v7148 = vmul.f32 %v6897, %v7127
        %v7149 = vmul.f32 %v6900, %v7127
        %v7150 = vmul.f32 %v6905, %v7127
        %v7151 = vmul.f32 %v6908, %v7127
        %v7152 = vmul.f32 %v6913, %v7127
        %v7153 = vmul.f32 %v6916, %v7127
        %v7154 = vmul.f32 %v6921, %v7127
        %v7155 = vmul.f32 %v6924, %v7127
        %v7156 = vmul.f32 %v6929, %v7127
        %v7157 = vmul.f32 %v6932, %v7127
        %v7158 = vmul.f32 %v6937, %v7127
        %v7159 = vmul.f32 %v6940, %v7127
        %v7160 = vmul.f32 %v7116, %v7123
        %v7161 = vsub.f32 %v6944, %v7160
        %v7163 = vlaneseq
        %v7164 = vshrl.u32 %v7163, 7
        %v7165 = vsub.s32 0, %v7164
        %v7166 = vrot.slane %v7161, %v7165
        %v7168 = vadd.f32 %v7128, %v7166
        %v7169 = vadd.f32 %v7129, %v7166
        %v7170 = vadd.f32 %v7130, %v7166
        %v7171 = vadd.f32 %v7131, %v7166
        %v7172 = vadd.f32 %v7132, %v7166
        %v7173 = vadd.f32 %v7133, %v7166
        %v7174 = vadd.f32 %v7134, %v7166
        %v7175 = vadd.f32 %v7135, %v7166
        %v7176 = vadd.f32 %v7136, %v7166
        %v7177 = vadd.f32 %v7137, %v7166
        %v7178 = vadd.f32 %v7138, %v7166
        %v7179 = vadd.f32 %v7139, %v7166
        %v7180 = vadd.f32 %v7140, %v7166
        %v7181 = vadd.f32 %v7141, %v7166
        %v7182 = vadd.f32 %v7142, %v7166
        %v7183 = vadd.f32 %v7143, %v7166
        %v7184 = vadd.f32 %v7144, %v7166
        %v7185 = vadd.f32 %v7145, %v7166
        %v7186 = vadd.f32 %v7146, %v7166
        %v7187 = vadd.f32 %v7147, %v7166
        %v7188 = vadd.f32 %v7148, %v7166
        %v7189 = vadd.f32 %v7149, %v7166
        %v7190 = vadd.f32 %v7150, %v7166
        %v7191 = vadd.f32 %v7151, %v7166
        %v7192 = vadd.f32 %v7152, %v7166
        %v7193 = vadd.f32 %v7153, %v7166
        %v7194 = vadd.f32 %v7154, %v7166
        %v7195 = vadd.f32 %v7155, %v7166
        %v7196 = vadd.f32 %v7156, %v7166
        %v7197 = vadd.f32 %v7157, %v7166
        %v7198 = vadd.f32 %v7158, %v7166
        %v7199 = vadd.f32 %v7159, %v7166
        %v7200 = vld [vmem:[#allocation20] sm:$0x3]
        %v7202 = vsel %vm774, %v7200, 0
        %7204 = vmatprep.subr.bf16.mxu0 0
        %7205 = vmatpush1.bf16.msra.mxu0 %v7202
        %7206 = vmatprep.subr.bf16.mxu0 0
        %7207 = vmatpush1.bf16.msra.mxu0 0
        %7208 = vmatprep.subr.bf16.mxu0 0
        %7209 = vmatpush1.bf16.msra.mxu0 0
        %7210 = vmatprep.subr.bf16.mxu0 0
        %7211 = vmatpush1.bf16.msra.mxu0 0
        %7212 = vmatprep.subr.bf16.mxu0 0
        %7213 = vmatpush1.bf16.msra.mxu0 0
        %7214 = vmatprep.subr.bf16.mxu0 0
        %7215 = vmatpush1.bf16.msra.mxu0 0
        %7216 = vmatprep.subr.bf16.mxu0 0
        %7217 = vmatpush1.bf16.msra.mxu0 0
        %7218 = vmatprep.subr.bf16.mxu0 0
        %7219 = vmatpush1.bf16.msra.mxu0 0
        %7220 = vmatprep.subr.bf16.mxu0 0
        %7221 = vmatpush1.bf16.msra.mxu0 0
        %7222 = vmatprep.subr.bf16.mxu0 0
        %7223 = vmatpush1.bf16.msra.mxu0 0
        %7224 = vmatprep.subr.bf16.mxu0 0
        %7225 = vmatpush1.bf16.msra.mxu0 0
        %7226 = vmatprep.subr.bf16.mxu0 0
        %7227 = vmatpush1.bf16.msra.mxu0 0
        %7228 = vmatprep.subr.bf16.mxu0 0
        %7229 = vmatpush1.bf16.msra.mxu0 0
        %7230 = vmatprep.subr.bf16.mxu0 0
        %7231 = vmatpush1.bf16.msra.mxu0 0
        %7232 = vmatprep.subr.bf16.mxu0 0
        %7233 = vmatpush1.bf16.msra.mxu0 0
        %7234 = vmatprep.subr.bf16.mxu0 0
        %7235 = vmatpush1.bf16.msra.mxu0 0
        %7236 = vmatprep.mubr.bf16.mxu0 0
        %7237 = vmatmul.mubr.bf16.gmra.mrb[0].mxu0 %v727
        %v7238 = vpop.f32.mrb[0].mxu0
        %v7239 = vadd.f32 0.0, %v7238
        %v7240 = vpop.f32.mrb[0].mxu0
        %v7241 = vpop.f32.mrb[0].mxu0
        %v7242 = vadd.f32 0.0, %v7241
        %v7243 = vpop.f32.mrb[0].mxu0
        %7244 = vmatprep.mubr.bf16.mxu0 0
        %7245 = vmatmul.mubr.bf16.gmra.mrb[0].mxu0 %v730
        %v7246 = vpop.f32.mrb[0].mxu0
        %v7247 = vadd.f32 0.0, %v7246
        %v7248 = vpop.f32.mrb[0].mxu0
        %v7249 = vpop.f32.mrb[0].mxu0
        %v7250 = vadd.f32 0.0, %v7249
        %v7251 = vpop.f32.mrb[0].mxu0
        %7252 = vmatprep.mubr.bf16.mxu0 0
        %7253 = vmatmul.mubr.bf16.gmra.mrb[0].mxu0 %v733
        %v7254 = vpop.f32.mrb[0].mxu0
        %v7255 = vadd.f32 0.0, %v7254
        %v7256 = vpop.f32.mrb[0].mxu0
        %v7257 = vpop.f32.mrb[0].mxu0
        %v7258 = vadd.f32 0.0, %v7257
        %v7259 = vpop.f32.mrb[0].mxu0
        %7260 = vmatprep.mubr.bf16.mxu0 0
        %7261 = vmatmul.mubr.bf16.gmra.mrb[0].mxu0 %v736
        %v7262 = vpop.f32.mrb[0].mxu0
        %v7263 = vadd.f32 0.0, %v7262
        %v7264 = vpop.f32.mrb[0].mxu0
        %v7265 = vpop.f32.mrb[0].mxu0
        %v7266 = vadd.f32 0.0, %v7265
        %v7267 = vpop.f32.mrb[0].mxu0
        %7268 = vmatprep.mubr.bf16.mxu0 0
        %7269 = vmatmul.mubr.bf16.gmra.mrb[0].mxu0 %v739
        %v7270 = vpop.f32.mrb[0].mxu0
        %v7271 = vadd.f32 0.0, %v7270
        %v7272 = vpop.f32.mrb[0].mxu0
        %v7273 = vpop.f32.mrb[0].mxu0
        %v7274 = vadd.f32 0.0, %v7273
        %v7275 = vpop.f32.mrb[0].mxu0
        %7276 = vmatprep.mubr.bf16.mxu0 0
        %7277 = vmatmul.mubr.bf16.gmra.mrb[0].mxu0 %v742
        %v7278 = vpop.f32.mrb[0].mxu0
        %v7279 = vadd.f32 0.0, %v7278
        %v7280 = vpop.f32.mrb[0].mxu0
        %v7281 = vpop.f32.mrb[0].mxu0
        %v7282 = vadd.f32 0.0, %v7281
        %v7283 = vpop.f32.mrb[0].mxu0
        %7284 = vmatprep.mubr.bf16.mxu0 0
        %7285 = vmatmul.mubr.bf16.gmra.mrb[0].mxu0 %v745
        %v7286 = vpop.f32.mrb[0].mxu0
        %v7287 = vadd.f32 0.0, %v7286
        %v7288 = vpop.f32.mrb[0].mxu0
        %v7289 = vpop.f32.mrb[0].mxu0
        %v7290 = vadd.f32 0.0, %v7289
        %v7291 = vpop.f32.mrb[0].mxu0
        %7292 = vmatprep.mubr.bf16.mxu0 0
        %7293 = vmatmul.mubr.bf16.gmra.mrb[0].mxu0 %v748
        %v7294 = vpop.f32.mrb[0].mxu0
        %v7295 = vadd.f32 0.0, %v7294
        %v7296 = vpop.f32.mrb[0].mxu0
        %v7297 = vpop.f32.mrb[0].mxu0
        %v7298 = vadd.f32 0.0, %v7297
        %v7299 = vpop.f32.mrb[0].mxu0
        %7300 = vmatprep.mubr.bf16.mxu0 0
        %7301 = vmatmul.mubr.bf16.gmra.mrb[0].mxu0 %v751
        %v7302 = vpop.f32.mrb[0].mxu0
        %v7303 = vadd.f32 0.0, %v7302
        %v7304 = vpop.f32.mrb[0].mxu0
        %v7305 = vpop.f32.mrb[0].mxu0
        %v7306 = vadd.f32 0.0, %v7305
        %v7307 = vpop.f32.mrb[0].mxu0
        %7308 = vmatprep.mubr.bf16.mxu0 0
        %7309 = vmatmul.mubr.bf16.gmra.mrb[0].mxu0 %v754
        %v7310 = vpop.f32.mrb[0].mxu0
        %v7311 = vadd.f32 0.0, %v7310
        %v7312 = vpop.f32.mrb[0].mxu0
        %v7313 = vpop.f32.mrb[0].mxu0
        %v7314 = vadd.f32 0.0, %v7313
        %v7315 = vpop.f32.mrb[0].mxu0
        %7316 = vmatprep.mubr.bf16.mxu0 0
        %7317 = vmatmul.mubr.bf16.gmra.mrb[0].mxu0 %v757
        %v7318 = vpop.f32.mrb[0].mxu0
        %v7319 = vadd.f32 0.0, %v7318
        %v7320 = vpop.f32.mrb[0].mxu0
        %v7321 = vpop.f32.mrb[0].mxu0
        %v7322 = vadd.f32 0.0, %v7321
        %v7323 = vpop.f32.mrb[0].mxu0
        %7324 = vmatprep.mubr.bf16.mxu0 0
        %7325 = vmatmul.mubr.bf16.gmra.mrb[0].mxu0 %v760
        %v7326 = vpop.f32.mrb[0].mxu0
        %v7327 = vadd.f32 0.0, %v7326
        %v7328 = vpop.f32.mrb[0].mxu0
        %v7329 = vpop.f32.mrb[0].mxu0
        %v7330 = vadd.f32 0.0, %v7329
        %v7331 = vpop.f32.mrb[0].mxu0
        %7332 = vmatprep.mubr.bf16.mxu0 0
        %7333 = vmatmul.mubr.bf16.gmra.mrb[0].mxu0 %v763
        %v7334 = vpop.f32.mrb[0].mxu0
        %v7335 = vadd.f32 0.0, %v7334
        %v7336 = vpop.f32.mrb[0].mxu0
        %v7337 = vpop.f32.mrb[0].mxu0
        %v7338 = vadd.f32 0.0, %v7337
        %v7339 = vpop.f32.mrb[0].mxu0
        %7340 = vmatprep.mubr.bf16.mxu0 0
        %7341 = vmatmul.mubr.bf16.gmra.mrb[0].mxu0 %v766
        %v7342 = vpop.f32.mrb[0].mxu0
        %v7343 = vadd.f32 0.0, %v7342
        %v7344 = vpop.f32.mrb[0].mxu0
        %v7345 = vpop.f32.mrb[0].mxu0
        %v7346 = vadd.f32 0.0, %v7345
        %v7347 = vpop.f32.mrb[0].mxu0
        %7348 = vmatprep.mubr.bf16.mxu0 0
        %7349 = vmatmul.mubr.bf16.gmra.mrb[0].mxu0 %v769
        %v7350 = vpop.f32.mrb[0].mxu0
        %v7351 = vadd.f32 0.0, %v7350
        %v7352 = vpop.f32.mrb[0].mxu0
        %v7353 = vpop.f32.mrb[0].mxu0
        %v7354 = vadd.f32 0.0, %v7353
        %v7355 = vpop.f32.mrb[0].mxu0
        %7356 = vmatprep.mubr.bf16.mxu0 0
        %7357 = vmatmul.mubr.bf16.gmra.mrb[0].mxu0 %v772
        %v7358 = vpop.f32.mrb[0].mxu0
        %v7359 = vadd.f32 0.0, %v7358
        %v7360 = vpop.f32.mrb[0].mxu0
        %v7361 = vpop.f32.mrb[0].mxu0
        %v7362 = vadd.f32 0.0, %v7361
        %v7363 = vpop.f32.mrb[0].mxu0
        %7364 = vdwg.mxu0
        %v7365 = vld [vmem:[#allocation21] sm:$0x1]
        %v7366 = vld [vmem:[#allocation23] sm:$0x1]
        %v7367 = vsel %vm6945, %v7239, 0.0
        %v7368 = vsel %vm6945, %v7242, 0.0
        %v7369 = vadd.f32 %v7367, %v7368
        %v7370 = vsel %vm6945, %v7247, 0.0
        %v7371 = vadd.f32 %v7369, %v7370
        %v7372 = vsel %vm6945, %v7250, 0.0
        %v7373 = vadd.f32 %v7371, %v7372
        %v7374 = vsel %vm6945, %v7255, 0.0
        %v7375 = vadd.f32 %v7373, %v7374
        %v7376 = vsel %vm6945, %v7258, 0.0
        %v7377 = vadd.f32 %v7375, %v7376
        %v7378 = vsel %vm6945, %v7263, 0.0
        %v7379 = vadd.f32 %v7377, %v7378
        %v7380 = vsel %vm6945, %v7266, 0.0
        %v7381 = vadd.f32 %v7379, %v7380
        %v7382 = vsel %vm6945, %v7271, 0.0
        %v7383 = vadd.f32 %v7381, %v7382
        %v7384 = vsel %vm6945, %v7274, 0.0
        %v7385 = vadd.f32 %v7383, %v7384
        %v7386 = vsel %vm6945, %v7279, 0.0
        %v7387 = vadd.f32 %v7385, %v7386
        %v7388 = vsel %vm6945, %v7282, 0.0
        %v7389 = vadd.f32 %v7387, %v7388
        %v7390 = vsel %vm6945, %v7287, 0.0
        %v7391 = vadd.f32 %v7389, %v7390
        %v7392 = vsel %vm6945, %v7290, 0.0
        %v7393 = vadd.f32 %v7391, %v7392
        %v7394 = vsel %vm6945, %v7295, 0.0
        %v7395 = vadd.f32 %v7393, %v7394
        %v7396 = vsel %vm6945, %v7298, 0.0
        %v7397 = vadd.f32 %v7395, %v7396
        %v7398 = vsel %vm6945, %v7303, 0.0
        %v7399 = vadd.f32 %v7397, %v7398
        %v7400 = vsel %vm6945, %v7306, 0.0
        %v7401 = vadd.f32 %v7399, %v7400
        %v7402 = vsel %vm6945, %v7311, 0.0
        %v7403 = vadd.f32 %v7401, %v7402
        %v7404 = vsel %vm6945, %v7314, 0.0
        %v7405 = vadd.f32 %v7403, %v7404
        %v7406 = vsel %vm6945, %v7319, 0.0
        %v7407 = vadd.f32 %v7405, %v7406
        %v7408 = vsel %vm6945, %v7322, 0.0
        %v7409 = vadd.f32 %v7407, %v7408
        %v7410 = vsel %vm6945, %v7327, 0.0
        %v7411 = vadd.f32 %v7409, %v7410
        %v7412 = vsel %vm6945, %v7330, 0.0
        %v7413 = vadd.f32 %v7411, %v7412
        %v7414 = vsel %vm6945, %v7335, 0.0
        %v7415 = vadd.f32 %v7413, %v7414
        %v7416 = vsel %vm6945, %v7338, 0.0
        %v7417 = vadd.f32 %v7415, %v7416
        %v7418 = vsel %vm6945, %v7343, 0.0
        %v7419 = vadd.f32 %v7417, %v7418
        %v7420 = vsel %vm6945, %v7346, 0.0
        %v7421 = vadd.f32 %v7419, %v7420
        %v7422 = vsel %vm6945, %v7351, 0.0
        %v7423 = vadd.f32 %v7421, %v7422
        %v7424 = vsel %vm6945, %v7354, 0.0
        %v7425 = vadd.f32 %v7423, %v7424
        %v7426 = vsel %vm6945, %v7359, 0.0
        %v7427 = vadd.f32 %v7425, %v7426
        %v7428 = vsel %vm6945, %v7362, 0.0
        %v7429 = vadd.f32 %v7427, %v7428
        %v7430 = vrot.slane %v7429, 4
        %v7431 = vadd.f32 %v7429, %v7430
        %v7432 = vrot.slane %v7431, 2
        %v7433 = vadd.f32 %v7431, %v7432
        %v7434 = vrot.slane %v7433, 1
        %v7435 = vadd.f32 %v7433, %v7434
        %v7436 = vmul.f32 %v7239, %v7239
        %v7437 = vmul.f32 %v7242, %v7242
        %v7438 = vmul.f32 %v7247, %v7247
        %v7439 = vmul.f32 %v7250, %v7250
        %v7440 = vmul.f32 %v7255, %v7255
        %v7441 = vmul.f32 %v7258, %v7258
        %v7442 = vmul.f32 %v7263, %v7263
        %v7443 = vmul.f32 %v7266, %v7266
        %v7444 = vmul.f32 %v7271, %v7271
        %v7445 = vmul.f32 %v7274, %v7274
        %v7446 = vmul.f32 %v7279, %v7279
        %v7447 = vmul.f32 %v7282, %v7282
        %v7448 = vmul.f32 %v7287, %v7287
        %v7449 = vmul.f32 %v7290, %v7290
        %v7450 = vmul.f32 %v7295, %v7295
        %v7451 = vmul.f32 %v7298, %v7298
        %v7452 = vmul.f32 %v7303, %v7303
        %v7453 = vmul.f32 %v7306, %v7306
        %v7454 = vmul.f32 %v7311, %v7311
        %v7455 = vmul.f32 %v7314, %v7314
        %v7456 = vmul.f32 %v7319, %v7319
        %v7457 = vmul.f32 %v7322, %v7322
        %v7458 = vmul.f32 %v7327, %v7327
        %v7459 = vmul.f32 %v7330, %v7330
        %v7460 = vmul.f32 %v7335, %v7335
        %v7461 = vmul.f32 %v7338, %v7338
        %v7462 = vmul.f32 %v7343, %v7343
        %v7463 = vmul.f32 %v7346, %v7346
        %v7464 = vmul.f32 %v7351, %v7351
        %v7465 = vmul.f32 %v7354, %v7354
        %v7466 = vmul.f32 %v7359, %v7359
        %v7467 = vmul.f32 %v7362, %v7362
        %v7468 = vsel %vm6945, %v7436, 0.0
        %v7469 = vsel %vm6945, %v7437, 0.0
        %v7470 = vadd.f32 %v7468, %v7469
        %v7471 = vsel %vm6945, %v7438, 0.0
        %v7472 = vadd.f32 %v7470, %v7471
        %v7473 = vsel %vm6945, %v7439, 0.0
        %v7474 = vadd.f32 %v7472, %v7473
        %v7475 = vsel %vm6945, %v7440, 0.0
        %v7476 = vadd.f32 %v7474, %v7475
        %v7477 = vsel %vm6945, %v7441, 0.0
        %v7478 = vadd.f32 %v7476, %v7477
        %v7479 = vsel %vm6945, %v7442, 0.0
        %v7480 = vadd.f32 %v7478, %v7479
        %v7481 = vsel %vm6945, %v7443, 0.0
        %v7482 = vadd.f32 %v7480, %v7481
        %v7483 = vsel %vm6945, %v7444, 0.0
        %v7484 = vadd.f32 %v7482, %v7483
        %v7485 = vsel %vm6945, %v7445, 0.0
        %v7486 = vadd.f32 %v7484, %v7485
        %v7487 = vsel %vm6945, %v7446, 0.0
        %v7488 = vadd.f32 %v7486, %v7487
        %v7489 = vsel %vm6945, %v7447, 0.0
        %v7490 = vadd.f32 %v7488, %v7489
        %v7491 = vsel %vm6945, %v7448, 0.0
        %v7492 = vadd.f32 %v7490, %v7491
        %v7493 = vsel %vm6945, %v7449, 0.0
        %v7494 = vadd.f32 %v7492, %v7493
        %v7495 = vsel %vm6945, %v7450, 0.0
        %v7496 = vadd.f32 %v7494, %v7495
        %v7497 = vsel %vm6945, %v7451, 0.0
        %v7498 = vadd.f32 %v7496, %v7497
        %v7499 = vsel %vm6945, %v7452, 0.0
        %v7500 = vadd.f32 %v7498, %v7499
        %v7501 = vsel %vm6945, %v7453, 0.0
        %v7502 = vadd.f32 %v7500, %v7501
        %v7503 = vsel %vm6945, %v7454, 0.0
        %v7504 = vadd.f32 %v7502, %v7503
        %v7505 = vsel %vm6945, %v7455, 0.0
        %v7506 = vadd.f32 %v7504, %v7505
        %v7507 = vsel %vm6945, %v7456, 0.0
        %v7508 = vadd.f32 %v7506, %v7507
        %v7509 = vsel %vm6945, %v7457, 0.0
        %v7510 = vadd.f32 %v7508, %v7509
        %v7511 = vsel %vm6945, %v7458, 0.0
        %v7512 = vadd.f32 %v7510, %v7511
        %v7513 = vsel %vm6945, %v7459, 0.0
        %v7514 = vadd.f32 %v7512, %v7513
        %v7515 = vsel %vm6945, %v7460, 0.0
        %v7516 = vadd.f32 %v7514, %v7515
        %v7517 = vsel %vm6945, %v7461, 0.0
        %v7518 = vadd.f32 %v7516, %v7517
        %v7519 = vsel %vm6945, %v7462, 0.0
        %v7520 = vadd.f32 %v7518, %v7519
        %v7521 = vsel %vm6945, %v7463, 0.0
        %v7522 = vadd.f32 %v7520, %v7521
        %v7523 = vsel %vm6945, %v7464, 0.0
        %v7524 = vadd.f32 %v7522, %v7523
        %v7525 = vsel %vm6945, %v7465, 0.0
        %v7526 = vadd.f32 %v7524, %v7525
        %v7527 = vsel %vm6945, %v7466, 0.0
        %v7528 = vadd.f32 %v7526, %v7527
        %v7529 = vsel %vm6945, %v7467, 0.0
        %v7530 = vadd.f32 %v7528, %v7529
        %v7531 = vrot.slane %v7530, 4
        %v7532 = vadd.f32 %v7530, %v7531
        %v7533 = vrot.slane %v7532, 2
        %v7534 = vadd.f32 %v7532, %v7533
        %v7535 = vrot.slane %v7534, 1
        %v7536 = vadd.f32 %v7534, %v7535
        %v7537 = vmul.f32 %v7435, 0.00390625
        %v7538 = vmul.f32 %v7536, 0.00390625
        %v7539 = vmul.f32 %v7537, %v7537
        %v7540 = vsub.f32 %v7538, %v7539
        %v7541 = vmax.f32 %v7540, 0.0
        %v7542 = vadd.f32 %v7541, 1e-05
        %v7543 = vrsqrt.pop %v7542
        %v7544 = vmul.f32 %v7543, %v7365
        %v7545 = vlaneseq
        %v7546 = vshrl.u32 %v7545, 7
        %v7547 = vsub.s32 0, %v7546
        %v7548 = vrot.slane %v7544, %v7547
        %v7549 = vmul.f32 %v7239, %v7548
        %v7550 = vmul.f32 %v7242, %v7548
        %v7551 = vmul.f32 %v7247, %v7548
        %v7552 = vmul.f32 %v7250, %v7548
        %v7553 = vmul.f32 %v7255, %v7548
        %v7554 = vmul.f32 %v7258, %v7548
        %v7555 = vmul.f32 %v7263, %v7548
        %v7556 = vmul.f32 %v7266, %v7548
        %v7557 = vmul.f32 %v7271, %v7548
        %v7558 = vmul.f32 %v7274, %v7548
        %v7559 = vmul.f32 %v7279, %v7548
        %v7560 = vmul.f32 %v7282, %v7548
        %v7561 = vmul.f32 %v7287, %v7548
        %v7562 = vmul.f32 %v7290, %v7548
        %v7563 = vmul.f32 %v7295, %v7548
        %v7564 = vmul.f32 %v7298, %v7548
        %v7565 = vmul.f32 %v7303, %v7548
        %v7566 = vmul.f32 %v7306, %v7548
        %v7567 = vmul.f32 %v7311, %v7548
        %v7568 = vmul.f32 %v7314, %v7548
        %v7569 = vmul.f32 %v7319, %v7548
        %v7570 = vmul.f32 %v7322, %v7548
        %v7571 = vmul.f32 %v7327, %v7548
        %v7572 = vmul.f32 %v7330, %v7548
        %v7573 = vmul.f32 %v7335, %v7548
        %v7574 = vmul.f32 %v7338, %v7548
        %v7575 = vmul.f32 %v7343, %v7548
        %v7576 = vmul.f32 %v7346, %v7548
        %v7577 = vmul.f32 %v7351, %v7548
        %v7578 = vmul.f32 %v7354, %v7548
        %v7579 = vmul.f32 %v7359, %v7548
        %v7580 = vmul.f32 %v7362, %v7548
        %v7581 = vmul.f32 %v7537, %v7544
        %v7582 = vsub.f32 %v7366, %v7581
        %v7584 = vlaneseq
        %v7585 = vshrl.u32 %v7584, 7
        %v7586 = vsub.s32 0, %v7585
        %v7587 = vrot.slane %v7582, %v7586
        %v7589 = vadd.f32 %v7549, %v7587
        %v7590 = vadd.f32 %v7550, %v7587
        %v7591 = vadd.f32 %v7551, %v7587
        %v7592 = vadd.f32 %v7552, %v7587
        %v7593 = vadd.f32 %v7553, %v7587
        %v7594 = vadd.f32 %v7554, %v7587
        %v7595 = vadd.f32 %v7555, %v7587
        %v7596 = vadd.f32 %v7556, %v7587
        %v7597 = vadd.f32 %v7557, %v7587
        %v7598 = vadd.f32 %v7558, %v7587
        %v7599 = vadd.f32 %v7559, %v7587
        %v7600 = vadd.f32 %v7560, %v7587
        %v7601 = vadd.f32 %v7561, %v7587
        %v7602 = vadd.f32 %v7562, %v7587
        %v7603 = vadd.f32 %v7563, %v7587
        %v7604 = vadd.f32 %v7564, %v7587
        %v7605 = vadd.f32 %v7565, %v7587
        %v7606 = vadd.f32 %v7566, %v7587
        %v7607 = vadd.f32 %v7567, %v7587
        %v7608 = vadd.f32 %v7568, %v7587
        %v7609 = vadd.f32 %v7569, %v7587
        %v7610 = vadd.f32 %v7570, %v7587
        %v7611 = vadd.f32 %v7571, %v7587
        %v7612 = vadd.f32 %v7572, %v7587
        %v7613 = vadd.f32 %v7573, %v7587
        %v7614 = vadd.f32 %v7574, %v7587
        %v7615 = vadd.f32 %v7575, %v7587
        %v7616 = vadd.f32 %v7576, %v7587
        %v7617 = vadd.f32 %v7577, %v7587
        %v7618 = vadd.f32 %v7578, %v7587
        %v7619 = vadd.f32 %v7579, %v7587
        %v7620 = vadd.f32 %v7580, %v7587
        %v7621 = vadd.f32 %v7168, %v7589
        %v7622 = vadd.f32 %v7169, %v7590
        %v7623 = vadd.f32 %v7170, %v7591
        %v7624 = vadd.f32 %v7171, %v7592
        %v7625 = vadd.f32 %v7172, %v7593
        %v7626 = vadd.f32 %v7173, %v7594
        %v7627 = vadd.f32 %v7174, %v7595
        %v7628 = vadd.f32 %v7175, %v7596
        %v7629 = vadd.f32 %v7176, %v7597
        %v7630 = vadd.f32 %v7177, %v7598
        %v7631 = vadd.f32 %v7178, %v7599
        %v7632 = vadd.f32 %v7179, %v7600
        %v7633 = vadd.f32 %v7180, %v7601
        %v7634 = vadd.f32 %v7181, %v7602
        %v7635 = vadd.f32 %v7182, %v7603
        %v7636 = vadd.f32 %v7183, %v7604
        %v7637 = vadd.f32 %v7184, %v7605
        %v7638 = vadd.f32 %v7185, %v7606
        %v7639 = vadd.f32 %v7186, %v7607
        %v7640 = vadd.f32 %v7187, %v7608
        %v7641 = vadd.f32 %v7188, %v7609
        %v7642 = vadd.f32 %v7189, %v7610
        %v7643 = vadd.f32 %v7190, %v7611
        %v7644 = vadd.f32 %v7191, %v7612
        %v7645 = vadd.f32 %v7192, %v7613
        %v7646 = vadd.f32 %v7193, %v7614
        %v7647 = vadd.f32 %v7194, %v7615
        %v7648 = vadd.f32 %v7195, %v7616
        %v7649 = vadd.f32 %v7196, %v7617
        %v7650 = vadd.f32 %v7197, %v7618
        %v7651 = vadd.f32 %v7198, %v7619
        %v7652 = vadd.f32 %v7199, %v7620
        %v7653 = vmax.f32 %v7621, 0.0
        %v7654 = vmax.f32 %v7622, 0.0
        %v7655 = vmax.f32 %v7623, 0.0
        %v7656 = vmax.f32 %v7624, 0.0
        %v7657 = vmax.f32 %v7625, 0.0
        %v7658 = vmax.f32 %v7626, 0.0
        %v7659 = vmax.f32 %v7627, 0.0
        %v7660 = vmax.f32 %v7628, 0.0
        %v7661 = vmax.f32 %v7629, 0.0
        %v7662 = vmax.f32 %v7630, 0.0
        %v7663 = vmax.f32 %v7631, 0.0
        %v7664 = vmax.f32 %v7632, 0.0
        %v7665 = vmax.f32 %v7633, 0.0
        %v7666 = vmax.f32 %v7634, 0.0
        %v7667 = vmax.f32 %v7635, 0.0
        %v7668 = vmax.f32 %v7636, 0.0
        %v7669 = vmax.f32 %v7637, 0.0
        %v7670 = vmax.f32 %v7638, 0.0
        %v7671 = vmax.f32 %v7639, 0.0
        %v7672 = vmax.f32 %v7640, 0.0
        %v7673 = vmax.f32 %v7641, 0.0
        %v7674 = vmax.f32 %v7642, 0.0
        %v7675 = vmax.f32 %v7643, 0.0
        %v7676 = vmax.f32 %v7644, 0.0
        %v7677 = vmax.f32 %v7645, 0.0
        %v7678 = vmax.f32 %v7646, 0.0
        %v7679 = vmax.f32 %v7647, 0.0
        %v7680 = vmax.f32 %v7648, 0.0
        %v7681 = vmax.f32 %v7649, 0.0
        %v7682 = vmax.f32 %v7650, 0.0
        %v7683 = vmax.f32 %v7651, 0.0
        %v7684 = vmax.f32 %v7652, 0.0
        %7685 = vst.msk [vmem:[%s610] sm:$0xff] %vm6945, %v7653
        %7686 = vst.msk [vmem:[%s610 + $0x8] sm:$0xff] %vm6945, %v7654
        %7687 = vst.msk [vmem:[%s610 + $0x10] sm:$0xff] %vm6945, %v7655
        %7688 = vst.msk [vmem:[%s610 + $0x18] sm:$0xff] %vm6945, %v7656
        %7689 = vst.msk [vmem:[%s610 + $0x20] sm:$0xff] %vm6945, %v7657
        %7690 = vst.msk [vmem:[%s610 + $0x28] sm:$0xff] %vm6945, %v7658
        %7691 = vst.msk [vmem:[%s610 + $0x30] sm:$0xff] %vm6945, %v7659
        %7692 = vst.msk [vmem:[%s610 + $0x38] sm:$0xff] %vm6945, %v7660
        %7693 = vst.msk [vmem:[%s610 + $0x40] sm:$0xff] %vm6945, %v7661
        %7694 = vst.msk [vmem:[%s610 + $0x48] sm:$0xff] %vm6945, %v7662
        %7695 = vst.msk [vmem:[%s610 + $0x50] sm:$0xff] %vm6945, %v7663
        %7696 = vst.msk [vmem:[%s610 + $0x58] sm:$0xff] %vm6945, %v7664
        %7697 = vst.msk [vmem:[%s610 + $0x60] sm:$0xff] %vm6945, %v7665
        %7698 = vst.msk [vmem:[%s610 + $0x68] sm:$0xff] %vm6945, %v7666
        %7699 = vst.msk [vmem:[%s610 + $0x70] sm:$0xff] %vm6945, %v7667
        %7700 = vst.msk [vmem:[%s610 + $0x78] sm:$0xff] %vm6945, %v7668
        %7701 = vst.msk [vmem:[%s610 + $0x80] sm:$0xff] %vm6945, %v7669
        %7702 = vst.msk [vmem:[%s610 + $0x88] sm:$0xff] %vm6945, %v7670
        %7703 = vst.msk [vmem:[%s610 + $0x90] sm:$0xff] %vm6945, %v7671
        %7704 = vst.msk [vmem:[%s610 + $0x98] sm:$0xff] %vm6945, %v7672
        %7705 = vst.msk [vmem:[%s610 + $0xa0] sm:$0xff] %vm6945, %v7673
        %7706 = vst.msk [vmem:[%s610 + $0xa8] sm:$0xff] %vm6945, %v7674
        %7707 = vst.msk [vmem:[%s610 + $0xb0] sm:$0xff] %vm6945, %v7675
        %7708 = vst.msk [vmem:[%s610 + $0xb8] sm:$0xff] %vm6945, %v7676
        %7709 = vst.msk [vmem:[%s610 + $0xc0] sm:$0xff] %vm6945, %v7677
        %7710 = vst.msk [vmem:[%s610 + $0xc8] sm:$0xff] %vm6945, %v7678
        %7711 = vst.msk [vmem:[%s610 + $0xd0] sm:$0xff] %vm6945, %v7679
        %7712 = vst.msk [vmem:[%s610 + $0xd8] sm:$0xff] %vm6945, %v7680
        %7713 = vst.msk [vmem:[%s610 + $0xe0] sm:$0xff] %vm6945, %v7681
        %7714 = vst.msk [vmem:[%s610 + $0xe8] sm:$0xff] %vm6945, %v7682
        %7715 = vst.msk [vmem:[%s610 + $0xf0] sm:$0xff] %vm6945, %v7683
        %7716 = vst.msk [vmem:[%s610 + $0xf8] sm:$0xff] %vm6945, %v7684
        %s7717 = sand.u32 %s322, 1
        %s7718 = scalar_lea.sflag [#allocation5], %s7717
        %s7719 = sand.u32 %s322, 1
        %s7720 = smul.addr %s7719, 256
        %s7721 = scalar_lea.vmem [#allocation24], %s7720
        // Predicated region
        $region125: #{tpu_custom_call.1} parent=71 // pred_check
          %p7722 = pneg %p332
        $region126: #{tpu_custom_call.1} parent=71 // pred_check_branch
          %7724 = sbr.rel (%p7722) target = $region128
        $region127: #{tpu_custom_call.1} parent=71 // pred_region
          %s7726 = ssub.s32 4096, 4096
          %7727 = vsyncadd %s7718, %s7726
          %s7728 = smul.addr %s36, 32
          %s7729 = smul.addr %s7728, 128
          %s7730 = scalar_lea.hbm %s13, %s7729
          %s7731 = sshll.u32 %s7721, 4
          %s7732 = int_to_ptr.vmem [resolvable:$true] %s7731
          %7737 = dma.vmem_to_hbm [thread:$0]  %s7732, 4096, %s7730, %s7718, 128, 128, 8
        $region128: #{tpu_custom_call.1} parent=71 // pred_fallthru
          _
      $region72: #{tpu_custom_call.1} parent=5 // pred_fallthru
        _
      %p7738 = scmp.le.s32.totalorder 2, %s31
      // Predicated region
      $region129: #{tpu_custom_call.1} parent=5 // pred_check
        %p7739 = pneg %p7738
      $region130: #{tpu_custom_call.1} parent=5 // pred_check_branch
        %7741 = sbr.rel (%p7739) target = $region132
      $region131: #{tpu_custom_call.1} parent=5 // pred_region
        %s7742 = ssub.s32 %s31, 2
        // Predicated region
        $region133: #{tpu_custom_call.1} parent=131 // pred_check
          %p7743 = pneg %p338
        $region134: #{tpu_custom_call.1} parent=131 // pred_check_branch
          %7745 = sbr.rel (%p7743) target = $region136
        $region135: #{tpu_custom_call.1} parent=131 // pred_region
          %s7746 = sand.u32 %s323, 1
          %s7747 = scalar_lea.sflag [#allocation5], %s7746
          %s7748 = sand.u32 %s323, 1
          %s7749 = smul.addr %s7748, 256
          %s7750 = scalar_lea.vmem [#allocation24], %s7749
          %7751 = dma.done %s7747, 4096
        $region136: #{tpu_custom_call.1} parent=131 // pred_fallthru
          _
      $region132: #{tpu_custom_call.1} parent=5 // pred_fallthru
        _
    $region6: #{tpu_custom_call.1} parent=1 // loop_footer
      %s35 = sadd.s32 1, %s31
    $region7: #{tpu_custom_call.1} parent=1 // loop_footer_branch
      %30 = sbr.rel target = $region3
    $region8: #{tpu_custom_call.1} parent=1 // loop_exit
      _
    %7752 = vsyncpa [#allocation4], 1
    %s7753 = scalar_lea.sflag [#allocation4], 1
    %7754 = vsyncpa %s7753, 1
    %7755 = vsyncpa [#allocation7], 1
    %7756 = vsyncpa [#allocation10], 1
    %7757 = vsyncpa [#allocation13], 1
    %7758 = vsyncpa [#allocation16], 1
    %7759 = vsyncpa [#allocation19], 1
    %7760 = vsyncpa [#allocation22], 1
    %7761 = vsyncpa [#allocation5], 1
    %s7762 = scalar_lea.sflag [#allocation5], 1
    %7763 = vsyncpa %s7762, 1

</llo_original>
